<compile_context>
chip_gen: v5e
topology: v5e:2x2
jax: 0.10.0
libtpu: 0.0.40
codegen_flags: <defaults>
</compile_context>

<pallas_src>
import functools

import numpy as np
import jax
import jax.numpy as jnp
from jax.experimental import pallas as pl
from jax.experimental.pallas import tpu as pltpu


# ---------------------------- fused Pallas kernel ----------------------------

def _simplenet_fused_kernel(
    x_ref,          # (1, S, Cin)  VMEM   one batch of NHWC-flattened input
    inp_w_ref,      # (Cin, E)     VMEM   1x1 input_proj weight
    inp_b_ref,      # (1, E)       VMEM
    qkv_w_ref,      # (E, 3E)      VMEM   packed MHA in_proj (q|k|v)
    qkv_b_ref,      # (1, 3E)      VMEM
    outp_w_ref,     # (E, E)       VMEM   MHA out_proj
    outp_b_ref,     # (1, E)       VMEM
    dec_w_ref,      # (E, dim)     VMEM   1x1 decode proxy (see TODO)
    dec_b_ref,      # (1, dim)     VMEM
    head_w_ref,     # (25, dim, 2) VMEM   5x5 conv taps, channel 0 = alpha, 1 = beta
    head_b_ref,     # (1, 2)       VMEM
    sel_ref,        # (25, S, S)   VMEM   0/1 shift-select matrices (spatial taps)
    gamma_ref,      # (1,)         SMEM   bridge residual scale
    o_ref,          # (1, S, 2)    VMEM   softplus(alpha|beta) per pixel
    *, num_heads, attn_mxu_dtype):
    S = x_ref.shape[1]
    E = inp_w_ref.shape[1]
    Dh = E // num_heads
    scale = 1.0 / float(np.sqrt(Dh))

    x = x_ref[0]                                                      # (S, Cin)

    # ---- MultiHeadAttentionBridge.input_proj (1x1 conv as matmul) ----
    proj = jnp.dot(x, inp_w_ref[...],
                   preferred_element_type=jnp.float32) + inp_b_ref[...]   # (S, E)
    skip = proj

    # ---- packed q/k/v projection; split with static lane slices in VMEM ----
    qkv = jnp.dot(proj, qkv_w_ref[...],
                  preferred_element_type=jnp.float32) + qkv_b_ref[...]    # (S, 3E)
    q = qkv[:, 0:E]
    k = qkv[:, E:2 * E]
    v = qkv[:, 2 * E:3 * E]

    # ---- multi-head attention, all heads in-kernel; out_proj fused per head ----
    # bf16 operands for the MXU (v6e/v7x), f32 accumulation.
    mha = jnp.zeros((S, E), jnp.float32)
    for h in range(num_heads):
        lo, hi = h * Dh, (h + 1) * Dh
        qh = q[:, lo:hi].astype(attn_mxu_dtype)
        kh = k[:, lo:hi].astype(attn_mxu_dtype)
        vh = v[:, lo:hi].astype(attn_mxu_dtype)
        # scores = q @ k^T  (contract head dim of both; no explicit transpose)
        s = jax.lax.dot_general(qh, kh, (((1,), (1,)), ((), ())),
                                preferred_element_type=jnp.float32) * scale  # (S, S)
        m = jnp.max(s, axis=-1, keepdims=True)
        p = jnp.exp(s - m)
        l = jnp.sum(p, axis=-1, keepdims=True)
        p = p * pl.reciprocal(l, approx=True)                          # EUP, not VALU div
        oh = jnp.dot(p.astype(attn_mxu_dtype), vh,
                     preferred_element_type=jnp.float32)               # (S, Dh)
        # accumulate this head's slice of out_proj -> lane-dense (S, E) result
        mha = mha + jnp.dot(oh, outp_w_ref[lo:hi, :],
                            preferred_element_type=jnp.float32)
    mha = mha + outp_b_ref[...]

    # bridge residual: skip + gamma * attention_out   (gamma scalar from SMEM)
    bridged = skip + gamma_ref[0] * mha                                # (S, E)

    # TODO(synk): UNet encoder/decoder body (class UNet) is not defined in the source;
    # deterministic 1x1 projection maps bridge channels (dim*16) back to dim.
    feat = jnp.dot(bridged, dec_w_ref[...],
                   preferred_element_type=jnp.float32) + dec_b_ref[...]  # (S, dim)

    # ---- alpha/beta heads: 5x5 conv, padding=2, as 25 shift-select matmuls ----
    # acc[s, o] = sum_t sel[t] @ (feat @ w_t); sel encodes the (di, dj) pixel shift
    # with zero padding, w_t = conv_weight[:, :, kh, kw] with t = kh*5 + kw.
    acc = jnp.zeros((S, 2), jnp.float32)
    for t in range(25):
        tap = jnp.dot(feat, head_w_ref[t], preferred_element_type=jnp.float32)   # (S, 2)
        acc = acc + jnp.dot(sel_ref[t], tap, preferred_element_type=jnp.float32)
    acc = acc + head_b_ref[...]
    # numerically-stable softplus
    o_ref[0] = jnp.maximum(acc, 0.0) + jnp.log1p(jnp.exp(-jnp.abs(acc)))


# ---------------------------- wrapper ----------------------------

def _build_shift_select(H, W):
    """(25, S, S) 0/1 matrices: sel[t] @ feat == feat shifted by tap t, zero padded."""
    S = H * W
    sel = np.zeros((25, S, S), np.float32)
    t = 0
    for di in range(-2, 3):
        for dj in range(-2, 3):
            for s in range(S):
                i, j = divmod(s, W)
                ii, jj = i + di, j + dj
                if 0 <= ii < H and 0 <= jj < W:
                    sel[t, s, ii * W + jj] = 1.0
            t += 1
    return jnp.asarray(sel)


def simplenet_forward(x, params, *, num_heads=8, attn_mxu_dtype=jnp.bfloat16):
    B, Cin, H, W = x.shape
    S = H * W
    E = params["inp_w"].shape[1]
    dim = params["dec_w"].shape[1]

    # One-time input layout transform NCHW -> (B, S=H*W, C); everything else stays
    # inside the fused kernel (no inter-kernel transposes / HBM bounces).
    x_seq = jnp.transpose(x, (0, 2, 3, 1)).reshape(B, S, Cin)

    # Conv2d(dim, 1, 5, pad=2) weights -> (25, dim, 2) tap layout; t = kh*5 + kw.
    head_w = jnp.stack(
        [jnp.transpose(params["alpha_w"][0], (1, 2, 0)).reshape(25, dim),
         jnp.transpose(params["beta_w"][0], (1, 2, 0)).reshape(25, dim)],
        axis=-1)                                                       # (25, dim, 2)
    head_b = jnp.concatenate([params["alpha_b"], params["beta_b"]]).reshape(1, 2)
    sel = _build_shift_select(H, W)                                    # (25, S, S)

    kernel = functools.partial(_simplenet_fused_kernel,
                               num_heads=num_heads,
                               attn_mxu_dtype=attn_mxu_dtype)

    def rep(shape):  # whole-array block, constant across the batch grid
        nd = len(shape)
        return pl.BlockSpec(shape, lambda b, _n=nd: (0,) * _n)

    in_specs = [
        pl.BlockSpec((1, S, Cin), lambda b: (b, 0, 0)),        # x (per batch)
        rep((Cin, E)), rep((1, E)),                            # input_proj
        rep((E, 3 * E)), rep((1, 3 * E)),                      # MHA in_proj
        rep((E, E)), rep((1, E)),                              # MHA out_proj
        rep((E, dim)), rep((1, dim)),                          # decode proxy
        rep((25, dim, 2)), rep((1, 2)),                        # conv heads
        rep((25, S, S)),                                       # shift-select
        pl.BlockSpec(memory_space=pltpu.MemorySpace.SMEM),     # gamma (1,)
    ]

    heads = pl.pallas_call(
        kernel,
        out_shape=jax.ShapeDtypeStruct((B, S, 2), jnp.float32),
        grid=(B,),
        in_specs=in_specs,
        out_specs=pl.BlockSpec((1, S, 2), lambda b: (b, 0, 0)),
        compiler_params=pltpu.CompilerParams(
            dimension_semantics=("parallel",),                 # 2 TCs on v7x
            vmem_limit_bytes=32 * 1024 * 1024),
    )(x_seq,
      params["inp_w"], params["inp_b"].reshape(1, E),
      params["in_proj_w"], params["in_proj_b"].reshape(1, 3 * E),
      params["out_proj_w"], params["out_proj_b"].reshape(1, E),
      params["dec_w"], params["dec_b"].reshape(1, dim),
      head_w, head_b, sel,
      params["gamma"].astype(jnp.float32))

    alpha = heads[:, :, 0].reshape(B, 1, H, W)
    beta = heads[:, :, 1].reshape(B, 1, H, W)
    return alpha, beta


# ---------------------------- parameters ----------------------------

def init_params(key, dim):
    in_ch = dim * 8           # bridge in_channels
    out_ch = dim * 16         # bridge out_channels == MHA embed dim
    ks = jax.random.split(key, 12)

    def w(k, shape, scale=0.02):
        return (scale * jax.random.normal(k, shape)).astype(jnp.float32)

    return dict(
        # MultiHeadAttentionBridge.input_proj : Conv2d(in_ch, out_ch, 1) as [Cin, Cout]
        inp_w=w(ks[0], (in_ch, out_ch)),
        inp_b=w(ks[1], (out_ch,)),
        # nn.MultiheadAttention in_proj (q|k|v packed, pre-transposed) and out_proj
        in_proj_w=w(ks[2], (out_ch, 3 * out_ch)),
        in_proj_b=w(ks[3], (3 * out_ch,)),
        out_proj_w=w(ks[4], (out_ch, out_ch)),
        out_proj_b=w(ks[5], (out_ch,)),
        # gamma: matches PyTorch init torch.zeros(1)
        gamma=jnp.zeros((1,), jnp.float32),
        # TODO(synk): UNet encoder/decoder not defined in source; 1x1 proxy E -> dim.
        dec_w=w(ks[6], (out_ch, dim)),
        dec_b=w(ks[7], (dim,)),
        # alpha / beta heads: Conv2d(dim, 1, 5, padding=2) + Softplus
        alpha_w=w(ks[8], (1, dim, 5, 5)),
        alpha_b=w(ks[9], (1,)),
        beta_w=w(ks[10], (1, dim, 5, 5)),
        beta_b=w(ks[11], (1,)),
    )


# ---------------------------- main ----------------------------

if __name__ == "__main__":
    dim = 32
    num_heads = 8
    B, H, W = 2, 4, 4

    key = jax.random.PRNGKey(0)
    k_param, k_x = jax.random.split(key)
    params = init_params(k_param, dim)
    x = jax.random.normal(k_x, (B, dim * 8, H, W), dtype=jnp.float32)

    fwd = jax.jit(functools.partial(simplenet_forward, num_heads=num_heads))
    alpha, beta = fwd(x, params)
    jax.block_until_ready((alpha, beta))

    assert alpha.shape == (B, 1, H, W) and beta.shape == (B, 1, H, W)
    assert bool(jnp.all(alpha >= 0.0)) and bool(jnp.all(beta >= 0.0))  # Softplus range
    print("KERNEL_OK")
</pallas_src>

<mosaic_0001>
module attributes {stable_mosaic.version = 11 : i64} {
  func.func @_simplenet_fused_kernel(%arg0: i32, %arg1: memref<1x16x256xf32, #tpu.memory_space<vmem>>, %arg2: memref<256x512xf32, #tpu.memory_space<vmem>>, %arg3: memref<1x512xf32, #tpu.memory_space<vmem>>, %arg4: memref<512x1536xf32, #tpu.memory_space<vmem>>, %arg5: memref<1x1536xf32, #tpu.memory_space<vmem>>, %arg6: memref<512x512xf32, #tpu.memory_space<vmem>>, %arg7: memref<1x512xf32, #tpu.memory_space<vmem>>, %arg8: memref<512x32xf32, #tpu.memory_space<vmem>>, %arg9: memref<1x32xf32, #tpu.memory_space<vmem>>, %arg10: memref<25x32x2xf32, #tpu.memory_space<vmem>>, %arg11: memref<1x2xf32, #tpu.memory_space<vmem>>, %arg12: memref<25x16x16xf32, #tpu.memory_space<vmem>>, %arg13: memref<1xf32, #tpu.memory_space<smem>>, %arg14: memref<1x16x2xf32, #tpu.memory_space<vmem>>) attributes {dimension_semantics = [#tpu.dimension_semantics<parallel>], iteration_bounds = array<i64: 2>, scalar_prefetch = 0 : i64, scratch_operands = 0 : i64, tpu.core_type = #tpu.core_type<tc>, window_params = [{transform_indices = @transform_0, window_bounds = array<i64: 1, 16, 256>}, {pipeline_mode = #tpu.pipeline_mode<synchronous>, transform_indices = @transform_1, window_bounds = array<i64: 256, 512>}, {pipeline_mode = #tpu.pipeline_mode<synchronous>, transform_indices = @transform_2, window_bounds = array<i64: 1, 512>}, {pipeline_mode = #tpu.pipeline_mode<synchronous>, transform_indices = @transform_3, window_bounds = array<i64: 512, 1536>}, {pipeline_mode = #tpu.pipeline_mode<synchronous>, transform_indices = @transform_4, window_bounds = array<i64: 1, 1536>}, {pipeline_mode = #tpu.pipeline_mode<synchronous>, transform_indices = @transform_5, window_bounds = array<i64: 512, 512>}, {pipeline_mode = #tpu.pipeline_mode<synchronous>, transform_indices = @transform_6, window_bounds = array<i64: 1, 512>}, {pipeline_mode = #tpu.pipeline_mode<synchronous>, transform_indices = @transform_7, window_bounds = array<i64: 512, 32>}, {pipeline_mode = #tpu.pipeline_mode<synchronous>, transform_indices = @transform_8, window_bounds = array<i64: 1, 32>}, {pipeline_mode = #tpu.pipeline_mode<synchronous>, transform_indices = @transform_9, window_bounds = array<i64: 25, 32, 2>}, {pipeline_mode = #tpu.pipeline_mode<synchronous>, transform_indices = @transform_10, window_bounds = array<i64: 1, 2>}, {pipeline_mode = #tpu.pipeline_mode<synchronous>, transform_indices = @transform_11, window_bounds = array<i64: 25, 16, 16>}, {transform_indices = @transform_12, window_bounds = array<i64: 1>}, {transform_indices = @transform_13, window_bounds = array<i64: 1, 16, 2>}]} {
    %c0 = arith.constant 0 : index
    %c0_0 = arith.constant 0 : index
    %c0_1 = arith.constant 0 : index
    %0 = vector.load %arg1[%c0, %c0_0, %c0_1] : memref<1x16x256xf32, #tpu.memory_space<vmem>>, vector<1x16x256xf32>
    %1 = vector.shape_cast %0 : vector<1x16x256xf32> to vector<16x256xf32>
    %c0_2 = arith.constant 0 : index
    %c0_3 = arith.constant 0 : index
    %2 = vector.load %arg2[%c0_2, %c0_3] : memref<256x512xf32, #tpu.memory_space<vmem>>, vector<256x512xf32>
    %cst = arith.constant dense<0.000000e+00> : vector<16x512xf32>
    %3 = tpu.matmul %1, %2, %cst {dimension_numbers = #tpu.dot_dimension_numbers<[1], [0], [0], [1], [0, 0, 1, 1], [], []>} : vector<16x256xf32>, vector<256x512xf32>, vector<16x512xf32> -> vector<16x512xf32>
    %c0_4 = arith.constant 0 : index
    %c0_5 = arith.constant 0 : index
    %4 = vector.load %arg3[%c0_4, %c0_5] : memref<1x512xf32, #tpu.memory_space<vmem>>, vector<1x512xf32>
    %5 = vector.broadcast %4 : vector<1x512xf32> to vector<16x512xf32>
    %6 = arith.addf %3, %5 : vector<16x512xf32>
    %c0_6 = arith.constant 0 : index
    %c0_7 = arith.constant 0 : index
    %7 = vector.load %arg4[%c0_6, %c0_7] : memref<512x1536xf32, #tpu.memory_space<vmem>>, vector<512x1536xf32>
    %cst_8 = arith.constant dense<0.000000e+00> : vector<16x1536xf32>
    %8 = tpu.matmul %6, %7, %cst_8 {dimension_numbers = #tpu.dot_dimension_numbers<[1], [0], [0], [1], [0, 0, 1, 1], [], []>} : vector<16x512xf32>, vector<512x1536xf32>, vector<16x1536xf32> -> vector<16x1536xf32>
    %c0_9 = arith.constant 0 : index
    %c0_10 = arith.constant 0 : index
    %9 = vector.load %arg5[%c0_9, %c0_10] : memref<1x1536xf32, #tpu.memory_space<vmem>>, vector<1x1536xf32>
    %10 = vector.broadcast %9 : vector<1x1536xf32> to vector<16x1536xf32>
    %11 = arith.addf %8, %10 : vector<16x1536xf32>
    %12 = vector.extract_strided_slice %11 {offsets = [0, 0], sizes = [16, 512], strides = [1, 1]} : vector<16x1536xf32> to vector<16x512xf32>
    %13 = vector.extract_strided_slice %11 {offsets = [0, 512], sizes = [16, 512], strides = [1, 1]} : vector<16x1536xf32> to vector<16x512xf32>
    %14 = vector.extract_strided_slice %11 {offsets = [0, 1024], sizes = [16, 512], strides = [1, 1]} : vector<16x1536xf32> to vector<16x512xf32>
    %cst_11 = arith.constant 0.000000e+00 : f32
    %15 = vector.broadcast %cst_11 : f32 to vector<16x512xf32>
    %16 = vector.extract_strided_slice %12 {offsets = [0, 0], sizes = [16, 64], strides = [1, 1]} : vector<16x512xf32> to vector<16x64xf32>
    %17 = arith.truncf %16 : vector<16x64xf32> to vector<16x64xbf16>
    %18 = vector.extract_strided_slice %13 {offsets = [0, 0], sizes = [16, 64], strides = [1, 1]} : vector<16x512xf32> to vector<16x64xf32>
    %19 = arith.truncf %18 : vector<16x64xf32> to vector<16x64xbf16>
    %20 = vector.extract_strided_slice %14 {offsets = [0, 0], sizes = [16, 64], strides = [1, 1]} : vector<16x512xf32> to vector<16x64xf32>
    %21 = arith.truncf %20 : vector<16x64xf32> to vector<16x64xbf16>
    %cst_12 = arith.constant dense<0.000000e+00> : vector<16x16xf32>
    %22 = tpu.matmul %17, %19, %cst_12 {dimension_numbers = #tpu.dot_dimension_numbers<[1], [1], [0], [0], [0, 0, 1, 0], [], []>} : vector<16x64xbf16>, vector<16x64xbf16>, vector<16x16xf32> -> vector<16x16xf32>
    %cst_13 = arith.constant 1.250000e-01 : f32
    %23 = vector.broadcast %cst_13 : f32 to vector<16x16xf32>
    %24 = arith.mulf %22, %23 : vector<16x16xf32>
    %cst_14 = arith.constant dense<0xFF800000> : vector<16xf32>
    %25 = vector.multi_reduction <maximumf>, %24, %cst_14 [1] : vector<16x16xf32> to vector<16xf32>
    %26 = vector.shape_cast %25 : vector<16xf32> to vector<16x1xf32>
    %27 = vector.broadcast %26 : vector<16x1xf32> to vector<16x16xf32>
    %28 = arith.subf %24, %27 : vector<16x16xf32>
    %29 = math.exp %28 : vector<16x16xf32>
    %cst_15 = arith.constant dense<0.000000e+00> : vector<16xf32>
    %30 = vector.multi_reduction <add>, %29, %cst_15 [1] : vector<16x16xf32> to vector<16xf32>
    %31 = vector.shape_cast %30 : vector<16xf32> to vector<16x1xf32>
    %32 = tpu.reciprocal %31 {approx = true} : vector<16x1xf32> -> vector<16x1xf32>
    %33 = vector.broadcast %32 : vector<16x1xf32> to vector<16x16xf32>
    %34 = arith.mulf %29, %33 : vector<16x16xf32>
    %35 = arith.truncf %34 : vector<16x16xf32> to vector<16x16xbf16>
    %cst_16 = arith.constant dense<0.000000e+00> : vector<16x64xf32>
    %36 = tpu.matmul %35, %21, %cst_16 {dimension_numbers = #tpu.dot_dimension_numbers<[1], [0], [0], [1], [0, 0, 1, 1], [], []>} : vector<16x16xbf16>, vector<16x64xbf16>, vector<16x64xf32> -> vector<16x64xf32>
    %c0_17 = arith.constant 0 : index
    %c0_18 = arith.constant 0 : index
    %37 = vector.load %arg6[%c0_17, %c0_18] : memref<512x512xf32, #tpu.memory_space<vmem>>, vector<64x512xf32>
    %cst_19 = arith.constant dense<0.000000e+00> : vector<16x512xf32>
    %38 = tpu.matmul %36, %37, %cst_19 {dimension_numbers = #tpu.dot_dimension_numbers<[1], [0], [0], [1], [0, 0, 1, 1], [], []>} : vector<16x64xf32>, vector<64x512xf32>, vector<16x512xf32> -> vector<16x512xf32>
    %39 = arith.addf %15, %38 : vector<16x512xf32>
    %40 = vector.extract_strided_slice %12 {offsets = [0, 64], sizes = [16, 64], strides = [1, 1]} : vector<16x512xf32> to vector<16x64xf32>
    %41 = arith.truncf %40 : vector<16x64xf32> to vector<16x64xbf16>
    %42 = vector.extract_strided_slice %13 {offsets = [0, 64], sizes = [16, 64], strides = [1, 1]} : vector<16x512xf32> to vector<16x64xf32>
    %43 = arith.truncf %42 : vector<16x64xf32> to vector<16x64xbf16>
    %44 = vector.extract_strided_slice %14 {offsets = [0, 64], sizes = [16, 64], strides = [1, 1]} : vector<16x512xf32> to vector<16x64xf32>
    %45 = arith.truncf %44 : vector<16x64xf32> to vector<16x64xbf16>
    %cst_20 = arith.constant dense<0.000000e+00> : vector<16x16xf32>
    %46 = tpu.matmul %41, %43, %cst_20 {dimension_numbers = #tpu.dot_dimension_numbers<[1], [1], [0], [0], [0, 0, 1, 0], [], []>} : vector<16x64xbf16>, vector<16x64xbf16>, vector<16x16xf32> -> vector<16x16xf32>
    %cst_21 = arith.constant 1.250000e-01 : f32
    %47 = vector.broadcast %cst_21 : f32 to vector<16x16xf32>
    %48 = arith.mulf %46, %47 : vector<16x16xf32>
    %cst_22 = arith.constant dense<0xFF800000> : vector<16xf32>
    %49 = vector.multi_reduction <maximumf>, %48, %cst_22 [1] : vector<16x16xf32> to vector<16xf32>
    %50 = vector.shape_cast %49 : vector<16xf32> to vector<16x1xf32>
    %51 = vector.broadcast %50 : vector<16x1xf32> to vector<16x16xf32>
    %52 = arith.subf %48, %51 : vector<16x16xf32>
    %53 = math.exp %52 : vector<16x16xf32>
    %cst_23 = arith.constant dense<0.000000e+00> : vector<16xf32>
    %54 = vector.multi_reduction <add>, %53, %cst_23 [1] : vector<16x16xf32> to vector<16xf32>
    %55 = vector.shape_cast %54 : vector<16xf32> to vector<16x1xf32>
    %56 = tpu.reciprocal %55 {approx = true} : vector<16x1xf32> -> vector<16x1xf32>
    %57 = vector.broadcast %56 : vector<16x1xf32> to vector<16x16xf32>
    %58 = arith.mulf %53, %57 : vector<16x16xf32>
    %59 = arith.truncf %58 : vector<16x16xf32> to vector<16x16xbf16>
    %cst_24 = arith.constant dense<0.000000e+00> : vector<16x64xf32>
    %60 = tpu.matmul %59, %45, %cst_24 {dimension_numbers = #tpu.dot_dimension_numbers<[1], [0], [0], [1], [0, 0, 1, 1], [], []>} : vector<16x16xbf16>, vector<16x64xbf16>, vector<16x64xf32> -> vector<16x64xf32>
    %c64 = arith.constant 64 : index
    %c0_25 = arith.constant 0 : index
    %61 = vector.load %arg6[%c64, %c0_25] : memref<512x512xf32, #tpu.memory_space<vmem>>, vector<64x512xf32>
    %cst_26 = arith.constant dense<0.000000e+00> : vector<16x512xf32>
    %62 = tpu.matmul %60, %61, %cst_26 {dimension_numbers = #tpu.dot_dimension_numbers<[1], [0], [0], [1], [0, 0, 1, 1], [], []>} : vector<16x64xf32>, vector<64x512xf32>, vector<16x512xf32> -> vector<16x512xf32>
    %63 = arith.addf %39, %62 : vector<16x512xf32>
    %64 = vector.extract_strided_slice %12 {offsets = [0, 128], sizes = [16, 64], strides = [1, 1]} : vector<16x512xf32> to vector<16x64xf32>
    %65 = arith.truncf %64 : vector<16x64xf32> to vector<16x64xbf16>
    %66 = vector.extract_strided_slice %13 {offsets = [0, 128], sizes = [16, 64], strides = [1, 1]} : vector<16x512xf32> to vector<16x64xf32>
    %67 = arith.truncf %66 : vector<16x64xf32> to vector<16x64xbf16>
    %68 = vector.extract_strided_slice %14 {offsets = [0, 128], sizes = [16, 64], strides = [1, 1]} : vector<16x512xf32> to vector<16x64xf32>
    %69 = arith.truncf %68 : vector<16x64xf32> to vector<16x64xbf16>
    %cst_27 = arith.constant dense<0.000000e+00> : vector<16x16xf32>
    %70 = tpu.matmul %65, %67, %cst_27 {dimension_numbers = #tpu.dot_dimension_numbers<[1], [1], [0], [0], [0, 0, 1, 0], [], []>} : vector<16x64xbf16>, vector<16x64xbf16>, vector<16x16xf32> -> vector<16x16xf32>
    %cst_28 = arith.constant 1.250000e-01 : f32
    %71 = vector.broadcast %cst_28 : f32 to vector<16x16xf32>
    %72 = arith.mulf %70, %71 : vector<16x16xf32>
    %cst_29 = arith.constant dense<0xFF800000> : vector<16xf32>
    %73 = vector.multi_reduction <maximumf>, %72, %cst_29 [1] : vector<16x16xf32> to vector<16xf32>
    %74 = vector.shape_cast %73 : vector<16xf32> to vector<16x1xf32>
    %75 = vector.broadcast %74 : vector<16x1xf32> to vector<16x16xf32>
    %76 = arith.subf %72, %75 : vector<16x16xf32>
    %77 = math.exp %76 : vector<16x16xf32>
    %cst_30 = arith.constant dense<0.000000e+00> : vector<16xf32>
    %78 = vector.multi_reduction <add>, %77, %cst_30 [1] : vector<16x16xf32> to vector<16xf32>
    %79 = vector.shape_cast %78 : vector<16xf32> to vector<16x1xf32>
    %80 = tpu.reciprocal %79 {approx = true} : vector<16x1xf32> -> vector<16x1xf32>
    %81 = vector.broadcast %80 : vector<16x1xf32> to vector<16x16xf32>
    %82 = arith.mulf %77, %81 : vector<16x16xf32>
    %83 = arith.truncf %82 : vector<16x16xf32> to vector<16x16xbf16>
    %cst_31 = arith.constant dense<0.000000e+00> : vector<16x64xf32>
    %84 = tpu.matmul %83, %69, %cst_31 {dimension_numbers = #tpu.dot_dimension_numbers<[1], [0], [0], [1], [0, 0, 1, 1], [], []>} : vector<16x16xbf16>, vector<16x64xbf16>, vector<16x64xf32> -> vector<16x64xf32>
    %c128 = arith.constant 128 : index
    %c0_32 = arith.constant 0 : index
    %85 = vector.load %arg6[%c128, %c0_32] : memref<512x512xf32, #tpu.memory_space<vmem>>, vector<64x512xf32>
    %cst_33 = arith.constant dense<0.000000e+00> : vector<16x512xf32>
    %86 = tpu.matmul %84, %85, %cst_33 {dimension_numbers = #tpu.dot_dimension_numbers<[1], [0], [0], [1], [0, 0, 1, 1], [], []>} : vector<16x64xf32>, vector<64x512xf32>, vector<16x512xf32> -> vector<16x512xf32>
    %87 = arith.addf %63, %86 : vector<16x512xf32>
    %88 = vector.extract_strided_slice %12 {offsets = [0, 192], sizes = [16, 64], strides = [1, 1]} : vector<16x512xf32> to vector<16x64xf32>
    %89 = arith.truncf %88 : vector<16x64xf32> to vector<16x64xbf16>
    %90 = vector.extract_strided_slice %13 {offsets = [0, 192], sizes = [16, 64], strides = [1, 1]} : vector<16x512xf32> to vector<16x64xf32>
    %91 = arith.truncf %90 : vector<16x64xf32> to vector<16x64xbf16>
    %92 = vector.extract_strided_slice %14 {offsets = [0, 192], sizes = [16, 64], strides = [1, 1]} : vector<16x512xf32> to vector<16x64xf32>
    %93 = arith.truncf %92 : vector<16x64xf32> to vector<16x64xbf16>
    %cst_34 = arith.constant dense<0.000000e+00> : vector<16x16xf32>
    %94 = tpu.matmul %89, %91, %cst_34 {dimension_numbers = #tpu.dot_dimension_numbers<[1], [1], [0], [0], [0, 0, 1, 0], [], []>} : vector<16x64xbf16>, vector<16x64xbf16>, vector<16x16xf32> -> vector<16x16xf32>
    %cst_35 = arith.constant 1.250000e-01 : f32
    %95 = vector.broadcast %cst_35 : f32 to vector<16x16xf32>
    %96 = arith.mulf %94, %95 : vector<16x16xf32>
    %cst_36 = arith.constant dense<0xFF800000> : vector<16xf32>
    %97 = vector.multi_reduction <maximumf>, %96, %cst_36 [1] : vector<16x16xf32> to vector<16xf32>
    %98 = vector.shape_cast %97 : vector<16xf32> to vector<16x1xf32>
    %99 = vector.broadcast %98 : vector<16x1xf32> to vector<16x16xf32>
    %100 = arith.subf %96, %99 : vector<16x16xf32>
    %101 = math.exp %100 : vector<16x16xf32>
    %cst_37 = arith.constant dense<0.000000e+00> : vector<16xf32>
    %102 = vector.multi_reduction <add>, %101, %cst_37 [1] : vector<16x16xf32> to vector<16xf32>
    %103 = vector.shape_cast %102 : vector<16xf32> to vector<16x1xf32>
    %104 = tpu.reciprocal %103 {approx = true} : vector<16x1xf32> -> vector<16x1xf32>
    %105 = vector.broadcast %104 : vector<16x1xf32> to vector<16x16xf32>
    %106 = arith.mulf %101, %105 : vector<16x16xf32>
    %107 = arith.truncf %106 : vector<16x16xf32> to vector<16x16xbf16>
    %cst_38 = arith.constant dense<0.000000e+00> : vector<16x64xf32>
    %108 = tpu.matmul %107, %93, %cst_38 {dimension_numbers = #tpu.dot_dimension_numbers<[1], [0], [0], [1], [0, 0, 1, 1], [], []>} : vector<16x16xbf16>, vector<16x64xbf16>, vector<16x64xf32> -> vector<16x64xf32>
    %c192 = arith.constant 192 : index
    %c0_39 = arith.constant 0 : index
    %109 = vector.load %arg6[%c192, %c0_39] : memref<512x512xf32, #tpu.memory_space<vmem>>, vector<64x512xf32>
    %cst_40 = arith.constant dense<0.000000e+00> : vector<16x512xf32>
    %110 = tpu.matmul %108, %109, %cst_40 {dimension_numbers = #tpu.dot_dimension_numbers<[1], [0], [0], [1], [0, 0, 1, 1], [], []>} : vector<16x64xf32>, vector<64x512xf32>, vector<16x512xf32> -> vector<16x512xf32>
    %111 = arith.addf %87, %110 : vector<16x512xf32>
    %112 = vector.extract_strided_slice %12 {offsets = [0, 256], sizes = [16, 64], strides = [1, 1]} : vector<16x512xf32> to vector<16x64xf32>
    %113 = arith.truncf %112 : vector<16x64xf32> to vector<16x64xbf16>
    %114 = vector.extract_strided_slice %13 {offsets = [0, 256], sizes = [16, 64], strides = [1, 1]} : vector<16x512xf32> to vector<16x64xf32>
    %115 = arith.truncf %114 : vector<16x64xf32> to vector<16x64xbf16>
    %116 = vector.extract_strided_slice %14 {offsets = [0, 256], sizes = [16, 64], strides = [1, 1]} : vector<16x512xf32> to vector<16x64xf32>
    %117 = arith.truncf %116 : vector<16x64xf32> to vector<16x64xbf16>
    %cst_41 = arith.constant dense<0.000000e+00> : vector<16x16xf32>
    %118 = tpu.matmul %113, %115, %cst_41 {dimension_numbers = #tpu.dot_dimension_numbers<[1], [1], [0], [0], [0, 0, 1, 0], [], []>} : vector<16x64xbf16>, vector<16x64xbf16>, vector<16x16xf32> -> vector<16x16xf32>
    %cst_42 = arith.constant 1.250000e-01 : f32
    %119 = vector.broadcast %cst_42 : f32 to vector<16x16xf32>
    %120 = arith.mulf %118, %119 : vector<16x16xf32>
    %cst_43 = arith.constant dense<0xFF800000> : vector<16xf32>
    %121 = vector.multi_reduction <maximumf>, %120, %cst_43 [1] : vector<16x16xf32> to vector<16xf32>
    %122 = vector.shape_cast %121 : vector<16xf32> to vector<16x1xf32>
    %123 = vector.broadcast %122 : vector<16x1xf32> to vector<16x16xf32>
    %124 = arith.subf %120, %123 : vector<16x16xf32>
    %125 = math.exp %124 : vector<16x16xf32>
    %cst_44 = arith.constant dense<0.000000e+00> : vector<16xf32>
    %126 = vector.multi_reduction <add>, %125, %cst_44 [1] : vector<16x16xf32> to vector<16xf32>
    %127 = vector.shape_cast %126 : vector<16xf32> to vector<16x1xf32>
    %128 = tpu.reciprocal %127 {approx = true} : vector<16x1xf32> -> vector<16x1xf32>
    %129 = vector.broadcast %128 : vector<16x1xf32> to vector<16x16xf32>
    %130 = arith.mulf %125, %129 : vector<16x16xf32>
    %131 = arith.truncf %130 : vector<16x16xf32> to vector<16x16xbf16>
    %cst_45 = arith.constant dense<0.000000e+00> : vector<16x64xf32>
    %132 = tpu.matmul %131, %117, %cst_45 {dimension_numbers = #tpu.dot_dimension_numbers<[1], [0], [0], [1], [0, 0, 1, 1], [], []>} : vector<16x16xbf16>, vector<16x64xbf16>, vector<16x64xf32> -> vector<16x64xf32>
    %c256 = arith.constant 256 : index
    %c0_46 = arith.constant 0 : index
    %133 = vector.load %arg6[%c256, %c0_46] : memref<512x512xf32, #tpu.memory_space<vmem>>, vector<64x512xf32>
    %cst_47 = arith.constant dense<0.000000e+00> : vector<16x512xf32>
    %134 = tpu.matmul %132, %133, %cst_47 {dimension_numbers = #tpu.dot_dimension_numbers<[1], [0], [0], [1], [0, 0, 1, 1], [], []>} : vector<16x64xf32>, vector<64x512xf32>, vector<16x512xf32> -> vector<16x512xf32>
    %135 = arith.addf %111, %134 : vector<16x512xf32>
    %136 = vector.extract_strided_slice %12 {offsets = [0, 320], sizes = [16, 64], strides = [1, 1]} : vector<16x512xf32> to vector<16x64xf32>
    %137 = arith.truncf %136 : vector<16x64xf32> to vector<16x64xbf16>
    %138 = vector.extract_strided_slice %13 {offsets = [0, 320], sizes = [16, 64], strides = [1, 1]} : vector<16x512xf32> to vector<16x64xf32>
    %139 = arith.truncf %138 : vector<16x64xf32> to vector<16x64xbf16>
    %140 = vector.extract_strided_slice %14 {offsets = [0, 320], sizes = [16, 64], strides = [1, 1]} : vector<16x512xf32> to vector<16x64xf32>
    %141 = arith.truncf %140 : vector<16x64xf32> to vector<16x64xbf16>
    %cst_48 = arith.constant dense<0.000000e+00> : vector<16x16xf32>
    %142 = tpu.matmul %137, %139, %cst_48 {dimension_numbers = #tpu.dot_dimension_numbers<[1], [1], [0], [0], [0, 0, 1, 0], [], []>} : vector<16x64xbf16>, vector<16x64xbf16>, vector<16x16xf32> -> vector<16x16xf32>
    %cst_49 = arith.constant 1.250000e-01 : f32
    %143 = vector.broadcast %cst_49 : f32 to vector<16x16xf32>
    %144 = arith.mulf %142, %143 : vector<16x16xf32>
    %cst_50 = arith.constant dense<0xFF800000> : vector<16xf32>
    %145 = vector.multi_reduction <maximumf>, %144, %cst_50 [1] : vector<16x16xf32> to vector<16xf32>
    %146 = vector.shape_cast %145 : vector<16xf32> to vector<16x1xf32>
    %147 = vector.broadcast %146 : vector<16x1xf32> to vector<16x16xf32>
    %148 = arith.subf %144, %147 : vector<16x16xf32>
    %149 = math.exp %148 : vector<16x16xf32>
    %cst_51 = arith.constant dense<0.000000e+00> : vector<16xf32>
    %150 = vector.multi_reduction <add>, %149, %cst_51 [1] : vector<16x16xf32> to vector<16xf32>
    %151 = vector.shape_cast %150 : vector<16xf32> to vector<16x1xf32>
    %152 = tpu.reciprocal %151 {approx = true} : vector<16x1xf32> -> vector<16x1xf32>
    %153 = vector.broadcast %152 : vector<16x1xf32> to vector<16x16xf32>
    %154 = arith.mulf %149, %153 : vector<16x16xf32>
    %155 = arith.truncf %154 : vector<16x16xf32> to vector<16x16xbf16>
    %cst_52 = arith.constant dense<0.000000e+00> : vector<16x64xf32>
    %156 = tpu.matmul %155, %141, %cst_52 {dimension_numbers = #tpu.dot_dimension_numbers<[1], [0], [0], [1], [0, 0, 1, 1], [], []>} : vector<16x16xbf16>, vector<16x64xbf16>, vector<16x64xf32> -> vector<16x64xf32>
    %c320 = arith.constant 320 : index
    %c0_53 = arith.constant 0 : index
    %157 = vector.load %arg6[%c320, %c0_53] : memref<512x512xf32, #tpu.memory_space<vmem>>, vector<64x512xf32>
    %cst_54 = arith.constant dense<0.000000e+00> : vector<16x512xf32>
    %158 = tpu.matmul %156, %157, %cst_54 {dimension_numbers = #tpu.dot_dimension_numbers<[1], [0], [0], [1], [0, 0, 1, 1], [], []>} : vector<16x64xf32>, vector<64x512xf32>, vector<16x512xf32> -> vector<16x512xf32>
    %159 = arith.addf %135, %158 : vector<16x512xf32>
    %160 = vector.extract_strided_slice %12 {offsets = [0, 384], sizes = [16, 64], strides = [1, 1]} : vector<16x512xf32> to vector<16x64xf32>
    %161 = arith.truncf %160 : vector<16x64xf32> to vector<16x64xbf16>
    %162 = vector.extract_strided_slice %13 {offsets = [0, 384], sizes = [16, 64], strides = [1, 1]} : vector<16x512xf32> to vector<16x64xf32>
    %163 = arith.truncf %162 : vector<16x64xf32> to vector<16x64xbf16>
    %164 = vector.extract_strided_slice %14 {offsets = [0, 384], sizes = [16, 64], strides = [1, 1]} : vector<16x512xf32> to vector<16x64xf32>
    %165 = arith.truncf %164 : vector<16x64xf32> to vector<16x64xbf16>
    %cst_55 = arith.constant dense<0.000000e+00> : vector<16x16xf32>
    %166 = tpu.matmul %161, %163, %cst_55 {dimension_numbers = #tpu.dot_dimension_numbers<[1], [1], [0], [0], [0, 0, 1, 0], [], []>} : vector<16x64xbf16>, vector<16x64xbf16>, vector<16x16xf32> -> vector<16x16xf32>
    %cst_56 = arith.constant 1.250000e-01 : f32
    %167 = vector.broadcast %cst_56 : f32 to vector<16x16xf32>
    %168 = arith.mulf %166, %167 : vector<16x16xf32>
    %cst_57 = arith.constant dense<0xFF800000> : vector<16xf32>
    %169 = vector.multi_reduction <maximumf>, %168, %cst_57 [1] : vector<16x16xf32> to vector<16xf32>
    %170 = vector.shape_cast %169 : vector<16xf32> to vector<16x1xf32>
    %171 = vector.broadcast %170 : vector<16x1xf32> to vector<16x16xf32>
    %172 = arith.subf %168, %171 : vector<16x16xf32>
    %173 = math.exp %172 : vector<16x16xf32>
    %cst_58 = arith.constant dense<0.000000e+00> : vector<16xf32>
    %174 = vector.multi_reduction <add>, %173, %cst_58 [1] : vector<16x16xf32> to vector<16xf32>
    %175 = vector.shape_cast %174 : vector<16xf32> to vector<16x1xf32>
    %176 = tpu.reciprocal %175 {approx = true} : vector<16x1xf32> -> vector<16x1xf32>
    %177 = vector.broadcast %176 : vector<16x1xf32> to vector<16x16xf32>
    %178 = arith.mulf %173, %177 : vector<16x16xf32>
    %179 = arith.truncf %178 : vector<16x16xf32> to vector<16x16xbf16>
    %cst_59 = arith.constant dense<0.000000e+00> : vector<16x64xf32>
    %180 = tpu.matmul %179, %165, %cst_59 {dimension_numbers = #tpu.dot_dimension_numbers<[1], [0], [0], [1], [0, 0, 1, 1], [], []>} : vector<16x16xbf16>, vector<16x64xbf16>, vector<16x64xf32> -> vector<16x64xf32>
    %c384 = arith.constant 384 : index
    %c0_60 = arith.constant 0 : index
    %181 = vector.load %arg6[%c384, %c0_60] : memref<512x512xf32, #tpu.memory_space<vmem>>, vector<64x512xf32>
    %cst_61 = arith.constant dense<0.000000e+00> : vector<16x512xf32>
    %182 = tpu.matmul %180, %181, %cst_61 {dimension_numbers = #tpu.dot_dimension_numbers<[1], [0], [0], [1], [0, 0, 1, 1], [], []>} : vector<16x64xf32>, vector<64x512xf32>, vector<16x512xf32> -> vector<16x512xf32>
    %183 = arith.addf %159, %182 : vector<16x512xf32>
    %184 = vector.extract_strided_slice %12 {offsets = [0, 448], sizes = [16, 64], strides = [1, 1]} : vector<16x512xf32> to vector<16x64xf32>
    %185 = arith.truncf %184 : vector<16x64xf32> to vector<16x64xbf16>
    %186 = vector.extract_strided_slice %13 {offsets = [0, 448], sizes = [16, 64], strides = [1, 1]} : vector<16x512xf32> to vector<16x64xf32>
    %187 = arith.truncf %186 : vector<16x64xf32> to vector<16x64xbf16>
    %188 = vector.extract_strided_slice %14 {offsets = [0, 448], sizes = [16, 64], strides = [1, 1]} : vector<16x512xf32> to vector<16x64xf32>
    %189 = arith.truncf %188 : vector<16x64xf32> to vector<16x64xbf16>
    %cst_62 = arith.constant dense<0.000000e+00> : vector<16x16xf32>
    %190 = tpu.matmul %185, %187, %cst_62 {dimension_numbers = #tpu.dot_dimension_numbers<[1], [1], [0], [0], [0, 0, 1, 0], [], []>} : vector<16x64xbf16>, vector<16x64xbf16>, vector<16x16xf32> -> vector<16x16xf32>
    %cst_63 = arith.constant 1.250000e-01 : f32
    %191 = vector.broadcast %cst_63 : f32 to vector<16x16xf32>
    %192 = arith.mulf %190, %191 : vector<16x16xf32>
    %cst_64 = arith.constant dense<0xFF800000> : vector<16xf32>
    %193 = vector.multi_reduction <maximumf>, %192, %cst_64 [1] : vector<16x16xf32> to vector<16xf32>
    %194 = vector.shape_cast %193 : vector<16xf32> to vector<16x1xf32>
    %195 = vector.broadcast %194 : vector<16x1xf32> to vector<16x16xf32>
    %196 = arith.subf %192, %195 : vector<16x16xf32>
    %197 = math.exp %196 : vector<16x16xf32>
    %cst_65 = arith.constant dense<0.000000e+00> : vector<16xf32>
    %198 = vector.multi_reduction <add>, %197, %cst_65 [1] : vector<16x16xf32> to vector<16xf32>
    %199 = vector.shape_cast %198 : vector<16xf32> to vector<16x1xf32>
    %200 = tpu.reciprocal %199 {approx = true} : vector<16x1xf32> -> vector<16x1xf32>
    %201 = vector.broadcast %200 : vector<16x1xf32> to vector<16x16xf32>
    %202 = arith.mulf %197, %201 : vector<16x16xf32>
    %203 = arith.truncf %202 : vector<16x16xf32> to vector<16x16xbf16>
    %cst_66 = arith.constant dense<0.000000e+00> : vector<16x64xf32>
    %204 = tpu.matmul %203, %189, %cst_66 {dimension_numbers = #tpu.dot_dimension_numbers<[1], [0], [0], [1], [0, 0, 1, 1], [], []>} : vector<16x16xbf16>, vector<16x64xbf16>, vector<16x64xf32> -> vector<16x64xf32>
    %c448 = arith.constant 448 : index
    %c0_67 = arith.constant 0 : index
    %205 = vector.load %arg6[%c448, %c0_67] : memref<512x512xf32, #tpu.memory_space<vmem>>, vector<64x512xf32>
    %cst_68 = arith.constant dense<0.000000e+00> : vector<16x512xf32>
    %206 = tpu.matmul %204, %205, %cst_68 {dimension_numbers = #tpu.dot_dimension_numbers<[1], [0], [0], [1], [0, 0, 1, 1], [], []>} : vector<16x64xf32>, vector<64x512xf32>, vector<16x512xf32> -> vector<16x512xf32>
    %207 = arith.addf %183, %206 : vector<16x512xf32>
    %c0_69 = arith.constant 0 : index
    %c0_70 = arith.constant 0 : index
    %208 = vector.load %arg7[%c0_69, %c0_70] : memref<1x512xf32, #tpu.memory_space<vmem>>, vector<1x512xf32>
    %209 = vector.broadcast %208 : vector<1x512xf32> to vector<16x512xf32>
    %210 = arith.addf %207, %209 : vector<16x512xf32>
    %c0_71 = arith.constant 0 : index
    %211 = memref.load %arg13[%c0_71] : memref<1xf32, #tpu.memory_space<smem>>
    %212 = vector.broadcast %211 : f32 to vector<16x512xf32>
    %213 = arith.mulf %212, %210 : vector<16x512xf32>
    %214 = arith.addf %6, %213 : vector<16x512xf32>
    %c0_72 = arith.constant 0 : index
    %c0_73 = arith.constant 0 : index
    %215 = vector.load %arg8[%c0_72, %c0_73] : memref<512x32xf32, #tpu.memory_space<vmem>>, vector<512x32xf32>
    %cst_74 = arith.constant dense<0.000000e+00> : vector<16x32xf32>
    %216 = tpu.matmul %214, %215, %cst_74 {dimension_numbers = #tpu.dot_dimension_numbers<[1], [0], [0], [1], [0, 0, 1, 1], [], []>} : vector<16x512xf32>, vector<512x32xf32>, vector<16x32xf32> -> vector<16x32xf32>
    %c0_75 = arith.constant 0 : index
    %c0_76 = arith.constant 0 : index
    %217 = vector.load %arg9[%c0_75, %c0_76] : memref<1x32xf32, #tpu.memory_space<vmem>>, vector<1x32xf32>
    %218 = vector.broadcast %217 : vector<1x32xf32> to vector<16x32xf32>
    %219 = arith.addf %216, %218 : vector<16x32xf32>
    %cst_77 = arith.constant 0.000000e+00 : f32
    %220 = vector.broadcast %cst_77 : f32 to vector<16x2xf32>
    %c0_78 = arith.constant 0 : index
    %c0_79 = arith.constant 0 : index
    %c0_80 = arith.constant 0 : index
    %221 = vector.load %arg10[%c0_78, %c0_79, %c0_80] : memref<25x32x2xf32, #tpu.memory_space<vmem>>, vector<1x32x2xf32>
    %222 = vector.shape_cast %221 : vector<1x32x2xf32> to vector<32x2xf32>
    %cst_81 = arith.constant dense<0.000000e+00> : vector<16x2xf32>
    %223 = tpu.matmul %219, %222, %cst_81 {dimension_numbers = #tpu.dot_dimension_numbers<[1], [0], [0], [1], [0, 0, 1, 1], [], []>} : vector<16x32xf32>, vector<32x2xf32>, vector<16x2xf32> -> vector<16x2xf32>
    %c0_82 = arith.constant 0 : index
    %c0_83 = arith.constant 0 : index
    %c0_84 = arith.constant 0 : index
    %224 = vector.load %arg12[%c0_82, %c0_83, %c0_84] : memref<25x16x16xf32, #tpu.memory_space<vmem>>, vector<1x16x16xf32>
    %225 = vector.shape_cast %224 : vector<1x16x16xf32> to vector<16x16xf32>
    %cst_85 = arith.constant dense<0.000000e+00> : vector<16x2xf32>
    %226 = tpu.matmul %225, %223, %cst_85 {dimension_numbers = #tpu.dot_dimension_numbers<[1], [0], [0], [1], [0, 0, 1, 1], [], []>} : vector<16x16xf32>, vector<16x2xf32>, vector<16x2xf32> -> vector<16x2xf32>
    %227 = arith.addf %220, %226 : vector<16x2xf32>
    %c1 = arith.constant 1 : index
    %c0_86 = arith.constant 0 : index
    %c0_87 = arith.constant 0 : index
    %228 = vector.load %arg10[%c1, %c0_86, %c0_87] : memref<25x32x2xf32, #tpu.memory_space<vmem>>, vector<1x32x2xf32>
    %229 = vector.shape_cast %228 : vector<1x32x2xf32> to vector<32x2xf32>
    %cst_88 = arith.constant dense<0.000000e+00> : vector<16x2xf32>
    %230 = tpu.matmul %219, %229, %cst_88 {dimension_numbers = #tpu.dot_dimension_numbers<[1], [0], [0], [1], [0, 0, 1, 1], [], []>} : vector<16x32xf32>, vector<32x2xf32>, vector<16x2xf32> -> vector<16x2xf32>
    %c1_89 = arith.constant 1 : index
    %c0_90 = arith.constant 0 : index
    %c0_91 = arith.constant 0 : index
    %231 = vector.load %arg12[%c1_89, %c0_90, %c0_91] : memref<25x16x16xf32, #tpu.memory_space<vmem>>, vector<1x16x16xf32>
    %232 = vector.shape_cast %231 : vector<1x16x16xf32> to vector<16x16xf32>
    %cst_92 = arith.constant dense<0.000000e+00> : vector<16x2xf32>
    %233 = tpu.matmul %232, %230, %cst_92 {dimension_numbers = #tpu.dot_dimension_numbers<[1], [0], [0], [1], [0, 0, 1, 1], [], []>} : vector<16x16xf32>, vector<16x2xf32>, vector<16x2xf32> -> vector<16x2xf32>
    %234 = arith.addf %227, %233 : vector<16x2xf32>
    %c2 = arith.constant 2 : index
    %c0_93 = arith.constant 0 : index
    %c0_94 = arith.constant 0 : index
    %235 = vector.load %arg10[%c2, %c0_93, %c0_94] : memref<25x32x2xf32, #tpu.memory_space<vmem>>, vector<1x32x2xf32>
    %236 = vector.shape_cast %235 : vector<1x32x2xf32> to vector<32x2xf32>
    %cst_95 = arith.constant dense<0.000000e+00> : vector<16x2xf32>
    %237 = tpu.matmul %219, %236, %cst_95 {dimension_numbers = #tpu.dot_dimension_numbers<[1], [0], [0], [1], [0, 0, 1, 1], [], []>} : vector<16x32xf32>, vector<32x2xf32>, vector<16x2xf32> -> vector<16x2xf32>
    %c2_96 = arith.constant 2 : index
    %c0_97 = arith.constant 0 : index
    %c0_98 = arith.constant 0 : index
    %238 = vector.load %arg12[%c2_96, %c0_97, %c0_98] : memref<25x16x16xf32, #tpu.memory_space<vmem>>, vector<1x16x16xf32>
    %239 = vector.shape_cast %238 : vector<1x16x16xf32> to vector<16x16xf32>
    %cst_99 = arith.constant dense<0.000000e+00> : vector<16x2xf32>
    %240 = tpu.matmul %239, %237, %cst_99 {dimension_numbers = #tpu.dot_dimension_numbers<[1], [0], [0], [1], [0, 0, 1, 1], [], []>} : vector<16x16xf32>, vector<16x2xf32>, vector<16x2xf32> -> vector<16x2xf32>
    %241 = arith.addf %234, %240 : vector<16x2xf32>
    %c3 = arith.constant 3 : index
    %c0_100 = arith.constant 0 : index
    %c0_101 = arith.constant 0 : index
    %242 = vector.load %arg10[%c3, %c0_100, %c0_101] : memref<25x32x2xf32, #tpu.memory_space<vmem>>, vector<1x32x2xf32>
    %243 = vector.shape_cast %242 : vector<1x32x2xf32> to vector<32x2xf32>
    %cst_102 = arith.constant dense<0.000000e+00> : vector<16x2xf32>
    %244 = tpu.matmul %219, %243, %cst_102 {dimension_numbers = #tpu.dot_dimension_numbers<[1], [0], [0], [1], [0, 0, 1, 1], [], []>} : vector<16x32xf32>, vector<32x2xf32>, vector<16x2xf32> -> vector<16x2xf32>
    %c3_103 = arith.constant 3 : index
    %c0_104 = arith.constant 0 : index
    %c0_105 = arith.constant 0 : index
    %245 = vector.load %arg12[%c3_103, %c0_104, %c0_105] : memref<25x16x16xf32, #tpu.memory_space<vmem>>, vector<1x16x16xf32>
    %246 = vector.shape_cast %245 : vector<1x16x16xf32> to vector<16x16xf32>
    %cst_106 = arith.constant dense<0.000000e+00> : vector<16x2xf32>
    %247 = tpu.matmul %246, %244, %cst_106 {dimension_numbers = #tpu.dot_dimension_numbers<[1], [0], [0], [1], [0, 0, 1, 1], [], []>} : vector<16x16xf32>, vector<16x2xf32>, vector<16x2xf32> -> vector<16x2xf32>
    %248 = arith.addf %241, %247 : vector<16x2xf32>
    %c4 = arith.constant 4 : index
    %c0_107 = arith.constant 0 : index
    %c0_108 = arith.constant 0 : index
    %249 = vector.load %arg10[%c4, %c0_107, %c0_108] : memref<25x32x2xf32, #tpu.memory_space<vmem>>, vector<1x32x2xf32>
    %250 = vector.shape_cast %249 : vector<1x32x2xf32> to vector<32x2xf32>
    %cst_109 = arith.constant dense<0.000000e+00> : vector<16x2xf32>
    %251 = tpu.matmul %219, %250, %cst_109 {dimension_numbers = #tpu.dot_dimension_numbers<[1], [0], [0], [1], [0, 0, 1, 1], [], []>} : vector<16x32xf32>, vector<32x2xf32>, vector<16x2xf32> -> vector<16x2xf32>
    %c4_110 = arith.constant 4 : index
    %c0_111 = arith.constant 0 : index
    %c0_112 = arith.constant 0 : index
    %252 = vector.load %arg12[%c4_110, %c0_111, %c0_112] : memref<25x16x16xf32, #tpu.memory_space<vmem>>, vector<1x16x16xf32>
    %253 = vector.shape_cast %252 : vector<1x16x16xf32> to vector<16x16xf32>
    %cst_113 = arith.constant dense<0.000000e+00> : vector<16x2xf32>
    %254 = tpu.matmul %253, %251, %cst_113 {dimension_numbers = #tpu.dot_dimension_numbers<[1], [0], [0], [1], [0, 0, 1, 1], [], []>} : vector<16x16xf32>, vector<16x2xf32>, vector<16x2xf32> -> vector<16x2xf32>
    %255 = arith.addf %248, %254 : vector<16x2xf32>
    %c5 = arith.constant 5 : index
    %c0_114 = arith.constant 0 : index
    %c0_115 = arith.constant 0 : index
    %256 = vector.load %arg10[%c5, %c0_114, %c0_115] : memref<25x32x2xf32, #tpu.memory_space<vmem>>, vector<1x32x2xf32>
    %257 = vector.shape_cast %256 : vector<1x32x2xf32> to vector<32x2xf32>
    %cst_116 = arith.constant dense<0.000000e+00> : vector<16x2xf32>
    %258 = tpu.matmul %219, %257, %cst_116 {dimension_numbers = #tpu.dot_dimension_numbers<[1], [0], [0], [1], [0, 0, 1, 1], [], []>} : vector<16x32xf32>, vector<32x2xf32>, vector<16x2xf32> -> vector<16x2xf32>
    %c5_117 = arith.constant 5 : index
    %c0_118 = arith.constant 0 : index
    %c0_119 = arith.constant 0 : index
    %259 = vector.load %arg12[%c5_117, %c0_118, %c0_119] : memref<25x16x16xf32, #tpu.memory_space<vmem>>, vector<1x16x16xf32>
    %260 = vector.shape_cast %259 : vector<1x16x16xf32> to vector<16x16xf32>
    %cst_120 = arith.constant dense<0.000000e+00> : vector<16x2xf32>
    %261 = tpu.matmul %260, %258, %cst_120 {dimension_numbers = #tpu.dot_dimension_numbers<[1], [0], [0], [1], [0, 0, 1, 1], [], []>} : vector<16x16xf32>, vector<16x2xf32>, vector<16x2xf32> -> vector<16x2xf32>
    %262 = arith.addf %255, %261 : vector<16x2xf32>
    %c6 = arith.constant 6 : index
    %c0_121 = arith.constant 0 : index
    %c0_122 = arith.constant 0 : index
    %263 = vector.load %arg10[%c6, %c0_121, %c0_122] : memref<25x32x2xf32, #tpu.memory_space<vmem>>, vector<1x32x2xf32>
    %264 = vector.shape_cast %263 : vector<1x32x2xf32> to vector<32x2xf32>
    %cst_123 = arith.constant dense<0.000000e+00> : vector<16x2xf32>
    %265 = tpu.matmul %219, %264, %cst_123 {dimension_numbers = #tpu.dot_dimension_numbers<[1], [0], [0], [1], [0, 0, 1, 1], [], []>} : vector<16x32xf32>, vector<32x2xf32>, vector<16x2xf32> -> vector<16x2xf32>
    %c6_124 = arith.constant 6 : index
    %c0_125 = arith.constant 0 : index
    %c0_126 = arith.constant 0 : index
    %266 = vector.load %arg12[%c6_124, %c0_125, %c0_126] : memref<25x16x16xf32, #tpu.memory_space<vmem>>, vector<1x16x16xf32>
    %267 = vector.shape_cast %266 : vector<1x16x16xf32> to vector<16x16xf32>
    %cst_127 = arith.constant dense<0.000000e+00> : vector<16x2xf32>
    %268 = tpu.matmul %267, %265, %cst_127 {dimension_numbers = #tpu.dot_dimension_numbers<[1], [0], [0], [1], [0, 0, 1, 1], [], []>} : vector<16x16xf32>, vector<16x2xf32>, vector<16x2xf32> -> vector<16x2xf32>
    %269 = arith.addf %262, %268 : vector<16x2xf32>
    %c7 = arith.constant 7 : index
    %c0_128 = arith.constant 0 : index
    %c0_129 = arith.constant 0 : index
    %270 = vector.load %arg10[%c7, %c0_128, %c0_129] : memref<25x32x2xf32, #tpu.memory_space<vmem>>, vector<1x32x2xf32>
    %271 = vector.shape_cast %270 : vector<1x32x2xf32> to vector<32x2xf32>
    %cst_130 = arith.constant dense<0.000000e+00> : vector<16x2xf32>
    %272 = tpu.matmul %219, %271, %cst_130 {dimension_numbers = #tpu.dot_dimension_numbers<[1], [0], [0], [1], [0, 0, 1, 1], [], []>} : vector<16x32xf32>, vector<32x2xf32>, vector<16x2xf32> -> vector<16x2xf32>
    %c7_131 = arith.constant 7 : index
    %c0_132 = arith.constant 0 : index
    %c0_133 = arith.constant 0 : index
    %273 = vector.load %arg12[%c7_131, %c0_132, %c0_133] : memref<25x16x16xf32, #tpu.memory_space<vmem>>, vector<1x16x16xf32>
    %274 = vector.shape_cast %273 : vector<1x16x16xf32> to vector<16x16xf32>
    %cst_134 = arith.constant dense<0.000000e+00> : vector<16x2xf32>
    %275 = tpu.matmul %274, %272, %cst_134 {dimension_numbers = #tpu.dot_dimension_numbers<[1], [0], [0], [1], [0, 0, 1, 1], [], []>} : vector<16x16xf32>, vector<16x2xf32>, vector<16x2xf32> -> vector<16x2xf32>
    %276 = arith.addf %269, %275 : vector<16x2xf32>
    %c8 = arith.constant 8 : index
    %c0_135 = arith.constant 0 : index
    %c0_136 = arith.constant 0 : index
    %277 = vector.load %arg10[%c8, %c0_135, %c0_136] : memref<25x32x2xf32, #tpu.memory_space<vmem>>, vector<1x32x2xf32>
    %278 = vector.shape_cast %277 : vector<1x32x2xf32> to vector<32x2xf32>
    %cst_137 = arith.constant dense<0.000000e+00> : vector<16x2xf32>
    %279 = tpu.matmul %219, %278, %cst_137 {dimension_numbers = #tpu.dot_dimension_numbers<[1], [0], [0], [1], [0, 0, 1, 1], [], []>} : vector<16x32xf32>, vector<32x2xf32>, vector<16x2xf32> -> vector<16x2xf32>
    %c8_138 = arith.constant 8 : index
    %c0_139 = arith.constant 0 : index
    %c0_140 = arith.constant 0 : index
    %280 = vector.load %arg12[%c8_138, %c0_139, %c0_140] : memref<25x16x16xf32, #tpu.memory_space<vmem>>, vector<1x16x16xf32>
    %281 = vector.shape_cast %280 : vector<1x16x16xf32> to vector<16x16xf32>
    %cst_141 = arith.constant dense<0.000000e+00> : vector<16x2xf32>
    %282 = tpu.matmul %281, %279, %cst_141 {dimension_numbers = #tpu.dot_dimension_numbers<[1], [0], [0], [1], [0, 0, 1, 1], [], []>} : vector<16x16xf32>, vector<16x2xf32>, vector<16x2xf32> -> vector<16x2xf32>
    %283 = arith.addf %276, %282 : vector<16x2xf32>
    %c9 = arith.constant 9 : index
    %c0_142 = arith.constant 0 : index
    %c0_143 = arith.constant 0 : index
    %284 = vector.load %arg10[%c9, %c0_142, %c0_143] : memref<25x32x2xf32, #tpu.memory_space<vmem>>, vector<1x32x2xf32>
    %285 = vector.shape_cast %284 : vector<1x32x2xf32> to vector<32x2xf32>
    %cst_144 = arith.constant dense<0.000000e+00> : vector<16x2xf32>
    %286 = tpu.matmul %219, %285, %cst_144 {dimension_numbers = #tpu.dot_dimension_numbers<[1], [0], [0], [1], [0, 0, 1, 1], [], []>} : vector<16x32xf32>, vector<32x2xf32>, vector<16x2xf32> -> vector<16x2xf32>
    %c9_145 = arith.constant 9 : index
    %c0_146 = arith.constant 0 : index
    %c0_147 = arith.constant 0 : index
    %287 = vector.load %arg12[%c9_145, %c0_146, %c0_147] : memref<25x16x16xf32, #tpu.memory_space<vmem>>, vector<1x16x16xf32>
    %288 = vector.shape_cast %287 : vector<1x16x16xf32> to vector<16x16xf32>
    %cst_148 = arith.constant dense<0.000000e+00> : vector<16x2xf32>
    %289 = tpu.matmul %288, %286, %cst_148 {dimension_numbers = #tpu.dot_dimension_numbers<[1], [0], [0], [1], [0, 0, 1, 1], [], []>} : vector<16x16xf32>, vector<16x2xf32>, vector<16x2xf32> -> vector<16x2xf32>
    %290 = arith.addf %283, %289 : vector<16x2xf32>
    %c10 = arith.constant 10 : index
    %c0_149 = arith.constant 0 : index
    %c0_150 = arith.constant 0 : index
    %291 = vector.load %arg10[%c10, %c0_149, %c0_150] : memref<25x32x2xf32, #tpu.memory_space<vmem>>, vector<1x32x2xf32>
    %292 = vector.shape_cast %291 : vector<1x32x2xf32> to vector<32x2xf32>
    %cst_151 = arith.constant dense<0.000000e+00> : vector<16x2xf32>
    %293 = tpu.matmul %219, %292, %cst_151 {dimension_numbers = #tpu.dot_dimension_numbers<[1], [0], [0], [1], [0, 0, 1, 1], [], []>} : vector<16x32xf32>, vector<32x2xf32>, vector<16x2xf32> -> vector<16x2xf32>
    %c10_152 = arith.constant 10 : index
    %c0_153 = arith.constant 0 : index
    %c0_154 = arith.constant 0 : index
    %294 = vector.load %arg12[%c10_152, %c0_153, %c0_154] : memref<25x16x16xf32, #tpu.memory_space<vmem>>, vector<1x16x16xf32>
    %295 = vector.shape_cast %294 : vector<1x16x16xf32> to vector<16x16xf32>
    %cst_155 = arith.constant dense<0.000000e+00> : vector<16x2xf32>
    %296 = tpu.matmul %295, %293, %cst_155 {dimension_numbers = #tpu.dot_dimension_numbers<[1], [0], [0], [1], [0, 0, 1, 1], [], []>} : vector<16x16xf32>, vector<16x2xf32>, vector<16x2xf32> -> vector<16x2xf32>
    %297 = arith.addf %290, %296 : vector<16x2xf32>
    %c11 = arith.constant 11 : index
    %c0_156 = arith.constant 0 : index
    %c0_157 = arith.constant 0 : index
    %298 = vector.load %arg10[%c11, %c0_156, %c0_157] : memref<25x32x2xf32, #tpu.memory_space<vmem>>, vector<1x32x2xf32>
    %299 = vector.shape_cast %298 : vector<1x32x2xf32> to vector<32x2xf32>
    %cst_158 = arith.constant dense<0.000000e+00> : vector<16x2xf32>
    %300 = tpu.matmul %219, %299, %cst_158 {dimension_numbers = #tpu.dot_dimension_numbers<[1], [0], [0], [1], [0, 0, 1, 1], [], []>} : vector<16x32xf32>, vector<32x2xf32>, vector<16x2xf32> -> vector<16x2xf32>
    %c11_159 = arith.constant 11 : index
    %c0_160 = arith.constant 0 : index
    %c0_161 = arith.constant 0 : index
    %301 = vector.load %arg12[%c11_159, %c0_160, %c0_161] : memref<25x16x16xf32, #tpu.memory_space<vmem>>, vector<1x16x16xf32>
    %302 = vector.shape_cast %301 : vector<1x16x16xf32> to vector<16x16xf32>
    %cst_162 = arith.constant dense<0.000000e+00> : vector<16x2xf32>
    %303 = tpu.matmul %302, %300, %cst_162 {dimension_numbers = #tpu.dot_dimension_numbers<[1], [0], [0], [1], [0, 0, 1, 1], [], []>} : vector<16x16xf32>, vector<16x2xf32>, vector<16x2xf32> -> vector<16x2xf32>
    %304 = arith.addf %297, %303 : vector<16x2xf32>
    %c12 = arith.constant 12 : index
    %c0_163 = arith.constant 0 : index
    %c0_164 = arith.constant 0 : index
    %305 = vector.load %arg10[%c12, %c0_163, %c0_164] : memref<25x32x2xf32, #tpu.memory_space<vmem>>, vector<1x32x2xf32>
    %306 = vector.shape_cast %305 : vector<1x32x2xf32> to vector<32x2xf32>
    %cst_165 = arith.constant dense<0.000000e+00> : vector<16x2xf32>
    %307 = tpu.matmul %219, %306, %cst_165 {dimension_numbers = #tpu.dot_dimension_numbers<[1], [0], [0], [1], [0, 0, 1, 1], [], []>} : vector<16x32xf32>, vector<32x2xf32>, vector<16x2xf32> -> vector<16x2xf32>
    %c12_166 = arith.constant 12 : index
    %c0_167 = arith.constant 0 : index
    %c0_168 = arith.constant 0 : index
    %308 = vector.load %arg12[%c12_166, %c0_167, %c0_168] : memref<25x16x16xf32, #tpu.memory_space<vmem>>, vector<1x16x16xf32>
    %309 = vector.shape_cast %308 : vector<1x16x16xf32> to vector<16x16xf32>
    %cst_169 = arith.constant dense<0.000000e+00> : vector<16x2xf32>
    %310 = tpu.matmul %309, %307, %cst_169 {dimension_numbers = #tpu.dot_dimension_numbers<[1], [0], [0], [1], [0, 0, 1, 1], [], []>} : vector<16x16xf32>, vector<16x2xf32>, vector<16x2xf32> -> vector<16x2xf32>
    %311 = arith.addf %304, %310 : vector<16x2xf32>
    %c13 = arith.constant 13 : index
    %c0_170 = arith.constant 0 : index
    %c0_171 = arith.constant 0 : index
    %312 = vector.load %arg10[%c13, %c0_170, %c0_171] : memref<25x32x2xf32, #tpu.memory_space<vmem>>, vector<1x32x2xf32>
    %313 = vector.shape_cast %312 : vector<1x32x2xf32> to vector<32x2xf32>
    %cst_172 = arith.constant dense<0.000000e+00> : vector<16x2xf32>
    %314 = tpu.matmul %219, %313, %cst_172 {dimension_numbers = #tpu.dot_dimension_numbers<[1], [0], [0], [1], [0, 0, 1, 1], [], []>} : vector<16x32xf32>, vector<32x2xf32>, vector<16x2xf32> -> vector<16x2xf32>
    %c13_173 = arith.constant 13 : index
    %c0_174 = arith.constant 0 : index
    %c0_175 = arith.constant 0 : index
    %315 = vector.load %arg12[%c13_173, %c0_174, %c0_175] : memref<25x16x16xf32, #tpu.memory_space<vmem>>, vector<1x16x16xf32>
    %316 = vector.shape_cast %315 : vector<1x16x16xf32> to vector<16x16xf32>
    %cst_176 = arith.constant dense<0.000000e+00> : vector<16x2xf32>
    %317 = tpu.matmul %316, %314, %cst_176 {dimension_numbers = #tpu.dot_dimension_numbers<[1], [0], [0], [1], [0, 0, 1, 1], [], []>} : vector<16x16xf32>, vector<16x2xf32>, vector<16x2xf32> -> vector<16x2xf32>
    %318 = arith.addf %311, %317 : vector<16x2xf32>
    %c14 = arith.constant 14 : index
    %c0_177 = arith.constant 0 : index
    %c0_178 = arith.constant 0 : index
    %319 = vector.load %arg10[%c14, %c0_177, %c0_178] : memref<25x32x2xf32, #tpu.memory_space<vmem>>, vector<1x32x2xf32>
    %320 = vector.shape_cast %319 : vector<1x32x2xf32> to vector<32x2xf32>
    %cst_179 = arith.constant dense<0.000000e+00> : vector<16x2xf32>
    %321 = tpu.matmul %219, %320, %cst_179 {dimension_numbers = #tpu.dot_dimension_numbers<[1], [0], [0], [1], [0, 0, 1, 1], [], []>} : vector<16x32xf32>, vector<32x2xf32>, vector<16x2xf32> -> vector<16x2xf32>
    %c14_180 = arith.constant 14 : index
    %c0_181 = arith.constant 0 : index
    %c0_182 = arith.constant 0 : index
    %322 = vector.load %arg12[%c14_180, %c0_181, %c0_182] : memref<25x16x16xf32, #tpu.memory_space<vmem>>, vector<1x16x16xf32>
    %323 = vector.shape_cast %322 : vector<1x16x16xf32> to vector<16x16xf32>
    %cst_183 = arith.constant dense<0.000000e+00> : vector<16x2xf32>
    %324 = tpu.matmul %323, %321, %cst_183 {dimension_numbers = #tpu.dot_dimension_numbers<[1], [0], [0], [1], [0, 0, 1, 1], [], []>} : vector<16x16xf32>, vector<16x2xf32>, vector<16x2xf32> -> vector<16x2xf32>
    %325 = arith.addf %318, %324 : vector<16x2xf32>
    %c15 = arith.constant 15 : index
    %c0_184 = arith.constant 0 : index
    %c0_185 = arith.constant 0 : index
    %326 = vector.load %arg10[%c15, %c0_184, %c0_185] : memref<25x32x2xf32, #tpu.memory_space<vmem>>, vector<1x32x2xf32>
    %327 = vector.shape_cast %326 : vector<1x32x2xf32> to vector<32x2xf32>
    %cst_186 = arith.constant dense<0.000000e+00> : vector<16x2xf32>
    %328 = tpu.matmul %219, %327, %cst_186 {dimension_numbers = #tpu.dot_dimension_numbers<[1], [0], [0], [1], [0, 0, 1, 1], [], []>} : vector<16x32xf32>, vector<32x2xf32>, vector<16x2xf32> -> vector<16x2xf32>
    %c15_187 = arith.constant 15 : index
    %c0_188 = arith.constant 0 : index
    %c0_189 = arith.constant 0 : index
    %329 = vector.load %arg12[%c15_187, %c0_188, %c0_189] : memref<25x16x16xf32, #tpu.memory_space<vmem>>, vector<1x16x16xf32>
    %330 = vector.shape_cast %329 : vector<1x16x16xf32> to vector<16x16xf32>
    %cst_190 = arith.constant dense<0.000000e+00> : vector<16x2xf32>
    %331 = tpu.matmul %330, %328, %cst_190 {dimension_numbers = #tpu.dot_dimension_numbers<[1], [0], [0], [1], [0, 0, 1, 1], [], []>} : vector<16x16xf32>, vector<16x2xf32>, vector<16x2xf32> -> vector<16x2xf32>
    %332 = arith.addf %325, %331 : vector<16x2xf32>
    %c16 = arith.constant 16 : index
    %c0_191 = arith.constant 0 : index
    %c0_192 = arith.constant 0 : index
    %333 = vector.load %arg10[%c16, %c0_191, %c0_192] : memref<25x32x2xf32, #tpu.memory_space<vmem>>, vector<1x32x2xf32>
    %334 = vector.shape_cast %333 : vector<1x32x2xf32> to vector<32x2xf32>
    %cst_193 = arith.constant dense<0.000000e+00> : vector<16x2xf32>
    %335 = tpu.matmul %219, %334, %cst_193 {dimension_numbers = #tpu.dot_dimension_numbers<[1], [0], [0], [1], [0, 0, 1, 1], [], []>} : vector<16x32xf32>, vector<32x2xf32>, vector<16x2xf32> -> vector<16x2xf32>
    %c16_194 = arith.constant 16 : index
    %c0_195 = arith.constant 0 : index
    %c0_196 = arith.constant 0 : index
    %336 = vector.load %arg12[%c16_194, %c0_195, %c0_196] : memref<25x16x16xf32, #tpu.memory_space<vmem>>, vector<1x16x16xf32>
    %337 = vector.shape_cast %336 : vector<1x16x16xf32> to vector<16x16xf32>
    %cst_197 = arith.constant dense<0.000000e+00> : vector<16x2xf32>
    %338 = tpu.matmul %337, %335, %cst_197 {dimension_numbers = #tpu.dot_dimension_numbers<[1], [0], [0], [1], [0, 0, 1, 1], [], []>} : vector<16x16xf32>, vector<16x2xf32>, vector<16x2xf32> -> vector<16x2xf32>
    %339 = arith.addf %332, %338 : vector<16x2xf32>
    %c17 = arith.constant 17 : index
    %c0_198 = arith.constant 0 : index
    %c0_199 = arith.constant 0 : index
    %340 = vector.load %arg10[%c17, %c0_198, %c0_199] : memref<25x32x2xf32, #tpu.memory_space<vmem>>, vector<1x32x2xf32>
    %341 = vector.shape_cast %340 : vector<1x32x2xf32> to vector<32x2xf32>
    %cst_200 = arith.constant dense<0.000000e+00> : vector<16x2xf32>
    %342 = tpu.matmul %219, %341, %cst_200 {dimension_numbers = #tpu.dot_dimension_numbers<[1], [0], [0], [1], [0, 0, 1, 1], [], []>} : vector<16x32xf32>, vector<32x2xf32>, vector<16x2xf32> -> vector<16x2xf32>
    %c17_201 = arith.constant 17 : index
    %c0_202 = arith.constant 0 : index
    %c0_203 = arith.constant 0 : index
    %343 = vector.load %arg12[%c17_201, %c0_202, %c0_203] : memref<25x16x16xf32, #tpu.memory_space<vmem>>, vector<1x16x16xf32>
    %344 = vector.shape_cast %343 : vector<1x16x16xf32> to vector<16x16xf32>
    %cst_204 = arith.constant dense<0.000000e+00> : vector<16x2xf32>
    %345 = tpu.matmul %344, %342, %cst_204 {dimension_numbers = #tpu.dot_dimension_numbers<[1], [0], [0], [1], [0, 0, 1, 1], [], []>} : vector<16x16xf32>, vector<16x2xf32>, vector<16x2xf32> -> vector<16x2xf32>
    %346 = arith.addf %339, %345 : vector<16x2xf32>
    %c18 = arith.constant 18 : index
    %c0_205 = arith.constant 0 : index
    %c0_206 = arith.constant 0 : index
    %347 = vector.load %arg10[%c18, %c0_205, %c0_206] : memref<25x32x2xf32, #tpu.memory_space<vmem>>, vector<1x32x2xf32>
    %348 = vector.shape_cast %347 : vector<1x32x2xf32> to vector<32x2xf32>
    %cst_207 = arith.constant dense<0.000000e+00> : vector<16x2xf32>
    %349 = tpu.matmul %219, %348, %cst_207 {dimension_numbers = #tpu.dot_dimension_numbers<[1], [0], [0], [1], [0, 0, 1, 1], [], []>} : vector<16x32xf32>, vector<32x2xf32>, vector<16x2xf32> -> vector<16x2xf32>
    %c18_208 = arith.constant 18 : index
    %c0_209 = arith.constant 0 : index
    %c0_210 = arith.constant 0 : index
    %350 = vector.load %arg12[%c18_208, %c0_209, %c0_210] : memref<25x16x16xf32, #tpu.memory_space<vmem>>, vector<1x16x16xf32>
    %351 = vector.shape_cast %350 : vector<1x16x16xf32> to vector<16x16xf32>
    %cst_211 = arith.constant dense<0.000000e+00> : vector<16x2xf32>
    %352 = tpu.matmul %351, %349, %cst_211 {dimension_numbers = #tpu.dot_dimension_numbers<[1], [0], [0], [1], [0, 0, 1, 1], [], []>} : vector<16x16xf32>, vector<16x2xf32>, vector<16x2xf32> -> vector<16x2xf32>
    %353 = arith.addf %346, %352 : vector<16x2xf32>
    %c19 = arith.constant 19 : index
    %c0_212 = arith.constant 0 : index
    %c0_213 = arith.constant 0 : index
    %354 = vector.load %arg10[%c19, %c0_212, %c0_213] : memref<25x32x2xf32, #tpu.memory_space<vmem>>, vector<1x32x2xf32>
    %355 = vector.shape_cast %354 : vector<1x32x2xf32> to vector<32x2xf32>
    %cst_214 = arith.constant dense<0.000000e+00> : vector<16x2xf32>
    %356 = tpu.matmul %219, %355, %cst_214 {dimension_numbers = #tpu.dot_dimension_numbers<[1], [0], [0], [1], [0, 0, 1, 1], [], []>} : vector<16x32xf32>, vector<32x2xf32>, vector<16x2xf32> -> vector<16x2xf32>
    %c19_215 = arith.constant 19 : index
    %c0_216 = arith.constant 0 : index
    %c0_217 = arith.constant 0 : index
    %357 = vector.load %arg12[%c19_215, %c0_216, %c0_217] : memref<25x16x16xf32, #tpu.memory_space<vmem>>, vector<1x16x16xf32>
    %358 = vector.shape_cast %357 : vector<1x16x16xf32> to vector<16x16xf32>
    %cst_218 = arith.constant dense<0.000000e+00> : vector<16x2xf32>
    %359 = tpu.matmul %358, %356, %cst_218 {dimension_numbers = #tpu.dot_dimension_numbers<[1], [0], [0], [1], [0, 0, 1, 1], [], []>} : vector<16x16xf32>, vector<16x2xf32>, vector<16x2xf32> -> vector<16x2xf32>
    %360 = arith.addf %353, %359 : vector<16x2xf32>
    %c20 = arith.constant 20 : index
    %c0_219 = arith.constant 0 : index
    %c0_220 = arith.constant 0 : index
    %361 = vector.load %arg10[%c20, %c0_219, %c0_220] : memref<25x32x2xf32, #tpu.memory_space<vmem>>, vector<1x32x2xf32>
    %362 = vector.shape_cast %361 : vector<1x32x2xf32> to vector<32x2xf32>
    %cst_221 = arith.constant dense<0.000000e+00> : vector<16x2xf32>
    %363 = tpu.matmul %219, %362, %cst_221 {dimension_numbers = #tpu.dot_dimension_numbers<[1], [0], [0], [1], [0, 0, 1, 1], [], []>} : vector<16x32xf32>, vector<32x2xf32>, vector<16x2xf32> -> vector<16x2xf32>
    %c20_222 = arith.constant 20 : index
    %c0_223 = arith.constant 0 : index
    %c0_224 = arith.constant 0 : index
    %364 = vector.load %arg12[%c20_222, %c0_223, %c0_224] : memref<25x16x16xf32, #tpu.memory_space<vmem>>, vector<1x16x16xf32>
    %365 = vector.shape_cast %364 : vector<1x16x16xf32> to vector<16x16xf32>
    %cst_225 = arith.constant dense<0.000000e+00> : vector<16x2xf32>
    %366 = tpu.matmul %365, %363, %cst_225 {dimension_numbers = #tpu.dot_dimension_numbers<[1], [0], [0], [1], [0, 0, 1, 1], [], []>} : vector<16x16xf32>, vector<16x2xf32>, vector<16x2xf32> -> vector<16x2xf32>
    %367 = arith.addf %360, %366 : vector<16x2xf32>
    %c21 = arith.constant 21 : index
    %c0_226 = arith.constant 0 : index
    %c0_227 = arith.constant 0 : index
    %368 = vector.load %arg10[%c21, %c0_226, %c0_227] : memref<25x32x2xf32, #tpu.memory_space<vmem>>, vector<1x32x2xf32>
    %369 = vector.shape_cast %368 : vector<1x32x2xf32> to vector<32x2xf32>
    %cst_228 = arith.constant dense<0.000000e+00> : vector<16x2xf32>
    %370 = tpu.matmul %219, %369, %cst_228 {dimension_numbers = #tpu.dot_dimension_numbers<[1], [0], [0], [1], [0, 0, 1, 1], [], []>} : vector<16x32xf32>, vector<32x2xf32>, vector<16x2xf32> -> vector<16x2xf32>
    %c21_229 = arith.constant 21 : index
    %c0_230 = arith.constant 0 : index
    %c0_231 = arith.constant 0 : index
    %371 = vector.load %arg12[%c21_229, %c0_230, %c0_231] : memref<25x16x16xf32, #tpu.memory_space<vmem>>, vector<1x16x16xf32>
    %372 = vector.shape_cast %371 : vector<1x16x16xf32> to vector<16x16xf32>
    %cst_232 = arith.constant dense<0.000000e+00> : vector<16x2xf32>
    %373 = tpu.matmul %372, %370, %cst_232 {dimension_numbers = #tpu.dot_dimension_numbers<[1], [0], [0], [1], [0, 0, 1, 1], [], []>} : vector<16x16xf32>, vector<16x2xf32>, vector<16x2xf32> -> vector<16x2xf32>
    %374 = arith.addf %367, %373 : vector<16x2xf32>
    %c22 = arith.constant 22 : index
    %c0_233 = arith.constant 0 : index
    %c0_234 = arith.constant 0 : index
    %375 = vector.load %arg10[%c22, %c0_233, %c0_234] : memref<25x32x2xf32, #tpu.memory_space<vmem>>, vector<1x32x2xf32>
    %376 = vector.shape_cast %375 : vector<1x32x2xf32> to vector<32x2xf32>
    %cst_235 = arith.constant dense<0.000000e+00> : vector<16x2xf32>
    %377 = tpu.matmul %219, %376, %cst_235 {dimension_numbers = #tpu.dot_dimension_numbers<[1], [0], [0], [1], [0, 0, 1, 1], [], []>} : vector<16x32xf32>, vector<32x2xf32>, vector<16x2xf32> -> vector<16x2xf32>
    %c22_236 = arith.constant 22 : index
    %c0_237 = arith.constant 0 : index
    %c0_238 = arith.constant 0 : index
    %378 = vector.load %arg12[%c22_236, %c0_237, %c0_238] : memref<25x16x16xf32, #tpu.memory_space<vmem>>, vector<1x16x16xf32>
    %379 = vector.shape_cast %378 : vector<1x16x16xf32> to vector<16x16xf32>
    %cst_239 = arith.constant dense<0.000000e+00> : vector<16x2xf32>
    %380 = tpu.matmul %379, %377, %cst_239 {dimension_numbers = #tpu.dot_dimension_numbers<[1], [0], [0], [1], [0, 0, 1, 1], [], []>} : vector<16x16xf32>, vector<16x2xf32>, vector<16x2xf32> -> vector<16x2xf32>
    %381 = arith.addf %374, %380 : vector<16x2xf32>
    %c23 = arith.constant 23 : index
    %c0_240 = arith.constant 0 : index
    %c0_241 = arith.constant 0 : index
    %382 = vector.load %arg10[%c23, %c0_240, %c0_241] : memref<25x32x2xf32, #tpu.memory_space<vmem>>, vector<1x32x2xf32>
    %383 = vector.shape_cast %382 : vector<1x32x2xf32> to vector<32x2xf32>
    %cst_242 = arith.constant dense<0.000000e+00> : vector<16x2xf32>
    %384 = tpu.matmul %219, %383, %cst_242 {dimension_numbers = #tpu.dot_dimension_numbers<[1], [0], [0], [1], [0, 0, 1, 1], [], []>} : vector<16x32xf32>, vector<32x2xf32>, vector<16x2xf32> -> vector<16x2xf32>
    %c23_243 = arith.constant 23 : index
    %c0_244 = arith.constant 0 : index
    %c0_245 = arith.constant 0 : index
    %385 = vector.load %arg12[%c23_243, %c0_244, %c0_245] : memref<25x16x16xf32, #tpu.memory_space<vmem>>, vector<1x16x16xf32>
    %386 = vector.shape_cast %385 : vector<1x16x16xf32> to vector<16x16xf32>
    %cst_246 = arith.constant dense<0.000000e+00> : vector<16x2xf32>
    %387 = tpu.matmul %386, %384, %cst_246 {dimension_numbers = #tpu.dot_dimension_numbers<[1], [0], [0], [1], [0, 0, 1, 1], [], []>} : vector<16x16xf32>, vector<16x2xf32>, vector<16x2xf32> -> vector<16x2xf32>
    %388 = arith.addf %381, %387 : vector<16x2xf32>
    %c24 = arith.constant 24 : index
    %c0_247 = arith.constant 0 : index
    %c0_248 = arith.constant 0 : index
    %389 = vector.load %arg10[%c24, %c0_247, %c0_248] : memref<25x32x2xf32, #tpu.memory_space<vmem>>, vector<1x32x2xf32>
    %390 = vector.shape_cast %389 : vector<1x32x2xf32> to vector<32x2xf32>
    %cst_249 = arith.constant dense<0.000000e+00> : vector<16x2xf32>
    %391 = tpu.matmul %219, %390, %cst_249 {dimension_numbers = #tpu.dot_dimension_numbers<[1], [0], [0], [1], [0, 0, 1, 1], [], []>} : vector<16x32xf32>, vector<32x2xf32>, vector<16x2xf32> -> vector<16x2xf32>
    %c24_250 = arith.constant 24 : index
    %c0_251 = arith.constant 0 : index
    %c0_252 = arith.constant 0 : index
    %392 = vector.load %arg12[%c24_250, %c0_251, %c0_252] : memref<25x16x16xf32, #tpu.memory_space<vmem>>, vector<1x16x16xf32>
    %393 = vector.shape_cast %392 : vector<1x16x16xf32> to vector<16x16xf32>
    %cst_253 = arith.constant dense<0.000000e+00> : vector<16x2xf32>
    %394 = tpu.matmul %393, %391, %cst_253 {dimension_numbers = #tpu.dot_dimension_numbers<[1], [0], [0], [1], [0, 0, 1, 1], [], []>} : vector<16x16xf32>, vector<16x2xf32>, vector<16x2xf32> -> vector<16x2xf32>
    %395 = arith.addf %388, %394 : vector<16x2xf32>
    %c0_254 = arith.constant 0 : index
    %c0_255 = arith.constant 0 : index
    %396 = vector.load %arg11[%c0_254, %c0_255] : memref<1x2xf32, #tpu.memory_space<vmem>>, vector<1x2xf32>
    %397 = vector.broadcast %396 : vector<1x2xf32> to vector<16x2xf32>
    %398 = arith.addf %395, %397 : vector<16x2xf32>
    %cst_256 = arith.constant 0.000000e+00 : f32
    %399 = vector.broadcast %cst_256 : f32 to vector<16x2xf32>
    %400 = arith.maximumf %398, %399 : vector<16x2xf32>
    %401 = math.absf %398 : vector<16x2xf32>
    %cst_257 = arith.constant 0.000000e+00 : f32
    %402 = vector.broadcast %cst_257 : f32 to vector<16x2xf32>
    %403 = arith.subf %402, %401 : vector<16x2xf32>
    %404 = math.exp %403 : vector<16x2xf32>
    %405 = math.log1p %404 : vector<16x2xf32>
    %406 = arith.addf %400, %405 : vector<16x2xf32>
    %c0_258 = arith.constant 0 : index
    %c0_259 = arith.constant 0 : index
    %c0_260 = arith.constant 0 : index
    %407 = vector.load %arg14[%c0_258, %c0_259, %c0_260] : memref<1x16x2xf32, #tpu.memory_space<vmem>>, vector<1x16x2xf32>
    %408 = vector.shape_cast %407 : vector<1x16x2xf32> to vector<16x2xf32>
    %409 = vector.shape_cast %406 : vector<16x2xf32> to vector<1x16x2xf32>
    tpu.vector_store %arg14[%c0_258, %c0_259, %c0_260], %409 {strides = array<i32>} : memref<1x16x2xf32, #tpu.memory_space<vmem>>, vector<1x16x2xf32>,
    return
  }
  func.func @transform_0(%arg0: i32) -> (i32, i32, i32) {
    %c0_i32 = arith.constant 0 : i32
    %c0_i32_0 = arith.constant 0 : i32
    %c0_i32_1 = arith.constant 0 : i32
    return %arg0, %c0_i32, %c0_i32_0 : i32, i32, i32
  }
  func.func @transform_1(%arg0: i32) -> (i32, i32) {
    %c0_i32 = arith.constant 0 : i32
    %c0_i32_0 = arith.constant 0 : i32
    %c0_i32_1 = arith.constant 0 : i32
    return %c0_i32, %c0_i32_0 : i32, i32
  }
  func.func @transform_2(%arg0: i32) -> (i32, i32) {
    %c0_i32 = arith.constant 0 : i32
    %c0_i32_0 = arith.constant 0 : i32
    %c0_i32_1 = arith.constant 0 : i32
    return %c0_i32, %c0_i32_0 : i32, i32
  }
  func.func @transform_3(%arg0: i32) -> (i32, i32) {
    %c0_i32 = arith.constant 0 : i32
    %c0_i32_0 = arith.constant 0 : i32
    %c0_i32_1 = arith.constant 0 : i32
    return %c0_i32, %c0_i32_0 : i32, i32
  }
  func.func @transform_4(%arg0: i32) -> (i32, i32) {
    %c0_i32 = arith.constant 0 : i32
    %c0_i32_0 = arith.constant 0 : i32
    %c0_i32_1 = arith.constant 0 : i32
    return %c0_i32, %c0_i32_0 : i32, i32
  }
  func.func @transform_5(%arg0: i32) -> (i32, i32) {
    %c0_i32 = arith.constant 0 : i32
    %c0_i32_0 = arith.constant 0 : i32
    %c0_i32_1 = arith.constant 0 : i32
    return %c0_i32, %c0_i32_0 : i32, i32
  }
  func.func @transform_6(%arg0: i32) -> (i32, i32) {
    %c0_i32 = arith.constant 0 : i32
    %c0_i32_0 = arith.constant 0 : i32
    %c0_i32_1 = arith.constant 0 : i32
    return %c0_i32, %c0_i32_0 : i32, i32
  }
  func.func @transform_7(%arg0: i32) -> (i32, i32) {
    %c0_i32 = arith.constant 0 : i32
    %c0_i32_0 = arith.constant 0 : i32
    %c0_i32_1 = arith.constant 0 : i32
    return %c0_i32, %c0_i32_0 : i32, i32
  }
  func.func @transform_8(%arg0: i32) -> (i32, i32) {
    %c0_i32 = arith.constant 0 : i32
    %c0_i32_0 = arith.constant 0 : i32
    %c0_i32_1 = arith.constant 0 : i32
    return %c0_i32, %c0_i32_0 : i32, i32
  }
  func.func @transform_9(%arg0: i32) -> (i32, i32, i32) {
    %c0_i32 = arith.constant 0 : i32
    %c0_i32_0 = arith.constant 0 : i32
    %c0_i32_1 = arith.constant 0 : i32
    %c0_i32_2 = arith.constant 0 : i32
    return %c0_i32, %c0_i32_0, %c0_i32_1 : i32, i32, i32
  }
  func.func @transform_10(%arg0: i32) -> (i32, i32) {
    %c0_i32 = arith.constant 0 : i32
    %c0_i32_0 = arith.constant 0 : i32
    %c0_i32_1 = arith.constant 0 : i32
    return %c0_i32, %c0_i32_0 : i32, i32
  }
  func.func @transform_11(%arg0: i32) -> (i32, i32, i32) {
    %c0_i32 = arith.constant 0 : i32
    %c0_i32_0 = arith.constant 0 : i32
    %c0_i32_1 = arith.constant 0 : i32
    %c0_i32_2 = arith.constant 0 : i32
    return %c0_i32, %c0_i32_0, %c0_i32_1 : i32, i32, i32
  }
  func.func @transform_12(%arg0: i32) -> i32 {
    %c0_i32 = arith.constant 0 : i32
    %c0_i32_0 = arith.constant 0 : i32
    return %c0_i32 : i32
  }
  func.func @transform_13(%arg0: i32) -> (i32, i32, i32) {
    %c0_i32 = arith.constant 0 : i32
    %c0_i32_0 = arith.constant 0 : i32
    %c0_i32_1 = arith.constant 0 : i32
    return %arg0, %c0_i32, %c0_i32_0 : i32, i32, i32
  }
}

</mosaic_0001>

<llo_original>
// kernel: squeeze.6
$region0: #{squeeze.6}
  %s0 = inlined_call_operand.vmem [shape: f32[2,16], index: 0, kind: input, shape index: {}]
  %s1 = inlined_call_operand.hbm [shape: f32[2,1,4,4], index: 1, kind: output, shape index: {}]
  $region1: #{squeeze.6} parent=0
    #allocation0 [shape = 'u8[4096]{0}', space=vmem, size = 0x1000, scoped, tag = 'operand span for operand 1']
    #allocation1 [shape = 's32[1]{0}', space=sflag, size = 0x4, scoped, tag = 'scoped memory for squeeze.6']
    #allocation2 [shape = 'u8[8192]{0}', space=vmem, size = 0x2000, scoped, tag = 'scoped mem for output reshape']
    #allocation3 [shape = 'u8[4096]{0}', space=vmem, size = 0x1000, scoped, tag = 'scoped mem for input reshape']
    %2 = vsyncpa [#allocation1], 0
    %s4 = ssub.s32 4, 1
    %v5 = vld [vmem:[%s0] sm:%s4]
    %6 = vst [vmem:[#allocation3] sm:%s4] %v5
    %v7 = vld [vmem:[#allocation3] sm:$0x3]
    %vm8 = vcmask 31744
    %9 = vst.msk [vmem:[#allocation2] ss:$8 sm:$0x3] %vm8, %v7
    %v10 = vld [vmem:[#allocation3] sm:$0x3]
    %11 = vrot.lane.b32.xlu0 %v10, 124
    %v12 = vpop.permute.xlu0 %11
    %vm13 = vcmask 31744
    %s14 = scalar_lea.vmem [#allocation2], 1
    %15 = vst.msk [vmem:[%s14] ss:$8 sm:$0x3] %vm13, %v12
    %v16 = vld [vmem:[#allocation3] sm:$0x3]
    %17 = vrot.lane.b32.xlu0 %v16, 120
    %v18 = vpop.permute.xlu0 %17
    %vm19 = vcmask 31744
    %s20 = scalar_lea.vmem [#allocation2], 2
    %21 = vst.msk [vmem:[%s20] ss:$8 sm:$0x3] %vm19, %v18
    %v22 = vld [vmem:[#allocation3] sm:$0x3]
    %23 = vrot.lane.b32.xlu0 %v22, 116
    %v24 = vpop.permute.xlu0 %23
    %vm25 = vcmask 31744
    %s26 = scalar_lea.vmem [#allocation2], 3
    %27 = vst.msk [vmem:[%s26] ss:$8 sm:$0x3] %vm25, %v24
    %s29 = ssub.s32 16, 1
    %v30 = vld [vmem:[#allocation2] sm:%s29]
    %s32 = ssub.s32 16, 1
    %33 = vst [vmem:[#allocation0] sm:%s32] %v30
    %s34 = scalar_lea.vmem [#allocation2], 8
    %v35 = vld [vmem:[%s34] sm:%s29]
    %s37 = ssub.s32 16, 1
    %s38 = scalar_lea.vmem [#allocation0], 4
    %39 = vst [vmem:[%s38] sm:%s37] %v35
    %41 = vsyncadd [#allocation1], 0
    %s43 = sshll.u32 [#allocation0], 4
    %s44 = int_to_ptr.vmem [resolvable:$true] %s43
    %s45 = sshll.u32 %s1, 4
    %s46 = int_to_ptr.hbm [resolvable:$true] %s45
    %48 = dma.vmem_to_hbm [thread:$0]  %s44, 128, %s46, [#allocation1]
    %50 = dma.done [#allocation1], 128
    %51 = vsyncpa [#allocation1], 1

// kernel: simplenet_forward.1
$region0: #{simplenet_forward.1}
  #allocation0 [shape = 'u32[]', space=smem, size = 0x4, offset = 0x4, fixed_abs, tag = 'smem constant byte address 0x4 - core index']
  #allocation1 [shape = 'u32[72,128]{1,0:T(1,128)}', space=vmem, size = 0x9000, scoped, tag = 'internal scratch']
  #allocation2 [shape = 'f32[1]{0:T(128)S(6)}', space=smem, size = 0x200, scoped, tag = 'scoped memory for simplenet_forward.1']
  %s0 = inlined_call_operand.vmem [shape: f32[2,16,256], index: 0, kind: input, shape index: {}]
  %s1 = inlined_call_operand.hbm [shape: f32[256,512], index: 1, kind: input, shape index: {}]
  %s2 = inlined_call_operand.hbm [shape: f32[1,512], index: 2, kind: input, shape index: {}]
  %s3 = inlined_call_operand.hbm [shape: f32[512,1536], index: 3, kind: input, shape index: {}]
  %s4 = inlined_call_operand.vmem [shape: f32[1,1536], index: 4, kind: input, shape index: {}]
  %s5 = inlined_call_operand.hbm [shape: f32[512,512], index: 5, kind: input, shape index: {}]
  %s6 = inlined_call_operand.hbm [shape: f32[1,512], index: 6, kind: input, shape index: {}]
  %s7 = inlined_call_operand.vmem [shape: f32[512,32], index: 7, kind: input, shape index: {}]
  %s8 = inlined_call_operand.hbm [shape: f32[1,32], index: 8, kind: input, shape index: {}]
  %s9 = inlined_call_operand.vmem [shape: f32[25,32,2], index: 9, kind: input, shape index: {}]
  %s10 = inlined_call_operand.vmem [shape: f32[1,2], index: 10, kind: input, shape index: {}]
  %s11 = inlined_call_operand.hbm [shape: f32[25,16,16], index: 11, kind: input, shape index: {}]
  %s12 = inlined_call_operand.<no memory space> [shape: f32[1], index: 12, kind: input, shape index: {}]
  %s13 = inlined_call_operand.vmem [shape: f32[2,16,2], index: 13, kind: output, shape index: {}]
  %s14 = sld [smem:[#allocation0]]
  $region113: #{simplenet_forward.1} parent=0
    _
  %s16 = ssub.s32 1, %s14
  %s17 = scalar_select 0, %s16, %s14
  %18 = sst [smem:[#allocation2]] %s12
  $region1: #{simplenet_forward.1} parent=0
    #allocation3 [shape = 'u8[524288]{0}', space=vmem, size = 0x80000, scoped, tag = 'input window, operand 1, single buffered']
    #allocation4 [shape = 's32[2]{0}', space=sflag, size = 0x8, scoped, tag = 'scoped memory for simplenet_forward.1']
    #allocation5 [shape = 'u8[2048]{0}', space=vmem, size = 0x800, scoped, tag = 'input window, operand 2, single buffered']
    #allocation6 [shape = 's32[1]{0}', space=sflag, size = 0x4, scoped, tag = 'scoped memory for simplenet_forward.1']
    #allocation7 [shape = 'u8[3145728]{0}', space=vmem, size = 0x300000, scoped, tag = 'input window, operand 3, single buffered']
    #allocation8 [shape = 'u8[1048576]{0}', space=vmem, size = 0x100000, scoped, tag = 'input window, operand 5, single buffered']
    #allocation9 [shape = 's32[1]{0}', space=sflag, size = 0x4, scoped, tag = 'scoped memory for simplenet_forward.1']
    #allocation10 [shape = 'u8[2048]{0}', space=vmem, size = 0x800, scoped, tag = 'input window, operand 6, single buffered']
    #allocation11 [shape = 'u8[512]{0}', space=vmem, size = 0x400, scoped, tag = 'input window, operand 8, single buffered']
    #allocation12 [shape = 's32[1]{0}', space=sflag, size = 0x4, scoped, tag = 'scoped memory for simplenet_forward.1']
    #allocation13 [shape = 'u8[204800]{0}', space=vmem, size = 0x32000, scoped, tag = 'input window, operand 11, single buffered']
    %19 = vsyncpa [#allocation4], 0
    %20 = vsyncpa [#allocation6], 0
    %21 = vsyncpa [#allocation9], 0
    %22 = vsyncpa [#allocation12], 0
    loop: start=0, step=1, limit=4
    $region2: #{simplenet_forward.1} parent=1 // loop_pre_header
      _
    $region3: #{simplenet_forward.1} parent=1 // loop_header
      %s24 = sphi 0, %s28
      %p25 = scmp.ge.s32.totalorder %s24, 4
      %s34 = sphi 0, %s36
      %s37 = sphi 0, %s34
      %s38 = sphi 0, %s37
      %s54 = sphi 0, %s38
      %s58 = sphi 0, %s58
      %s60 = sphi 0, %s58
      %s61 = sphi 0, %s60
      %s75 = sphi 0, %s61
      %s79 = sphi 0, %s79
      %s81 = sphi 0, %s79
      %s82 = sphi 0, %s81
      %s96 = sphi 0, %s82
      %s100 = sphi 0, %s100
      %s102 = sphi 0, %s100
      %s103 = sphi 0, %s102
      %s117 = sphi 0, %s103
      %s121 = sphi 0, %s121
      %s123 = sphi 0, %s121
      %s124 = sphi 0, %s123
      %s138 = sphi 0, %s124
      %s142 = sphi 0, %s142
      %s144 = sphi 0, %s142
      %s145 = sphi 0, %s144
      %s159 = sphi 0, %s145
      %s163 = sphi 0, %s163
      %s165 = sphi 0, %s163
      %s166 = sphi 0, %s165
      %s180 = sphi 0, %s166
      %s184 = sphi 0, %s184
      %s186 = sphi 0, %s184
      %s187 = sphi 0, %s186
      %s201 = sphi 0, %s187
      %s205 = sphi 0, %s205
      %s207 = sphi 0, %s205
      %s208 = sphi 0, %s207
      %s222 = sphi 0, %s208
      %s226 = sphi 0, %s226
      %s228 = sphi 0, %s226
      %s229 = sphi 0, %s228
      %s243 = sphi 0, %s229
      %s247 = sphi 0, %s247
      %s249 = sphi 0, %s247
      %s250 = sphi 0, %s249
      %s264 = sphi 0, %s250
      %s268 = sphi 0, %s268
      %s270 = sphi 0, %s268
      %s271 = sphi 0, %s270
      %s285 = sphi 0, %s271
      %s289 = sphi 0, %s289
      %s291 = sphi 0, %s289
      %s292 = sphi 0, %s291
      %s306 = sphi 0, %s292
      %s312 = sphi 0, %s314
      %s315 = sphi 0, %s312
      %s316 = sphi 0, %s315
      %s332 = sphi 0, %s316
    $region4: #{simplenet_forward.1} parent=1 // loop_header_branch
      %27 = sbr.rel (%p25) target = $region8
    $region5: #{simplenet_forward.1} parent=1 // loop_body
      %s29 = ssub.s32 %s24, 1
      %s30 = ssub.s32 %s24, 2
      %s31 = sadd.s32 %s24, 1
      %s32 = ssub.s32 %s24, %s31
      %p33 = scmp.eq.s32.totalorder %s32, 0
      %s35 = sadd.s32 %s34, 1
      %s36 = scalar_select %p33, %s34, %s35
      %p39 = pneg %p33
      %p40 = scmp.eq.s32.totalorder %s24, 1
      %p41 = por %p39, %p40
      %p42 = scmp.ne.s32.totalorder %s34, %s37
      %p43 = scmp.eq.s32.totalorder %s24, 0
      %p44 = por %p42, %p43
      %p45 = scmp.ne.s32.totalorder %s34, %s37
      %p46 = scmp.eq.s32.totalorder %s29, 1
      %p47 = por %p45, %p46
      %p48 = scmp.ne.s32.totalorder %s37, %s38
      %p49 = scmp.eq.s32.totalorder %s29, 0
      %p50 = por %p48, %p49
      %p51 = scmp.ne.s32.totalorder %s37, %s38
      %p52 = scmp.eq.s32.totalorder %s30, 1
      %p53 = por %p51, %p52
      %p55 = scmp.ne.s32.totalorder %s38, %s54
      %p56 = scmp.eq.s32.totalorder %s30, 0
      %p57 = por %p55, %p56
      %s59 = sadd.s32 %s58, 1
      %p62 = scmp.eq.s32.totalorder %s24, 1
      %p63 = scmp.ne.s32.totalorder %s58, %s60
      %p64 = scmp.eq.s32.totalorder %s24, 0
      %p65 = por %p63, %p64
      %p66 = scmp.ne.s32.totalorder %s58, %s60
      %p67 = scmp.eq.s32.totalorder %s29, 1
      %p68 = por %p66, %p67
      %p69 = scmp.ne.s32.totalorder %s60, %s61
      %p70 = scmp.eq.s32.totalorder %s29, 0
      %p71 = por %p69, %p70
      %p72 = scmp.ne.s32.totalorder %s60, %s61
      %p73 = scmp.eq.s32.totalorder %s30, 1
      %p74 = por %p72, %p73
      %p76 = scmp.ne.s32.totalorder %s61, %s75
      %p77 = scmp.eq.s32.totalorder %s30, 0
      %p78 = por %p76, %p77
      %s80 = sadd.s32 %s79, 1
      %p83 = scmp.eq.s32.totalorder %s24, 1
      %p84 = scmp.ne.s32.totalorder %s79, %s81
      %p85 = scmp.eq.s32.totalorder %s24, 0
      %p86 = por %p84, %p85
      %p87 = scmp.ne.s32.totalorder %s79, %s81
      %p88 = scmp.eq.s32.totalorder %s29, 1
      %p89 = por %p87, %p88
      %p90 = scmp.ne.s32.totalorder %s81, %s82
      %p91 = scmp.eq.s32.totalorder %s29, 0
      %p92 = por %p90, %p91
      %p93 = scmp.ne.s32.totalorder %s81, %s82
      %p94 = scmp.eq.s32.totalorder %s30, 1
      %p95 = por %p93, %p94
      %p97 = scmp.ne.s32.totalorder %s82, %s96
      %p98 = scmp.eq.s32.totalorder %s30, 0
      %p99 = por %p97, %p98
      %s101 = sadd.s32 %s100, 1
      %p104 = scmp.eq.s32.totalorder %s24, 1
      %p105 = scmp.ne.s32.totalorder %s100, %s102
      %p106 = scmp.eq.s32.totalorder %s24, 0
      %p107 = por %p105, %p106
      %p108 = scmp.ne.s32.totalorder %s100, %s102
      %p109 = scmp.eq.s32.totalorder %s29, 1
      %p110 = por %p108, %p109
      %p111 = scmp.ne.s32.totalorder %s102, %s103
      %p112 = scmp.eq.s32.totalorder %s29, 0
      %p113 = por %p111, %p112
      %p114 = scmp.ne.s32.totalorder %s102, %s103
      %p115 = scmp.eq.s32.totalorder %s30, 1
      %p116 = por %p114, %p115
      %p118 = scmp.ne.s32.totalorder %s103, %s117
      %p119 = scmp.eq.s32.totalorder %s30, 0
      %p120 = por %p118, %p119
      %s122 = sadd.s32 %s121, 1
      %p125 = scmp.eq.s32.totalorder %s24, 1
      %p126 = scmp.ne.s32.totalorder %s121, %s123
      %p127 = scmp.eq.s32.totalorder %s24, 0
      %p128 = por %p126, %p127
      %p129 = scmp.ne.s32.totalorder %s121, %s123
      %p130 = scmp.eq.s32.totalorder %s29, 1
      %p131 = por %p129, %p130
      %p132 = scmp.ne.s32.totalorder %s123, %s124
      %p133 = scmp.eq.s32.totalorder %s29, 0
      %p134 = por %p132, %p133
      %p135 = scmp.ne.s32.totalorder %s123, %s124
      %p136 = scmp.eq.s32.totalorder %s30, 1
      %p137 = por %p135, %p136
      %p139 = scmp.ne.s32.totalorder %s124, %s138
      %p140 = scmp.eq.s32.totalorder %s30, 0
      %p141 = por %p139, %p140
      %s143 = sadd.s32 %s142, 1
      %p146 = scmp.eq.s32.totalorder %s24, 1
      %p147 = scmp.ne.s32.totalorder %s142, %s144
      %p148 = scmp.eq.s32.totalorder %s24, 0
      %p149 = por %p147, %p148
      %p150 = scmp.ne.s32.totalorder %s142, %s144
      %p151 = scmp.eq.s32.totalorder %s29, 1
      %p152 = por %p150, %p151
      %p153 = scmp.ne.s32.totalorder %s144, %s145
      %p154 = scmp.eq.s32.totalorder %s29, 0
      %p155 = por %p153, %p154
      %p156 = scmp.ne.s32.totalorder %s144, %s145
      %p157 = scmp.eq.s32.totalorder %s30, 1
      %p158 = por %p156, %p157
      %p160 = scmp.ne.s32.totalorder %s145, %s159
      %p161 = scmp.eq.s32.totalorder %s30, 0
      %p162 = por %p160, %p161
      %s164 = sadd.s32 %s163, 1
      %p167 = scmp.eq.s32.totalorder %s24, 1
      %p168 = scmp.ne.s32.totalorder %s163, %s165
      %p169 = scmp.eq.s32.totalorder %s24, 0
      %p170 = por %p168, %p169
      %p171 = scmp.ne.s32.totalorder %s163, %s165
      %p172 = scmp.eq.s32.totalorder %s29, 1
      %p173 = por %p171, %p172
      %p174 = scmp.ne.s32.totalorder %s165, %s166
      %p175 = scmp.eq.s32.totalorder %s29, 0
      %p176 = por %p174, %p175
      %p177 = scmp.ne.s32.totalorder %s165, %s166
      %p178 = scmp.eq.s32.totalorder %s30, 1
      %p179 = por %p177, %p178
      %p181 = scmp.ne.s32.totalorder %s166, %s180
      %p182 = scmp.eq.s32.totalorder %s30, 0
      %p183 = por %p181, %p182
      %s185 = sadd.s32 %s184, 1
      %p188 = scmp.eq.s32.totalorder %s24, 1
      %p189 = scmp.ne.s32.totalorder %s184, %s186
      %p190 = scmp.eq.s32.totalorder %s24, 0
      %p191 = por %p189, %p190
      %p192 = scmp.ne.s32.totalorder %s184, %s186
      %p193 = scmp.eq.s32.totalorder %s29, 1
      %p194 = por %p192, %p193
      %p195 = scmp.ne.s32.totalorder %s186, %s187
      %p196 = scmp.eq.s32.totalorder %s29, 0
      %p197 = por %p195, %p196
      %p198 = scmp.ne.s32.totalorder %s186, %s187
      %p199 = scmp.eq.s32.totalorder %s30, 1
      %p200 = por %p198, %p199
      %p202 = scmp.ne.s32.totalorder %s187, %s201
      %p203 = scmp.eq.s32.totalorder %s30, 0
      %p204 = por %p202, %p203
      %s206 = sadd.s32 %s205, 1
      %p209 = scmp.eq.s32.totalorder %s24, 1
      %p210 = scmp.ne.s32.totalorder %s205, %s207
      %p211 = scmp.eq.s32.totalorder %s24, 0
      %p212 = por %p210, %p211
      %p213 = scmp.ne.s32.totalorder %s205, %s207
      %p214 = scmp.eq.s32.totalorder %s29, 1
      %p215 = por %p213, %p214
      %p216 = scmp.ne.s32.totalorder %s207, %s208
      %p217 = scmp.eq.s32.totalorder %s29, 0
      %p218 = por %p216, %p217
      %p219 = scmp.ne.s32.totalorder %s207, %s208
      %p220 = scmp.eq.s32.totalorder %s30, 1
      %p221 = por %p219, %p220
      %p223 = scmp.ne.s32.totalorder %s208, %s222
      %p224 = scmp.eq.s32.totalorder %s30, 0
      %p225 = por %p223, %p224
      %s227 = sadd.s32 %s226, 1
      %p230 = scmp.eq.s32.totalorder %s24, 1
      %p231 = scmp.ne.s32.totalorder %s226, %s228
      %p232 = scmp.eq.s32.totalorder %s24, 0
      %p233 = por %p231, %p232
      %p234 = scmp.ne.s32.totalorder %s226, %s228
      %p235 = scmp.eq.s32.totalorder %s29, 1
      %p236 = por %p234, %p235
      %p237 = scmp.ne.s32.totalorder %s228, %s229
      %p238 = scmp.eq.s32.totalorder %s29, 0
      %p239 = por %p237, %p238
      %p240 = scmp.ne.s32.totalorder %s228, %s229
      %p241 = scmp.eq.s32.totalorder %s30, 1
      %p242 = por %p240, %p241
      %p244 = scmp.ne.s32.totalorder %s229, %s243
      %p245 = scmp.eq.s32.totalorder %s30, 0
      %p246 = por %p244, %p245
      %s248 = sadd.s32 %s247, 1
      %p251 = scmp.eq.s32.totalorder %s24, 1
      %p252 = scmp.ne.s32.totalorder %s247, %s249
      %p253 = scmp.eq.s32.totalorder %s24, 0
      %p254 = por %p252, %p253
      %p255 = scmp.ne.s32.totalorder %s247, %s249
      %p256 = scmp.eq.s32.totalorder %s29, 1
      %p257 = por %p255, %p256
      %p258 = scmp.ne.s32.totalorder %s249, %s250
      %p259 = scmp.eq.s32.totalorder %s29, 0
      %p260 = por %p258, %p259
      %p261 = scmp.ne.s32.totalorder %s249, %s250
      %p262 = scmp.eq.s32.totalorder %s30, 1
      %p263 = por %p261, %p262
      %p265 = scmp.ne.s32.totalorder %s250, %s264
      %p266 = scmp.eq.s32.totalorder %s30, 0
      %p267 = por %p265, %p266
      %s269 = sadd.s32 %s268, 1
      %p272 = scmp.eq.s32.totalorder %s24, 1
      %p273 = scmp.ne.s32.totalorder %s268, %s270
      %p274 = scmp.eq.s32.totalorder %s24, 0
      %p275 = por %p273, %p274
      %p276 = scmp.ne.s32.totalorder %s268, %s270
      %p277 = scmp.eq.s32.totalorder %s29, 1
      %p278 = por %p276, %p277
      %p279 = scmp.ne.s32.totalorder %s270, %s271
      %p280 = scmp.eq.s32.totalorder %s29, 0
      %p281 = por %p279, %p280
      %p282 = scmp.ne.s32.totalorder %s270, %s271
      %p283 = scmp.eq.s32.totalorder %s30, 1
      %p284 = por %p282, %p283
      %p286 = scmp.ne.s32.totalorder %s271, %s285
      %p287 = scmp.eq.s32.totalorder %s30, 0
      %p288 = por %p286, %p287
      %s290 = sadd.s32 %s289, 1
      %p293 = scmp.eq.s32.totalorder %s24, 1
      %p294 = scmp.ne.s32.totalorder %s289, %s291
      %p295 = scmp.eq.s32.totalorder %s24, 0
      %p296 = por %p294, %p295
      %p297 = scmp.ne.s32.totalorder %s289, %s291
      %p298 = scmp.eq.s32.totalorder %s29, 1
      %p299 = por %p297, %p298
      %p300 = scmp.ne.s32.totalorder %s291, %s292
      %p301 = scmp.eq.s32.totalorder %s29, 0
      %p302 = por %p300, %p301
      %p303 = scmp.ne.s32.totalorder %s291, %s292
      %p304 = scmp.eq.s32.totalorder %s30, 1
      %p305 = por %p303, %p304
      %p307 = scmp.ne.s32.totalorder %s292, %s306
      %p308 = scmp.eq.s32.totalorder %s30, 0
      %p309 = por %p307, %p308
      %s310 = ssub.s32 %s24, %s31
      %p311 = scmp.eq.s32.totalorder %s310, 0
      %s313 = sadd.s32 %s312, 1
      %s314 = scalar_select %p311, %s312, %s313
      %p317 = pneg %p311
      %p318 = scmp.eq.s32.totalorder %s24, 1
      %p319 = por %p317, %p318
      %p320 = scmp.ne.s32.totalorder %s312, %s315
      %p321 = scmp.eq.s32.totalorder %s24, 0
      %p322 = por %p320, %p321
      %p323 = scmp.ne.s32.totalorder %s312, %s315
      %p324 = scmp.eq.s32.totalorder %s29, 1
      %p325 = por %p323, %p324
      %p326 = scmp.ne.s32.totalorder %s315, %s316
      %p327 = scmp.eq.s32.totalorder %s29, 0
      %p328 = por %p326, %p327
      %p329 = scmp.ne.s32.totalorder %s315, %s316
      %p330 = scmp.eq.s32.totalorder %s30, 1
      %p331 = por %p329, %p330
      %p333 = scmp.ne.s32.totalorder %s316, %s332
      %p334 = scmp.eq.s32.totalorder %s30, 0
      %p335 = por %p333, %p334
      %p336 = scmp.le.s32.totalorder 1, %s24
      %p337 = scmp.lt.s32.totalorder %s24, 3
      %p338 = pnand %p336, %p337
      %p339 = pneg %p338
      // Predicated region
      $region9: #{simplenet_forward.1} parent=5 // pred_check
        _
      $region10: #{simplenet_forward.1} parent=5 // pred_check_branch
        %341 = sbr.rel (%p338) target = $region12
      $region11: #{simplenet_forward.1} parent=5 // pred_region
        %s342 = ssub.s32 %s24, 1
        // Predicated region
        $region13: #{simplenet_forward.1} parent=11 // pred_check
          %p343 = pneg %p71
        $region14: #{simplenet_forward.1} parent=11 // pred_check_branch
          %345 = sbr.rel (%p343) target = $region16
        $region15: #{simplenet_forward.1} parent=11 // pred_region
          %347 = vsyncadd [#allocation4], 0
          %s348 = sshll.u32 %s1, 4
          %s349 = int_to_ptr.hbm [resolvable:$true] %s348
          %s350 = sshll.u32 [#allocation3], 4
          %s351 = int_to_ptr.vmem [resolvable:$true] %s350
          %356 = dma.hbm_to_vmem [thread:$0]  %s349, 16384, %s351, [#allocation4], 512, 512, 32
        $region16: #{simplenet_forward.1} parent=11 // pred_fallthru
          _
        // Predicated region
        $region17: #{simplenet_forward.1} parent=11 // pred_check
          %p357 = pneg %p92
        $region18: #{simplenet_forward.1} parent=11 // pred_check_branch
          %359 = sbr.rel (%p357) target = $region20
        $region19: #{simplenet_forward.1} parent=11 // pred_region
          %361 = vsyncadd [#allocation6], 0
          %s363 = sshll.u32 %s2, 4
          %s364 = int_to_ptr.hbm [resolvable:$true] %s363
          %s365 = sshll.u32 [#allocation5], 4
          %s366 = int_to_ptr.vmem [resolvable:$true] %s365
          %368 = dma.hbm_to_vmem [thread:$0]  %s364, 64, %s366, [#allocation6]
        $region20: #{simplenet_forward.1} parent=11 // pred_fallthru
          _
        // Predicated region
        $region21: #{simplenet_forward.1} parent=11 // pred_check
          %p369 = pneg %p113
        $region22: #{simplenet_forward.1} parent=11 // pred_check_branch
          %371 = sbr.rel (%p369) target = $region24
        $region23: #{simplenet_forward.1} parent=11 // pred_region
          %373 = vsyncadd [#allocation6], 0
          %s374 = sshll.u32 %s3, 4
          %s375 = int_to_ptr.hbm [resolvable:$true] %s374
          %s376 = sshll.u32 [#allocation7], 4
          %s377 = int_to_ptr.vmem [resolvable:$true] %s376
          %382 = dma.hbm_to_vmem [thread:$0]  %s375, 98304, %s377, [#allocation6], 1536, 1536, 96
        $region24: #{simplenet_forward.1} parent=11 // pred_fallthru
          _
        // Predicated region
        $region25: #{simplenet_forward.1} parent=11 // pred_check
          %p383 = pneg %p134
        $region26: #{simplenet_forward.1} parent=11 // pred_check_branch
          %385 = sbr.rel (%p383) target = $region28
        $region27: #{simplenet_forward.1} parent=11 // pred_region
          _
        $region28: #{simplenet_forward.1} parent=11 // pred_fallthru
          _
        // Predicated region
        $region29: #{simplenet_forward.1} parent=11 // pred_check
          %p386 = pneg %p155
        $region30: #{simplenet_forward.1} parent=11 // pred_check_branch
          %388 = sbr.rel (%p386) target = $region32
        $region31: #{simplenet_forward.1} parent=11 // pred_region
          %390 = vsyncadd [#allocation9], 0
          %s391 = sshll.u32 %s5, 4
          %s392 = int_to_ptr.hbm [resolvable:$true] %s391
          %s393 = sshll.u32 [#allocation8], 4
          %s394 = int_to_ptr.vmem [resolvable:$true] %s393
          %399 = dma.hbm_to_vmem [thread:$0]  %s392, 32768, %s394, [#allocation9], 512, 512, 32
        $region32: #{simplenet_forward.1} parent=11 // pred_fallthru
          _
        // Predicated region
        $region33: #{simplenet_forward.1} parent=11 // pred_check
          %p400 = pneg %p176
        $region34: #{simplenet_forward.1} parent=11 // pred_check_branch
          %402 = sbr.rel (%p400) target = $region36
        $region35: #{simplenet_forward.1} parent=11 // pred_region
          %404 = vsyncadd [#allocation9], 0
          %s406 = sshll.u32 %s6, 4
          %s407 = int_to_ptr.hbm [resolvable:$true] %s406
          %s408 = sshll.u32 [#allocation10], 4
          %s409 = int_to_ptr.vmem [resolvable:$true] %s408
          %411 = dma.hbm_to_vmem [thread:$0]  %s407, 64, %s409, [#allocation9]
        $region36: #{simplenet_forward.1} parent=11 // pred_fallthru
          _
        // Predicated region
        $region37: #{simplenet_forward.1} parent=11 // pred_check
          %p412 = pneg %p197
        $region38: #{simplenet_forward.1} parent=11 // pred_check_branch
          %414 = sbr.rel (%p412) target = $region40
        $region39: #{simplenet_forward.1} parent=11 // pred_region
          _
        $region40: #{simplenet_forward.1} parent=11 // pred_fallthru
          _
        // Predicated region
        $region41: #{simplenet_forward.1} parent=11 // pred_check
          %p415 = pneg %p218
        $region42: #{simplenet_forward.1} parent=11 // pred_check_branch
          %417 = sbr.rel (%p415) target = $region44
        $region43: #{simplenet_forward.1} parent=11 // pred_region
          %419 = vsyncadd [#allocation12], 0
          %s421 = sshll.u32 %s8, 4
          %s422 = int_to_ptr.hbm [resolvable:$true] %s421
          %s423 = sshll.u32 [#allocation11], 4
          %s424 = int_to_ptr.vmem [resolvable:$true] %s423
          %426 = dma.hbm_to_vmem [thread:$0]  %s422, 16, %s424, [#allocation12]
        $region44: #{simplenet_forward.1} parent=11 // pred_fallthru
          _
        // Predicated region
        $region45: #{simplenet_forward.1} parent=11 // pred_check
          %p427 = pneg %p239
        $region46: #{simplenet_forward.1} parent=11 // pred_check_branch
          %429 = sbr.rel (%p427) target = $region48
        $region47: #{simplenet_forward.1} parent=11 // pred_region
          _
        $region48: #{simplenet_forward.1} parent=11 // pred_fallthru
          _
        // Predicated region
        $region49: #{simplenet_forward.1} parent=11 // pred_check
          %p430 = pneg %p260
        $region50: #{simplenet_forward.1} parent=11 // pred_check_branch
          %432 = sbr.rel (%p430) target = $region52
        $region51: #{simplenet_forward.1} parent=11 // pred_region
          _
        $region52: #{simplenet_forward.1} parent=11 // pred_fallthru
          _
        // Predicated region
        $region53: #{simplenet_forward.1} parent=11 // pred_check
          %p433 = pneg %p281
        $region54: #{simplenet_forward.1} parent=11 // pred_check_branch
          %435 = sbr.rel (%p433) target = $region56
        $region55: #{simplenet_forward.1} parent=11 // pred_region
          %437 = vsyncadd [#allocation12], 0
          %s438 = sshll.u32 %s11, 4
          %s439 = int_to_ptr.hbm [resolvable:$true] %s438
          %s440 = sshll.u32 [#allocation13], 4
          %s441 = int_to_ptr.vmem [resolvable:$true] %s440
          %446 = dma.hbm_to_vmem [thread:$0]  %s439, 6400, %s441, [#allocation12], 128, 128, 8
        $region56: #{simplenet_forward.1} parent=11 // pred_fallthru
          _
        // Predicated region
        $region57: #{simplenet_forward.1} parent=11 // pred_check
          %p447 = pneg %p302
        $region58: #{simplenet_forward.1} parent=11 // pred_check_branch
          %449 = sbr.rel (%p447) target = $region60
        $region59: #{simplenet_forward.1} parent=11 // pred_region
          _
        $region60: #{simplenet_forward.1} parent=11 // pred_fallthru
          _
      $region12: #{simplenet_forward.1} parent=5 // pred_fallthru
        _
      %p450 = scmp.lt.s32.totalorder %s24, 2
      // Predicated region
      $region61: #{simplenet_forward.1} parent=5 // pred_check
        %p451 = pneg %p450
      $region62: #{simplenet_forward.1} parent=5 // pred_check_branch
        %453 = sbr.rel (%p451) target = $region64
      $region63: #{simplenet_forward.1} parent=5 // pred_region
        // Predicated region
        $region65: #{simplenet_forward.1} parent=63 // pred_check
          %p454 = pneg %p44
        $region66: #{simplenet_forward.1} parent=63 // pred_check_branch
          %456 = sbr.rel (%p454) target = $region68
        $region67: #{simplenet_forward.1} parent=63 // pred_region
          %p457 = scmp.lt.s32.totalorder %s24, 1
          %s458 = scalar_select %p457, %s24, 1
          %s459 = smul.addr %s458, 4
          %s460 = smul.addr %s459, 8
          %s461 = scalar_lea.vmem %s0, %s460
        $region68: #{simplenet_forward.1} parent=63 // pred_fallthru
          _
      $region64: #{simplenet_forward.1} parent=5 // pred_fallthru
        _
      %p462 = scmp.le.s32.totalorder 1, %s24
      %p463 = scmp.lt.s32.totalorder %s24, 3
      %p464 = pnand %p462, %p463
      %p465 = pneg %p464
      // Predicated region
      $region69: #{simplenet_forward.1} parent=5 // pred_check
        _
      $region70: #{simplenet_forward.1} parent=5 // pred_check_branch
        %467 = sbr.rel (%p464) target = $region72
      $region71: #{simplenet_forward.1} parent=5 // pred_region
        %s468 = ssub.s32 %s24, 1
        // Predicated region
        $region73: #{simplenet_forward.1} parent=71 // pred_check
          %p469 = pneg %p71
        $region74: #{simplenet_forward.1} parent=71 // pred_check_branch
          %471 = sbr.rel (%p469) target = $region76
        $region75: #{simplenet_forward.1} parent=71 // pred_region
          %473 = dma.done [#allocation4], 16384
        $region76: #{simplenet_forward.1} parent=71 // pred_fallthru
          _
        // Predicated region
        $region77: #{simplenet_forward.1} parent=71 // pred_check
          %p474 = pneg %p92
        $region78: #{simplenet_forward.1} parent=71 // pred_check_branch
          %476 = sbr.rel (%p474) target = $region80
        $region79: #{simplenet_forward.1} parent=71 // pred_region
          %478 = dma.done [#allocation6], 64
        $region80: #{simplenet_forward.1} parent=71 // pred_fallthru
          _
        // Predicated region
        $region81: #{simplenet_forward.1} parent=71 // pred_check
          %p479 = pneg %p113
        $region82: #{simplenet_forward.1} parent=71 // pred_check_branch
          %481 = sbr.rel (%p479) target = $region84
        $region83: #{simplenet_forward.1} parent=71 // pred_region
          %483 = dma.done [#allocation6], 98304
        $region84: #{simplenet_forward.1} parent=71 // pred_fallthru
          _
        // Predicated region
        $region85: #{simplenet_forward.1} parent=71 // pred_check
          %p484 = pneg %p155
        $region86: #{simplenet_forward.1} parent=71 // pred_check_branch
          %486 = sbr.rel (%p484) target = $region88
        $region87: #{simplenet_forward.1} parent=71 // pred_region
          %488 = dma.done [#allocation9], 32768
        $region88: #{simplenet_forward.1} parent=71 // pred_fallthru
          _
        // Predicated region
        $region89: #{simplenet_forward.1} parent=71 // pred_check
          %p489 = pneg %p176
        $region90: #{simplenet_forward.1} parent=71 // pred_check_branch
          %491 = sbr.rel (%p489) target = $region92
        $region91: #{simplenet_forward.1} parent=71 // pred_region
          %493 = dma.done [#allocation9], 64
        $region92: #{simplenet_forward.1} parent=71 // pred_fallthru
          _
        // Predicated region
        $region93: #{simplenet_forward.1} parent=71 // pred_check
          %p494 = pneg %p218
        $region94: #{simplenet_forward.1} parent=71 // pred_check_branch
          %496 = sbr.rel (%p494) target = $region96
        $region95: #{simplenet_forward.1} parent=71 // pred_region
          %498 = dma.done [#allocation12], 16
        $region96: #{simplenet_forward.1} parent=71 // pred_fallthru
          _
        // Predicated region
        $region97: #{simplenet_forward.1} parent=71 // pred_check
          %p499 = pneg %p281
        $region98: #{simplenet_forward.1} parent=71 // pred_check_branch
          %501 = sbr.rel (%p499) target = $region100
        $region99: #{simplenet_forward.1} parent=71 // pred_region
          %503 = dma.done [#allocation12], 6400
        $region100: #{simplenet_forward.1} parent=71 // pred_fallthru
          _
        %p504 = scmp.lt.s32.totalorder %s29, 1
        %s505 = scalar_select %p504, %s29, 1
        %s506 = smul.addr %s505, 4
        %s507 = smul.addr %s506, 8
        %s508 = scalar_lea.vmem %s0, %s507
        %p509 = pneg %p50
        %p510 = pneg %p47
        %p511 = pneg %p71
        %p512 = pneg %p68
        %p513 = pneg %p92
        %p514 = pneg %p89
        %p515 = pneg %p113
        %p516 = pneg %p110
        %p517 = pneg %p134
        %p518 = pneg %p131
        %p519 = pneg %p155
        %p520 = pneg %p152
        %p521 = pneg %p176
        %p522 = pneg %p173
        %p523 = pneg %p197
        %p524 = pneg %p194
        %p525 = pneg %p218
        %p526 = pneg %p215
        %p527 = pneg %p239
        %p528 = pneg %p236
        %p529 = pneg %p260
        %p530 = pneg %p257
        %p531 = pneg %p281
        %p532 = pneg %p278
        %p533 = pneg %p302
        %p534 = pneg %p299
        %p535 = pneg %p328
        %p536 = pneg %p325
        %p537 = scmp.lt.s32.totalorder %s29, 1
        %s538 = scalar_select %p537, %s29, 1
        %s539 = smul.addr %s538, 2
        %s540 = smul.addr %s539, 8
        %s541 = scalar_lea.vmem %s13, %s540
        %p542 = scmp.lt.s32.totalorder %s29, 1
        %s543 = scalar_select %p542, %s29, 1
        %s544 = smul.addr %s543, 4
        %s545 = smul.addr %s544, 8
        %s546 = scalar_lea.vmem %s0, %s545
        %p547 = scmp.lt.s32.totalorder %s29, 1
        %s548 = scalar_select %p547, %s29, 1
        %s549 = smul.addr %s548, 2
        %s550 = smul.addr %s549, 8
        %s551 = scalar_lea.vmem %s13, %s550
        %v553 = vld [vmem:[%s546] sm:$0xff]
        %v554 = vld [vmem:[%s546 + $0x8] sm:$0xff]
        %v555 = vld [vmem:[%s546 + $0x10] sm:$0xff]
        %v556 = vld [vmem:[%s546 + $0x18] sm:$0xff]
        %v557 = vld [vmem:[#allocation3] sm:$0xff]
        %v558 = vld [vmem:[#allocation3 + $0x8] sm:$0xff]
        %v559 = vld [vmem:[#allocation3 + $0x10] sm:$0xff]
        %v560 = vld [vmem:[#allocation3 + $0x18] sm:$0xff]
        %v561 = vld [vmem:[#allocation3 + $0x20] sm:$0xff]
        %v562 = vld [vmem:[#allocation3 + $0x28] sm:$0xff]
        %v563 = vld [vmem:[#allocation3 + $0x30] sm:$0xff]
        %v564 = vld [vmem:[#allocation3 + $0x38] sm:$0xff]
        %v565 = vld [vmem:[#allocation3 + $0x40] sm:$0xff]
        %v566 = vld [vmem:[#allocation3 + $0x48] sm:$0xff]
        %v567 = vld [vmem:[#allocation3 + $0x50] sm:$0xff]
        %v568 = vld [vmem:[#allocation3 + $0x58] sm:$0xff]
        %v569 = vld [vmem:[#allocation3 + $0x60] sm:$0xff]
        %v570 = vld [vmem:[#allocation3 + $0x68] sm:$0xff]
        %v571 = vld [vmem:[#allocation3 + $0x70] sm:$0xff]
        %v572 = vld [vmem:[#allocation3 + $0x78] sm:$0xff]
        %v573 = vld [vmem:[#allocation3 + $0x80] sm:$0xff]
        %v574 = vld [vmem:[#allocation3 + $0x88] sm:$0xff]
        %v575 = vld [vmem:[#allocation3 + $0x90] sm:$0xff]
        %v576 = vld [vmem:[#allocation3 + $0x98] sm:$0xff]
        %v577 = vld [vmem:[#allocation3 + $0xa0] sm:$0xff]
        %v578 = vld [vmem:[#allocation3 + $0xa8] sm:$0xff]
        %v579 = vld [vmem:[#allocation3 + $0xb0] sm:$0xff]
        %v580 = vld [vmem:[#allocation3 + $0xb8] sm:$0xff]
        %v581 = vld [vmem:[#allocation3 + $0xc0] sm:$0xff]
        %v582 = vld [vmem:[#allocation3 + $0xc8] sm:$0xff]
        %v583 = vld [vmem:[#allocation3 + $0xd0] sm:$0xff]
        %v584 = vld [vmem:[#allocation3 + $0xd8] sm:$0xff]
        %v585 = vld [vmem:[#allocation3 + $0xe0] sm:$0xff]
        %v586 = vld [vmem:[#allocation3 + $0xe8] sm:$0xff]
        %v587 = vld [vmem:[#allocation3 + $0xf0] sm:$0xff]
        %v588 = vld [vmem:[#allocation3 + $0xf8] sm:$0xff]
        %v589 = vld [vmem:[#allocation3 + $0x100] sm:$0xff]
        %v590 = vld [vmem:[#allocation3 + $0x108] sm:$0xff]
        %v591 = vld [vmem:[#allocation3 + $0x110] sm:$0xff]
        %v592 = vld [vmem:[#allocation3 + $0x118] sm:$0xff]
        %v593 = vld [vmem:[#allocation3 + $0x120] sm:$0xff]
        %v594 = vld [vmem:[#allocation3 + $0x128] sm:$0xff]
        %v595 = vld [vmem:[#allocation3 + $0x130] sm:$0xff]
        %v596 = vld [vmem:[#allocation3 + $0x138] sm:$0xff]
        %v597 = vld [vmem:[#allocation3 + $0x140] sm:$0xff]
        %v598 = vld [vmem:[#allocation3 + $0x148] sm:$0xff]
        %v599 = vld [vmem:[#allocation3 + $0x150] sm:$0xff]
        %v600 = vld [vmem:[#allocation3 + $0x158] sm:$0xff]
        %v601 = vld [vmem:[#allocation3 + $0x160] sm:$0xff]
        %v602 = vld [vmem:[#allocation3 + $0x168] sm:$0xff]
        %v603 = vld [vmem:[#allocation3 + $0x170] sm:$0xff]
        %v604 = vld [vmem:[#allocation3 + $0x178] sm:$0xff]
        %v605 = vld [vmem:[#allocation3 + $0x180] sm:$0xff]
        %v606 = vld [vmem:[#allocation3 + $0x188] sm:$0xff]
        %v607 = vld [vmem:[#allocation3 + $0x190] sm:$0xff]
        %v608 = vld [vmem:[#allocation3 + $0x198] sm:$0xff]
        %v609 = vld [vmem:[#allocation3 + $0x1a0] sm:$0xff]
        %v610 = vld [vmem:[#allocation3 + $0x1a8] sm:$0xff]
        %v611 = vld [vmem:[#allocation3 + $0x1b0] sm:$0xff]
        %v612 = vld [vmem:[#allocation3 + $0x1b8] sm:$0xff]
        %v613 = vld [vmem:[#allocation3 + $0x1c0] sm:$0xff]
        %v614 = vld [vmem:[#allocation3 + $0x1c8] sm:$0xff]
        %v615 = vld [vmem:[#allocation3 + $0x1d0] sm:$0xff]
        %v616 = vld [vmem:[#allocation3 + $0x1d8] sm:$0xff]
        %v617 = vld [vmem:[#allocation3 + $0x1e0] sm:$0xff]
        %v618 = vld [vmem:[#allocation3 + $0x1e8] sm:$0xff]
        %v619 = vld [vmem:[#allocation3 + $0x1f0] sm:$0xff]
        %v620 = vld [vmem:[#allocation3 + $0x1f8] sm:$0xff]
        %v621 = vld [vmem:[#allocation3 + $0x200] sm:$0xff]
        %v622 = vld [vmem:[#allocation3 + $0x208] sm:$0xff]
        %v623 = vld [vmem:[#allocation3 + $0x210] sm:$0xff]
        %v624 = vld [vmem:[#allocation3 + $0x218] sm:$0xff]
        %v625 = vld [vmem:[#allocation3 + $0x220] sm:$0xff]
        %v626 = vld [vmem:[#allocation3 + $0x228] sm:$0xff]
        %v627 = vld [vmem:[#allocation3 + $0x230] sm:$0xff]
        %v628 = vld [vmem:[#allocation3 + $0x238] sm:$0xff]
        %v629 = vld [vmem:[#allocation3 + $0x240] sm:$0xff]
        %v630 = vld [vmem:[#allocation3 + $0x248] sm:$0xff]
        %v631 = vld [vmem:[#allocation3 + $0x250] sm:$0xff]
        %v632 = vld [vmem:[#allocation3 + $0x258] sm:$0xff]
        %v633 = vld [vmem:[#allocation3 + $0x260] sm:$0xff]
        %v634 = vld [vmem:[#allocation3 + $0x268] sm:$0xff]
        %v635 = vld [vmem:[#allocation3 + $0x270] sm:$0xff]
        %v636 = vld [vmem:[#allocation3 + $0x278] sm:$0xff]
        %v637 = vld [vmem:[#allocation3 + $0x280] sm:$0xff]
        %v638 = vld [vmem:[#allocation3 + $0x288] sm:$0xff]
        %v639 = vld [vmem:[#allocation3 + $0x290] sm:$0xff]
        %v640 = vld [vmem:[#allocation3 + $0x298] sm:$0xff]
        %v641 = vld [vmem:[#allocation3 + $0x2a0] sm:$0xff]
        %v642 = vld [vmem:[#allocation3 + $0x2a8] sm:$0xff]
        %v643 = vld [vmem:[#allocation3 + $0x2b0] sm:$0xff]
        %v644 = vld [vmem:[#allocation3 + $0x2b8] sm:$0xff]
        %v645 = vld [vmem:[#allocation3 + $0x2c0] sm:$0xff]
        %v646 = vld [vmem:[#allocation3 + $0x2c8] sm:$0xff]
        %v647 = vld [vmem:[#allocation3 + $0x2d0] sm:$0xff]
        %v648 = vld [vmem:[#allocation3 + $0x2d8] sm:$0xff]
        %v649 = vld [vmem:[#allocation3 + $0x2e0] sm:$0xff]
        %v650 = vld [vmem:[#allocation3 + $0x2e8] sm:$0xff]
        %v651 = vld [vmem:[#allocation3 + $0x2f0] sm:$0xff]
        %v652 = vld [vmem:[#allocation3 + $0x2f8] sm:$0xff]
        %v653 = vld [vmem:[#allocation3 + $0x300] sm:$0xff]
        %v654 = vld [vmem:[#allocation3 + $0x308] sm:$0xff]
        %v655 = vld [vmem:[#allocation3 + $0x310] sm:$0xff]
        %v656 = vld [vmem:[#allocation3 + $0x318] sm:$0xff]
        %v657 = vld [vmem:[#allocation3 + $0x320] sm:$0xff]
        %v658 = vld [vmem:[#allocation3 + $0x328] sm:$0xff]
        %v659 = vld [vmem:[#allocation3 + $0x330] sm:$0xff]
        %v660 = vld [vmem:[#allocation3 + $0x338] sm:$0xff]
        %v661 = vld [vmem:[#allocation3 + $0x340] sm:$0xff]
        %v662 = vld [vmem:[#allocation3 + $0x348] sm:$0xff]
        %v663 = vld [vmem:[#allocation3 + $0x350] sm:$0xff]
        %v664 = vld [vmem:[#allocation3 + $0x358] sm:$0xff]
        %v665 = vld [vmem:[#allocation3 + $0x360] sm:$0xff]
        %v666 = vld [vmem:[#allocation3 + $0x368] sm:$0xff]
        %v667 = vld [vmem:[#allocation3 + $0x370] sm:$0xff]
        %v668 = vld [vmem:[#allocation3 + $0x378] sm:$0xff]
        %v669 = vld [vmem:[#allocation3 + $0x380] sm:$0xff]
        %v670 = vld [vmem:[#allocation3 + $0x388] sm:$0xff]
        %v671 = vld [vmem:[#allocation3 + $0x390] sm:$0xff]
        %v672 = vld [vmem:[#allocation3 + $0x398] sm:$0xff]
        %v673 = vld [vmem:[#allocation3 + $0x3a0] sm:$0xff]
        %v674 = vld [vmem:[#allocation3 + $0x3a8] sm:$0xff]
        %v675 = vld [vmem:[#allocation3 + $0x3b0] sm:$0xff]
        %v676 = vld [vmem:[#allocation3 + $0x3b8] sm:$0xff]
        %v677 = vld [vmem:[#allocation3 + $0x3c0] sm:$0xff]
        %v678 = vld [vmem:[#allocation3 + $0x3c8] sm:$0xff]
        %v679 = vld [vmem:[#allocation3 + $0x3d0] sm:$0xff]
        %v680 = vld [vmem:[#allocation3 + $0x3d8] sm:$0xff]
        %v681 = vld [vmem:[#allocation3 + $0x3e0] sm:$0xff]
        %v682 = vld [vmem:[#allocation3 + $0x3e8] sm:$0xff]
        %v683 = vld [vmem:[#allocation3 + $0x3f0] sm:$0xff]
        %v684 = vld [vmem:[#allocation3 + $0x3f8] sm:$0xff]
        %v685 = vld [vmem:[#allocation5] sm:$0xf]
        %v687 = vperm.slane %v685, 0
        %v688 = vperm.slane %v685, 1
        %v689 = vperm.slane %v685, 2
        %v690 = vperm.slane %v685, 3
        %695 = vmatpush.msra.mxu0 %v617
        %696 = vmatpush.msra.mxu0 %v613
        %697 = vmatpush.msra.mxu0 %v609
        %698 = vmatpush.msra.mxu0 %v605
        %699 = vmatpush.msra.mxu0 %v601
        %700 = vmatpush.msra.mxu0 %v597
        %701 = vmatpush.msra.mxu0 %v593
        %702 = vmatpush.msra.mxu0 %v589
        %703 = vmatpush.msra.mxu0 %v585
        %704 = vmatpush.msra.mxu0 %v581
        %705 = vmatpush.msra.mxu0 %v577
        %706 = vmatpush.msra.mxu0 %v573
        %707 = vmatpush.msra.mxu0 %v569
        %708 = vmatpush.msra.mxu0 %v565
        %709 = vmatpush.msra.mxu0 %v561
        %710 = vmatpush.msra.mxu0 %v557
        %711 = vmatmul.f32.gmra.mxu0 %v553
        %v712 = vpop.f32.mrf.mxu0
        %v713 = vadd.f32 %v687, %v712
        %714 = vmatmul.f32.gmra.mxu0 %v555
        %v715 = vpop.f32.mrf.mxu0
        %v716 = vadd.f32 %v687, %v715
        %717 = vdwg.mxu0
        %718 = vmatpush.msra.mxu0 %v681
        %719 = vmatpush.msra.mxu0 %v677
        %720 = vmatpush.msra.mxu0 %v673
        %721 = vmatpush.msra.mxu0 %v669
        %722 = vmatpush.msra.mxu0 %v665
        %723 = vmatpush.msra.mxu0 %v661
        %724 = vmatpush.msra.mxu0 %v657
        %725 = vmatpush.msra.mxu0 %v653
        %726 = vmatpush.msra.mxu0 %v649
        %727 = vmatpush.msra.mxu0 %v645
        %728 = vmatpush.msra.mxu0 %v641
        %729 = vmatpush.msra.mxu0 %v637
        %730 = vmatpush.msra.mxu0 %v633
        %731 = vmatpush.msra.mxu0 %v629
        %732 = vmatpush.msra.mxu0 %v625
        %733 = vmatpush.msra.mxu0 %v621
        %734 = vmatmul.f32.gmra.mxu0 %v554
        %v735 = vpop.f32.mrf.mxu0
        %v736 = vadd.f32 %v713, %v735
        %737 = vmatmul.f32.gmra.mxu0 %v556
        %v738 = vpop.f32.mrf.mxu0
        %v739 = vadd.f32 %v716, %v738
        %740 = vdwg.mxu0
        %741 = vmatpush.msra.mxu0 %v618
        %742 = vmatpush.msra.mxu0 %v614
        %743 = vmatpush.msra.mxu0 %v610
        %744 = vmatpush.msra.mxu0 %v606
        %745 = vmatpush.msra.mxu0 %v602
        %746 = vmatpush.msra.mxu0 %v598
        %747 = vmatpush.msra.mxu0 %v594
        %748 = vmatpush.msra.mxu0 %v590
        %749 = vmatpush.msra.mxu0 %v586
        %750 = vmatpush.msra.mxu0 %v582
        %751 = vmatpush.msra.mxu0 %v578
        %752 = vmatpush.msra.mxu0 %v574
        %753 = vmatpush.msra.mxu0 %v570
        %754 = vmatpush.msra.mxu0 %v566
        %755 = vmatpush.msra.mxu0 %v562
        %756 = vmatpush.msra.mxu0 %v558
        %757 = vmatmul.f32.gmra.mxu0 %v553
        %v758 = vpop.f32.mrf.mxu0
        %v759 = vadd.f32 %v688, %v758
        %760 = vmatmul.f32.gmra.mxu0 %v555
        %v761 = vpop.f32.mrf.mxu0
        %v762 = vadd.f32 %v688, %v761
        %763 = vdwg.mxu0
        %764 = vmatpush.msra.mxu0 %v682
        %765 = vmatpush.msra.mxu0 %v678
        %766 = vmatpush.msra.mxu0 %v674
        %767 = vmatpush.msra.mxu0 %v670
        %768 = vmatpush.msra.mxu0 %v666
        %769 = vmatpush.msra.mxu0 %v662
        %770 = vmatpush.msra.mxu0 %v658
        %771 = vmatpush.msra.mxu0 %v654
        %772 = vmatpush.msra.mxu0 %v650
        %773 = vmatpush.msra.mxu0 %v646
        %774 = vmatpush.msra.mxu0 %v642
        %775 = vmatpush.msra.mxu0 %v638
        %776 = vmatpush.msra.mxu0 %v634
        %777 = vmatpush.msra.mxu0 %v630
        %778 = vmatpush.msra.mxu0 %v626
        %779 = vmatpush.msra.mxu0 %v622
        %780 = vmatmul.f32.gmra.mxu0 %v554
        %v781 = vpop.f32.mrf.mxu0
        %v782 = vadd.f32 %v759, %v781
        %783 = vmatmul.f32.gmra.mxu0 %v556
        %v784 = vpop.f32.mrf.mxu0
        %v785 = vadd.f32 %v762, %v784
        %786 = vdwg.mxu0
        %787 = vmatpush.msra.mxu0 %v619
        %788 = vmatpush.msra.mxu0 %v615
        %789 = vmatpush.msra.mxu0 %v611
        %790 = vmatpush.msra.mxu0 %v607
        %791 = vmatpush.msra.mxu0 %v603
        %792 = vmatpush.msra.mxu0 %v599
        %793 = vmatpush.msra.mxu0 %v595
        %794 = vmatpush.msra.mxu0 %v591
        %795 = vmatpush.msra.mxu0 %v587
        %796 = vmatpush.msra.mxu0 %v583
        %797 = vmatpush.msra.mxu0 %v579
        %798 = vmatpush.msra.mxu0 %v575
        %799 = vmatpush.msra.mxu0 %v571
        %800 = vmatpush.msra.mxu0 %v567
        %801 = vmatpush.msra.mxu0 %v563
        %802 = vmatpush.msra.mxu0 %v559
        %803 = vmatmul.f32.gmra.mxu0 %v553
        %v804 = vpop.f32.mrf.mxu0
        %v805 = vadd.f32 %v689, %v804
        %806 = vmatmul.f32.gmra.mxu0 %v555
        %v807 = vpop.f32.mrf.mxu0
        %v808 = vadd.f32 %v689, %v807
        %809 = vdwg.mxu0
        %810 = vmatpush.msra.mxu0 %v683
        %811 = vmatpush.msra.mxu0 %v679
        %812 = vmatpush.msra.mxu0 %v675
        %813 = vmatpush.msra.mxu0 %v671
        %814 = vmatpush.msra.mxu0 %v667
        %815 = vmatpush.msra.mxu0 %v663
        %816 = vmatpush.msra.mxu0 %v659
        %817 = vmatpush.msra.mxu0 %v655
        %818 = vmatpush.msra.mxu0 %v651
        %819 = vmatpush.msra.mxu0 %v647
        %820 = vmatpush.msra.mxu0 %v643
        %821 = vmatpush.msra.mxu0 %v639
        %822 = vmatpush.msra.mxu0 %v635
        %823 = vmatpush.msra.mxu0 %v631
        %824 = vmatpush.msra.mxu0 %v627
        %825 = vmatpush.msra.mxu0 %v623
        %826 = vmatmul.f32.gmra.mxu0 %v554
        %v827 = vpop.f32.mrf.mxu0
        %v828 = vadd.f32 %v805, %v827
        %829 = vmatmul.f32.gmra.mxu0 %v556
        %v830 = vpop.f32.mrf.mxu0
        %v831 = vadd.f32 %v808, %v830
        %832 = vdwg.mxu0
        %833 = vmatpush.msra.mxu0 %v620
        %834 = vmatpush.msra.mxu0 %v616
        %835 = vmatpush.msra.mxu0 %v612
        %836 = vmatpush.msra.mxu0 %v608
        %837 = vmatpush.msra.mxu0 %v604
        %838 = vmatpush.msra.mxu0 %v600
        %839 = vmatpush.msra.mxu0 %v596
        %840 = vmatpush.msra.mxu0 %v592
        %841 = vmatpush.msra.mxu0 %v588
        %842 = vmatpush.msra.mxu0 %v584
        %843 = vmatpush.msra.mxu0 %v580
        %844 = vmatpush.msra.mxu0 %v576
        %845 = vmatpush.msra.mxu0 %v572
        %846 = vmatpush.msra.mxu0 %v568
        %847 = vmatpush.msra.mxu0 %v564
        %848 = vmatpush.msra.mxu0 %v560
        %849 = vmatmul.f32.gmra.mxu0 %v553
        %v850 = vpop.f32.mrf.mxu0
        %v851 = vadd.f32 %v690, %v850
        %852 = vmatmul.f32.gmra.mxu0 %v555
        %v853 = vpop.f32.mrf.mxu0
        %v854 = vadd.f32 %v690, %v853
        %855 = vdwg.mxu0
        %856 = vmatpush.msra.mxu0 %v684
        %857 = vmatpush.msra.mxu0 %v680
        %858 = vmatpush.msra.mxu0 %v676
        %859 = vmatpush.msra.mxu0 %v672
        %860 = vmatpush.msra.mxu0 %v668
        %861 = vmatpush.msra.mxu0 %v664
        %862 = vmatpush.msra.mxu0 %v660
        %863 = vmatpush.msra.mxu0 %v656
        %864 = vmatpush.msra.mxu0 %v652
        %865 = vmatpush.msra.mxu0 %v648
        %866 = vmatpush.msra.mxu0 %v644
        %867 = vmatpush.msra.mxu0 %v640
        %868 = vmatpush.msra.mxu0 %v636
        %869 = vmatpush.msra.mxu0 %v632
        %870 = vmatpush.msra.mxu0 %v628
        %871 = vmatpush.msra.mxu0 %v624
        %872 = vmatmul.f32.gmra.mxu0 %v554
        %v873 = vpop.f32.mrf.mxu0
        %v874 = vadd.f32 %v851, %v873
        %875 = vmatmul.f32.gmra.mxu0 %v556
        %v876 = vpop.f32.mrf.mxu0
        %v877 = vadd.f32 %v854, %v876
        %878 = vdwg.mxu0
        %v879 = vld [vmem:[#allocation7] sm:$0xff]
        %v880 = vld [vmem:[#allocation7 + $0x8] sm:$0xff]
        %v881 = vld [vmem:[#allocation7 + $0x10] sm:$0xff]
        %v882 = vld [vmem:[#allocation7 + $0x18] sm:$0xff]
        %v883 = vld [vmem:[#allocation7 + $0x20] sm:$0xff]
        %v884 = vld [vmem:[#allocation7 + $0x28] sm:$0xff]
        %v885 = vld [vmem:[#allocation7 + $0x30] sm:$0xff]
        %v886 = vld [vmem:[#allocation7 + $0x38] sm:$0xff]
        %v887 = vld [vmem:[#allocation7 + $0x40] sm:$0xff]
        %v888 = vld [vmem:[#allocation7 + $0x48] sm:$0xff]
        %v889 = vld [vmem:[#allocation7 + $0x50] sm:$0xff]
        %v890 = vld [vmem:[#allocation7 + $0x58] sm:$0xff]
        %v891 = vld [vmem:[#allocation7 + $0x60] sm:$0xff]
        %v892 = vld [vmem:[#allocation7 + $0x68] sm:$0xff]
        %v893 = vld [vmem:[#allocation7 + $0x70] sm:$0xff]
        %v894 = vld [vmem:[#allocation7 + $0x78] sm:$0xff]
        %v895 = vld [vmem:[#allocation7 + $0x80] sm:$0xff]
        %v896 = vld [vmem:[#allocation7 + $0x88] sm:$0xff]
        %v897 = vld [vmem:[#allocation7 + $0x90] sm:$0xff]
        %v898 = vld [vmem:[#allocation7 + $0x98] sm:$0xff]
        %v899 = vld [vmem:[#allocation7 + $0xa0] sm:$0xff]
        %v900 = vld [vmem:[#allocation7 + $0xa8] sm:$0xff]
        %v901 = vld [vmem:[#allocation7 + $0xb0] sm:$0xff]
        %v902 = vld [vmem:[#allocation7 + $0xb8] sm:$0xff]
        %v903 = vld [vmem:[#allocation7 + $0xc0] sm:$0xff]
        %v904 = vld [vmem:[#allocation7 + $0xc8] sm:$0xff]
        %v905 = vld [vmem:[#allocation7 + $0xd0] sm:$0xff]
        %v906 = vld [vmem:[#allocation7 + $0xd8] sm:$0xff]
        %v907 = vld [vmem:[#allocation7 + $0xe0] sm:$0xff]
        %v908 = vld [vmem:[#allocation7 + $0xe8] sm:$0xff]
        %v909 = vld [vmem:[#allocation7 + $0xf0] sm:$0xff]
        %v910 = vld [vmem:[#allocation7 + $0xf8] sm:$0xff]
        %v911 = vld [vmem:[#allocation7 + $0x100] sm:$0xff]
        %v912 = vld [vmem:[#allocation7 + $0x108] sm:$0xff]
        %v913 = vld [vmem:[#allocation7 + $0x110] sm:$0xff]
        %v914 = vld [vmem:[#allocation7 + $0x118] sm:$0xff]
        %v915 = vld [vmem:[#allocation7 + $0x120] sm:$0xff]
        %v916 = vld [vmem:[#allocation7 + $0x128] sm:$0xff]
        %v917 = vld [vmem:[#allocation7 + $0x130] sm:$0xff]
        %v918 = vld [vmem:[#allocation7 + $0x138] sm:$0xff]
        %v919 = vld [vmem:[#allocation7 + $0x140] sm:$0xff]
        %v920 = vld [vmem:[#allocation7 + $0x148] sm:$0xff]
        %v921 = vld [vmem:[#allocation7 + $0x150] sm:$0xff]
        %v922 = vld [vmem:[#allocation7 + $0x158] sm:$0xff]
        %v923 = vld [vmem:[#allocation7 + $0x160] sm:$0xff]
        %v924 = vld [vmem:[#allocation7 + $0x168] sm:$0xff]
        %v925 = vld [vmem:[#allocation7 + $0x170] sm:$0xff]
        %v926 = vld [vmem:[#allocation7 + $0x178] sm:$0xff]
        %v927 = vld [vmem:[#allocation7 + $0x180] sm:$0xff]
        %v928 = vld [vmem:[#allocation7 + $0x188] sm:$0xff]
        %v929 = vld [vmem:[#allocation7 + $0x190] sm:$0xff]
        %v930 = vld [vmem:[#allocation7 + $0x198] sm:$0xff]
        %v931 = vld [vmem:[#allocation7 + $0x1a0] sm:$0xff]
        %v932 = vld [vmem:[#allocation7 + $0x1a8] sm:$0xff]
        %v933 = vld [vmem:[#allocation7 + $0x1b0] sm:$0xff]
        %v934 = vld [vmem:[#allocation7 + $0x1b8] sm:$0xff]
        %v935 = vld [vmem:[#allocation7 + $0x1c0] sm:$0xff]
        %v936 = vld [vmem:[#allocation7 + $0x1c8] sm:$0xff]
        %v937 = vld [vmem:[#allocation7 + $0x1d0] sm:$0xff]
        %v938 = vld [vmem:[#allocation7 + $0x1d8] sm:$0xff]
        %v939 = vld [vmem:[#allocation7 + $0x1e0] sm:$0xff]
        %v940 = vld [vmem:[#allocation7 + $0x1e8] sm:$0xff]
        %v941 = vld [vmem:[#allocation7 + $0x1f0] sm:$0xff]
        %v942 = vld [vmem:[#allocation7 + $0x1f8] sm:$0xff]
        %v943 = vld [vmem:[#allocation7 + $0x200] sm:$0xff]
        %v944 = vld [vmem:[#allocation7 + $0x208] sm:$0xff]
        %v945 = vld [vmem:[#allocation7 + $0x210] sm:$0xff]
        %v946 = vld [vmem:[#allocation7 + $0x218] sm:$0xff]
        %v947 = vld [vmem:[#allocation7 + $0x220] sm:$0xff]
        %v948 = vld [vmem:[#allocation7 + $0x228] sm:$0xff]
        %v949 = vld [vmem:[#allocation7 + $0x230] sm:$0xff]
        %v950 = vld [vmem:[#allocation7 + $0x238] sm:$0xff]
        %v951 = vld [vmem:[#allocation7 + $0x240] sm:$0xff]
        %v952 = vld [vmem:[#allocation7 + $0x248] sm:$0xff]
        %v953 = vld [vmem:[#allocation7 + $0x250] sm:$0xff]
        %v954 = vld [vmem:[#allocation7 + $0x258] sm:$0xff]
        %v955 = vld [vmem:[#allocation7 + $0x260] sm:$0xff]
        %v956 = vld [vmem:[#allocation7 + $0x268] sm:$0xff]
        %v957 = vld [vmem:[#allocation7 + $0x270] sm:$0xff]
        %v958 = vld [vmem:[#allocation7 + $0x278] sm:$0xff]
        %v959 = vld [vmem:[#allocation7 + $0x280] sm:$0xff]
        %v960 = vld [vmem:[#allocation7 + $0x288] sm:$0xff]
        %v961 = vld [vmem:[#allocation7 + $0x290] sm:$0xff]
        %v962 = vld [vmem:[#allocation7 + $0x298] sm:$0xff]
        %v963 = vld [vmem:[#allocation7 + $0x2a0] sm:$0xff]
        %v964 = vld [vmem:[#allocation7 + $0x2a8] sm:$0xff]
        %v965 = vld [vmem:[#allocation7 + $0x2b0] sm:$0xff]
        %v966 = vld [vmem:[#allocation7 + $0x2b8] sm:$0xff]
        %v967 = vld [vmem:[#allocation7 + $0x2c0] sm:$0xff]
        %v968 = vld [vmem:[#allocation7 + $0x2c8] sm:$0xff]
        %v969 = vld [vmem:[#allocation7 + $0x2d0] sm:$0xff]
        %v970 = vld [vmem:[#allocation7 + $0x2d8] sm:$0xff]
        %v971 = vld [vmem:[#allocation7 + $0x2e0] sm:$0xff]
        %v972 = vld [vmem:[#allocation7 + $0x2e8] sm:$0xff]
        %v973 = vld [vmem:[#allocation7 + $0x2f0] sm:$0xff]
        %v974 = vld [vmem:[#allocation7 + $0x2f8] sm:$0xff]
        %v975 = vld [vmem:[#allocation7 + $0x300] sm:$0xff]
        %v976 = vld [vmem:[#allocation7 + $0x308] sm:$0xff]
        %v977 = vld [vmem:[#allocation7 + $0x310] sm:$0xff]
        %v978 = vld [vmem:[#allocation7 + $0x318] sm:$0xff]
        %v979 = vld [vmem:[#allocation7 + $0x320] sm:$0xff]
        %v980 = vld [vmem:[#allocation7 + $0x328] sm:$0xff]
        %v981 = vld [vmem:[#allocation7 + $0x330] sm:$0xff]
        %v982 = vld [vmem:[#allocation7 + $0x338] sm:$0xff]
        %v983 = vld [vmem:[#allocation7 + $0x340] sm:$0xff]
        %v984 = vld [vmem:[#allocation7 + $0x348] sm:$0xff]
        %v985 = vld [vmem:[#allocation7 + $0x350] sm:$0xff]
        %v986 = vld [vmem:[#allocation7 + $0x358] sm:$0xff]
        %v987 = vld [vmem:[#allocation7 + $0x360] sm:$0xff]
        %v988 = vld [vmem:[#allocation7 + $0x368] sm:$0xff]
        %v989 = vld [vmem:[#allocation7 + $0x370] sm:$0xff]
        %v990 = vld [vmem:[#allocation7 + $0x378] sm:$0xff]
        %v991 = vld [vmem:[#allocation7 + $0x380] sm:$0xff]
        %v992 = vld [vmem:[#allocation7 + $0x388] sm:$0xff]
        %v993 = vld [vmem:[#allocation7 + $0x390] sm:$0xff]
        %v994 = vld [vmem:[#allocation7 + $0x398] sm:$0xff]
        %v995 = vld [vmem:[#allocation7 + $0x3a0] sm:$0xff]
        %v996 = vld [vmem:[#allocation7 + $0x3a8] sm:$0xff]
        %v997 = vld [vmem:[#allocation7 + $0x3b0] sm:$0xff]
        %v998 = vld [vmem:[#allocation7 + $0x3b8] sm:$0xff]
        %v999 = vld [vmem:[#allocation7 + $0x3c0] sm:$0xff]
        %v1000 = vld [vmem:[#allocation7 + $0x3c8] sm:$0xff]
        %v1001 = vld [vmem:[#allocation7 + $0x3d0] sm:$0xff]
        %v1002 = vld [vmem:[#allocation7 + $0x3d8] sm:$0xff]
        %v1003 = vld [vmem:[#allocation7 + $0x3e0] sm:$0xff]
        %v1004 = vld [vmem:[#allocation7 + $0x3e8] sm:$0xff]
        %v1005 = vld [vmem:[#allocation7 + $0x3f0] sm:$0xff]
        %v1006 = vld [vmem:[#allocation7 + $0x3f8] sm:$0xff]
        %v1007 = vld [vmem:[#allocation7 + $0x400] sm:$0xff]
        %v1008 = vld [vmem:[#allocation7 + $0x408] sm:$0xff]
        %v1009 = vld [vmem:[#allocation7 + $0x410] sm:$0xff]
        %v1010 = vld [vmem:[#allocation7 + $0x418] sm:$0xff]
        %v1011 = vld [vmem:[#allocation7 + $0x420] sm:$0xff]
        %v1012 = vld [vmem:[#allocation7 + $0x428] sm:$0xff]
        %v1013 = vld [vmem:[#allocation7 + $0x430] sm:$0xff]
        %v1014 = vld [vmem:[#allocation7 + $0x438] sm:$0xff]
        %v1015 = vld [vmem:[#allocation7 + $0x440] sm:$0xff]
        %v1016 = vld [vmem:[#allocation7 + $0x448] sm:$0xff]
        %v1017 = vld [vmem:[#allocation7 + $0x450] sm:$0xff]
        %v1018 = vld [vmem:[#allocation7 + $0x458] sm:$0xff]
        %v1019 = vld [vmem:[#allocation7 + $0x460] sm:$0xff]
        %v1020 = vld [vmem:[#allocation7 + $0x468] sm:$0xff]
        %v1021 = vld [vmem:[#allocation7 + $0x470] sm:$0xff]
        %v1022 = vld [vmem:[#allocation7 + $0x478] sm:$0xff]
        %v1023 = vld [vmem:[#allocation7 + $0x480] sm:$0xff]
        %v1024 = vld [vmem:[#allocation7 + $0x488] sm:$0xff]
        %v1025 = vld [vmem:[#allocation7 + $0x490] sm:$0xff]
        %v1026 = vld [vmem:[#allocation7 + $0x498] sm:$0xff]
        %v1027 = vld [vmem:[#allocation7 + $0x4a0] sm:$0xff]
        %v1028 = vld [vmem:[#allocation7 + $0x4a8] sm:$0xff]
        %v1029 = vld [vmem:[#allocation7 + $0x4b0] sm:$0xff]
        %v1030 = vld [vmem:[#allocation7 + $0x4b8] sm:$0xff]
        %v1031 = vld [vmem:[#allocation7 + $0x4c0] sm:$0xff]
        %v1032 = vld [vmem:[#allocation7 + $0x4c8] sm:$0xff]
        %v1033 = vld [vmem:[#allocation7 + $0x4d0] sm:$0xff]
        %v1034 = vld [vmem:[#allocation7 + $0x4d8] sm:$0xff]
        %v1035 = vld [vmem:[#allocation7 + $0x4e0] sm:$0xff]
        %v1036 = vld [vmem:[#allocation7 + $0x4e8] sm:$0xff]
        %v1037 = vld [vmem:[#allocation7 + $0x4f0] sm:$0xff]
        %v1038 = vld [vmem:[#allocation7 + $0x4f8] sm:$0xff]
        %v1039 = vld [vmem:[#allocation7 + $0x500] sm:$0xff]
        %v1040 = vld [vmem:[#allocation7 + $0x508] sm:$0xff]
        %v1041 = vld [vmem:[#allocation7 + $0x510] sm:$0xff]
        %v1042 = vld [vmem:[#allocation7 + $0x518] sm:$0xff]
        %v1043 = vld [vmem:[#allocation7 + $0x520] sm:$0xff]
        %v1044 = vld [vmem:[#allocation7 + $0x528] sm:$0xff]
        %v1045 = vld [vmem:[#allocation7 + $0x530] sm:$0xff]
        %v1046 = vld [vmem:[#allocation7 + $0x538] sm:$0xff]
        %v1047 = vld [vmem:[#allocation7 + $0x540] sm:$0xff]
        %v1048 = vld [vmem:[#allocation7 + $0x548] sm:$0xff]
        %v1049 = vld [vmem:[#allocation7 + $0x550] sm:$0xff]
        %v1050 = vld [vmem:[#allocation7 + $0x558] sm:$0xff]
        %v1051 = vld [vmem:[#allocation7 + $0x560] sm:$0xff]
        %v1052 = vld [vmem:[#allocation7 + $0x568] sm:$0xff]
        %v1053 = vld [vmem:[#allocation7 + $0x570] sm:$0xff]
        %v1054 = vld [vmem:[#allocation7 + $0x578] sm:$0xff]
        %v1055 = vld [vmem:[#allocation7 + $0x580] sm:$0xff]
        %v1056 = vld [vmem:[#allocation7 + $0x588] sm:$0xff]
        %v1057 = vld [vmem:[#allocation7 + $0x590] sm:$0xff]
        %v1058 = vld [vmem:[#allocation7 + $0x598] sm:$0xff]
        %v1059 = vld [vmem:[#allocation7 + $0x5a0] sm:$0xff]
        %v1060 = vld [vmem:[#allocation7 + $0x5a8] sm:$0xff]
        %v1061 = vld [vmem:[#allocation7 + $0x5b0] sm:$0xff]
        %v1062 = vld [vmem:[#allocation7 + $0x5b8] sm:$0xff]
        %v1063 = vld [vmem:[#allocation7 + $0x5c0] sm:$0xff]
        %v1064 = vld [vmem:[#allocation7 + $0x5c8] sm:$0xff]
        %v1065 = vld [vmem:[#allocation7 + $0x5d0] sm:$0xff]
        %v1066 = vld [vmem:[#allocation7 + $0x5d8] sm:$0xff]
        %v1067 = vld [vmem:[#allocation7 + $0x5e0] sm:$0xff]
        %v1068 = vld [vmem:[#allocation7 + $0x5e8] sm:$0xff]
        %v1069 = vld [vmem:[#allocation7 + $0x5f0] sm:$0xff]
        %v1070 = vld [vmem:[#allocation7 + $0x5f8] sm:$0xff]
        %v1071 = vld [vmem:[#allocation7 + $0x600] sm:$0xff]
        %v1072 = vld [vmem:[#allocation7 + $0x608] sm:$0xff]
        %v1073 = vld [vmem:[#allocation7 + $0x610] sm:$0xff]
        %v1074 = vld [vmem:[#allocation7 + $0x618] sm:$0xff]
        %v1075 = vld [vmem:[#allocation7 + $0x620] sm:$0xff]
        %v1076 = vld [vmem:[#allocation7 + $0x628] sm:$0xff]
        %v1077 = vld [vmem:[#allocation7 + $0x630] sm:$0xff]
        %v1078 = vld [vmem:[#allocation7 + $0x638] sm:$0xff]
        %v1079 = vld [vmem:[#allocation7 + $0x640] sm:$0xff]
        %v1080 = vld [vmem:[#allocation7 + $0x648] sm:$0xff]
        %v1081 = vld [vmem:[#allocation7 + $0x650] sm:$0xff]
        %v1082 = vld [vmem:[#allocation7 + $0x658] sm:$0xff]
        %v1083 = vld [vmem:[#allocation7 + $0x660] sm:$0xff]
        %v1084 = vld [vmem:[#allocation7 + $0x668] sm:$0xff]
        %v1085 = vld [vmem:[#allocation7 + $0x670] sm:$0xff]
        %v1086 = vld [vmem:[#allocation7 + $0x678] sm:$0xff]
        %v1087 = vld [vmem:[#allocation7 + $0x680] sm:$0xff]
        %v1088 = vld [vmem:[#allocation7 + $0x688] sm:$0xff]
        %v1089 = vld [vmem:[#allocation7 + $0x690] sm:$0xff]
        %v1090 = vld [vmem:[#allocation7 + $0x698] sm:$0xff]
        %v1091 = vld [vmem:[#allocation7 + $0x6a0] sm:$0xff]
        %v1092 = vld [vmem:[#allocation7 + $0x6a8] sm:$0xff]
        %v1093 = vld [vmem:[#allocation7 + $0x6b0] sm:$0xff]
        %v1094 = vld [vmem:[#allocation7 + $0x6b8] sm:$0xff]
        %v1095 = vld [vmem:[#allocation7 + $0x6c0] sm:$0xff]
        %v1096 = vld [vmem:[#allocation7 + $0x6c8] sm:$0xff]
        %v1097 = vld [vmem:[#allocation7 + $0x6d0] sm:$0xff]
        %v1098 = vld [vmem:[#allocation7 + $0x6d8] sm:$0xff]
        %v1099 = vld [vmem:[#allocation7 + $0x6e0] sm:$0xff]
        %v1100 = vld [vmem:[#allocation7 + $0x6e8] sm:$0xff]
        %v1101 = vld [vmem:[#allocation7 + $0x6f0] sm:$0xff]
        %v1102 = vld [vmem:[#allocation7 + $0x6f8] sm:$0xff]
        %v1103 = vld [vmem:[#allocation7 + $0x700] sm:$0xff]
        %v1104 = vld [vmem:[#allocation7 + $0x708] sm:$0xff]
        %v1105 = vld [vmem:[#allocation7 + $0x710] sm:$0xff]
        %v1106 = vld [vmem:[#allocation7 + $0x718] sm:$0xff]
        %v1107 = vld [vmem:[#allocation7 + $0x720] sm:$0xff]
        %v1108 = vld [vmem:[#allocation7 + $0x728] sm:$0xff]
        %v1109 = vld [vmem:[#allocation7 + $0x730] sm:$0xff]
        %v1110 = vld [vmem:[#allocation7 + $0x738] sm:$0xff]
        %v1111 = vld [vmem:[#allocation7 + $0x740] sm:$0xff]
        %v1112 = vld [vmem:[#allocation7 + $0x748] sm:$0xff]
        %v1113 = vld [vmem:[#allocation7 + $0x750] sm:$0xff]
        %v1114 = vld [vmem:[#allocation7 + $0x758] sm:$0xff]
        %v1115 = vld [vmem:[#allocation7 + $0x760] sm:$0xff]
        %v1116 = vld [vmem:[#allocation7 + $0x768] sm:$0xff]
        %v1117 = vld [vmem:[#allocation7 + $0x770] sm:$0xff]
        %v1118 = vld [vmem:[#allocation7 + $0x778] sm:$0xff]
        %v1119 = vld [vmem:[#allocation7 + $0x780] sm:$0xff]
        %v1120 = vld [vmem:[#allocation7 + $0x788] sm:$0xff]
        %v1121 = vld [vmem:[#allocation7 + $0x790] sm:$0xff]
        %v1122 = vld [vmem:[#allocation7 + $0x798] sm:$0xff]
        %v1123 = vld [vmem:[#allocation7 + $0x7a0] sm:$0xff]
        %v1124 = vld [vmem:[#allocation7 + $0x7a8] sm:$0xff]
        %v1125 = vld [vmem:[#allocation7 + $0x7b0] sm:$0xff]
        %v1126 = vld [vmem:[#allocation7 + $0x7b8] sm:$0xff]
        %v1127 = vld [vmem:[#allocation7 + $0x7c0] sm:$0xff]
        %v1128 = vld [vmem:[#allocation7 + $0x7c8] sm:$0xff]
        %v1129 = vld [vmem:[#allocation7 + $0x7d0] sm:$0xff]
        %v1130 = vld [vmem:[#allocation7 + $0x7d8] sm:$0xff]
        %v1131 = vld [vmem:[#allocation7 + $0x7e0] sm:$0xff]
        %v1132 = vld [vmem:[#allocation7 + $0x7e8] sm:$0xff]
        %v1133 = vld [vmem:[#allocation7 + $0x7f0] sm:$0xff]
        %v1134 = vld [vmem:[#allocation7 + $0x7f8] sm:$0xff]
        %v1135 = vld [vmem:[#allocation7 + $0x800] sm:$0xff]
        %v1136 = vld [vmem:[#allocation7 + $0x808] sm:$0xff]
        %v1137 = vld [vmem:[#allocation7 + $0x810] sm:$0xff]
        %v1138 = vld [vmem:[#allocation7 + $0x818] sm:$0xff]
        %v1139 = vld [vmem:[#allocation7 + $0x820] sm:$0xff]
        %v1140 = vld [vmem:[#allocation7 + $0x828] sm:$0xff]
        %v1141 = vld [vmem:[#allocation7 + $0x830] sm:$0xff]
        %v1142 = vld [vmem:[#allocation7 + $0x838] sm:$0xff]
        %v1143 = vld [vmem:[#allocation7 + $0x840] sm:$0xff]
        %v1144 = vld [vmem:[#allocation7 + $0x848] sm:$0xff]
        %v1145 = vld [vmem:[#allocation7 + $0x850] sm:$0xff]
        %v1146 = vld [vmem:[#allocation7 + $0x858] sm:$0xff]
        %v1147 = vld [vmem:[#allocation7 + $0x860] sm:$0xff]
        %v1148 = vld [vmem:[#allocation7 + $0x868] sm:$0xff]
        %v1149 = vld [vmem:[#allocation7 + $0x870] sm:$0xff]
        %v1150 = vld [vmem:[#allocation7 + $0x878] sm:$0xff]
        %v1151 = vld [vmem:[#allocation7 + $0x880] sm:$0xff]
        %v1152 = vld [vmem:[#allocation7 + $0x888] sm:$0xff]
        %v1153 = vld [vmem:[#allocation7 + $0x890] sm:$0xff]
        %v1154 = vld [vmem:[#allocation7 + $0x898] sm:$0xff]
        %v1155 = vld [vmem:[#allocation7 + $0x8a0] sm:$0xff]
        %v1156 = vld [vmem:[#allocation7 + $0x8a8] sm:$0xff]
        %v1157 = vld [vmem:[#allocation7 + $0x8b0] sm:$0xff]
        %v1158 = vld [vmem:[#allocation7 + $0x8b8] sm:$0xff]
        %v1159 = vld [vmem:[#allocation7 + $0x8c0] sm:$0xff]
        %v1160 = vld [vmem:[#allocation7 + $0x8c8] sm:$0xff]
        %v1161 = vld [vmem:[#allocation7 + $0x8d0] sm:$0xff]
        %v1162 = vld [vmem:[#allocation7 + $0x8d8] sm:$0xff]
        %v1163 = vld [vmem:[#allocation7 + $0x8e0] sm:$0xff]
        %v1164 = vld [vmem:[#allocation7 + $0x8e8] sm:$0xff]
        %v1165 = vld [vmem:[#allocation7 + $0x8f0] sm:$0xff]
        %v1166 = vld [vmem:[#allocation7 + $0x8f8] sm:$0xff]
        %v1167 = vld [vmem:[#allocation7 + $0x900] sm:$0xff]
        %v1168 = vld [vmem:[#allocation7 + $0x908] sm:$0xff]
        %v1169 = vld [vmem:[#allocation7 + $0x910] sm:$0xff]
        %v1170 = vld [vmem:[#allocation7 + $0x918] sm:$0xff]
        %v1171 = vld [vmem:[#allocation7 + $0x920] sm:$0xff]
        %v1172 = vld [vmem:[#allocation7 + $0x928] sm:$0xff]
        %v1173 = vld [vmem:[#allocation7 + $0x930] sm:$0xff]
        %v1174 = vld [vmem:[#allocation7 + $0x938] sm:$0xff]
        %v1175 = vld [vmem:[#allocation7 + $0x940] sm:$0xff]
        %v1176 = vld [vmem:[#allocation7 + $0x948] sm:$0xff]
        %v1177 = vld [vmem:[#allocation7 + $0x950] sm:$0xff]
        %v1178 = vld [vmem:[#allocation7 + $0x958] sm:$0xff]
        %v1179 = vld [vmem:[#allocation7 + $0x960] sm:$0xff]
        %v1180 = vld [vmem:[#allocation7 + $0x968] sm:$0xff]
        %v1181 = vld [vmem:[#allocation7 + $0x970] sm:$0xff]
        %v1182 = vld [vmem:[#allocation7 + $0x978] sm:$0xff]
        %v1183 = vld [vmem:[#allocation7 + $0x980] sm:$0xff]
        %v1184 = vld [vmem:[#allocation7 + $0x988] sm:$0xff]
        %v1185 = vld [vmem:[#allocation7 + $0x990] sm:$0xff]
        %v1186 = vld [vmem:[#allocation7 + $0x998] sm:$0xff]
        %v1187 = vld [vmem:[#allocation7 + $0x9a0] sm:$0xff]
        %v1188 = vld [vmem:[#allocation7 + $0x9a8] sm:$0xff]
        %v1189 = vld [vmem:[#allocation7 + $0x9b0] sm:$0xff]
        %v1190 = vld [vmem:[#allocation7 + $0x9b8] sm:$0xff]
        %v1191 = vld [vmem:[#allocation7 + $0x9c0] sm:$0xff]
        %v1192 = vld [vmem:[#allocation7 + $0x9c8] sm:$0xff]
        %v1193 = vld [vmem:[#allocation7 + $0x9d0] sm:$0xff]
        %v1194 = vld [vmem:[#allocation7 + $0x9d8] sm:$0xff]
        %v1195 = vld [vmem:[#allocation7 + $0x9e0] sm:$0xff]
        %v1196 = vld [vmem:[#allocation7 + $0x9e8] sm:$0xff]
        %v1197 = vld [vmem:[#allocation7 + $0x9f0] sm:$0xff]
        %v1198 = vld [vmem:[#allocation7 + $0x9f8] sm:$0xff]
        %v1199 = vld [vmem:[#allocation7 + $0xa00] sm:$0xff]
        %v1200 = vld [vmem:[#allocation7 + $0xa08] sm:$0xff]
        %v1201 = vld [vmem:[#allocation7 + $0xa10] sm:$0xff]
        %v1202 = vld [vmem:[#allocation7 + $0xa18] sm:$0xff]
        %v1203 = vld [vmem:[#allocation7 + $0xa20] sm:$0xff]
        %v1204 = vld [vmem:[#allocation7 + $0xa28] sm:$0xff]
        %v1205 = vld [vmem:[#allocation7 + $0xa30] sm:$0xff]
        %v1206 = vld [vmem:[#allocation7 + $0xa38] sm:$0xff]
        %v1207 = vld [vmem:[#allocation7 + $0xa40] sm:$0xff]
        %v1208 = vld [vmem:[#allocation7 + $0xa48] sm:$0xff]
        %v1209 = vld [vmem:[#allocation7 + $0xa50] sm:$0xff]
        %v1210 = vld [vmem:[#allocation7 + $0xa58] sm:$0xff]
        %v1211 = vld [vmem:[#allocation7 + $0xa60] sm:$0xff]
        %v1212 = vld [vmem:[#allocation7 + $0xa68] sm:$0xff]
        %v1213 = vld [vmem:[#allocation7 + $0xa70] sm:$0xff]
        %v1214 = vld [vmem:[#allocation7 + $0xa78] sm:$0xff]
        %v1215 = vld [vmem:[#allocation7 + $0xa80] sm:$0xff]
        %v1216 = vld [vmem:[#allocation7 + $0xa88] sm:$0xff]
        %v1217 = vld [vmem:[#allocation7 + $0xa90] sm:$0xff]
        %v1218 = vld [vmem:[#allocation7 + $0xa98] sm:$0xff]
        %v1219 = vld [vmem:[#allocation7 + $0xaa0] sm:$0xff]
        %v1220 = vld [vmem:[#allocation7 + $0xaa8] sm:$0xff]
        %v1221 = vld [vmem:[#allocation7 + $0xab0] sm:$0xff]
        %v1222 = vld [vmem:[#allocation7 + $0xab8] sm:$0xff]
        %v1223 = vld [vmem:[#allocation7 + $0xac0] sm:$0xff]
        %v1224 = vld [vmem:[#allocation7 + $0xac8] sm:$0xff]
        %v1225 = vld [vmem:[#allocation7 + $0xad0] sm:$0xff]
        %v1226 = vld [vmem:[#allocation7 + $0xad8] sm:$0xff]
        %v1227 = vld [vmem:[#allocation7 + $0xae0] sm:$0xff]
        %v1228 = vld [vmem:[#allocation7 + $0xae8] sm:$0xff]
        %v1229 = vld [vmem:[#allocation7 + $0xaf0] sm:$0xff]
        %v1230 = vld [vmem:[#allocation7 + $0xaf8] sm:$0xff]
        %v1231 = vld [vmem:[#allocation7 + $0xb00] sm:$0xff]
        %v1232 = vld [vmem:[#allocation7 + $0xb08] sm:$0xff]
        %v1233 = vld [vmem:[#allocation7 + $0xb10] sm:$0xff]
        %v1234 = vld [vmem:[#allocation7 + $0xb18] sm:$0xff]
        %v1235 = vld [vmem:[#allocation7 + $0xb20] sm:$0xff]
        %v1236 = vld [vmem:[#allocation7 + $0xb28] sm:$0xff]
        %v1237 = vld [vmem:[#allocation7 + $0xb30] sm:$0xff]
        %v1238 = vld [vmem:[#allocation7 + $0xb38] sm:$0xff]
        %v1239 = vld [vmem:[#allocation7 + $0xb40] sm:$0xff]
        %v1240 = vld [vmem:[#allocation7 + $0xb48] sm:$0xff]
        %v1241 = vld [vmem:[#allocation7 + $0xb50] sm:$0xff]
        %v1242 = vld [vmem:[#allocation7 + $0xb58] sm:$0xff]
        %v1243 = vld [vmem:[#allocation7 + $0xb60] sm:$0xff]
        %v1244 = vld [vmem:[#allocation7 + $0xb68] sm:$0xff]
        %v1245 = vld [vmem:[#allocation7 + $0xb70] sm:$0xff]
        %v1246 = vld [vmem:[#allocation7 + $0xb78] sm:$0xff]
        %v1247 = vld [vmem:[#allocation7 + $0xb80] sm:$0xff]
        %v1248 = vld [vmem:[#allocation7 + $0xb88] sm:$0xff]
        %v1249 = vld [vmem:[#allocation7 + $0xb90] sm:$0xff]
        %v1250 = vld [vmem:[#allocation7 + $0xb98] sm:$0xff]
        %v1251 = vld [vmem:[#allocation7 + $0xba0] sm:$0xff]
        %v1252 = vld [vmem:[#allocation7 + $0xba8] sm:$0xff]
        %v1253 = vld [vmem:[#allocation7 + $0xbb0] sm:$0xff]
        %v1254 = vld [vmem:[#allocation7 + $0xbb8] sm:$0xff]
        %v1255 = vld [vmem:[#allocation7 + $0xbc0] sm:$0xff]
        %v1256 = vld [vmem:[#allocation7 + $0xbc8] sm:$0xff]
        %v1257 = vld [vmem:[#allocation7 + $0xbd0] sm:$0xff]
        %v1258 = vld [vmem:[#allocation7 + $0xbd8] sm:$0xff]
        %v1259 = vld [vmem:[#allocation7 + $0xbe0] sm:$0xff]
        %v1260 = vld [vmem:[#allocation7 + $0xbe8] sm:$0xff]
        %v1261 = vld [vmem:[#allocation7 + $0xbf0] sm:$0xff]
        %v1262 = vld [vmem:[#allocation7 + $0xbf8] sm:$0xff]
        %v1263 = vld [vmem:[#allocation7 + $0xc00] sm:$0xff]
        %v1264 = vld [vmem:[#allocation7 + $0xc08] sm:$0xff]
        %v1265 = vld [vmem:[#allocation7 + $0xc10] sm:$0xff]
        %v1266 = vld [vmem:[#allocation7 + $0xc18] sm:$0xff]
        %v1267 = vld [vmem:[#allocation7 + $0xc20] sm:$0xff]
        %v1268 = vld [vmem:[#allocation7 + $0xc28] sm:$0xff]
        %v1269 = vld [vmem:[#allocation7 + $0xc30] sm:$0xff]
        %v1270 = vld [vmem:[#allocation7 + $0xc38] sm:$0xff]
        %v1271 = vld [vmem:[#allocation7 + $0xc40] sm:$0xff]
        %v1272 = vld [vmem:[#allocation7 + $0xc48] sm:$0xff]
        %v1273 = vld [vmem:[#allocation7 + $0xc50] sm:$0xff]
        %v1274 = vld [vmem:[#allocation7 + $0xc58] sm:$0xff]
        %v1275 = vld [vmem:[#allocation7 + $0xc60] sm:$0xff]
        %v1276 = vld [vmem:[#allocation7 + $0xc68] sm:$0xff]
        %v1277 = vld [vmem:[#allocation7 + $0xc70] sm:$0xff]
        %v1278 = vld [vmem:[#allocation7 + $0xc78] sm:$0xff]
        %v1279 = vld [vmem:[#allocation7 + $0xc80] sm:$0xff]
        %v1280 = vld [vmem:[#allocation7 + $0xc88] sm:$0xff]
        %v1281 = vld [vmem:[#allocation7 + $0xc90] sm:$0xff]
        %v1282 = vld [vmem:[#allocation7 + $0xc98] sm:$0xff]
        %v1283 = vld [vmem:[#allocation7 + $0xca0] sm:$0xff]
        %v1284 = vld [vmem:[#allocation7 + $0xca8] sm:$0xff]
        %v1285 = vld [vmem:[#allocation7 + $0xcb0] sm:$0xff]
        %v1286 = vld [vmem:[#allocation7 + $0xcb8] sm:$0xff]
        %v1287 = vld [vmem:[#allocation7 + $0xcc0] sm:$0xff]
        %v1288 = vld [vmem:[#allocation7 + $0xcc8] sm:$0xff]
        %v1289 = vld [vmem:[#allocation7 + $0xcd0] sm:$0xff]
        %v1290 = vld [vmem:[#allocation7 + $0xcd8] sm:$0xff]
        %v1291 = vld [vmem:[#allocation7 + $0xce0] sm:$0xff]
        %v1292 = vld [vmem:[#allocation7 + $0xce8] sm:$0xff]
        %v1293 = vld [vmem:[#allocation7 + $0xcf0] sm:$0xff]
        %v1294 = vld [vmem:[#allocation7 + $0xcf8] sm:$0xff]
        %v1295 = vld [vmem:[#allocation7 + $0xd00] sm:$0xff]
        %v1296 = vld [vmem:[#allocation7 + $0xd08] sm:$0xff]
        %v1297 = vld [vmem:[#allocation7 + $0xd10] sm:$0xff]
        %v1298 = vld [vmem:[#allocation7 + $0xd18] sm:$0xff]
        %v1299 = vld [vmem:[#allocation7 + $0xd20] sm:$0xff]
        %v1300 = vld [vmem:[#allocation7 + $0xd28] sm:$0xff]
        %v1301 = vld [vmem:[#allocation7 + $0xd30] sm:$0xff]
        %v1302 = vld [vmem:[#allocation7 + $0xd38] sm:$0xff]
        %v1303 = vld [vmem:[#allocation7 + $0xd40] sm:$0xff]
        %v1304 = vld [vmem:[#allocation7 + $0xd48] sm:$0xff]
        %v1305 = vld [vmem:[#allocation7 + $0xd50] sm:$0xff]
        %v1306 = vld [vmem:[#allocation7 + $0xd58] sm:$0xff]
        %v1307 = vld [vmem:[#allocation7 + $0xd60] sm:$0xff]
        %v1308 = vld [vmem:[#allocation7 + $0xd68] sm:$0xff]
        %v1309 = vld [vmem:[#allocation7 + $0xd70] sm:$0xff]
        %v1310 = vld [vmem:[#allocation7 + $0xd78] sm:$0xff]
        %v1311 = vld [vmem:[#allocation7 + $0xd80] sm:$0xff]
        %v1312 = vld [vmem:[#allocation7 + $0xd88] sm:$0xff]
        %v1313 = vld [vmem:[#allocation7 + $0xd90] sm:$0xff]
        %v1314 = vld [vmem:[#allocation7 + $0xd98] sm:$0xff]
        %v1315 = vld [vmem:[#allocation7 + $0xda0] sm:$0xff]
        %v1316 = vld [vmem:[#allocation7 + $0xda8] sm:$0xff]
        %v1317 = vld [vmem:[#allocation7 + $0xdb0] sm:$0xff]
        %v1318 = vld [vmem:[#allocation7 + $0xdb8] sm:$0xff]
        %v1319 = vld [vmem:[#allocation7 + $0xdc0] sm:$0xff]
        %v1320 = vld [vmem:[#allocation7 + $0xdc8] sm:$0xff]
        %v1321 = vld [vmem:[#allocation7 + $0xdd0] sm:$0xff]
        %v1322 = vld [vmem:[#allocation7 + $0xdd8] sm:$0xff]
        %v1323 = vld [vmem:[#allocation7 + $0xde0] sm:$0xff]
        %v1324 = vld [vmem:[#allocation7 + $0xde8] sm:$0xff]
        %v1325 = vld [vmem:[#allocation7 + $0xdf0] sm:$0xff]
        %v1326 = vld [vmem:[#allocation7 + $0xdf8] sm:$0xff]
        %v1327 = vld [vmem:[#allocation7 + $0xe00] sm:$0xff]
        %v1328 = vld [vmem:[#allocation7 + $0xe08] sm:$0xff]
        %v1329 = vld [vmem:[#allocation7 + $0xe10] sm:$0xff]
        %v1330 = vld [vmem:[#allocation7 + $0xe18] sm:$0xff]
        %v1331 = vld [vmem:[#allocation7 + $0xe20] sm:$0xff]
        %v1332 = vld [vmem:[#allocation7 + $0xe28] sm:$0xff]
        %v1333 = vld [vmem:[#allocation7 + $0xe30] sm:$0xff]
        %v1334 = vld [vmem:[#allocation7 + $0xe38] sm:$0xff]
        %v1335 = vld [vmem:[#allocation7 + $0xe40] sm:$0xff]
        %v1336 = vld [vmem:[#allocation7 + $0xe48] sm:$0xff]
        %v1337 = vld [vmem:[#allocation7 + $0xe50] sm:$0xff]
        %v1338 = vld [vmem:[#allocation7 + $0xe58] sm:$0xff]
        %v1339 = vld [vmem:[#allocation7 + $0xe60] sm:$0xff]
        %v1340 = vld [vmem:[#allocation7 + $0xe68] sm:$0xff]
        %v1341 = vld [vmem:[#allocation7 + $0xe70] sm:$0xff]
        %v1342 = vld [vmem:[#allocation7 + $0xe78] sm:$0xff]
        %v1343 = vld [vmem:[#allocation7 + $0xe80] sm:$0xff]
        %v1344 = vld [vmem:[#allocation7 + $0xe88] sm:$0xff]
        %v1345 = vld [vmem:[#allocation7 + $0xe90] sm:$0xff]
        %v1346 = vld [vmem:[#allocation7 + $0xe98] sm:$0xff]
        %v1347 = vld [vmem:[#allocation7 + $0xea0] sm:$0xff]
        %v1348 = vld [vmem:[#allocation7 + $0xea8] sm:$0xff]
        %v1349 = vld [vmem:[#allocation7 + $0xeb0] sm:$0xff]
        %v1350 = vld [vmem:[#allocation7 + $0xeb8] sm:$0xff]
        %v1351 = vld [vmem:[#allocation7 + $0xec0] sm:$0xff]
        %v1352 = vld [vmem:[#allocation7 + $0xec8] sm:$0xff]
        %v1353 = vld [vmem:[#allocation7 + $0xed0] sm:$0xff]
        %v1354 = vld [vmem:[#allocation7 + $0xed8] sm:$0xff]
        %v1355 = vld [vmem:[#allocation7 + $0xee0] sm:$0xff]
        %v1356 = vld [vmem:[#allocation7 + $0xee8] sm:$0xff]
        %v1357 = vld [vmem:[#allocation7 + $0xef0] sm:$0xff]
        %v1358 = vld [vmem:[#allocation7 + $0xef8] sm:$0xff]
        %v1359 = vld [vmem:[#allocation7 + $0xf00] sm:$0xff]
        %v1360 = vld [vmem:[#allocation7 + $0xf08] sm:$0xff]
        %v1361 = vld [vmem:[#allocation7 + $0xf10] sm:$0xff]
        %v1362 = vld [vmem:[#allocation7 + $0xf18] sm:$0xff]
        %v1363 = vld [vmem:[#allocation7 + $0xf20] sm:$0xff]
        %v1364 = vld [vmem:[#allocation7 + $0xf28] sm:$0xff]
        %v1365 = vld [vmem:[#allocation7 + $0xf30] sm:$0xff]
        %v1366 = vld [vmem:[#allocation7 + $0xf38] sm:$0xff]
        %v1367 = vld [vmem:[#allocation7 + $0xf40] sm:$0xff]
        %v1368 = vld [vmem:[#allocation7 + $0xf48] sm:$0xff]
        %v1369 = vld [vmem:[#allocation7 + $0xf50] sm:$0xff]
        %v1370 = vld [vmem:[#allocation7 + $0xf58] sm:$0xff]
        %v1371 = vld [vmem:[#allocation7 + $0xf60] sm:$0xff]
        %v1372 = vld [vmem:[#allocation7 + $0xf68] sm:$0xff]
        %v1373 = vld [vmem:[#allocation7 + $0xf70] sm:$0xff]
        %v1374 = vld [vmem:[#allocation7 + $0xf78] sm:$0xff]
        %v1375 = vld [vmem:[#allocation7 + $0xf80] sm:$0xff]
        %v1376 = vld [vmem:[#allocation7 + $0xf88] sm:$0xff]
        %v1377 = vld [vmem:[#allocation7 + $0xf90] sm:$0xff]
        %v1378 = vld [vmem:[#allocation7 + $0xf98] sm:$0xff]
        %v1379 = vld [vmem:[#allocation7 + $0xfa0] sm:$0xff]
        %v1380 = vld [vmem:[#allocation7 + $0xfa8] sm:$0xff]
        %v1381 = vld [vmem:[#allocation7 + $0xfb0] sm:$0xff]
        %v1382 = vld [vmem:[#allocation7 + $0xfb8] sm:$0xff]
        %v1383 = vld [vmem:[#allocation7 + $0xfc0] sm:$0xff]
        %v1384 = vld [vmem:[#allocation7 + $0xfc8] sm:$0xff]
        %v1385 = vld [vmem:[#allocation7 + $0xfd0] sm:$0xff]
        %v1386 = vld [vmem:[#allocation7 + $0xfd8] sm:$0xff]
        %v1387 = vld [vmem:[#allocation7 + $0xfe0] sm:$0xff]
        %v1388 = vld [vmem:[#allocation7 + $0xfe8] sm:$0xff]
        %v1389 = vld [vmem:[#allocation7 + $0xff0] sm:$0xff]
        %v1390 = vld [vmem:[#allocation7 + $0xff8] sm:$0xff]
        %v1391 = vld [vmem:[#allocation7 + $0x1000] sm:$0xff]
        %v1392 = vld [vmem:[#allocation7 + $0x1008] sm:$0xff]
        %v1393 = vld [vmem:[#allocation7 + $0x1010] sm:$0xff]
        %v1394 = vld [vmem:[#allocation7 + $0x1018] sm:$0xff]
        %v1395 = vld [vmem:[#allocation7 + $0x1020] sm:$0xff]
        %v1396 = vld [vmem:[#allocation7 + $0x1028] sm:$0xff]
        %v1397 = vld [vmem:[#allocation7 + $0x1030] sm:$0xff]
        %v1398 = vld [vmem:[#allocation7 + $0x1038] sm:$0xff]
        %v1399 = vld [vmem:[#allocation7 + $0x1040] sm:$0xff]
        %v1400 = vld [vmem:[#allocation7 + $0x1048] sm:$0xff]
        %v1401 = vld [vmem:[#allocation7 + $0x1050] sm:$0xff]
        %v1402 = vld [vmem:[#allocation7 + $0x1058] sm:$0xff]
        %v1403 = vld [vmem:[#allocation7 + $0x1060] sm:$0xff]
        %v1404 = vld [vmem:[#allocation7 + $0x1068] sm:$0xff]
        %v1405 = vld [vmem:[#allocation7 + $0x1070] sm:$0xff]
        %v1406 = vld [vmem:[#allocation7 + $0x1078] sm:$0xff]
        %v1407 = vld [vmem:[#allocation7 + $0x1080] sm:$0xff]
        %v1408 = vld [vmem:[#allocation7 + $0x1088] sm:$0xff]
        %v1409 = vld [vmem:[#allocation7 + $0x1090] sm:$0xff]
        %v1410 = vld [vmem:[#allocation7 + $0x1098] sm:$0xff]
        %v1411 = vld [vmem:[#allocation7 + $0x10a0] sm:$0xff]
        %v1412 = vld [vmem:[#allocation7 + $0x10a8] sm:$0xff]
        %v1413 = vld [vmem:[#allocation7 + $0x10b0] sm:$0xff]
        %v1414 = vld [vmem:[#allocation7 + $0x10b8] sm:$0xff]
        %v1415 = vld [vmem:[#allocation7 + $0x10c0] sm:$0xff]
        %v1416 = vld [vmem:[#allocation7 + $0x10c8] sm:$0xff]
        %v1417 = vld [vmem:[#allocation7 + $0x10d0] sm:$0xff]
        %v1418 = vld [vmem:[#allocation7 + $0x10d8] sm:$0xff]
        %v1419 = vld [vmem:[#allocation7 + $0x10e0] sm:$0xff]
        %v1420 = vld [vmem:[#allocation7 + $0x10e8] sm:$0xff]
        %v1421 = vld [vmem:[#allocation7 + $0x10f0] sm:$0xff]
        %v1422 = vld [vmem:[#allocation7 + $0x10f8] sm:$0xff]
        %v1423 = vld [vmem:[#allocation7 + $0x1100] sm:$0xff]
        %v1424 = vld [vmem:[#allocation7 + $0x1108] sm:$0xff]
        %v1425 = vld [vmem:[#allocation7 + $0x1110] sm:$0xff]
        %v1426 = vld [vmem:[#allocation7 + $0x1118] sm:$0xff]
        %v1427 = vld [vmem:[#allocation7 + $0x1120] sm:$0xff]
        %v1428 = vld [vmem:[#allocation7 + $0x1128] sm:$0xff]
        %v1429 = vld [vmem:[#allocation7 + $0x1130] sm:$0xff]
        %v1430 = vld [vmem:[#allocation7 + $0x1138] sm:$0xff]
        %v1431 = vld [vmem:[#allocation7 + $0x1140] sm:$0xff]
        %v1432 = vld [vmem:[#allocation7 + $0x1148] sm:$0xff]
        %v1433 = vld [vmem:[#allocation7 + $0x1150] sm:$0xff]
        %v1434 = vld [vmem:[#allocation7 + $0x1158] sm:$0xff]
        %v1435 = vld [vmem:[#allocation7 + $0x1160] sm:$0xff]
        %v1436 = vld [vmem:[#allocation7 + $0x1168] sm:$0xff]
        %v1437 = vld [vmem:[#allocation7 + $0x1170] sm:$0xff]
        %v1438 = vld [vmem:[#allocation7 + $0x1178] sm:$0xff]
        %v1439 = vld [vmem:[#allocation7 + $0x1180] sm:$0xff]
        %v1440 = vld [vmem:[#allocation7 + $0x1188] sm:$0xff]
        %v1441 = vld [vmem:[#allocation7 + $0x1190] sm:$0xff]
        %v1442 = vld [vmem:[#allocation7 + $0x1198] sm:$0xff]
        %v1443 = vld [vmem:[#allocation7 + $0x11a0] sm:$0xff]
        %v1444 = vld [vmem:[#allocation7 + $0x11a8] sm:$0xff]
        %v1445 = vld [vmem:[#allocation7 + $0x11b0] sm:$0xff]
        %v1446 = vld [vmem:[#allocation7 + $0x11b8] sm:$0xff]
        %v1447 = vld [vmem:[#allocation7 + $0x11c0] sm:$0xff]
        %v1448 = vld [vmem:[#allocation7 + $0x11c8] sm:$0xff]
        %v1449 = vld [vmem:[#allocation7 + $0x11d0] sm:$0xff]
        %v1450 = vld [vmem:[#allocation7 + $0x11d8] sm:$0xff]
        %v1451 = vld [vmem:[#allocation7 + $0x11e0] sm:$0xff]
        %v1452 = vld [vmem:[#allocation7 + $0x11e8] sm:$0xff]
        %v1453 = vld [vmem:[#allocation7 + $0x11f0] sm:$0xff]
        %v1454 = vld [vmem:[#allocation7 + $0x11f8] sm:$0xff]
        %v1455 = vld [vmem:[#allocation7 + $0x1200] sm:$0xff]
        %v1456 = vld [vmem:[#allocation7 + $0x1208] sm:$0xff]
        %v1457 = vld [vmem:[#allocation7 + $0x1210] sm:$0xff]
        %v1458 = vld [vmem:[#allocation7 + $0x1218] sm:$0xff]
        %v1459 = vld [vmem:[#allocation7 + $0x1220] sm:$0xff]
        %v1460 = vld [vmem:[#allocation7 + $0x1228] sm:$0xff]
        %v1461 = vld [vmem:[#allocation7 + $0x1230] sm:$0xff]
        %v1462 = vld [vmem:[#allocation7 + $0x1238] sm:$0xff]
        %v1463 = vld [vmem:[#allocation7 + $0x1240] sm:$0xff]
        %v1464 = vld [vmem:[#allocation7 + $0x1248] sm:$0xff]
        %v1465 = vld [vmem:[#allocation7 + $0x1250] sm:$0xff]
        %v1466 = vld [vmem:[#allocation7 + $0x1258] sm:$0xff]
        %v1467 = vld [vmem:[#allocation7 + $0x1260] sm:$0xff]
        %v1468 = vld [vmem:[#allocation7 + $0x1268] sm:$0xff]
        %v1469 = vld [vmem:[#allocation7 + $0x1270] sm:$0xff]
        %v1470 = vld [vmem:[#allocation7 + $0x1278] sm:$0xff]
        %v1471 = vld [vmem:[#allocation7 + $0x1280] sm:$0xff]
        %v1472 = vld [vmem:[#allocation7 + $0x1288] sm:$0xff]
        %v1473 = vld [vmem:[#allocation7 + $0x1290] sm:$0xff]
        %v1474 = vld [vmem:[#allocation7 + $0x1298] sm:$0xff]
        %v1475 = vld [vmem:[#allocation7 + $0x12a0] sm:$0xff]
        %v1476 = vld [vmem:[#allocation7 + $0x12a8] sm:$0xff]
        %v1477 = vld [vmem:[#allocation7 + $0x12b0] sm:$0xff]
        %v1478 = vld [vmem:[#allocation7 + $0x12b8] sm:$0xff]
        %v1479 = vld [vmem:[#allocation7 + $0x12c0] sm:$0xff]
        %v1480 = vld [vmem:[#allocation7 + $0x12c8] sm:$0xff]
        %v1481 = vld [vmem:[#allocation7 + $0x12d0] sm:$0xff]
        %v1482 = vld [vmem:[#allocation7 + $0x12d8] sm:$0xff]
        %v1483 = vld [vmem:[#allocation7 + $0x12e0] sm:$0xff]
        %v1484 = vld [vmem:[#allocation7 + $0x12e8] sm:$0xff]
        %v1485 = vld [vmem:[#allocation7 + $0x12f0] sm:$0xff]
        %v1486 = vld [vmem:[#allocation7 + $0x12f8] sm:$0xff]
        %v1487 = vld [vmem:[#allocation7 + $0x1300] sm:$0xff]
        %v1488 = vld [vmem:[#allocation7 + $0x1308] sm:$0xff]
        %v1489 = vld [vmem:[#allocation7 + $0x1310] sm:$0xff]
        %v1490 = vld [vmem:[#allocation7 + $0x1318] sm:$0xff]
        %v1491 = vld [vmem:[#allocation7 + $0x1320] sm:$0xff]
        %v1492 = vld [vmem:[#allocation7 + $0x1328] sm:$0xff]
        %v1493 = vld [vmem:[#allocation7 + $0x1330] sm:$0xff]
        %v1494 = vld [vmem:[#allocation7 + $0x1338] sm:$0xff]
        %v1495 = vld [vmem:[#allocation7 + $0x1340] sm:$0xff]
        %v1496 = vld [vmem:[#allocation7 + $0x1348] sm:$0xff]
        %v1497 = vld [vmem:[#allocation7 + $0x1350] sm:$0xff]
        %v1498 = vld [vmem:[#allocation7 + $0x1358] sm:$0xff]
        %v1499 = vld [vmem:[#allocation7 + $0x1360] sm:$0xff]
        %v1500 = vld [vmem:[#allocation7 + $0x1368] sm:$0xff]
        %v1501 = vld [vmem:[#allocation7 + $0x1370] sm:$0xff]
        %v1502 = vld [vmem:[#allocation7 + $0x1378] sm:$0xff]
        %v1503 = vld [vmem:[#allocation7 + $0x1380] sm:$0xff]
        %v1504 = vld [vmem:[#allocation7 + $0x1388] sm:$0xff]
        %v1505 = vld [vmem:[#allocation7 + $0x1390] sm:$0xff]
        %v1506 = vld [vmem:[#allocation7 + $0x1398] sm:$0xff]
        %v1507 = vld [vmem:[#allocation7 + $0x13a0] sm:$0xff]
        %v1508 = vld [vmem:[#allocation7 + $0x13a8] sm:$0xff]
        %v1509 = vld [vmem:[#allocation7 + $0x13b0] sm:$0xff]
        %v1510 = vld [vmem:[#allocation7 + $0x13b8] sm:$0xff]
        %v1511 = vld [vmem:[#allocation7 + $0x13c0] sm:$0xff]
        %v1512 = vld [vmem:[#allocation7 + $0x13c8] sm:$0xff]
        %v1513 = vld [vmem:[#allocation7 + $0x13d0] sm:$0xff]
        %v1514 = vld [vmem:[#allocation7 + $0x13d8] sm:$0xff]
        %v1515 = vld [vmem:[#allocation7 + $0x13e0] sm:$0xff]
        %v1516 = vld [vmem:[#allocation7 + $0x13e8] sm:$0xff]
        %v1517 = vld [vmem:[#allocation7 + $0x13f0] sm:$0xff]
        %v1518 = vld [vmem:[#allocation7 + $0x13f8] sm:$0xff]
        %v1519 = vld [vmem:[#allocation7 + $0x1400] sm:$0xff]
        %v1520 = vld [vmem:[#allocation7 + $0x1408] sm:$0xff]
        %v1521 = vld [vmem:[#allocation7 + $0x1410] sm:$0xff]
        %v1522 = vld [vmem:[#allocation7 + $0x1418] sm:$0xff]
        %v1523 = vld [vmem:[#allocation7 + $0x1420] sm:$0xff]
        %v1524 = vld [vmem:[#allocation7 + $0x1428] sm:$0xff]
        %v1525 = vld [vmem:[#allocation7 + $0x1430] sm:$0xff]
        %v1526 = vld [vmem:[#allocation7 + $0x1438] sm:$0xff]
        %v1527 = vld [vmem:[#allocation7 + $0x1440] sm:$0xff]
        %v1528 = vld [vmem:[#allocation7 + $0x1448] sm:$0xff]
        %v1529 = vld [vmem:[#allocation7 + $0x1450] sm:$0xff]
        %v1530 = vld [vmem:[#allocation7 + $0x1458] sm:$0xff]
        %v1531 = vld [vmem:[#allocation7 + $0x1460] sm:$0xff]
        %v1532 = vld [vmem:[#allocation7 + $0x1468] sm:$0xff]
        %v1533 = vld [vmem:[#allocation7 + $0x1470] sm:$0xff]
        %v1534 = vld [vmem:[#allocation7 + $0x1478] sm:$0xff]
        %v1535 = vld [vmem:[#allocation7 + $0x1480] sm:$0xff]
        %v1536 = vld [vmem:[#allocation7 + $0x1488] sm:$0xff]
        %v1537 = vld [vmem:[#allocation7 + $0x1490] sm:$0xff]
        %v1538 = vld [vmem:[#allocation7 + $0x1498] sm:$0xff]
        %v1539 = vld [vmem:[#allocation7 + $0x14a0] sm:$0xff]
        %v1540 = vld [vmem:[#allocation7 + $0x14a8] sm:$0xff]
        %v1541 = vld [vmem:[#allocation7 + $0x14b0] sm:$0xff]
        %v1542 = vld [vmem:[#allocation7 + $0x14b8] sm:$0xff]
        %v1543 = vld [vmem:[#allocation7 + $0x14c0] sm:$0xff]
        %v1544 = vld [vmem:[#allocation7 + $0x14c8] sm:$0xff]
        %v1545 = vld [vmem:[#allocation7 + $0x14d0] sm:$0xff]
        %v1546 = vld [vmem:[#allocation7 + $0x14d8] sm:$0xff]
        %v1547 = vld [vmem:[#allocation7 + $0x14e0] sm:$0xff]
        %v1548 = vld [vmem:[#allocation7 + $0x14e8] sm:$0xff]
        %v1549 = vld [vmem:[#allocation7 + $0x14f0] sm:$0xff]
        %v1550 = vld [vmem:[#allocation7 + $0x14f8] sm:$0xff]
        %v1551 = vld [vmem:[#allocation7 + $0x1500] sm:$0xff]
        %v1552 = vld [vmem:[#allocation7 + $0x1508] sm:$0xff]
        %v1553 = vld [vmem:[#allocation7 + $0x1510] sm:$0xff]
        %v1554 = vld [vmem:[#allocation7 + $0x1518] sm:$0xff]
        %v1555 = vld [vmem:[#allocation7 + $0x1520] sm:$0xff]
        %v1556 = vld [vmem:[#allocation7 + $0x1528] sm:$0xff]
        %v1557 = vld [vmem:[#allocation7 + $0x1530] sm:$0xff]
        %v1558 = vld [vmem:[#allocation7 + $0x1538] sm:$0xff]
        %v1559 = vld [vmem:[#allocation7 + $0x1540] sm:$0xff]
        %v1560 = vld [vmem:[#allocation7 + $0x1548] sm:$0xff]
        %v1561 = vld [vmem:[#allocation7 + $0x1550] sm:$0xff]
        %v1562 = vld [vmem:[#allocation7 + $0x1558] sm:$0xff]
        %v1563 = vld [vmem:[#allocation7 + $0x1560] sm:$0xff]
        %v1564 = vld [vmem:[#allocation7 + $0x1568] sm:$0xff]
        %v1565 = vld [vmem:[#allocation7 + $0x1570] sm:$0xff]
        %v1566 = vld [vmem:[#allocation7 + $0x1578] sm:$0xff]
        %v1567 = vld [vmem:[#allocation7 + $0x1580] sm:$0xff]
        %v1568 = vld [vmem:[#allocation7 + $0x1588] sm:$0xff]
        %v1569 = vld [vmem:[#allocation7 + $0x1590] sm:$0xff]
        %v1570 = vld [vmem:[#allocation7 + $0x1598] sm:$0xff]
        %v1571 = vld [vmem:[#allocation7 + $0x15a0] sm:$0xff]
        %v1572 = vld [vmem:[#allocation7 + $0x15a8] sm:$0xff]
        %v1573 = vld [vmem:[#allocation7 + $0x15b0] sm:$0xff]
        %v1574 = vld [vmem:[#allocation7 + $0x15b8] sm:$0xff]
        %v1575 = vld [vmem:[#allocation7 + $0x15c0] sm:$0xff]
        %v1576 = vld [vmem:[#allocation7 + $0x15c8] sm:$0xff]
        %v1577 = vld [vmem:[#allocation7 + $0x15d0] sm:$0xff]
        %v1578 = vld [vmem:[#allocation7 + $0x15d8] sm:$0xff]
        %v1579 = vld [vmem:[#allocation7 + $0x15e0] sm:$0xff]
        %v1580 = vld [vmem:[#allocation7 + $0x15e8] sm:$0xff]
        %v1581 = vld [vmem:[#allocation7 + $0x15f0] sm:$0xff]
        %v1582 = vld [vmem:[#allocation7 + $0x15f8] sm:$0xff]
        %v1583 = vld [vmem:[#allocation7 + $0x1600] sm:$0xff]
        %v1584 = vld [vmem:[#allocation7 + $0x1608] sm:$0xff]
        %v1585 = vld [vmem:[#allocation7 + $0x1610] sm:$0xff]
        %v1586 = vld [vmem:[#allocation7 + $0x1618] sm:$0xff]
        %v1587 = vld [vmem:[#allocation7 + $0x1620] sm:$0xff]
        %v1588 = vld [vmem:[#allocation7 + $0x1628] sm:$0xff]
        %v1589 = vld [vmem:[#allocation7 + $0x1630] sm:$0xff]
        %v1590 = vld [vmem:[#allocation7 + $0x1638] sm:$0xff]
        %v1591 = vld [vmem:[#allocation7 + $0x1640] sm:$0xff]
        %v1592 = vld [vmem:[#allocation7 + $0x1648] sm:$0xff]
        %v1593 = vld [vmem:[#allocation7 + $0x1650] sm:$0xff]
        %v1594 = vld [vmem:[#allocation7 + $0x1658] sm:$0xff]
        %v1595 = vld [vmem:[#allocation7 + $0x1660] sm:$0xff]
        %v1596 = vld [vmem:[#allocation7 + $0x1668] sm:$0xff]
        %v1597 = vld [vmem:[#allocation7 + $0x1670] sm:$0xff]
        %v1598 = vld [vmem:[#allocation7 + $0x1678] sm:$0xff]
        %v1599 = vld [vmem:[#allocation7 + $0x1680] sm:$0xff]
        %v1600 = vld [vmem:[#allocation7 + $0x1688] sm:$0xff]
        %v1601 = vld [vmem:[#allocation7 + $0x1690] sm:$0xff]
        %v1602 = vld [vmem:[#allocation7 + $0x1698] sm:$0xff]
        %v1603 = vld [vmem:[#allocation7 + $0x16a0] sm:$0xff]
        %v1604 = vld [vmem:[#allocation7 + $0x16a8] sm:$0xff]
        %v1605 = vld [vmem:[#allocation7 + $0x16b0] sm:$0xff]
        %v1606 = vld [vmem:[#allocation7 + $0x16b8] sm:$0xff]
        %v1607 = vld [vmem:[#allocation7 + $0x16c0] sm:$0xff]
        %v1608 = vld [vmem:[#allocation7 + $0x16c8] sm:$0xff]
        %v1609 = vld [vmem:[#allocation7 + $0x16d0] sm:$0xff]
        %v1610 = vld [vmem:[#allocation7 + $0x16d8] sm:$0xff]
        %v1611 = vld [vmem:[#allocation7 + $0x16e0] sm:$0xff]
        %v1612 = vld [vmem:[#allocation7 + $0x16e8] sm:$0xff]
        %v1613 = vld [vmem:[#allocation7 + $0x16f0] sm:$0xff]
        %v1614 = vld [vmem:[#allocation7 + $0x16f8] sm:$0xff]
        %v1615 = vld [vmem:[#allocation7 + $0x1700] sm:$0xff]
        %v1616 = vld [vmem:[#allocation7 + $0x1708] sm:$0xff]
        %v1617 = vld [vmem:[#allocation7 + $0x1710] sm:$0xff]
        %v1618 = vld [vmem:[#allocation7 + $0x1718] sm:$0xff]
        %v1619 = vld [vmem:[#allocation7 + $0x1720] sm:$0xff]
        %v1620 = vld [vmem:[#allocation7 + $0x1728] sm:$0xff]
        %v1621 = vld [vmem:[#allocation7 + $0x1730] sm:$0xff]
        %v1622 = vld [vmem:[#allocation7 + $0x1738] sm:$0xff]
        %v1623 = vld [vmem:[#allocation7 + $0x1740] sm:$0xff]
        %v1624 = vld [vmem:[#allocation7 + $0x1748] sm:$0xff]
        %v1625 = vld [vmem:[#allocation7 + $0x1750] sm:$0xff]
        %v1626 = vld [vmem:[#allocation7 + $0x1758] sm:$0xff]
        %v1627 = vld [vmem:[#allocation7 + $0x1760] sm:$0xff]
        %v1628 = vld [vmem:[#allocation7 + $0x1768] sm:$0xff]
        %v1629 = vld [vmem:[#allocation7 + $0x1770] sm:$0xff]
        %v1630 = vld [vmem:[#allocation7 + $0x1778] sm:$0xff]
        %v1631 = vld [vmem:[#allocation7 + $0x1780] sm:$0xff]
        %v1632 = vld [vmem:[#allocation7 + $0x1788] sm:$0xff]
        %v1633 = vld [vmem:[#allocation7 + $0x1790] sm:$0xff]
        %v1634 = vld [vmem:[#allocation7 + $0x1798] sm:$0xff]
        %v1635 = vld [vmem:[#allocation7 + $0x17a0] sm:$0xff]
        %v1636 = vld [vmem:[#allocation7 + $0x17a8] sm:$0xff]
        %v1637 = vld [vmem:[#allocation7 + $0x17b0] sm:$0xff]
        %v1638 = vld [vmem:[#allocation7 + $0x17b8] sm:$0xff]
        %v1639 = vld [vmem:[#allocation7 + $0x17c0] sm:$0xff]
        %v1640 = vld [vmem:[#allocation7 + $0x17c8] sm:$0xff]
        %v1641 = vld [vmem:[#allocation7 + $0x17d0] sm:$0xff]
        %v1642 = vld [vmem:[#allocation7 + $0x17d8] sm:$0xff]
        %v1643 = vld [vmem:[#allocation7 + $0x17e0] sm:$0xff]
        %v1644 = vld [vmem:[#allocation7 + $0x17e8] sm:$0xff]
        %v1645 = vld [vmem:[#allocation7 + $0x17f0] sm:$0xff]
        %v1646 = vld [vmem:[#allocation7 + $0x17f8] sm:$0xff]
        %v1647 = vld [vmem:[%s4] sm:$0xff]
        %v1648 = vld [vmem:[%s4 + $0x8] sm:$0xf]
        %v1651 = vperm.slane %v1647, 0
        %v1652 = vperm.slane %v1647, 1
        %v1653 = vperm.slane %v1647, 2
        %v1654 = vperm.slane %v1647, 3
        %v1655 = vperm.slane %v1647, 4
        %v1656 = vperm.slane %v1647, 5
        %v1657 = vperm.slane %v1647, 6
        %v1658 = vperm.slane %v1647, 7
        %v1659 = vperm.slane %v1648, 0
        %v1660 = vperm.slane %v1648, 1
        %v1661 = vperm.slane %v1648, 2
        %v1662 = vperm.slane %v1648, 3
        %1675 = vmatpush.msra.mxu0 %v1059
        %1676 = vmatpush.msra.mxu0 %v1047
        %1677 = vmatpush.msra.mxu0 %v1035
        %1678 = vmatpush.msra.mxu0 %v1023
        %1679 = vmatpush.msra.mxu0 %v1011
        %1680 = vmatpush.msra.mxu0 %v999
        %1681 = vmatpush.msra.mxu0 %v987
        %1682 = vmatpush.msra.mxu0 %v975
        %1683 = vmatpush.msra.mxu0 %v963
        %1684 = vmatpush.msra.mxu0 %v951
        %1685 = vmatpush.msra.mxu0 %v939
        %1686 = vmatpush.msra.mxu0 %v927
        %1687 = vmatpush.msra.mxu0 %v915
        %1688 = vmatpush.msra.mxu0 %v903
        %1689 = vmatpush.msra.mxu0 %v891
        %1690 = vmatpush.msra.mxu0 %v879
        %1691 = vmatmul.f32.gmra.mxu0 %v736
        %v1692 = vpop.f32.mrf.mxu0
        %v1693 = vadd.f32 %v1651, %v1692
        %1694 = vmatmul.f32.gmra.mxu0 %v739
        %v1695 = vpop.f32.mrf.mxu0
        %v1696 = vadd.f32 %v1651, %v1695
        %1697 = vdwg.mxu0
        %1698 = vmatpush.msra.mxu0 %v1251
        %1699 = vmatpush.msra.mxu0 %v1239
        %1700 = vmatpush.msra.mxu0 %v1227
        %1701 = vmatpush.msra.mxu0 %v1215
        %1702 = vmatpush.msra.mxu0 %v1203
        %1703 = vmatpush.msra.mxu0 %v1191
        %1704 = vmatpush.msra.mxu0 %v1179
        %1705 = vmatpush.msra.mxu0 %v1167
        %1706 = vmatpush.msra.mxu0 %v1155
        %1707 = vmatpush.msra.mxu0 %v1143
        %1708 = vmatpush.msra.mxu0 %v1131
        %1709 = vmatpush.msra.mxu0 %v1119
        %1710 = vmatpush.msra.mxu0 %v1107
        %1711 = vmatpush.msra.mxu0 %v1095
        %1712 = vmatpush.msra.mxu0 %v1083
        %1713 = vmatpush.msra.mxu0 %v1071
        %1714 = vmatmul.f32.gmra.mxu0 %v782
        %v1715 = vpop.f32.mrf.mxu0
        %v1716 = vadd.f32 %v1693, %v1715
        %1717 = vmatmul.f32.gmra.mxu0 %v785
        %v1718 = vpop.f32.mrf.mxu0
        %v1719 = vadd.f32 %v1696, %v1718
        %1720 = vdwg.mxu0
        %1721 = vmatpush.msra.mxu0 %v1443
        %1722 = vmatpush.msra.mxu0 %v1431
        %1723 = vmatpush.msra.mxu0 %v1419
        %1724 = vmatpush.msra.mxu0 %v1407
        %1725 = vmatpush.msra.mxu0 %v1395
        %1726 = vmatpush.msra.mxu0 %v1383
        %1727 = vmatpush.msra.mxu0 %v1371
        %1728 = vmatpush.msra.mxu0 %v1359
        %1729 = vmatpush.msra.mxu0 %v1347
        %1730 = vmatpush.msra.mxu0 %v1335
        %1731 = vmatpush.msra.mxu0 %v1323
        %1732 = vmatpush.msra.mxu0 %v1311
        %1733 = vmatpush.msra.mxu0 %v1299
        %1734 = vmatpush.msra.mxu0 %v1287
        %1735 = vmatpush.msra.mxu0 %v1275
        %1736 = vmatpush.msra.mxu0 %v1263
        %1737 = vmatmul.f32.gmra.mxu0 %v828
        %v1738 = vpop.f32.mrf.mxu0
        %v1739 = vadd.f32 %v1716, %v1738
        %1740 = vmatmul.f32.gmra.mxu0 %v831
        %v1741 = vpop.f32.mrf.mxu0
        %v1742 = vadd.f32 %v1719, %v1741
        %1743 = vdwg.mxu0
        %1744 = vmatpush.msra.mxu0 %v1635
        %1745 = vmatpush.msra.mxu0 %v1623
        %1746 = vmatpush.msra.mxu0 %v1611
        %1747 = vmatpush.msra.mxu0 %v1599
        %1748 = vmatpush.msra.mxu0 %v1587
        %1749 = vmatpush.msra.mxu0 %v1575
        %1750 = vmatpush.msra.mxu0 %v1563
        %1751 = vmatpush.msra.mxu0 %v1551
        %1752 = vmatpush.msra.mxu0 %v1539
        %1753 = vmatpush.msra.mxu0 %v1527
        %1754 = vmatpush.msra.mxu0 %v1515
        %1755 = vmatpush.msra.mxu0 %v1503
        %1756 = vmatpush.msra.mxu0 %v1491
        %1757 = vmatpush.msra.mxu0 %v1479
        %1758 = vmatpush.msra.mxu0 %v1467
        %1759 = vmatpush.msra.mxu0 %v1455
        %1760 = vmatmul.f32.gmra.mxu0 %v874
        %v1761 = vpop.f32.mrf.mxu0
        %v1762 = vadd.f32 %v1739, %v1761
        %1763 = vmatmul.f32.gmra.mxu0 %v877
        %v1764 = vpop.f32.mrf.mxu0
        %v1765 = vadd.f32 %v1742, %v1764
        %1766 = vdwg.mxu0
        %1767 = vmatpush.msra.mxu0 %v1060
        %1768 = vmatpush.msra.mxu0 %v1048
        %1769 = vmatpush.msra.mxu0 %v1036
        %1770 = vmatpush.msra.mxu0 %v1024
        %1771 = vmatpush.msra.mxu0 %v1012
        %1772 = vmatpush.msra.mxu0 %v1000
        %1773 = vmatpush.msra.mxu0 %v988
        %1774 = vmatpush.msra.mxu0 %v976
        %1775 = vmatpush.msra.mxu0 %v964
        %1776 = vmatpush.msra.mxu0 %v952
        %1777 = vmatpush.msra.mxu0 %v940
        %1778 = vmatpush.msra.mxu0 %v928
        %1779 = vmatpush.msra.mxu0 %v916
        %1780 = vmatpush.msra.mxu0 %v904
        %1781 = vmatpush.msra.mxu0 %v892
        %1782 = vmatpush.msra.mxu0 %v880
        %1783 = vmatmul.f32.gmra.mxu0 %v736
        %v1784 = vpop.f32.mrf.mxu0
        %v1785 = vadd.f32 %v1652, %v1784
        %1786 = vmatmul.f32.gmra.mxu0 %v739
        %v1787 = vpop.f32.mrf.mxu0
        %v1788 = vadd.f32 %v1652, %v1787
        %1789 = vdwg.mxu0
        %1790 = vmatpush.msra.mxu0 %v1252
        %1791 = vmatpush.msra.mxu0 %v1240
        %1792 = vmatpush.msra.mxu0 %v1228
        %1793 = vmatpush.msra.mxu0 %v1216
        %1794 = vmatpush.msra.mxu0 %v1204
        %1795 = vmatpush.msra.mxu0 %v1192
        %1796 = vmatpush.msra.mxu0 %v1180
        %1797 = vmatpush.msra.mxu0 %v1168
        %1798 = vmatpush.msra.mxu0 %v1156
        %1799 = vmatpush.msra.mxu0 %v1144
        %1800 = vmatpush.msra.mxu0 %v1132
        %1801 = vmatpush.msra.mxu0 %v1120
        %1802 = vmatpush.msra.mxu0 %v1108
        %1803 = vmatpush.msra.mxu0 %v1096
        %1804 = vmatpush.msra.mxu0 %v1084
        %1805 = vmatpush.msra.mxu0 %v1072
        %1806 = vmatmul.f32.gmra.mxu0 %v782
        %v1807 = vpop.f32.mrf.mxu0
        %v1808 = vadd.f32 %v1785, %v1807
        %1809 = vmatmul.f32.gmra.mxu0 %v785
        %v1810 = vpop.f32.mrf.mxu0
        %v1811 = vadd.f32 %v1788, %v1810
        %1812 = vdwg.mxu0
        %1813 = vmatpush.msra.mxu0 %v1444
        %1814 = vmatpush.msra.mxu0 %v1432
        %1815 = vmatpush.msra.mxu0 %v1420
        %1816 = vmatpush.msra.mxu0 %v1408
        %1817 = vmatpush.msra.mxu0 %v1396
        %1818 = vmatpush.msra.mxu0 %v1384
        %1819 = vmatpush.msra.mxu0 %v1372
        %1820 = vmatpush.msra.mxu0 %v1360
        %1821 = vmatpush.msra.mxu0 %v1348
        %1822 = vmatpush.msra.mxu0 %v1336
        %1823 = vmatpush.msra.mxu0 %v1324
        %1824 = vmatpush.msra.mxu0 %v1312
        %1825 = vmatpush.msra.mxu0 %v1300
        %1826 = vmatpush.msra.mxu0 %v1288
        %1827 = vmatpush.msra.mxu0 %v1276
        %1828 = vmatpush.msra.mxu0 %v1264
        %1829 = vmatmul.f32.gmra.mxu0 %v828
        %v1830 = vpop.f32.mrf.mxu0
        %v1831 = vadd.f32 %v1808, %v1830
        %1832 = vmatmul.f32.gmra.mxu0 %v831
        %v1833 = vpop.f32.mrf.mxu0
        %v1834 = vadd.f32 %v1811, %v1833
        %1835 = vdwg.mxu0
        %1836 = vmatpush.msra.mxu0 %v1636
        %1837 = vmatpush.msra.mxu0 %v1624
        %1838 = vmatpush.msra.mxu0 %v1612
        %1839 = vmatpush.msra.mxu0 %v1600
        %1840 = vmatpush.msra.mxu0 %v1588
        %1841 = vmatpush.msra.mxu0 %v1576
        %1842 = vmatpush.msra.mxu0 %v1564
        %1843 = vmatpush.msra.mxu0 %v1552
        %1844 = vmatpush.msra.mxu0 %v1540
        %1845 = vmatpush.msra.mxu0 %v1528
        %1846 = vmatpush.msra.mxu0 %v1516
        %1847 = vmatpush.msra.mxu0 %v1504
        %1848 = vmatpush.msra.mxu0 %v1492
        %1849 = vmatpush.msra.mxu0 %v1480
        %1850 = vmatpush.msra.mxu0 %v1468
        %1851 = vmatpush.msra.mxu0 %v1456
        %1852 = vmatmul.f32.gmra.mxu0 %v874
        %v1853 = vpop.f32.mrf.mxu0
        %v1854 = vadd.f32 %v1831, %v1853
        %1855 = vmatmul.f32.gmra.mxu0 %v877
        %v1856 = vpop.f32.mrf.mxu0
        %v1857 = vadd.f32 %v1834, %v1856
        %1858 = vdwg.mxu0
        %1859 = vmatpush.msra.mxu0 %v1061
        %1860 = vmatpush.msra.mxu0 %v1049
        %1861 = vmatpush.msra.mxu0 %v1037
        %1862 = vmatpush.msra.mxu0 %v1025
        %1863 = vmatpush.msra.mxu0 %v1013
        %1864 = vmatpush.msra.mxu0 %v1001
        %1865 = vmatpush.msra.mxu0 %v989
        %1866 = vmatpush.msra.mxu0 %v977
        %1867 = vmatpush.msra.mxu0 %v965
        %1868 = vmatpush.msra.mxu0 %v953
        %1869 = vmatpush.msra.mxu0 %v941
        %1870 = vmatpush.msra.mxu0 %v929
        %1871 = vmatpush.msra.mxu0 %v917
        %1872 = vmatpush.msra.mxu0 %v905
        %1873 = vmatpush.msra.mxu0 %v893
        %1874 = vmatpush.msra.mxu0 %v881
        %1875 = vmatmul.f32.gmra.mxu0 %v736
        %v1876 = vpop.f32.mrf.mxu0
        %v1877 = vadd.f32 %v1653, %v1876
        %1878 = vmatmul.f32.gmra.mxu0 %v739
        %v1879 = vpop.f32.mrf.mxu0
        %v1880 = vadd.f32 %v1653, %v1879
        %1881 = vdwg.mxu0
        %1882 = vmatpush.msra.mxu0 %v1253
        %1883 = vmatpush.msra.mxu0 %v1241
        %1884 = vmatpush.msra.mxu0 %v1229
        %1885 = vmatpush.msra.mxu0 %v1217
        %1886 = vmatpush.msra.mxu0 %v1205
        %1887 = vmatpush.msra.mxu0 %v1193
        %1888 = vmatpush.msra.mxu0 %v1181
        %1889 = vmatpush.msra.mxu0 %v1169
        %1890 = vmatpush.msra.mxu0 %v1157
        %1891 = vmatpush.msra.mxu0 %v1145
        %1892 = vmatpush.msra.mxu0 %v1133
        %1893 = vmatpush.msra.mxu0 %v1121
        %1894 = vmatpush.msra.mxu0 %v1109
        %1895 = vmatpush.msra.mxu0 %v1097
        %1896 = vmatpush.msra.mxu0 %v1085
        %1897 = vmatpush.msra.mxu0 %v1073
        %1898 = vmatmul.f32.gmra.mxu0 %v782
        %v1899 = vpop.f32.mrf.mxu0
        %v1900 = vadd.f32 %v1877, %v1899
        %1901 = vmatmul.f32.gmra.mxu0 %v785
        %v1902 = vpop.f32.mrf.mxu0
        %v1903 = vadd.f32 %v1880, %v1902
        %1904 = vdwg.mxu0
        %1905 = vmatpush.msra.mxu0 %v1445
        %1906 = vmatpush.msra.mxu0 %v1433
        %1907 = vmatpush.msra.mxu0 %v1421
        %1908 = vmatpush.msra.mxu0 %v1409
        %1909 = vmatpush.msra.mxu0 %v1397
        %1910 = vmatpush.msra.mxu0 %v1385
        %1911 = vmatpush.msra.mxu0 %v1373
        %1912 = vmatpush.msra.mxu0 %v1361
        %1913 = vmatpush.msra.mxu0 %v1349
        %1914 = vmatpush.msra.mxu0 %v1337
        %1915 = vmatpush.msra.mxu0 %v1325
        %1916 = vmatpush.msra.mxu0 %v1313
        %1917 = vmatpush.msra.mxu0 %v1301
        %1918 = vmatpush.msra.mxu0 %v1289
        %1919 = vmatpush.msra.mxu0 %v1277
        %1920 = vmatpush.msra.mxu0 %v1265
        %1921 = vmatmul.f32.gmra.mxu0 %v828
        %v1922 = vpop.f32.mrf.mxu0
        %v1923 = vadd.f32 %v1900, %v1922
        %1924 = vmatmul.f32.gmra.mxu0 %v831
        %v1925 = vpop.f32.mrf.mxu0
        %v1926 = vadd.f32 %v1903, %v1925
        %1927 = vdwg.mxu0
        %1928 = vmatpush.msra.mxu0 %v1637
        %1929 = vmatpush.msra.mxu0 %v1625
        %1930 = vmatpush.msra.mxu0 %v1613
        %1931 = vmatpush.msra.mxu0 %v1601
        %1932 = vmatpush.msra.mxu0 %v1589
        %1933 = vmatpush.msra.mxu0 %v1577
        %1934 = vmatpush.msra.mxu0 %v1565
        %1935 = vmatpush.msra.mxu0 %v1553
        %1936 = vmatpush.msra.mxu0 %v1541
        %1937 = vmatpush.msra.mxu0 %v1529
        %1938 = vmatpush.msra.mxu0 %v1517
        %1939 = vmatpush.msra.mxu0 %v1505
        %1940 = vmatpush.msra.mxu0 %v1493
        %1941 = vmatpush.msra.mxu0 %v1481
        %1942 = vmatpush.msra.mxu0 %v1469
        %1943 = vmatpush.msra.mxu0 %v1457
        %1944 = vmatmul.f32.gmra.mxu0 %v874
        %v1945 = vpop.f32.mrf.mxu0
        %v1946 = vadd.f32 %v1923, %v1945
        %1947 = vmatmul.f32.gmra.mxu0 %v877
        %v1948 = vpop.f32.mrf.mxu0
        %v1949 = vadd.f32 %v1926, %v1948
        %1950 = vdwg.mxu0
        %1951 = vmatpush.msra.mxu0 %v1062
        %1952 = vmatpush.msra.mxu0 %v1050
        %1953 = vmatpush.msra.mxu0 %v1038
        %1954 = vmatpush.msra.mxu0 %v1026
        %1955 = vmatpush.msra.mxu0 %v1014
        %1956 = vmatpush.msra.mxu0 %v1002
        %1957 = vmatpush.msra.mxu0 %v990
        %1958 = vmatpush.msra.mxu0 %v978
        %1959 = vmatpush.msra.mxu0 %v966
        %1960 = vmatpush.msra.mxu0 %v954
        %1961 = vmatpush.msra.mxu0 %v942
        %1962 = vmatpush.msra.mxu0 %v930
        %1963 = vmatpush.msra.mxu0 %v918
        %1964 = vmatpush.msra.mxu0 %v906
        %1965 = vmatpush.msra.mxu0 %v894
        %1966 = vmatpush.msra.mxu0 %v882
        %1967 = vmatmul.f32.gmra.mxu0 %v736
        %v1968 = vpop.f32.mrf.mxu0
        %v1969 = vadd.f32 %v1654, %v1968
        %1970 = vmatmul.f32.gmra.mxu0 %v739
        %v1971 = vpop.f32.mrf.mxu0
        %v1972 = vadd.f32 %v1654, %v1971
        %1973 = vdwg.mxu0
        %1974 = vmatpush.msra.mxu0 %v1254
        %1975 = vmatpush.msra.mxu0 %v1242
        %1976 = vmatpush.msra.mxu0 %v1230
        %1977 = vmatpush.msra.mxu0 %v1218
        %1978 = vmatpush.msra.mxu0 %v1206
        %1979 = vmatpush.msra.mxu0 %v1194
        %1980 = vmatpush.msra.mxu0 %v1182
        %1981 = vmatpush.msra.mxu0 %v1170
        %1982 = vmatpush.msra.mxu0 %v1158
        %1983 = vmatpush.msra.mxu0 %v1146
        %1984 = vmatpush.msra.mxu0 %v1134
        %1985 = vmatpush.msra.mxu0 %v1122
        %1986 = vmatpush.msra.mxu0 %v1110
        %1987 = vmatpush.msra.mxu0 %v1098
        %1988 = vmatpush.msra.mxu0 %v1086
        %1989 = vmatpush.msra.mxu0 %v1074
        %1990 = vmatmul.f32.gmra.mxu0 %v782
        %v1991 = vpop.f32.mrf.mxu0
        %v1992 = vadd.f32 %v1969, %v1991
        %1993 = vmatmul.f32.gmra.mxu0 %v785
        %v1994 = vpop.f32.mrf.mxu0
        %v1995 = vadd.f32 %v1972, %v1994
        %1996 = vdwg.mxu0
        %1997 = vmatpush.msra.mxu0 %v1446
        %1998 = vmatpush.msra.mxu0 %v1434
        %1999 = vmatpush.msra.mxu0 %v1422
        %2000 = vmatpush.msra.mxu0 %v1410
        %2001 = vmatpush.msra.mxu0 %v1398
        %2002 = vmatpush.msra.mxu0 %v1386
        %2003 = vmatpush.msra.mxu0 %v1374
        %2004 = vmatpush.msra.mxu0 %v1362
        %2005 = vmatpush.msra.mxu0 %v1350
        %2006 = vmatpush.msra.mxu0 %v1338
        %2007 = vmatpush.msra.mxu0 %v1326
        %2008 = vmatpush.msra.mxu0 %v1314
        %2009 = vmatpush.msra.mxu0 %v1302
        %2010 = vmatpush.msra.mxu0 %v1290
        %2011 = vmatpush.msra.mxu0 %v1278
        %2012 = vmatpush.msra.mxu0 %v1266
        %2013 = vmatmul.f32.gmra.mxu0 %v828
        %v2014 = vpop.f32.mrf.mxu0
        %v2015 = vadd.f32 %v1992, %v2014
        %2016 = vmatmul.f32.gmra.mxu0 %v831
        %v2017 = vpop.f32.mrf.mxu0
        %v2018 = vadd.f32 %v1995, %v2017
        %2019 = vdwg.mxu0
        %2020 = vmatpush.msra.mxu0 %v1638
        %2021 = vmatpush.msra.mxu0 %v1626
        %2022 = vmatpush.msra.mxu0 %v1614
        %2023 = vmatpush.msra.mxu0 %v1602
        %2024 = vmatpush.msra.mxu0 %v1590
        %2025 = vmatpush.msra.mxu0 %v1578
        %2026 = vmatpush.msra.mxu0 %v1566
        %2027 = vmatpush.msra.mxu0 %v1554
        %2028 = vmatpush.msra.mxu0 %v1542
        %2029 = vmatpush.msra.mxu0 %v1530
        %2030 = vmatpush.msra.mxu0 %v1518
        %2031 = vmatpush.msra.mxu0 %v1506
        %2032 = vmatpush.msra.mxu0 %v1494
        %2033 = vmatpush.msra.mxu0 %v1482
        %2034 = vmatpush.msra.mxu0 %v1470
        %2035 = vmatpush.msra.mxu0 %v1458
        %2036 = vmatmul.f32.gmra.mxu0 %v874
        %v2037 = vpop.f32.mrf.mxu0
        %v2038 = vadd.f32 %v2015, %v2037
        %2039 = vmatmul.f32.gmra.mxu0 %v877
        %v2040 = vpop.f32.mrf.mxu0
        %v2041 = vadd.f32 %v2018, %v2040
        %2042 = vdwg.mxu0
        %2043 = vmatpush.msra.mxu0 %v1063
        %2044 = vmatpush.msra.mxu0 %v1051
        %2045 = vmatpush.msra.mxu0 %v1039
        %2046 = vmatpush.msra.mxu0 %v1027
        %2047 = vmatpush.msra.mxu0 %v1015
        %2048 = vmatpush.msra.mxu0 %v1003
        %2049 = vmatpush.msra.mxu0 %v991
        %2050 = vmatpush.msra.mxu0 %v979
        %2051 = vmatpush.msra.mxu0 %v967
        %2052 = vmatpush.msra.mxu0 %v955
        %2053 = vmatpush.msra.mxu0 %v943
        %2054 = vmatpush.msra.mxu0 %v931
        %2055 = vmatpush.msra.mxu0 %v919
        %2056 = vmatpush.msra.mxu0 %v907
        %2057 = vmatpush.msra.mxu0 %v895
        %2058 = vmatpush.msra.mxu0 %v883
        %2059 = vmatmul.f32.gmra.mxu0 %v736
        %v2060 = vpop.f32.mrf.mxu0
        %v2061 = vadd.f32 %v1655, %v2060
        %2062 = vmatmul.f32.gmra.mxu0 %v739
        %v2063 = vpop.f32.mrf.mxu0
        %v2064 = vadd.f32 %v1655, %v2063
        %2065 = vdwg.mxu0
        %2066 = vmatpush.msra.mxu0 %v1255
        %2067 = vmatpush.msra.mxu0 %v1243
        %2068 = vmatpush.msra.mxu0 %v1231
        %2069 = vmatpush.msra.mxu0 %v1219
        %2070 = vmatpush.msra.mxu0 %v1207
        %2071 = vmatpush.msra.mxu0 %v1195
        %2072 = vmatpush.msra.mxu0 %v1183
        %2073 = vmatpush.msra.mxu0 %v1171
        %2074 = vmatpush.msra.mxu0 %v1159
        %2075 = vmatpush.msra.mxu0 %v1147
        %2076 = vmatpush.msra.mxu0 %v1135
        %2077 = vmatpush.msra.mxu0 %v1123
        %2078 = vmatpush.msra.mxu0 %v1111
        %2079 = vmatpush.msra.mxu0 %v1099
        %2080 = vmatpush.msra.mxu0 %v1087
        %2081 = vmatpush.msra.mxu0 %v1075
        %2082 = vmatmul.f32.gmra.mxu0 %v782
        %v2083 = vpop.f32.mrf.mxu0
        %v2084 = vadd.f32 %v2061, %v2083
        %2085 = vmatmul.f32.gmra.mxu0 %v785
        %v2086 = vpop.f32.mrf.mxu0
        %v2087 = vadd.f32 %v2064, %v2086
        %2088 = vdwg.mxu0
        %2089 = vmatpush.msra.mxu0 %v1447
        %2090 = vmatpush.msra.mxu0 %v1435
        %2091 = vmatpush.msra.mxu0 %v1423
        %2092 = vmatpush.msra.mxu0 %v1411
        %2093 = vmatpush.msra.mxu0 %v1399
        %2094 = vmatpush.msra.mxu0 %v1387
        %2095 = vmatpush.msra.mxu0 %v1375
        %2096 = vmatpush.msra.mxu0 %v1363
        %2097 = vmatpush.msra.mxu0 %v1351
        %2098 = vmatpush.msra.mxu0 %v1339
        %2099 = vmatpush.msra.mxu0 %v1327
        %2100 = vmatpush.msra.mxu0 %v1315
        %2101 = vmatpush.msra.mxu0 %v1303
        %2102 = vmatpush.msra.mxu0 %v1291
        %2103 = vmatpush.msra.mxu0 %v1279
        %2104 = vmatpush.msra.mxu0 %v1267
        %2105 = vmatmul.f32.gmra.mxu0 %v828
        %v2106 = vpop.f32.mrf.mxu0
        %v2107 = vadd.f32 %v2084, %v2106
        %2108 = vmatmul.f32.gmra.mxu0 %v831
        %v2109 = vpop.f32.mrf.mxu0
        %v2110 = vadd.f32 %v2087, %v2109
        %2111 = vdwg.mxu0
        %2112 = vmatpush.msra.mxu0 %v1639
        %2113 = vmatpush.msra.mxu0 %v1627
        %2114 = vmatpush.msra.mxu0 %v1615
        %2115 = vmatpush.msra.mxu0 %v1603
        %2116 = vmatpush.msra.mxu0 %v1591
        %2117 = vmatpush.msra.mxu0 %v1579
        %2118 = vmatpush.msra.mxu0 %v1567
        %2119 = vmatpush.msra.mxu0 %v1555
        %2120 = vmatpush.msra.mxu0 %v1543
        %2121 = vmatpush.msra.mxu0 %v1531
        %2122 = vmatpush.msra.mxu0 %v1519
        %2123 = vmatpush.msra.mxu0 %v1507
        %2124 = vmatpush.msra.mxu0 %v1495
        %2125 = vmatpush.msra.mxu0 %v1483
        %2126 = vmatpush.msra.mxu0 %v1471
        %2127 = vmatpush.msra.mxu0 %v1459
        %2128 = vmatmul.f32.gmra.mxu0 %v874
        %v2129 = vpop.f32.mrf.mxu0
        %v2130 = vadd.f32 %v2107, %v2129
        %2131 = vmatmul.f32.gmra.mxu0 %v877
        %v2132 = vpop.f32.mrf.mxu0
        %v2133 = vadd.f32 %v2110, %v2132
        %2134 = vdwg.mxu0
        %2135 = vmatpush.msra.mxu0 %v1064
        %2136 = vmatpush.msra.mxu0 %v1052
        %2137 = vmatpush.msra.mxu0 %v1040
        %2138 = vmatpush.msra.mxu0 %v1028
        %2139 = vmatpush.msra.mxu0 %v1016
        %2140 = vmatpush.msra.mxu0 %v1004
        %2141 = vmatpush.msra.mxu0 %v992
        %2142 = vmatpush.msra.mxu0 %v980
        %2143 = vmatpush.msra.mxu0 %v968
        %2144 = vmatpush.msra.mxu0 %v956
        %2145 = vmatpush.msra.mxu0 %v944
        %2146 = vmatpush.msra.mxu0 %v932
        %2147 = vmatpush.msra.mxu0 %v920
        %2148 = vmatpush.msra.mxu0 %v908
        %2149 = vmatpush.msra.mxu0 %v896
        %2150 = vmatpush.msra.mxu0 %v884
        %2151 = vmatmul.f32.gmra.mxu0 %v736
        %v2152 = vpop.f32.mrf.mxu0
        %v2153 = vadd.f32 %v1656, %v2152
        %2154 = vmatmul.f32.gmra.mxu0 %v739
        %v2155 = vpop.f32.mrf.mxu0
        %v2156 = vadd.f32 %v1656, %v2155
        %2157 = vdwg.mxu0
        %2158 = vmatpush.msra.mxu0 %v1256
        %2159 = vmatpush.msra.mxu0 %v1244
        %2160 = vmatpush.msra.mxu0 %v1232
        %2161 = vmatpush.msra.mxu0 %v1220
        %2162 = vmatpush.msra.mxu0 %v1208
        %2163 = vmatpush.msra.mxu0 %v1196
        %2164 = vmatpush.msra.mxu0 %v1184
        %2165 = vmatpush.msra.mxu0 %v1172
        %2166 = vmatpush.msra.mxu0 %v1160
        %2167 = vmatpush.msra.mxu0 %v1148
        %2168 = vmatpush.msra.mxu0 %v1136
        %2169 = vmatpush.msra.mxu0 %v1124
        %2170 = vmatpush.msra.mxu0 %v1112
        %2171 = vmatpush.msra.mxu0 %v1100
        %2172 = vmatpush.msra.mxu0 %v1088
        %2173 = vmatpush.msra.mxu0 %v1076
        %2174 = vmatmul.f32.gmra.mxu0 %v782
        %v2175 = vpop.f32.mrf.mxu0
        %v2176 = vadd.f32 %v2153, %v2175
        %2177 = vmatmul.f32.gmra.mxu0 %v785
        %v2178 = vpop.f32.mrf.mxu0
        %v2179 = vadd.f32 %v2156, %v2178
        %2180 = vdwg.mxu0
        %2181 = vmatpush.msra.mxu0 %v1448
        %2182 = vmatpush.msra.mxu0 %v1436
        %2183 = vmatpush.msra.mxu0 %v1424
        %2184 = vmatpush.msra.mxu0 %v1412
        %2185 = vmatpush.msra.mxu0 %v1400
        %2186 = vmatpush.msra.mxu0 %v1388
        %2187 = vmatpush.msra.mxu0 %v1376
        %2188 = vmatpush.msra.mxu0 %v1364
        %2189 = vmatpush.msra.mxu0 %v1352
        %2190 = vmatpush.msra.mxu0 %v1340
        %2191 = vmatpush.msra.mxu0 %v1328
        %2192 = vmatpush.msra.mxu0 %v1316
        %2193 = vmatpush.msra.mxu0 %v1304
        %2194 = vmatpush.msra.mxu0 %v1292
        %2195 = vmatpush.msra.mxu0 %v1280
        %2196 = vmatpush.msra.mxu0 %v1268
        %2197 = vmatmul.f32.gmra.mxu0 %v828
        %v2198 = vpop.f32.mrf.mxu0
        %v2199 = vadd.f32 %v2176, %v2198
        %2200 = vmatmul.f32.gmra.mxu0 %v831
        %v2201 = vpop.f32.mrf.mxu0
        %v2202 = vadd.f32 %v2179, %v2201
        %2203 = vdwg.mxu0
        %2204 = vmatpush.msra.mxu0 %v1640
        %2205 = vmatpush.msra.mxu0 %v1628
        %2206 = vmatpush.msra.mxu0 %v1616
        %2207 = vmatpush.msra.mxu0 %v1604
        %2208 = vmatpush.msra.mxu0 %v1592
        %2209 = vmatpush.msra.mxu0 %v1580
        %2210 = vmatpush.msra.mxu0 %v1568
        %2211 = vmatpush.msra.mxu0 %v1556
        %2212 = vmatpush.msra.mxu0 %v1544
        %2213 = vmatpush.msra.mxu0 %v1532
        %2214 = vmatpush.msra.mxu0 %v1520
        %2215 = vmatpush.msra.mxu0 %v1508
        %2216 = vmatpush.msra.mxu0 %v1496
        %2217 = vmatpush.msra.mxu0 %v1484
        %2218 = vmatpush.msra.mxu0 %v1472
        %2219 = vmatpush.msra.mxu0 %v1460
        %2220 = vmatmul.f32.gmra.mxu0 %v874
        %v2221 = vpop.f32.mrf.mxu0
        %v2222 = vadd.f32 %v2199, %v2221
        %2223 = vmatmul.f32.gmra.mxu0 %v877
        %v2224 = vpop.f32.mrf.mxu0
        %v2225 = vadd.f32 %v2202, %v2224
        %2226 = vdwg.mxu0
        %2227 = vmatpush.msra.mxu0 %v1065
        %2228 = vmatpush.msra.mxu0 %v1053
        %2229 = vmatpush.msra.mxu0 %v1041
        %2230 = vmatpush.msra.mxu0 %v1029
        %2231 = vmatpush.msra.mxu0 %v1017
        %2232 = vmatpush.msra.mxu0 %v1005
        %2233 = vmatpush.msra.mxu0 %v993
        %2234 = vmatpush.msra.mxu0 %v981
        %2235 = vmatpush.msra.mxu0 %v969
        %2236 = vmatpush.msra.mxu0 %v957
        %2237 = vmatpush.msra.mxu0 %v945
        %2238 = vmatpush.msra.mxu0 %v933
        %2239 = vmatpush.msra.mxu0 %v921
        %2240 = vmatpush.msra.mxu0 %v909
        %2241 = vmatpush.msra.mxu0 %v897
        %2242 = vmatpush.msra.mxu0 %v885
        %2243 = vmatmul.f32.gmra.mxu0 %v736
        %v2244 = vpop.f32.mrf.mxu0
        %v2245 = vadd.f32 %v1657, %v2244
        %2246 = vmatmul.f32.gmra.mxu0 %v739
        %v2247 = vpop.f32.mrf.mxu0
        %v2248 = vadd.f32 %v1657, %v2247
        %2249 = vdwg.mxu0
        %2250 = vmatpush.msra.mxu0 %v1257
        %2251 = vmatpush.msra.mxu0 %v1245
        %2252 = vmatpush.msra.mxu0 %v1233
        %2253 = vmatpush.msra.mxu0 %v1221
        %2254 = vmatpush.msra.mxu0 %v1209
        %2255 = vmatpush.msra.mxu0 %v1197
        %2256 = vmatpush.msra.mxu0 %v1185
        %2257 = vmatpush.msra.mxu0 %v1173
        %2258 = vmatpush.msra.mxu0 %v1161
        %2259 = vmatpush.msra.mxu0 %v1149
        %2260 = vmatpush.msra.mxu0 %v1137
        %2261 = vmatpush.msra.mxu0 %v1125
        %2262 = vmatpush.msra.mxu0 %v1113
        %2263 = vmatpush.msra.mxu0 %v1101
        %2264 = vmatpush.msra.mxu0 %v1089
        %2265 = vmatpush.msra.mxu0 %v1077
        %2266 = vmatmul.f32.gmra.mxu0 %v782
        %v2267 = vpop.f32.mrf.mxu0
        %v2268 = vadd.f32 %v2245, %v2267
        %2269 = vmatmul.f32.gmra.mxu0 %v785
        %v2270 = vpop.f32.mrf.mxu0
        %v2271 = vadd.f32 %v2248, %v2270
        %2272 = vdwg.mxu0
        %2273 = vmatpush.msra.mxu0 %v1449
        %2274 = vmatpush.msra.mxu0 %v1437
        %2275 = vmatpush.msra.mxu0 %v1425
        %2276 = vmatpush.msra.mxu0 %v1413
        %2277 = vmatpush.msra.mxu0 %v1401
        %2278 = vmatpush.msra.mxu0 %v1389
        %2279 = vmatpush.msra.mxu0 %v1377
        %2280 = vmatpush.msra.mxu0 %v1365
        %2281 = vmatpush.msra.mxu0 %v1353
        %2282 = vmatpush.msra.mxu0 %v1341
        %2283 = vmatpush.msra.mxu0 %v1329
        %2284 = vmatpush.msra.mxu0 %v1317
        %2285 = vmatpush.msra.mxu0 %v1305
        %2286 = vmatpush.msra.mxu0 %v1293
        %2287 = vmatpush.msra.mxu0 %v1281
        %2288 = vmatpush.msra.mxu0 %v1269
        %2289 = vmatmul.f32.gmra.mxu0 %v828
        %v2290 = vpop.f32.mrf.mxu0
        %v2291 = vadd.f32 %v2268, %v2290
        %2292 = vmatmul.f32.gmra.mxu0 %v831
        %v2293 = vpop.f32.mrf.mxu0
        %v2294 = vadd.f32 %v2271, %v2293
        %2295 = vdwg.mxu0
        %2296 = vmatpush.msra.mxu0 %v1641
        %2297 = vmatpush.msra.mxu0 %v1629
        %2298 = vmatpush.msra.mxu0 %v1617
        %2299 = vmatpush.msra.mxu0 %v1605
        %2300 = vmatpush.msra.mxu0 %v1593
        %2301 = vmatpush.msra.mxu0 %v1581
        %2302 = vmatpush.msra.mxu0 %v1569
        %2303 = vmatpush.msra.mxu0 %v1557
        %2304 = vmatpush.msra.mxu0 %v1545
        %2305 = vmatpush.msra.mxu0 %v1533
        %2306 = vmatpush.msra.mxu0 %v1521
        %2307 = vmatpush.msra.mxu0 %v1509
        %2308 = vmatpush.msra.mxu0 %v1497
        %2309 = vmatpush.msra.mxu0 %v1485
        %2310 = vmatpush.msra.mxu0 %v1473
        %2311 = vmatpush.msra.mxu0 %v1461
        %2312 = vmatmul.f32.gmra.mxu0 %v874
        %v2313 = vpop.f32.mrf.mxu0
        %v2314 = vadd.f32 %v2291, %v2313
        %2315 = vmatmul.f32.gmra.mxu0 %v877
        %v2316 = vpop.f32.mrf.mxu0
        %v2317 = vadd.f32 %v2294, %v2316
        %2318 = vdwg.mxu0
        %2319 = vmatpush.msra.mxu0 %v1066
        %2320 = vmatpush.msra.mxu0 %v1054
        %2321 = vmatpush.msra.mxu0 %v1042
        %2322 = vmatpush.msra.mxu0 %v1030
        %2323 = vmatpush.msra.mxu0 %v1018
        %2324 = vmatpush.msra.mxu0 %v1006
        %2325 = vmatpush.msra.mxu0 %v994
        %2326 = vmatpush.msra.mxu0 %v982
        %2327 = vmatpush.msra.mxu0 %v970
        %2328 = vmatpush.msra.mxu0 %v958
        %2329 = vmatpush.msra.mxu0 %v946
        %2330 = vmatpush.msra.mxu0 %v934
        %2331 = vmatpush.msra.mxu0 %v922
        %2332 = vmatpush.msra.mxu0 %v910
        %2333 = vmatpush.msra.mxu0 %v898
        %2334 = vmatpush.msra.mxu0 %v886
        %2335 = vmatmul.f32.gmra.mxu0 %v736
        %v2336 = vpop.f32.mrf.mxu0
        %v2337 = vadd.f32 %v1658, %v2336
        %2338 = vmatmul.f32.gmra.mxu0 %v739
        %v2339 = vpop.f32.mrf.mxu0
        %v2340 = vadd.f32 %v1658, %v2339
        %2341 = vdwg.mxu0
        %2342 = vmatpush.msra.mxu0 %v1258
        %2343 = vmatpush.msra.mxu0 %v1246
        %2344 = vmatpush.msra.mxu0 %v1234
        %2345 = vmatpush.msra.mxu0 %v1222
        %2346 = vmatpush.msra.mxu0 %v1210
        %2347 = vmatpush.msra.mxu0 %v1198
        %2348 = vmatpush.msra.mxu0 %v1186
        %2349 = vmatpush.msra.mxu0 %v1174
        %2350 = vmatpush.msra.mxu0 %v1162
        %2351 = vmatpush.msra.mxu0 %v1150
        %2352 = vmatpush.msra.mxu0 %v1138
        %2353 = vmatpush.msra.mxu0 %v1126
        %2354 = vmatpush.msra.mxu0 %v1114
        %2355 = vmatpush.msra.mxu0 %v1102
        %2356 = vmatpush.msra.mxu0 %v1090
        %2357 = vmatpush.msra.mxu0 %v1078
        %2358 = vmatmul.f32.gmra.mxu0 %v782
        %v2359 = vpop.f32.mrf.mxu0
        %v2360 = vadd.f32 %v2337, %v2359
        %2361 = vmatmul.f32.gmra.mxu0 %v785
        %v2362 = vpop.f32.mrf.mxu0
        %v2363 = vadd.f32 %v2340, %v2362
        %2364 = vdwg.mxu0
        %2365 = vmatpush.msra.mxu0 %v1450
        %2366 = vmatpush.msra.mxu0 %v1438
        %2367 = vmatpush.msra.mxu0 %v1426
        %2368 = vmatpush.msra.mxu0 %v1414
        %2369 = vmatpush.msra.mxu0 %v1402
        %2370 = vmatpush.msra.mxu0 %v1390
        %2371 = vmatpush.msra.mxu0 %v1378
        %2372 = vmatpush.msra.mxu0 %v1366
        %2373 = vmatpush.msra.mxu0 %v1354
        %2374 = vmatpush.msra.mxu0 %v1342
        %2375 = vmatpush.msra.mxu0 %v1330
        %2376 = vmatpush.msra.mxu0 %v1318
        %2377 = vmatpush.msra.mxu0 %v1306
        %2378 = vmatpush.msra.mxu0 %v1294
        %2379 = vmatpush.msra.mxu0 %v1282
        %2380 = vmatpush.msra.mxu0 %v1270
        %2381 = vmatmul.f32.gmra.mxu0 %v828
        %v2382 = vpop.f32.mrf.mxu0
        %v2383 = vadd.f32 %v2360, %v2382
        %2384 = vmatmul.f32.gmra.mxu0 %v831
        %v2385 = vpop.f32.mrf.mxu0
        %v2386 = vadd.f32 %v2363, %v2385
        %2387 = vdwg.mxu0
        %2388 = vmatpush.msra.mxu0 %v1642
        %2389 = vmatpush.msra.mxu0 %v1630
        %2390 = vmatpush.msra.mxu0 %v1618
        %2391 = vmatpush.msra.mxu0 %v1606
        %2392 = vmatpush.msra.mxu0 %v1594
        %2393 = vmatpush.msra.mxu0 %v1582
        %2394 = vmatpush.msra.mxu0 %v1570
        %2395 = vmatpush.msra.mxu0 %v1558
        %2396 = vmatpush.msra.mxu0 %v1546
        %2397 = vmatpush.msra.mxu0 %v1534
        %2398 = vmatpush.msra.mxu0 %v1522
        %2399 = vmatpush.msra.mxu0 %v1510
        %2400 = vmatpush.msra.mxu0 %v1498
        %2401 = vmatpush.msra.mxu0 %v1486
        %2402 = vmatpush.msra.mxu0 %v1474
        %2403 = vmatpush.msra.mxu0 %v1462
        %2404 = vmatmul.f32.gmra.mxu0 %v874
        %v2405 = vpop.f32.mrf.mxu0
        %v2406 = vadd.f32 %v2383, %v2405
        %2407 = vmatmul.f32.gmra.mxu0 %v877
        %v2408 = vpop.f32.mrf.mxu0
        %v2409 = vadd.f32 %v2386, %v2408
        %2410 = vdwg.mxu0
        %2411 = vmatpush.msra.mxu0 %v1067
        %2412 = vmatpush.msra.mxu0 %v1055
        %2413 = vmatpush.msra.mxu0 %v1043
        %2414 = vmatpush.msra.mxu0 %v1031
        %2415 = vmatpush.msra.mxu0 %v1019
        %2416 = vmatpush.msra.mxu0 %v1007
        %2417 = vmatpush.msra.mxu0 %v995
        %2418 = vmatpush.msra.mxu0 %v983
        %2419 = vmatpush.msra.mxu0 %v971
        %2420 = vmatpush.msra.mxu0 %v959
        %2421 = vmatpush.msra.mxu0 %v947
        %2422 = vmatpush.msra.mxu0 %v935
        %2423 = vmatpush.msra.mxu0 %v923
        %2424 = vmatpush.msra.mxu0 %v911
        %2425 = vmatpush.msra.mxu0 %v899
        %2426 = vmatpush.msra.mxu0 %v887
        %2427 = vmatmul.f32.gmra.mxu0 %v736
        %v2428 = vpop.f32.mrf.mxu0
        %v2429 = vadd.f32 %v1659, %v2428
        %2430 = vmatmul.f32.gmra.mxu0 %v739
        %v2431 = vpop.f32.mrf.mxu0
        %v2432 = vadd.f32 %v1659, %v2431
        %2433 = vdwg.mxu0
        %2434 = vmatpush.msra.mxu0 %v1259
        %2435 = vmatpush.msra.mxu0 %v1247
        %2436 = vmatpush.msra.mxu0 %v1235
        %2437 = vmatpush.msra.mxu0 %v1223
        %2438 = vmatpush.msra.mxu0 %v1211
        %2439 = vmatpush.msra.mxu0 %v1199
        %2440 = vmatpush.msra.mxu0 %v1187
        %2441 = vmatpush.msra.mxu0 %v1175
        %2442 = vmatpush.msra.mxu0 %v1163
        %2443 = vmatpush.msra.mxu0 %v1151
        %2444 = vmatpush.msra.mxu0 %v1139
        %2445 = vmatpush.msra.mxu0 %v1127
        %2446 = vmatpush.msra.mxu0 %v1115
        %2447 = vmatpush.msra.mxu0 %v1103
        %2448 = vmatpush.msra.mxu0 %v1091
        %2449 = vmatpush.msra.mxu0 %v1079
        %2450 = vmatmul.f32.gmra.mxu0 %v782
        %v2451 = vpop.f32.mrf.mxu0
        %v2452 = vadd.f32 %v2429, %v2451
        %2453 = vmatmul.f32.gmra.mxu0 %v785
        %v2454 = vpop.f32.mrf.mxu0
        %v2455 = vadd.f32 %v2432, %v2454
        %2456 = vdwg.mxu0
        %2457 = vmatpush.msra.mxu0 %v1451
        %2458 = vmatpush.msra.mxu0 %v1439
        %2459 = vmatpush.msra.mxu0 %v1427
        %2460 = vmatpush.msra.mxu0 %v1415
        %2461 = vmatpush.msra.mxu0 %v1403
        %2462 = vmatpush.msra.mxu0 %v1391
        %2463 = vmatpush.msra.mxu0 %v1379
        %2464 = vmatpush.msra.mxu0 %v1367
        %2465 = vmatpush.msra.mxu0 %v1355
        %2466 = vmatpush.msra.mxu0 %v1343
        %2467 = vmatpush.msra.mxu0 %v1331
        %2468 = vmatpush.msra.mxu0 %v1319
        %2469 = vmatpush.msra.mxu0 %v1307
        %2470 = vmatpush.msra.mxu0 %v1295
        %2471 = vmatpush.msra.mxu0 %v1283
        %2472 = vmatpush.msra.mxu0 %v1271
        %2473 = vmatmul.f32.gmra.mxu0 %v828
        %v2474 = vpop.f32.mrf.mxu0
        %v2475 = vadd.f32 %v2452, %v2474
        %2476 = vmatmul.f32.gmra.mxu0 %v831
        %v2477 = vpop.f32.mrf.mxu0
        %v2478 = vadd.f32 %v2455, %v2477
        %2479 = vdwg.mxu0
        %2480 = vmatpush.msra.mxu0 %v1643
        %2481 = vmatpush.msra.mxu0 %v1631
        %2482 = vmatpush.msra.mxu0 %v1619
        %2483 = vmatpush.msra.mxu0 %v1607
        %2484 = vmatpush.msra.mxu0 %v1595
        %2485 = vmatpush.msra.mxu0 %v1583
        %2486 = vmatpush.msra.mxu0 %v1571
        %2487 = vmatpush.msra.mxu0 %v1559
        %2488 = vmatpush.msra.mxu0 %v1547
        %2489 = vmatpush.msra.mxu0 %v1535
        %2490 = vmatpush.msra.mxu0 %v1523
        %2491 = vmatpush.msra.mxu0 %v1511
        %2492 = vmatpush.msra.mxu0 %v1499
        %2493 = vmatpush.msra.mxu0 %v1487
        %2494 = vmatpush.msra.mxu0 %v1475
        %2495 = vmatpush.msra.mxu0 %v1463
        %2496 = vmatmul.f32.gmra.mxu0 %v874
        %v2497 = vpop.f32.mrf.mxu0
        %v2498 = vadd.f32 %v2475, %v2497
        %2499 = vmatmul.f32.gmra.mxu0 %v877
        %v2500 = vpop.f32.mrf.mxu0
        %v2501 = vadd.f32 %v2478, %v2500
        %2502 = vdwg.mxu0
        %2503 = vmatpush.msra.mxu0 %v1068
        %2504 = vmatpush.msra.mxu0 %v1056
        %2505 = vmatpush.msra.mxu0 %v1044
        %2506 = vmatpush.msra.mxu0 %v1032
        %2507 = vmatpush.msra.mxu0 %v1020
        %2508 = vmatpush.msra.mxu0 %v1008
        %2509 = vmatpush.msra.mxu0 %v996
        %2510 = vmatpush.msra.mxu0 %v984
        %2511 = vmatpush.msra.mxu0 %v972
        %2512 = vmatpush.msra.mxu0 %v960
        %2513 = vmatpush.msra.mxu0 %v948
        %2514 = vmatpush.msra.mxu0 %v936
        %2515 = vmatpush.msra.mxu0 %v924
        %2516 = vmatpush.msra.mxu0 %v912
        %2517 = vmatpush.msra.mxu0 %v900
        %2518 = vmatpush.msra.mxu0 %v888
        %2519 = vmatmul.f32.gmra.mxu0 %v736
        %v2520 = vpop.f32.mrf.mxu0
        %v2521 = vadd.f32 %v1660, %v2520
        %2522 = vmatmul.f32.gmra.mxu0 %v739
        %v2523 = vpop.f32.mrf.mxu0
        %v2524 = vadd.f32 %v1660, %v2523
        %2525 = vdwg.mxu0
        %2526 = vmatpush.msra.mxu0 %v1260
        %2527 = vmatpush.msra.mxu0 %v1248
        %2528 = vmatpush.msra.mxu0 %v1236
        %2529 = vmatpush.msra.mxu0 %v1224
        %2530 = vmatpush.msra.mxu0 %v1212
        %2531 = vmatpush.msra.mxu0 %v1200
        %2532 = vmatpush.msra.mxu0 %v1188
        %2533 = vmatpush.msra.mxu0 %v1176
        %2534 = vmatpush.msra.mxu0 %v1164
        %2535 = vmatpush.msra.mxu0 %v1152
        %2536 = vmatpush.msra.mxu0 %v1140
        %2537 = vmatpush.msra.mxu0 %v1128
        %2538 = vmatpush.msra.mxu0 %v1116
        %2539 = vmatpush.msra.mxu0 %v1104
        %2540 = vmatpush.msra.mxu0 %v1092
        %2541 = vmatpush.msra.mxu0 %v1080
        %2542 = vmatmul.f32.gmra.mxu0 %v782
        %v2543 = vpop.f32.mrf.mxu0
        %v2544 = vadd.f32 %v2521, %v2543
        %2545 = vmatmul.f32.gmra.mxu0 %v785
        %v2546 = vpop.f32.mrf.mxu0
        %v2547 = vadd.f32 %v2524, %v2546
        %2548 = vdwg.mxu0
        %2549 = vmatpush.msra.mxu0 %v1452
        %2550 = vmatpush.msra.mxu0 %v1440
        %2551 = vmatpush.msra.mxu0 %v1428
        %2552 = vmatpush.msra.mxu0 %v1416
        %2553 = vmatpush.msra.mxu0 %v1404
        %2554 = vmatpush.msra.mxu0 %v1392
        %2555 = vmatpush.msra.mxu0 %v1380
        %2556 = vmatpush.msra.mxu0 %v1368
        %2557 = vmatpush.msra.mxu0 %v1356
        %2558 = vmatpush.msra.mxu0 %v1344
        %2559 = vmatpush.msra.mxu0 %v1332
        %2560 = vmatpush.msra.mxu0 %v1320
        %2561 = vmatpush.msra.mxu0 %v1308
        %2562 = vmatpush.msra.mxu0 %v1296
        %2563 = vmatpush.msra.mxu0 %v1284
        %2564 = vmatpush.msra.mxu0 %v1272
        %2565 = vmatmul.f32.gmra.mxu0 %v828
        %v2566 = vpop.f32.mrf.mxu0
        %v2567 = vadd.f32 %v2544, %v2566
        %2568 = vmatmul.f32.gmra.mxu0 %v831
        %v2569 = vpop.f32.mrf.mxu0
        %v2570 = vadd.f32 %v2547, %v2569
        %2571 = vdwg.mxu0
        %2572 = vmatpush.msra.mxu0 %v1644
        %2573 = vmatpush.msra.mxu0 %v1632
        %2574 = vmatpush.msra.mxu0 %v1620
        %2575 = vmatpush.msra.mxu0 %v1608
        %2576 = vmatpush.msra.mxu0 %v1596
        %2577 = vmatpush.msra.mxu0 %v1584
        %2578 = vmatpush.msra.mxu0 %v1572
        %2579 = vmatpush.msra.mxu0 %v1560
        %2580 = vmatpush.msra.mxu0 %v1548
        %2581 = vmatpush.msra.mxu0 %v1536
        %2582 = vmatpush.msra.mxu0 %v1524
        %2583 = vmatpush.msra.mxu0 %v1512
        %2584 = vmatpush.msra.mxu0 %v1500
        %2585 = vmatpush.msra.mxu0 %v1488
        %2586 = vmatpush.msra.mxu0 %v1476
        %2587 = vmatpush.msra.mxu0 %v1464
        %2588 = vmatmul.f32.gmra.mxu0 %v874
        %v2589 = vpop.f32.mrf.mxu0
        %v2590 = vadd.f32 %v2567, %v2589
        %2591 = vmatmul.f32.gmra.mxu0 %v877
        %v2592 = vpop.f32.mrf.mxu0
        %v2593 = vadd.f32 %v2570, %v2592
        %2594 = vdwg.mxu0
        %2595 = vmatpush.msra.mxu0 %v1069
        %2596 = vmatpush.msra.mxu0 %v1057
        %2597 = vmatpush.msra.mxu0 %v1045
        %2598 = vmatpush.msra.mxu0 %v1033
        %2599 = vmatpush.msra.mxu0 %v1021
        %2600 = vmatpush.msra.mxu0 %v1009
        %2601 = vmatpush.msra.mxu0 %v997
        %2602 = vmatpush.msra.mxu0 %v985
        %2603 = vmatpush.msra.mxu0 %v973
        %2604 = vmatpush.msra.mxu0 %v961
        %2605 = vmatpush.msra.mxu0 %v949
        %2606 = vmatpush.msra.mxu0 %v937
        %2607 = vmatpush.msra.mxu0 %v925
        %2608 = vmatpush.msra.mxu0 %v913
        %2609 = vmatpush.msra.mxu0 %v901
        %2610 = vmatpush.msra.mxu0 %v889
        %2611 = vmatmul.f32.gmra.mxu0 %v736
        %v2612 = vpop.f32.mrf.mxu0
        %v2613 = vadd.f32 %v1661, %v2612
        %2614 = vmatmul.f32.gmra.mxu0 %v739
        %v2615 = vpop.f32.mrf.mxu0
        %v2616 = vadd.f32 %v1661, %v2615
        %2617 = vdwg.mxu0
        %2618 = vmatpush.msra.mxu0 %v1261
        %2619 = vmatpush.msra.mxu0 %v1249
        %2620 = vmatpush.msra.mxu0 %v1237
        %2621 = vmatpush.msra.mxu0 %v1225
        %2622 = vmatpush.msra.mxu0 %v1213
        %2623 = vmatpush.msra.mxu0 %v1201
        %2624 = vmatpush.msra.mxu0 %v1189
        %2625 = vmatpush.msra.mxu0 %v1177
        %2626 = vmatpush.msra.mxu0 %v1165
        %2627 = vmatpush.msra.mxu0 %v1153
        %2628 = vmatpush.msra.mxu0 %v1141
        %2629 = vmatpush.msra.mxu0 %v1129
        %2630 = vmatpush.msra.mxu0 %v1117
        %2631 = vmatpush.msra.mxu0 %v1105
        %2632 = vmatpush.msra.mxu0 %v1093
        %2633 = vmatpush.msra.mxu0 %v1081
        %2634 = vmatmul.f32.gmra.mxu0 %v782
        %v2635 = vpop.f32.mrf.mxu0
        %v2636 = vadd.f32 %v2613, %v2635
        %2637 = vmatmul.f32.gmra.mxu0 %v785
        %v2638 = vpop.f32.mrf.mxu0
        %v2639 = vadd.f32 %v2616, %v2638
        %2640 = vdwg.mxu0
        %2641 = vmatpush.msra.mxu0 %v1453
        %2642 = vmatpush.msra.mxu0 %v1441
        %2643 = vmatpush.msra.mxu0 %v1429
        %2644 = vmatpush.msra.mxu0 %v1417
        %2645 = vmatpush.msra.mxu0 %v1405
        %2646 = vmatpush.msra.mxu0 %v1393
        %2647 = vmatpush.msra.mxu0 %v1381
        %2648 = vmatpush.msra.mxu0 %v1369
        %2649 = vmatpush.msra.mxu0 %v1357
        %2650 = vmatpush.msra.mxu0 %v1345
        %2651 = vmatpush.msra.mxu0 %v1333
        %2652 = vmatpush.msra.mxu0 %v1321
        %2653 = vmatpush.msra.mxu0 %v1309
        %2654 = vmatpush.msra.mxu0 %v1297
        %2655 = vmatpush.msra.mxu0 %v1285
        %2656 = vmatpush.msra.mxu0 %v1273
        %2657 = vmatmul.f32.gmra.mxu0 %v828
        %v2658 = vpop.f32.mrf.mxu0
        %v2659 = vadd.f32 %v2636, %v2658
        %2660 = vmatmul.f32.gmra.mxu0 %v831
        %v2661 = vpop.f32.mrf.mxu0
        %v2662 = vadd.f32 %v2639, %v2661
        %2663 = vdwg.mxu0
        %2664 = vmatpush.msra.mxu0 %v1645
        %2665 = vmatpush.msra.mxu0 %v1633
        %2666 = vmatpush.msra.mxu0 %v1621
        %2667 = vmatpush.msra.mxu0 %v1609
        %2668 = vmatpush.msra.mxu0 %v1597
        %2669 = vmatpush.msra.mxu0 %v1585
        %2670 = vmatpush.msra.mxu0 %v1573
        %2671 = vmatpush.msra.mxu0 %v1561
        %2672 = vmatpush.msra.mxu0 %v1549
        %2673 = vmatpush.msra.mxu0 %v1537
        %2674 = vmatpush.msra.mxu0 %v1525
        %2675 = vmatpush.msra.mxu0 %v1513
        %2676 = vmatpush.msra.mxu0 %v1501
        %2677 = vmatpush.msra.mxu0 %v1489
        %2678 = vmatpush.msra.mxu0 %v1477
        %2679 = vmatpush.msra.mxu0 %v1465
        %2680 = vmatmul.f32.gmra.mxu0 %v874
        %v2681 = vpop.f32.mrf.mxu0
        %v2682 = vadd.f32 %v2659, %v2681
        %2683 = vmatmul.f32.gmra.mxu0 %v877
        %v2684 = vpop.f32.mrf.mxu0
        %v2685 = vadd.f32 %v2662, %v2684
        %2686 = vdwg.mxu0
        %2687 = vmatpush.msra.mxu0 %v1070
        %2688 = vmatpush.msra.mxu0 %v1058
        %2689 = vmatpush.msra.mxu0 %v1046
        %2690 = vmatpush.msra.mxu0 %v1034
        %2691 = vmatpush.msra.mxu0 %v1022
        %2692 = vmatpush.msra.mxu0 %v1010
        %2693 = vmatpush.msra.mxu0 %v998
        %2694 = vmatpush.msra.mxu0 %v986
        %2695 = vmatpush.msra.mxu0 %v974
        %2696 = vmatpush.msra.mxu0 %v962
        %2697 = vmatpush.msra.mxu0 %v950
        %2698 = vmatpush.msra.mxu0 %v938
        %2699 = vmatpush.msra.mxu0 %v926
        %2700 = vmatpush.msra.mxu0 %v914
        %2701 = vmatpush.msra.mxu0 %v902
        %2702 = vmatpush.msra.mxu0 %v890
        %2703 = vmatmul.f32.gmra.mxu0 %v736
        %v2704 = vpop.f32.mrf.mxu0
        %v2705 = vadd.f32 %v1662, %v2704
        %2706 = vmatmul.f32.gmra.mxu0 %v739
        %v2707 = vpop.f32.mrf.mxu0
        %v2708 = vadd.f32 %v1662, %v2707
        %2709 = vdwg.mxu0
        %2710 = vmatpush.msra.mxu0 %v1262
        %2711 = vmatpush.msra.mxu0 %v1250
        %2712 = vmatpush.msra.mxu0 %v1238
        %2713 = vmatpush.msra.mxu0 %v1226
        %2714 = vmatpush.msra.mxu0 %v1214
        %2715 = vmatpush.msra.mxu0 %v1202
        %2716 = vmatpush.msra.mxu0 %v1190
        %2717 = vmatpush.msra.mxu0 %v1178
        %2718 = vmatpush.msra.mxu0 %v1166
        %2719 = vmatpush.msra.mxu0 %v1154
        %2720 = vmatpush.msra.mxu0 %v1142
        %2721 = vmatpush.msra.mxu0 %v1130
        %2722 = vmatpush.msra.mxu0 %v1118
        %2723 = vmatpush.msra.mxu0 %v1106
        %2724 = vmatpush.msra.mxu0 %v1094
        %2725 = vmatpush.msra.mxu0 %v1082
        %2726 = vmatmul.f32.gmra.mxu0 %v782
        %v2727 = vpop.f32.mrf.mxu0
        %v2728 = vadd.f32 %v2705, %v2727
        %2729 = vmatmul.f32.gmra.mxu0 %v785
        %v2730 = vpop.f32.mrf.mxu0
        %v2731 = vadd.f32 %v2708, %v2730
        %2732 = vdwg.mxu0
        %2733 = vmatpush.msra.mxu0 %v1454
        %2734 = vmatpush.msra.mxu0 %v1442
        %2735 = vmatpush.msra.mxu0 %v1430
        %2736 = vmatpush.msra.mxu0 %v1418
        %2737 = vmatpush.msra.mxu0 %v1406
        %2738 = vmatpush.msra.mxu0 %v1394
        %2739 = vmatpush.msra.mxu0 %v1382
        %2740 = vmatpush.msra.mxu0 %v1370
        %2741 = vmatpush.msra.mxu0 %v1358
        %2742 = vmatpush.msra.mxu0 %v1346
        %2743 = vmatpush.msra.mxu0 %v1334
        %2744 = vmatpush.msra.mxu0 %v1322
        %2745 = vmatpush.msra.mxu0 %v1310
        %2746 = vmatpush.msra.mxu0 %v1298
        %2747 = vmatpush.msra.mxu0 %v1286
        %2748 = vmatpush.msra.mxu0 %v1274
        %2749 = vmatmul.f32.gmra.mxu0 %v828
        %v2750 = vpop.f32.mrf.mxu0
        %v2751 = vadd.f32 %v2728, %v2750
        %2752 = vmatmul.f32.gmra.mxu0 %v831
        %v2753 = vpop.f32.mrf.mxu0
        %v2754 = vadd.f32 %v2731, %v2753
        %2755 = vdwg.mxu0
        %2756 = vmatpush.msra.mxu0 %v1646
        %2757 = vmatpush.msra.mxu0 %v1634
        %2758 = vmatpush.msra.mxu0 %v1622
        %2759 = vmatpush.msra.mxu0 %v1610
        %2760 = vmatpush.msra.mxu0 %v1598
        %2761 = vmatpush.msra.mxu0 %v1586
        %2762 = vmatpush.msra.mxu0 %v1574
        %2763 = vmatpush.msra.mxu0 %v1562
        %2764 = vmatpush.msra.mxu0 %v1550
        %2765 = vmatpush.msra.mxu0 %v1538
        %2766 = vmatpush.msra.mxu0 %v1526
        %2767 = vmatpush.msra.mxu0 %v1514
        %2768 = vmatpush.msra.mxu0 %v1502
        %2769 = vmatpush.msra.mxu0 %v1490
        %2770 = vmatpush.msra.mxu0 %v1478
        %2771 = vmatpush.msra.mxu0 %v1466
        %2772 = vmatmul.f32.gmra.mxu0 %v874
        %v2773 = vpop.f32.mrf.mxu0
        %v2774 = vadd.f32 %v2751, %v2773
        %2775 = vmatmul.f32.gmra.mxu0 %v877
        %v2776 = vpop.f32.mrf.mxu0
        %v2777 = vadd.f32 %v2754, %v2776
        %2778 = vdwg.mxu0
        %v2779 = vpack.c.bf16 %v1765, %v1762
        %v2780 = vpack.c.bf16 %v2133, %v2130
        %v2781 = vpack.c.bf16 %v2501, %v2498
        %vm2782 = vcmask 523264
        %v2784 = vsel %vm2782, %v2779, 0
        %v2787 = vsel %vm2782, %v2780, 0
        %2789 = vmatpush.bf16.xpose.msra.mxu0 0
        %2790 = vmatpush.bf16.xpose.msra.mxu0 0
        %2791 = vmatpush.bf16.xpose.msra.mxu0 0
        %2792 = vmatpush.bf16.xpose.msra.mxu0 0
        %2793 = vmatpush.bf16.xpose.msra.mxu0 0
        %2794 = vmatpush.bf16.xpose.msra.mxu0 0
        %2795 = vmatpush.bf16.xpose.msra.mxu0 0
        %2796 = vmatpush.bf16.xpose.msra.mxu0 %v2787
        %2797 = vmatmul.bf16.gmra.mxu0 %v2784
        %v2798 = vpop.f32.mrf.mxu0
        %v2799 = vadd.f32 0.0, %v2798
        %v2800 = vpop.f32.mrf.mxu0
        %v2801 = vadd.f32 0.0, %v2800
        %2802 = vdwg.mxu0
        %v2803 = vmul.f32 %v2799, 0.125
        %v2804 = vmul.f32 %v2801, 0.125
        %vm2805 = vcmask 130048
        %v2806 = vsel %vm2805, %v2803, -inf
        %2807 = vmax.xlane.f32.xlu0 %v2806
        %v2808 = vpop.xlane.xlu0 %2807
        %v2809 = vsel %vm2805, %v2804, -inf
        %2810 = vmax.xlane.f32.xlu0 %v2809
        %v2811 = vpop.xlane.xlu0 %2810
        %v2812 = vsub.f32 %v2803, %v2808
        %v2813 = vsub.f32 %v2804, %v2811
        %v2814 = vmul.f32 %v2812, 1.442695
        %v2815 = vpow.pop %v2814
        %v2816 = vmul.f32 %v2813, 1.442695
        %v2817 = vpow.pop %v2816
        %v2818 = vsel %vm2805, %v2815, 0.0
        %2819 = vadd.xlane.f32.xlu0 %v2818
        %v2820 = vpop.xlane.xlu0 %2819
        %v2821 = vsel %vm2805, %v2817, 0.0
        %2822 = vadd.xlane.f32.xlu0 %v2821
        %v2823 = vpop.xlane.xlu0 %2822
        %v2824 = vrcp.pop %v2820
        %v2825 = vrcp.pop %v2823
        %v2826 = vmul.f32 %v2815, %v2824
        %v2827 = vmul.f32 %v2817, %v2825
        %v2828 = vpack.c.bf16 %v2827, %v2826
        %v2830 = vsel %vm2805, %v2828, 0
        %2832 = vmatpush.bf16.msra.mxu0 0
        %2833 = vmatpush.bf16.msra.mxu0 0
        %2834 = vmatpush.bf16.msra.mxu0 0
        %2835 = vmatpush.bf16.msra.mxu0 0
        %2836 = vmatpush.bf16.msra.mxu0 0
        %2837 = vmatpush.bf16.msra.mxu0 0
        %2838 = vmatpush.bf16.msra.mxu0 0
        %2839 = vmatpush.bf16.msra.mxu0 %v2781
        %2840 = vmatmul.bf16.gmra.mxu0 %v2830
        %v2841 = vpop.f32.mrf.mxu0
        %v2842 = vadd.f32 0.0, %v2841
        %v2843 = vpop.f32.mrf.mxu0
        %v2844 = vadd.f32 0.0, %v2843
        %2845 = vdwg.mxu0
        %v2846 = vld [vmem:[#allocation8] sm:$0xff]
        %v2847 = vld [vmem:[#allocation8 + $0x8] sm:$0xff]
        %v2848 = vld [vmem:[#allocation8 + $0x10] sm:$0xff]
        %v2849 = vld [vmem:[#allocation8 + $0x18] sm:$0xff]
        %v2850 = vld [vmem:[#allocation8 + $0x20] sm:$0xff]
        %v2851 = vld [vmem:[#allocation8 + $0x28] sm:$0xff]
        %v2852 = vld [vmem:[#allocation8 + $0x30] sm:$0xff]
        %v2853 = vld [vmem:[#allocation8 + $0x38] sm:$0xff]
        %v2854 = vld [vmem:[#allocation8 + $0x40] sm:$0xff]
        %v2855 = vld [vmem:[#allocation8 + $0x48] sm:$0xff]
        %v2856 = vld [vmem:[#allocation8 + $0x50] sm:$0xff]
        %v2857 = vld [vmem:[#allocation8 + $0x58] sm:$0xff]
        %v2858 = vld [vmem:[#allocation8 + $0x60] sm:$0xff]
        %v2859 = vld [vmem:[#allocation8 + $0x68] sm:$0xff]
        %v2860 = vld [vmem:[#allocation8 + $0x70] sm:$0xff]
        %v2861 = vld [vmem:[#allocation8 + $0x78] sm:$0xff]
        %v2862 = vld [vmem:[#allocation8 + $0x80] sm:$0xff]
        %v2863 = vld [vmem:[#allocation8 + $0x88] sm:$0xff]
        %v2864 = vld [vmem:[#allocation8 + $0x90] sm:$0xff]
        %v2865 = vld [vmem:[#allocation8 + $0x98] sm:$0xff]
        %v2866 = vld [vmem:[#allocation8 + $0xa0] sm:$0xff]
        %v2867 = vld [vmem:[#allocation8 + $0xa8] sm:$0xff]
        %v2868 = vld [vmem:[#allocation8 + $0xb0] sm:$0xff]
        %v2869 = vld [vmem:[#allocation8 + $0xb8] sm:$0xff]
        %v2870 = vld [vmem:[#allocation8 + $0xc0] sm:$0xff]
        %v2871 = vld [vmem:[#allocation8 + $0xc8] sm:$0xff]
        %v2872 = vld [vmem:[#allocation8 + $0xd0] sm:$0xff]
        %v2873 = vld [vmem:[#allocation8 + $0xd8] sm:$0xff]
        %v2874 = vld [vmem:[#allocation8 + $0xe0] sm:$0xff]
        %v2875 = vld [vmem:[#allocation8 + $0xe8] sm:$0xff]
        %v2876 = vld [vmem:[#allocation8 + $0xf0] sm:$0xff]
        %v2877 = vld [vmem:[#allocation8 + $0xf8] sm:$0xff]
        %2879 = vrot.lane.b32.xlu0 %v2779, 64
        %v2880 = vpop.permute.xlu0 %2879
        %2882 = vrot.lane.b32.xlu0 %v2780, 64
        %v2883 = vpop.permute.xlu0 %2882
        %v2885 = vsel %vm2782, %v2880, 0
        %v2888 = vsel %vm2782, %v2883, 0
        %2890 = vmatpush.bf16.xpose.msra.mxu0 0
        %2891 = vmatpush.bf16.xpose.msra.mxu0 0
        %2892 = vmatpush.bf16.xpose.msra.mxu0 0
        %2893 = vmatpush.bf16.xpose.msra.mxu0 0
        %2894 = vmatpush.bf16.xpose.msra.mxu0 0
        %2895 = vmatpush.bf16.xpose.msra.mxu0 0
        %2896 = vmatpush.bf16.xpose.msra.mxu0 0
        %2897 = vmatpush.bf16.xpose.msra.mxu0 %v2888
        %2898 = vmatmul.bf16.gmra.mxu0 %v2885
        %v2899 = vpop.f32.mrf.mxu0
        %v2900 = vadd.f32 0.0, %v2899
        %v2901 = vpop.f32.mrf.mxu0
        %v2902 = vadd.f32 0.0, %v2901
        %2903 = vdwg.mxu0
        %v2904 = vmul.f32 %v2900, 0.125
        %v2905 = vmul.f32 %v2902, 0.125
        %v2906 = vsel %vm2805, %v2904, -inf
        %2907 = vmax.xlane.f32.xlu0 %v2906
        %v2908 = vpop.xlane.xlu0 %2907
        %v2909 = vsel %vm2805, %v2905, -inf
        %2910 = vmax.xlane.f32.xlu0 %v2909
        %v2911 = vpop.xlane.xlu0 %2910
        %v2912 = vsub.f32 %v2904, %v2908
        %v2913 = vsub.f32 %v2905, %v2911
        %v2914 = vmul.f32 %v2912, 1.442695
        %v2915 = vpow.pop %v2914
        %v2916 = vmul.f32 %v2913, 1.442695
        %v2917 = vpow.pop %v2916
        %v2918 = vsel %vm2805, %v2915, 0.0
        %2919 = vadd.xlane.f32.xlu0 %v2918
        %v2920 = vpop.xlane.xlu0 %2919
        %v2921 = vsel %vm2805, %v2917, 0.0
        %2922 = vadd.xlane.f32.xlu0 %v2921
        %v2923 = vpop.xlane.xlu0 %2922
        %v2924 = vrcp.pop %v2920
        %v2925 = vrcp.pop %v2923
        %v2926 = vmul.f32 %v2915, %v2924
        %v2927 = vmul.f32 %v2917, %v2925
        %v2928 = vpack.c.bf16 %v2927, %v2926
        %2930 = vrot.lane.b32.xlu0 %v2781, 64
        %v2931 = vpop.permute.xlu0 %2930
        %v2934 = vsel %vm2805, %v2928, 0
        %2936 = vmatpush.bf16.msra.mxu0 0
        %2937 = vmatpush.bf16.msra.mxu0 0
        %2938 = vmatpush.bf16.msra.mxu0 0
        %2939 = vmatpush.bf16.msra.mxu0 0
        %2940 = vmatpush.bf16.msra.mxu0 0
        %2941 = vmatpush.bf16.msra.mxu0 0
        %2942 = vmatpush.bf16.msra.mxu0 0
        %2943 = vmatpush.bf16.msra.mxu0 %v2931
        %2944 = vmatmul.bf16.gmra.mxu0 %v2934
        %v2945 = vpop.f32.mrf.mxu0
        %v2946 = vadd.f32 0.0, %v2945
        %v2947 = vpop.f32.mrf.mxu0
        %v2948 = vadd.f32 0.0, %v2947
        %2949 = vdwg.mxu0
        %v2950 = vld [vmem:[#allocation8 + $0x100] sm:$0xff]
        %v2951 = vld [vmem:[#allocation8 + $0x108] sm:$0xff]
        %v2952 = vld [vmem:[#allocation8 + $0x110] sm:$0xff]
        %v2953 = vld [vmem:[#allocation8 + $0x118] sm:$0xff]
        %v2954 = vld [vmem:[#allocation8 + $0x120] sm:$0xff]
        %v2955 = vld [vmem:[#allocation8 + $0x128] sm:$0xff]
        %v2956 = vld [vmem:[#allocation8 + $0x130] sm:$0xff]
        %v2957 = vld [vmem:[#allocation8 + $0x138] sm:$0xff]
        %v2958 = vld [vmem:[#allocation8 + $0x140] sm:$0xff]
        %v2959 = vld [vmem:[#allocation8 + $0x148] sm:$0xff]
        %v2960 = vld [vmem:[#allocation8 + $0x150] sm:$0xff]
        %v2961 = vld [vmem:[#allocation8 + $0x158] sm:$0xff]
        %v2962 = vld [vmem:[#allocation8 + $0x160] sm:$0xff]
        %v2963 = vld [vmem:[#allocation8 + $0x168] sm:$0xff]
        %v2964 = vld [vmem:[#allocation8 + $0x170] sm:$0xff]
        %v2965 = vld [vmem:[#allocation8 + $0x178] sm:$0xff]
        %v2966 = vld [vmem:[#allocation8 + $0x180] sm:$0xff]
        %v2967 = vld [vmem:[#allocation8 + $0x188] sm:$0xff]
        %v2968 = vld [vmem:[#allocation8 + $0x190] sm:$0xff]
        %v2969 = vld [vmem:[#allocation8 + $0x198] sm:$0xff]
        %v2970 = vld [vmem:[#allocation8 + $0x1a0] sm:$0xff]
        %v2971 = vld [vmem:[#allocation8 + $0x1a8] sm:$0xff]
        %v2972 = vld [vmem:[#allocation8 + $0x1b0] sm:$0xff]
        %v2973 = vld [vmem:[#allocation8 + $0x1b8] sm:$0xff]
        %v2974 = vld [vmem:[#allocation8 + $0x1c0] sm:$0xff]
        %v2975 = vld [vmem:[#allocation8 + $0x1c8] sm:$0xff]
        %v2976 = vld [vmem:[#allocation8 + $0x1d0] sm:$0xff]
        %v2977 = vld [vmem:[#allocation8 + $0x1d8] sm:$0xff]
        %v2978 = vld [vmem:[#allocation8 + $0x1e0] sm:$0xff]
        %v2979 = vld [vmem:[#allocation8 + $0x1e8] sm:$0xff]
        %v2980 = vld [vmem:[#allocation8 + $0x1f0] sm:$0xff]
        %v2981 = vld [vmem:[#allocation8 + $0x1f8] sm:$0xff]
        %v2983 = vsel %vm2782, %v2946, 0
        %v2986 = vsel %vm2782, %v2948, 0
        %2988 = vmatpush.msra.mxu0 0.0
        %2989 = vmatpush.msra.mxu0 0.0
        %2990 = vmatpush.msra.mxu0 0.0
        %2991 = vmatpush.msra.mxu0 0.0
        %2992 = vmatpush.msra.mxu0 0.0
        %2993 = vmatpush.msra.mxu0 0.0
        %2994 = vmatpush.msra.mxu0 0.0
        %2995 = vmatpush.msra.mxu0 0.0
        %2996 = vmatpush.msra.mxu0 %v2978
        %2997 = vmatpush.msra.mxu0 %v2974
        %2998 = vmatpush.msra.mxu0 %v2970
        %2999 = vmatpush.msra.mxu0 %v2966
        %3000 = vmatpush.msra.mxu0 %v2962
        %3001 = vmatpush.msra.mxu0 %v2958
        %3002 = vmatpush.msra.mxu0 %v2954
        %3003 = vmatpush.msra.mxu0 %v2950
        %3004 = vmatmul.f32.gmra.mxu0 %v2983
        %v3005 = vpop.f32.mrf.mxu0
        %v3006 = vadd.f32 0.0, %v3005
        %3007 = vmatmul.f32.gmra.mxu0 %v2986
        %v3008 = vpop.f32.mrf.mxu0
        %v3009 = vadd.f32 0.0, %v3008
        %3010 = vdwg.mxu0
        %3011 = vmatpush.msra.mxu0 0.0
        %3012 = vmatpush.msra.mxu0 0.0
        %3013 = vmatpush.msra.mxu0 0.0
        %3014 = vmatpush.msra.mxu0 0.0
        %3015 = vmatpush.msra.mxu0 0.0
        %3016 = vmatpush.msra.mxu0 0.0
        %3017 = vmatpush.msra.mxu0 0.0
        %3018 = vmatpush.msra.mxu0 0.0
        %3019 = vmatpush.msra.mxu0 %v2979
        %3020 = vmatpush.msra.mxu0 %v2975
        %3021 = vmatpush.msra.mxu0 %v2971
        %3022 = vmatpush.msra.mxu0 %v2967
        %3023 = vmatpush.msra.mxu0 %v2963
        %3024 = vmatpush.msra.mxu0 %v2959
        %3025 = vmatpush.msra.mxu0 %v2955
        %3026 = vmatpush.msra.mxu0 %v2951
        %3027 = vmatmul.f32.gmra.mxu0 %v2983
        %v3028 = vpop.f32.mrf.mxu0
        %v3029 = vadd.f32 0.0, %v3028
        %3030 = vmatmul.f32.gmra.mxu0 %v2986
        %v3031 = vpop.f32.mrf.mxu0
        %v3032 = vadd.f32 0.0, %v3031
        %3033 = vdwg.mxu0
        %3034 = vmatpush.msra.mxu0 0.0
        %3035 = vmatpush.msra.mxu0 0.0
        %3036 = vmatpush.msra.mxu0 0.0
        %3037 = vmatpush.msra.mxu0 0.0
        %3038 = vmatpush.msra.mxu0 0.0
        %3039 = vmatpush.msra.mxu0 0.0
        %3040 = vmatpush.msra.mxu0 0.0
        %3041 = vmatpush.msra.mxu0 0.0
        %3042 = vmatpush.msra.mxu0 %v2980
        %3043 = vmatpush.msra.mxu0 %v2976
        %3044 = vmatpush.msra.mxu0 %v2972
        %3045 = vmatpush.msra.mxu0 %v2968
        %3046 = vmatpush.msra.mxu0 %v2964
        %3047 = vmatpush.msra.mxu0 %v2960
        %3048 = vmatpush.msra.mxu0 %v2956
        %3049 = vmatpush.msra.mxu0 %v2952
        %3050 = vmatmul.f32.gmra.mxu0 %v2983
        %v3051 = vpop.f32.mrf.mxu0
        %v3052 = vadd.f32 0.0, %v3051
        %3053 = vmatmul.f32.gmra.mxu0 %v2986
        %v3054 = vpop.f32.mrf.mxu0
        %v3055 = vadd.f32 0.0, %v3054
        %3056 = vdwg.mxu0
        %3057 = vmatpush.msra.mxu0 0.0
        %3058 = vmatpush.msra.mxu0 0.0
        %3059 = vmatpush.msra.mxu0 0.0
        %3060 = vmatpush.msra.mxu0 0.0
        %3061 = vmatpush.msra.mxu0 0.0
        %3062 = vmatpush.msra.mxu0 0.0
        %3063 = vmatpush.msra.mxu0 0.0
        %3064 = vmatpush.msra.mxu0 0.0
        %3065 = vmatpush.msra.mxu0 %v2981
        %3066 = vmatpush.msra.mxu0 %v2977
        %3067 = vmatpush.msra.mxu0 %v2973
        %3068 = vmatpush.msra.mxu0 %v2969
        %3069 = vmatpush.msra.mxu0 %v2965
        %3070 = vmatpush.msra.mxu0 %v2961
        %3071 = vmatpush.msra.mxu0 %v2957
        %3072 = vmatpush.msra.mxu0 %v2953
        %3073 = vmatmul.f32.gmra.mxu0 %v2983
        %v3074 = vpop.f32.mrf.mxu0
        %v3075 = vadd.f32 0.0, %v3074
        %3076 = vmatmul.f32.gmra.mxu0 %v2986
        %v3077 = vpop.f32.mrf.mxu0
        %v3078 = vadd.f32 0.0, %v3077
        %3079 = vdwg.mxu0
        %v3081 = vsel %vm2782, %v2842, 0
        %v3084 = vsel %vm2782, %v2844, 0
        %3086 = vmatpush.msra.mxu0 0.0
        %3087 = vmatpush.msra.mxu0 0.0
        %3088 = vmatpush.msra.mxu0 0.0
        %3089 = vmatpush.msra.mxu0 0.0
        %3090 = vmatpush.msra.mxu0 0.0
        %3091 = vmatpush.msra.mxu0 0.0
        %3092 = vmatpush.msra.mxu0 0.0
        %3093 = vmatpush.msra.mxu0 0.0
        %3094 = vmatpush.msra.mxu0 %v2874
        %3095 = vmatpush.msra.mxu0 %v2870
        %3096 = vmatpush.msra.mxu0 %v2866
        %3097 = vmatpush.msra.mxu0 %v2862
        %3098 = vmatpush.msra.mxu0 %v2858
        %3099 = vmatpush.msra.mxu0 %v2854
        %3100 = vmatpush.msra.mxu0 %v2850
        %3101 = vmatpush.msra.mxu0 %v2846
        %3102 = vmatmul.f32.gmra.mxu0 %v3081
        %v3103 = vpop.f32.mrf.mxu0
        %v3104 = vadd.f32 %v3006, %v3103
        %3105 = vmatmul.f32.gmra.mxu0 %v3084
        %v3106 = vpop.f32.mrf.mxu0
        %v3107 = vadd.f32 %v3009, %v3106
        %3108 = vdwg.mxu0
        %3109 = vmatpush.msra.mxu0 0.0
        %3110 = vmatpush.msra.mxu0 0.0
        %3111 = vmatpush.msra.mxu0 0.0
        %3112 = vmatpush.msra.mxu0 0.0
        %3113 = vmatpush.msra.mxu0 0.0
        %3114 = vmatpush.msra.mxu0 0.0
        %3115 = vmatpush.msra.mxu0 0.0
        %3116 = vmatpush.msra.mxu0 0.0
        %3117 = vmatpush.msra.mxu0 %v2875
        %3118 = vmatpush.msra.mxu0 %v2871
        %3119 = vmatpush.msra.mxu0 %v2867
        %3120 = vmatpush.msra.mxu0 %v2863
        %3121 = vmatpush.msra.mxu0 %v2859
        %3122 = vmatpush.msra.mxu0 %v2855
        %3123 = vmatpush.msra.mxu0 %v2851
        %3124 = vmatpush.msra.mxu0 %v2847
        %3125 = vmatmul.f32.gmra.mxu0 %v3081
        %v3126 = vpop.f32.mrf.mxu0
        %v3127 = vadd.f32 %v3029, %v3126
        %3128 = vmatmul.f32.gmra.mxu0 %v3084
        %v3129 = vpop.f32.mrf.mxu0
        %v3130 = vadd.f32 %v3032, %v3129
        %3131 = vdwg.mxu0
        %3132 = vmatpush.msra.mxu0 0.0
        %3133 = vmatpush.msra.mxu0 0.0
        %3134 = vmatpush.msra.mxu0 0.0
        %3135 = vmatpush.msra.mxu0 0.0
        %3136 = vmatpush.msra.mxu0 0.0
        %3137 = vmatpush.msra.mxu0 0.0
        %3138 = vmatpush.msra.mxu0 0.0
        %3139 = vmatpush.msra.mxu0 0.0
        %3140 = vmatpush.msra.mxu0 %v2876
        %3141 = vmatpush.msra.mxu0 %v2872
        %3142 = vmatpush.msra.mxu0 %v2868
        %3143 = vmatpush.msra.mxu0 %v2864
        %3144 = vmatpush.msra.mxu0 %v2860
        %3145 = vmatpush.msra.mxu0 %v2856
        %3146 = vmatpush.msra.mxu0 %v2852
        %3147 = vmatpush.msra.mxu0 %v2848
        %3148 = vmatmul.f32.gmra.mxu0 %v3081
        %v3149 = vpop.f32.mrf.mxu0
        %v3150 = vadd.f32 %v3052, %v3149
        %3151 = vmatmul.f32.gmra.mxu0 %v3084
        %v3152 = vpop.f32.mrf.mxu0
        %v3153 = vadd.f32 %v3055, %v3152
        %3154 = vdwg.mxu0
        %3155 = vmatpush.msra.mxu0 0.0
        %3156 = vmatpush.msra.mxu0 0.0
        %3157 = vmatpush.msra.mxu0 0.0
        %3158 = vmatpush.msra.mxu0 0.0
        %3159 = vmatpush.msra.mxu0 0.0
        %3160 = vmatpush.msra.mxu0 0.0
        %3161 = vmatpush.msra.mxu0 0.0
        %3162 = vmatpush.msra.mxu0 0.0
        %3163 = vmatpush.msra.mxu0 %v2877
        %3164 = vmatpush.msra.mxu0 %v2873
        %3165 = vmatpush.msra.mxu0 %v2869
        %3166 = vmatpush.msra.mxu0 %v2865
        %3167 = vmatpush.msra.mxu0 %v2861
        %3168 = vmatpush.msra.mxu0 %v2857
        %3169 = vmatpush.msra.mxu0 %v2853
        %3170 = vmatpush.msra.mxu0 %v2849
        %3171 = vmatmul.f32.gmra.mxu0 %v3081
        %v3172 = vpop.f32.mrf.mxu0
        %v3173 = vadd.f32 %v3075, %v3172
        %3174 = vmatmul.f32.gmra.mxu0 %v3084
        %v3175 = vpop.f32.mrf.mxu0
        %v3176 = vadd.f32 %v3078, %v3175
        %3177 = vdwg.mxu0
        %v3178 = vpack.c.bf16 %v1857, %v1854
        %v3179 = vpack.c.bf16 %v2225, %v2222
        %v3180 = vpack.c.bf16 %v2593, %v2590
        %v3182 = vsel %vm2782, %v3178, 0
        %v3185 = vsel %vm2782, %v3179, 0
        %3187 = vmatpush.bf16.xpose.msra.mxu0 0
        %3188 = vmatpush.bf16.xpose.msra.mxu0 0
        %3189 = vmatpush.bf16.xpose.msra.mxu0 0
        %3190 = vmatpush.bf16.xpose.msra.mxu0 0
        %3191 = vmatpush.bf16.xpose.msra.mxu0 0
        %3192 = vmatpush.bf16.xpose.msra.mxu0 0
        %3193 = vmatpush.bf16.xpose.msra.mxu0 0
        %3194 = vmatpush.bf16.xpose.msra.mxu0 %v3185
        %3195 = vmatmul.bf16.gmra.mxu0 %v3182
        %v3196 = vpop.f32.mrf.mxu0
        %v3197 = vadd.f32 0.0, %v3196
        %v3198 = vpop.f32.mrf.mxu0
        %v3199 = vadd.f32 0.0, %v3198
        %3200 = vdwg.mxu0
        %v3201 = vmul.f32 %v3197, 0.125
        %v3202 = vmul.f32 %v3199, 0.125
        %v3203 = vsel %vm2805, %v3201, -inf
        %3204 = vmax.xlane.f32.xlu0 %v3203
        %v3205 = vpop.xlane.xlu0 %3204
        %v3206 = vsel %vm2805, %v3202, -inf
        %3207 = vmax.xlane.f32.xlu0 %v3206
        %v3208 = vpop.xlane.xlu0 %3207
        %v3209 = vsub.f32 %v3201, %v3205
        %v3210 = vsub.f32 %v3202, %v3208
        %v3211 = vmul.f32 %v3209, 1.442695
        %v3212 = vpow.pop %v3211
        %v3213 = vmul.f32 %v3210, 1.442695
        %v3214 = vpow.pop %v3213
        %v3215 = vsel %vm2805, %v3212, 0.0
        %3216 = vadd.xlane.f32.xlu0 %v3215
        %v3217 = vpop.xlane.xlu0 %3216
        %v3218 = vsel %vm2805, %v3214, 0.0
        %3219 = vadd.xlane.f32.xlu0 %v3218
        %v3220 = vpop.xlane.xlu0 %3219
        %v3221 = vrcp.pop %v3217
        %v3222 = vrcp.pop %v3220
        %v3223 = vmul.f32 %v3212, %v3221
        %v3224 = vmul.f32 %v3214, %v3222
        %v3225 = vpack.c.bf16 %v3224, %v3223
        %v3227 = vsel %vm2805, %v3225, 0
        %3229 = vmatpush.bf16.msra.mxu0 0
        %3230 = vmatpush.bf16.msra.mxu0 0
        %3231 = vmatpush.bf16.msra.mxu0 0
        %3232 = vmatpush.bf16.msra.mxu0 0
        %3233 = vmatpush.bf16.msra.mxu0 0
        %3234 = vmatpush.bf16.msra.mxu0 0
        %3235 = vmatpush.bf16.msra.mxu0 0
        %3236 = vmatpush.bf16.msra.mxu0 %v3180
        %3237 = vmatmul.bf16.gmra.mxu0 %v3227
        %v3238 = vpop.f32.mrf.mxu0
        %v3239 = vadd.f32 0.0, %v3238
        %v3240 = vpop.f32.mrf.mxu0
        %v3241 = vadd.f32 0.0, %v3240
        %3242 = vdwg.mxu0
        %v3243 = vld [vmem:[#allocation8 + $0x200] sm:$0xff]
        %v3244 = vld [vmem:[#allocation8 + $0x208] sm:$0xff]
        %v3245 = vld [vmem:[#allocation8 + $0x210] sm:$0xff]
        %v3246 = vld [vmem:[#allocation8 + $0x218] sm:$0xff]
        %v3247 = vld [vmem:[#allocation8 + $0x220] sm:$0xff]
        %v3248 = vld [vmem:[#allocation8 + $0x228] sm:$0xff]
        %v3249 = vld [vmem:[#allocation8 + $0x230] sm:$0xff]
        %v3250 = vld [vmem:[#allocation8 + $0x238] sm:$0xff]
        %v3251 = vld [vmem:[#allocation8 + $0x240] sm:$0xff]
        %v3252 = vld [vmem:[#allocation8 + $0x248] sm:$0xff]
        %v3253 = vld [vmem:[#allocation8 + $0x250] sm:$0xff]
        %v3254 = vld [vmem:[#allocation8 + $0x258] sm:$0xff]
        %v3255 = vld [vmem:[#allocation8 + $0x260] sm:$0xff]
        %v3256 = vld [vmem:[#allocation8 + $0x268] sm:$0xff]
        %v3257 = vld [vmem:[#allocation8 + $0x270] sm:$0xff]
        %v3258 = vld [vmem:[#allocation8 + $0x278] sm:$0xff]
        %v3259 = vld [vmem:[#allocation8 + $0x280] sm:$0xff]
        %v3260 = vld [vmem:[#allocation8 + $0x288] sm:$0xff]
        %v3261 = vld [vmem:[#allocation8 + $0x290] sm:$0xff]
        %v3262 = vld [vmem:[#allocation8 + $0x298] sm:$0xff]
        %v3263 = vld [vmem:[#allocation8 + $0x2a0] sm:$0xff]
        %v3264 = vld [vmem:[#allocation8 + $0x2a8] sm:$0xff]
        %v3265 = vld [vmem:[#allocation8 + $0x2b0] sm:$0xff]
        %v3266 = vld [vmem:[#allocation8 + $0x2b8] sm:$0xff]
        %v3267 = vld [vmem:[#allocation8 + $0x2c0] sm:$0xff]
        %v3268 = vld [vmem:[#allocation8 + $0x2c8] sm:$0xff]
        %v3269 = vld [vmem:[#allocation8 + $0x2d0] sm:$0xff]
        %v3270 = vld [vmem:[#allocation8 + $0x2d8] sm:$0xff]
        %v3271 = vld [vmem:[#allocation8 + $0x2e0] sm:$0xff]
        %v3272 = vld [vmem:[#allocation8 + $0x2e8] sm:$0xff]
        %v3273 = vld [vmem:[#allocation8 + $0x2f0] sm:$0xff]
        %v3274 = vld [vmem:[#allocation8 + $0x2f8] sm:$0xff]
        %v3276 = vsel %vm2782, %v3239, 0
        %v3279 = vsel %vm2782, %v3241, 0
        %3281 = vmatpush.msra.mxu0 0.0
        %3282 = vmatpush.msra.mxu0 0.0
        %3283 = vmatpush.msra.mxu0 0.0
        %3284 = vmatpush.msra.mxu0 0.0
        %3285 = vmatpush.msra.mxu0 0.0
        %3286 = vmatpush.msra.mxu0 0.0
        %3287 = vmatpush.msra.mxu0 0.0
        %3288 = vmatpush.msra.mxu0 0.0
        %3289 = vmatpush.msra.mxu0 %v3271
        %3290 = vmatpush.msra.mxu0 %v3267
        %3291 = vmatpush.msra.mxu0 %v3263
        %3292 = vmatpush.msra.mxu0 %v3259
        %3293 = vmatpush.msra.mxu0 %v3255
        %3294 = vmatpush.msra.mxu0 %v3251
        %3295 = vmatpush.msra.mxu0 %v3247
        %3296 = vmatpush.msra.mxu0 %v3243
        %3297 = vmatmul.f32.gmra.mxu0 %v3276
        %v3298 = vpop.f32.mrf.mxu0
        %v3299 = vadd.f32 0.0, %v3298
        %3300 = vmatmul.f32.gmra.mxu0 %v3279
        %v3301 = vpop.f32.mrf.mxu0
        %v3302 = vadd.f32 0.0, %v3301
        %3303 = vdwg.mxu0
        %3304 = vmatpush.msra.mxu0 0.0
        %3305 = vmatpush.msra.mxu0 0.0
        %3306 = vmatpush.msra.mxu0 0.0
        %3307 = vmatpush.msra.mxu0 0.0
        %3308 = vmatpush.msra.mxu0 0.0
        %3309 = vmatpush.msra.mxu0 0.0
        %3310 = vmatpush.msra.mxu0 0.0
        %3311 = vmatpush.msra.mxu0 0.0
        %3312 = vmatpush.msra.mxu0 %v3272
        %3313 = vmatpush.msra.mxu0 %v3268
        %3314 = vmatpush.msra.mxu0 %v3264
        %3315 = vmatpush.msra.mxu0 %v3260
        %3316 = vmatpush.msra.mxu0 %v3256
        %3317 = vmatpush.msra.mxu0 %v3252
        %3318 = vmatpush.msra.mxu0 %v3248
        %3319 = vmatpush.msra.mxu0 %v3244
        %3320 = vmatmul.f32.gmra.mxu0 %v3276
        %v3321 = vpop.f32.mrf.mxu0
        %v3322 = vadd.f32 0.0, %v3321
        %3323 = vmatmul.f32.gmra.mxu0 %v3279
        %v3324 = vpop.f32.mrf.mxu0
        %v3325 = vadd.f32 0.0, %v3324
        %3326 = vdwg.mxu0
        %3327 = vmatpush.msra.mxu0 0.0
        %3328 = vmatpush.msra.mxu0 0.0
        %3329 = vmatpush.msra.mxu0 0.0
        %3330 = vmatpush.msra.mxu0 0.0
        %3331 = vmatpush.msra.mxu0 0.0
        %3332 = vmatpush.msra.mxu0 0.0
        %3333 = vmatpush.msra.mxu0 0.0
        %3334 = vmatpush.msra.mxu0 0.0
        %3335 = vmatpush.msra.mxu0 %v3273
        %3336 = vmatpush.msra.mxu0 %v3269
        %3337 = vmatpush.msra.mxu0 %v3265
        %3338 = vmatpush.msra.mxu0 %v3261
        %3339 = vmatpush.msra.mxu0 %v3257
        %3340 = vmatpush.msra.mxu0 %v3253
        %3341 = vmatpush.msra.mxu0 %v3249
        %3342 = vmatpush.msra.mxu0 %v3245
        %3343 = vmatmul.f32.gmra.mxu0 %v3276
        %v3344 = vpop.f32.mrf.mxu0
        %v3345 = vadd.f32 0.0, %v3344
        %3346 = vmatmul.f32.gmra.mxu0 %v3279
        %v3347 = vpop.f32.mrf.mxu0
        %v3348 = vadd.f32 0.0, %v3347
        %3349 = vdwg.mxu0
        %3350 = vmatpush.msra.mxu0 0.0
        %3351 = vmatpush.msra.mxu0 0.0
        %3352 = vmatpush.msra.mxu0 0.0
        %3353 = vmatpush.msra.mxu0 0.0
        %3354 = vmatpush.msra.mxu0 0.0
        %3355 = vmatpush.msra.mxu0 0.0
        %3356 = vmatpush.msra.mxu0 0.0
        %3357 = vmatpush.msra.mxu0 0.0
        %3358 = vmatpush.msra.mxu0 %v3274
        %3359 = vmatpush.msra.mxu0 %v3270
        %3360 = vmatpush.msra.mxu0 %v3266
        %3361 = vmatpush.msra.mxu0 %v3262
        %3362 = vmatpush.msra.mxu0 %v3258
        %3363 = vmatpush.msra.mxu0 %v3254
        %3364 = vmatpush.msra.mxu0 %v3250
        %3365 = vmatpush.msra.mxu0 %v3246
        %3366 = vmatmul.f32.gmra.mxu0 %v3276
        %v3367 = vpop.f32.mrf.mxu0
        %v3368 = vadd.f32 0.0, %v3367
        %3369 = vmatmul.f32.gmra.mxu0 %v3279
        %v3370 = vpop.f32.mrf.mxu0
        %v3371 = vadd.f32 0.0, %v3370
        %3372 = vdwg.mxu0
        %v3373 = vadd.f32 %v3104, %v3299
        %v3374 = vadd.f32 %v3127, %v3322
        %v3375 = vadd.f32 %v3150, %v3345
        %v3376 = vadd.f32 %v3173, %v3368
        %v3377 = vadd.f32 %v3107, %v3302
        %v3378 = vadd.f32 %v3130, %v3325
        %v3379 = vadd.f32 %v3153, %v3348
        %v3380 = vadd.f32 %v3176, %v3371
        %3382 = vrot.lane.b32.xlu0 %v3178, 64
        %v3383 = vpop.permute.xlu0 %3382
        %3385 = vrot.lane.b32.xlu0 %v3179, 64
        %v3386 = vpop.permute.xlu0 %3385
        %v3388 = vsel %vm2782, %v3383, 0
        %v3391 = vsel %vm2782, %v3386, 0
        %3393 = vmatpush.bf16.xpose.msra.mxu0 0
        %3394 = vmatpush.bf16.xpose.msra.mxu0 0
        %3395 = vmatpush.bf16.xpose.msra.mxu0 0
        %3396 = vmatpush.bf16.xpose.msra.mxu0 0
        %3397 = vmatpush.bf16.xpose.msra.mxu0 0
        %3398 = vmatpush.bf16.xpose.msra.mxu0 0
        %3399 = vmatpush.bf16.xpose.msra.mxu0 0
        %3400 = vmatpush.bf16.xpose.msra.mxu0 %v3391
        %3401 = vmatmul.bf16.gmra.mxu0 %v3388
        %v3402 = vpop.f32.mrf.mxu0
        %v3403 = vadd.f32 0.0, %v3402
        %v3404 = vpop.f32.mrf.mxu0
        %v3405 = vadd.f32 0.0, %v3404
        %3406 = vdwg.mxu0
        %v3407 = vmul.f32 %v3403, 0.125
        %v3408 = vmul.f32 %v3405, 0.125
        %v3409 = vsel %vm2805, %v3407, -inf
        %3410 = vmax.xlane.f32.xlu0 %v3409
        %v3411 = vpop.xlane.xlu0 %3410
        %v3412 = vsel %vm2805, %v3408, -inf
        %3413 = vmax.xlane.f32.xlu0 %v3412
        %v3414 = vpop.xlane.xlu0 %3413
        %v3415 = vsub.f32 %v3407, %v3411
        %v3416 = vsub.f32 %v3408, %v3414
        %v3417 = vmul.f32 %v3415, 1.442695
        %v3418 = vpow.pop %v3417
        %v3419 = vmul.f32 %v3416, 1.442695
        %v3420 = vpow.pop %v3419
        %v3421 = vsel %vm2805, %v3418, 0.0
        %3422 = vadd.xlane.f32.xlu0 %v3421
        %v3423 = vpop.xlane.xlu0 %3422
        %v3424 = vsel %vm2805, %v3420, 0.0
        %3425 = vadd.xlane.f32.xlu0 %v3424
        %v3426 = vpop.xlane.xlu0 %3425
        %v3427 = vrcp.pop %v3423
        %v3428 = vrcp.pop %v3426
        %v3429 = vmul.f32 %v3418, %v3427
        %v3430 = vmul.f32 %v3420, %v3428
        %v3431 = vpack.c.bf16 %v3430, %v3429
        %3433 = vrot.lane.b32.xlu0 %v3180, 64
        %v3434 = vpop.permute.xlu0 %3433
        %v3437 = vsel %vm2805, %v3431, 0
        %3439 = vmatpush.bf16.msra.mxu0 0
        %3440 = vmatpush.bf16.msra.mxu0 0
        %3441 = vmatpush.bf16.msra.mxu0 0
        %3442 = vmatpush.bf16.msra.mxu0 0
        %3443 = vmatpush.bf16.msra.mxu0 0
        %3444 = vmatpush.bf16.msra.mxu0 0
        %3445 = vmatpush.bf16.msra.mxu0 0
        %3446 = vmatpush.bf16.msra.mxu0 %v3434
        %3447 = vmatmul.bf16.gmra.mxu0 %v3437
        %v3448 = vpop.f32.mrf.mxu0
        %v3449 = vadd.f32 0.0, %v3448
        %v3450 = vpop.f32.mrf.mxu0
        %v3451 = vadd.f32 0.0, %v3450
        %3452 = vdwg.mxu0
        %v3453 = vld [vmem:[#allocation8 + $0x300] sm:$0xff]
        %v3454 = vld [vmem:[#allocation8 + $0x308] sm:$0xff]
        %v3455 = vld [vmem:[#allocation8 + $0x310] sm:$0xff]
        %v3456 = vld [vmem:[#allocation8 + $0x318] sm:$0xff]
        %v3457 = vld [vmem:[#allocation8 + $0x320] sm:$0xff]
        %v3458 = vld [vmem:[#allocation8 + $0x328] sm:$0xff]
        %v3459 = vld [vmem:[#allocation8 + $0x330] sm:$0xff]
        %v3460 = vld [vmem:[#allocation8 + $0x338] sm:$0xff]
        %v3461 = vld [vmem:[#allocation8 + $0x340] sm:$0xff]
        %v3462 = vld [vmem:[#allocation8 + $0x348] sm:$0xff]
        %v3463 = vld [vmem:[#allocation8 + $0x350] sm:$0xff]
        %v3464 = vld [vmem:[#allocation8 + $0x358] sm:$0xff]
        %v3465 = vld [vmem:[#allocation8 + $0x360] sm:$0xff]
        %v3466 = vld [vmem:[#allocation8 + $0x368] sm:$0xff]
        %v3467 = vld [vmem:[#allocation8 + $0x370] sm:$0xff]
        %v3468 = vld [vmem:[#allocation8 + $0x378] sm:$0xff]
        %v3469 = vld [vmem:[#allocation8 + $0x380] sm:$0xff]
        %v3470 = vld [vmem:[#allocation8 + $0x388] sm:$0xff]
        %v3471 = vld [vmem:[#allocation8 + $0x390] sm:$0xff]
        %v3472 = vld [vmem:[#allocation8 + $0x398] sm:$0xff]
        %v3473 = vld [vmem:[#allocation8 + $0x3a0] sm:$0xff]
        %v3474 = vld [vmem:[#allocation8 + $0x3a8] sm:$0xff]
        %v3475 = vld [vmem:[#allocation8 + $0x3b0] sm:$0xff]
        %v3476 = vld [vmem:[#allocation8 + $0x3b8] sm:$0xff]
        %v3477 = vld [vmem:[#allocation8 + $0x3c0] sm:$0xff]
        %v3478 = vld [vmem:[#allocation8 + $0x3c8] sm:$0xff]
        %v3479 = vld [vmem:[#allocation8 + $0x3d0] sm:$0xff]
        %v3480 = vld [vmem:[#allocation8 + $0x3d8] sm:$0xff]
        %v3481 = vld [vmem:[#allocation8 + $0x3e0] sm:$0xff]
        %v3482 = vld [vmem:[#allocation8 + $0x3e8] sm:$0xff]
        %v3483 = vld [vmem:[#allocation8 + $0x3f0] sm:$0xff]
        %v3484 = vld [vmem:[#allocation8 + $0x3f8] sm:$0xff]
        %v3486 = vsel %vm2782, %v3449, 0
        %v3489 = vsel %vm2782, %v3451, 0
        %3491 = vmatpush.msra.mxu0 0.0
        %3492 = vmatpush.msra.mxu0 0.0
        %3493 = vmatpush.msra.mxu0 0.0
        %3494 = vmatpush.msra.mxu0 0.0
        %3495 = vmatpush.msra.mxu0 0.0
        %3496 = vmatpush.msra.mxu0 0.0
        %3497 = vmatpush.msra.mxu0 0.0
        %3498 = vmatpush.msra.mxu0 0.0
        %3499 = vmatpush.msra.mxu0 %v3481
        %3500 = vmatpush.msra.mxu0 %v3477
        %3501 = vmatpush.msra.mxu0 %v3473
        %3502 = vmatpush.msra.mxu0 %v3469
        %3503 = vmatpush.msra.mxu0 %v3465
        %3504 = vmatpush.msra.mxu0 %v3461
        %3505 = vmatpush.msra.mxu0 %v3457
        %3506 = vmatpush.msra.mxu0 %v3453
        %3507 = vmatmul.f32.gmra.mxu0 %v3486
        %v3508 = vpop.f32.mrf.mxu0
        %v3509 = vadd.f32 0.0, %v3508
        %3510 = vmatmul.f32.gmra.mxu0 %v3489
        %v3511 = vpop.f32.mrf.mxu0
        %v3512 = vadd.f32 0.0, %v3511
        %3513 = vdwg.mxu0
        %3514 = vmatpush.msra.mxu0 0.0
        %3515 = vmatpush.msra.mxu0 0.0
        %3516 = vmatpush.msra.mxu0 0.0
        %3517 = vmatpush.msra.mxu0 0.0
        %3518 = vmatpush.msra.mxu0 0.0
        %3519 = vmatpush.msra.mxu0 0.0
        %3520 = vmatpush.msra.mxu0 0.0
        %3521 = vmatpush.msra.mxu0 0.0
        %3522 = vmatpush.msra.mxu0 %v3482
        %3523 = vmatpush.msra.mxu0 %v3478
        %3524 = vmatpush.msra.mxu0 %v3474
        %3525 = vmatpush.msra.mxu0 %v3470
        %3526 = vmatpush.msra.mxu0 %v3466
        %3527 = vmatpush.msra.mxu0 %v3462
        %3528 = vmatpush.msra.mxu0 %v3458
        %3529 = vmatpush.msra.mxu0 %v3454
        %3530 = vmatmul.f32.gmra.mxu0 %v3486
        %v3531 = vpop.f32.mrf.mxu0
        %v3532 = vadd.f32 0.0, %v3531
        %3533 = vmatmul.f32.gmra.mxu0 %v3489
        %v3534 = vpop.f32.mrf.mxu0
        %v3535 = vadd.f32 0.0, %v3534
        %3536 = vdwg.mxu0
        %3537 = vmatpush.msra.mxu0 0.0
        %3538 = vmatpush.msra.mxu0 0.0
        %3539 = vmatpush.msra.mxu0 0.0
        %3540 = vmatpush.msra.mxu0 0.0
        %3541 = vmatpush.msra.mxu0 0.0
        %3542 = vmatpush.msra.mxu0 0.0
        %3543 = vmatpush.msra.mxu0 0.0
        %3544 = vmatpush.msra.mxu0 0.0
        %3545 = vmatpush.msra.mxu0 %v3483
        %3546 = vmatpush.msra.mxu0 %v3479
        %3547 = vmatpush.msra.mxu0 %v3475
        %3548 = vmatpush.msra.mxu0 %v3471
        %3549 = vmatpush.msra.mxu0 %v3467
        %3550 = vmatpush.msra.mxu0 %v3463
        %3551 = vmatpush.msra.mxu0 %v3459
        %3552 = vmatpush.msra.mxu0 %v3455
        %3553 = vmatmul.f32.gmra.mxu0 %v3486
        %v3554 = vpop.f32.mrf.mxu0
        %v3555 = vadd.f32 0.0, %v3554
        %3556 = vmatmul.f32.gmra.mxu0 %v3489
        %v3557 = vpop.f32.mrf.mxu0
        %v3558 = vadd.f32 0.0, %v3557
        %3559 = vdwg.mxu0
        %3560 = vmatpush.msra.mxu0 0.0
        %3561 = vmatpush.msra.mxu0 0.0
        %3562 = vmatpush.msra.mxu0 0.0
        %3563 = vmatpush.msra.mxu0 0.0
        %3564 = vmatpush.msra.mxu0 0.0
        %3565 = vmatpush.msra.mxu0 0.0
        %3566 = vmatpush.msra.mxu0 0.0
        %3567 = vmatpush.msra.mxu0 0.0
        %3568 = vmatpush.msra.mxu0 %v3484
        %3569 = vmatpush.msra.mxu0 %v3480
        %3570 = vmatpush.msra.mxu0 %v3476
        %3571 = vmatpush.msra.mxu0 %v3472
        %3572 = vmatpush.msra.mxu0 %v3468
        %3573 = vmatpush.msra.mxu0 %v3464
        %3574 = vmatpush.msra.mxu0 %v3460
        %3575 = vmatpush.msra.mxu0 %v3456
        %3576 = vmatmul.f32.gmra.mxu0 %v3486
        %v3577 = vpop.f32.mrf.mxu0
        %v3578 = vadd.f32 0.0, %v3577
        %3579 = vmatmul.f32.gmra.mxu0 %v3489
        %v3580 = vpop.f32.mrf.mxu0
        %v3581 = vadd.f32 0.0, %v3580
        %3582 = vdwg.mxu0
        %v3583 = vadd.f32 %v3373, %v3509
        %v3584 = vadd.f32 %v3374, %v3532
        %v3585 = vadd.f32 %v3375, %v3555
        %v3586 = vadd.f32 %v3376, %v3578
        %v3587 = vadd.f32 %v3377, %v3512
        %v3588 = vadd.f32 %v3378, %v3535
        %v3589 = vadd.f32 %v3379, %v3558
        %v3590 = vadd.f32 %v3380, %v3581
        %v3591 = vpack.c.bf16 %v1949, %v1946
        %v3592 = vpack.c.bf16 %v2317, %v2314
        %v3593 = vpack.c.bf16 %v2685, %v2682
        %v3595 = vsel %vm2782, %v3591, 0
        %v3598 = vsel %vm2782, %v3592, 0
        %3600 = vmatpush.bf16.xpose.msra.mxu0 0
        %3601 = vmatpush.bf16.xpose.msra.mxu0 0
        %3602 = vmatpush.bf16.xpose.msra.mxu0 0
        %3603 = vmatpush.bf16.xpose.msra.mxu0 0
        %3604 = vmatpush.bf16.xpose.msra.mxu0 0
        %3605 = vmatpush.bf16.xpose.msra.mxu0 0
        %3606 = vmatpush.bf16.xpose.msra.mxu0 0
        %3607 = vmatpush.bf16.xpose.msra.mxu0 %v3598
        %3608 = vmatmul.bf16.gmra.mxu0 %v3595
        %v3609 = vpop.f32.mrf.mxu0
        %v3610 = vadd.f32 0.0, %v3609
        %v3611 = vpop.f32.mrf.mxu0
        %v3612 = vadd.f32 0.0, %v3611
        %3613 = vdwg.mxu0
        %v3614 = vmul.f32 %v3610, 0.125
        %v3615 = vmul.f32 %v3612, 0.125
        %v3616 = vsel %vm2805, %v3614, -inf
        %3617 = vmax.xlane.f32.xlu0 %v3616
        %v3618 = vpop.xlane.xlu0 %3617
        %v3619 = vsel %vm2805, %v3615, -inf
        %3620 = vmax.xlane.f32.xlu0 %v3619
        %v3621 = vpop.xlane.xlu0 %3620
        %v3622 = vsub.f32 %v3614, %v3618
        %v3623 = vsub.f32 %v3615, %v3621
        %v3624 = vmul.f32 %v3622, 1.442695
        %v3625 = vpow.pop %v3624
        %v3626 = vmul.f32 %v3623, 1.442695
        %v3627 = vpow.pop %v3626
        %v3628 = vsel %vm2805, %v3625, 0.0
        %3629 = vadd.xlane.f32.xlu0 %v3628
        %v3630 = vpop.xlane.xlu0 %3629
        %v3631 = vsel %vm2805, %v3627, 0.0
        %3632 = vadd.xlane.f32.xlu0 %v3631
        %v3633 = vpop.xlane.xlu0 %3632
        %v3634 = vrcp.pop %v3630
        %v3635 = vrcp.pop %v3633
        %v3636 = vmul.f32 %v3625, %v3634
        %v3637 = vmul.f32 %v3627, %v3635
        %v3638 = vpack.c.bf16 %v3637, %v3636
        %v3640 = vsel %vm2805, %v3638, 0
        %3642 = vmatpush.bf16.msra.mxu0 0
        %3643 = vmatpush.bf16.msra.mxu0 0
        %3644 = vmatpush.bf16.msra.mxu0 0
        %3645 = vmatpush.bf16.msra.mxu0 0
        %3646 = vmatpush.bf16.msra.mxu0 0
        %3647 = vmatpush.bf16.msra.mxu0 0
        %3648 = vmatpush.bf16.msra.mxu0 0
        %3649 = vmatpush.bf16.msra.mxu0 %v3593
        %3650 = vmatmul.bf16.gmra.mxu0 %v3640
        %v3651 = vpop.f32.mrf.mxu0
        %v3652 = vadd.f32 0.0, %v3651
        %v3653 = vpop.f32.mrf.mxu0
        %v3654 = vadd.f32 0.0, %v3653
        %3655 = vdwg.mxu0
        %v3656 = vld [vmem:[#allocation8 + $0x400] sm:$0xff]
        %v3657 = vld [vmem:[#allocation8 + $0x408] sm:$0xff]
        %v3658 = vld [vmem:[#allocation8 + $0x410] sm:$0xff]
        %v3659 = vld [vmem:[#allocation8 + $0x418] sm:$0xff]
        %v3660 = vld [vmem:[#allocation8 + $0x420] sm:$0xff]
        %v3661 = vld [vmem:[#allocation8 + $0x428] sm:$0xff]
        %v3662 = vld [vmem:[#allocation8 + $0x430] sm:$0xff]
        %v3663 = vld [vmem:[#allocation8 + $0x438] sm:$0xff]
        %v3664 = vld [vmem:[#allocation8 + $0x440] sm:$0xff]
        %v3665 = vld [vmem:[#allocation8 + $0x448] sm:$0xff]
        %v3666 = vld [vmem:[#allocation8 + $0x450] sm:$0xff]
        %v3667 = vld [vmem:[#allocation8 + $0x458] sm:$0xff]
        %v3668 = vld [vmem:[#allocation8 + $0x460] sm:$0xff]
        %v3669 = vld [vmem:[#allocation8 + $0x468] sm:$0xff]
        %v3670 = vld [vmem:[#allocation8 + $0x470] sm:$0xff]
        %v3671 = vld [vmem:[#allocation8 + $0x478] sm:$0xff]
        %v3672 = vld [vmem:[#allocation8 + $0x480] sm:$0xff]
        %v3673 = vld [vmem:[#allocation8 + $0x488] sm:$0xff]
        %v3674 = vld [vmem:[#allocation8 + $0x490] sm:$0xff]
        %v3675 = vld [vmem:[#allocation8 + $0x498] sm:$0xff]
        %v3676 = vld [vmem:[#allocation8 + $0x4a0] sm:$0xff]
        %v3677 = vld [vmem:[#allocation8 + $0x4a8] sm:$0xff]
        %v3678 = vld [vmem:[#allocation8 + $0x4b0] sm:$0xff]
        %v3679 = vld [vmem:[#allocation8 + $0x4b8] sm:$0xff]
        %v3680 = vld [vmem:[#allocation8 + $0x4c0] sm:$0xff]
        %v3681 = vld [vmem:[#allocation8 + $0x4c8] sm:$0xff]
        %v3682 = vld [vmem:[#allocation8 + $0x4d0] sm:$0xff]
        %v3683 = vld [vmem:[#allocation8 + $0x4d8] sm:$0xff]
        %v3684 = vld [vmem:[#allocation8 + $0x4e0] sm:$0xff]
        %v3685 = vld [vmem:[#allocation8 + $0x4e8] sm:$0xff]
        %v3686 = vld [vmem:[#allocation8 + $0x4f0] sm:$0xff]
        %v3687 = vld [vmem:[#allocation8 + $0x4f8] sm:$0xff]
        %v3689 = vsel %vm2782, %v3652, 0
        %v3692 = vsel %vm2782, %v3654, 0
        %3694 = vmatpush.msra.mxu0 0.0
        %3695 = vmatpush.msra.mxu0 0.0
        %3696 = vmatpush.msra.mxu0 0.0
        %3697 = vmatpush.msra.mxu0 0.0
        %3698 = vmatpush.msra.mxu0 0.0
        %3699 = vmatpush.msra.mxu0 0.0
        %3700 = vmatpush.msra.mxu0 0.0
        %3701 = vmatpush.msra.mxu0 0.0
        %3702 = vmatpush.msra.mxu0 %v3684
        %3703 = vmatpush.msra.mxu0 %v3680
        %3704 = vmatpush.msra.mxu0 %v3676
        %3705 = vmatpush.msra.mxu0 %v3672
        %3706 = vmatpush.msra.mxu0 %v3668
        %3707 = vmatpush.msra.mxu0 %v3664
        %3708 = vmatpush.msra.mxu0 %v3660
        %3709 = vmatpush.msra.mxu0 %v3656
        %3710 = vmatmul.f32.gmra.mxu0 %v3689
        %v3711 = vpop.f32.mrf.mxu0
        %v3712 = vadd.f32 0.0, %v3711
        %3713 = vmatmul.f32.gmra.mxu0 %v3692
        %v3714 = vpop.f32.mrf.mxu0
        %v3715 = vadd.f32 0.0, %v3714
        %3716 = vdwg.mxu0
        %3717 = vmatpush.msra.mxu0 0.0
        %3718 = vmatpush.msra.mxu0 0.0
        %3719 = vmatpush.msra.mxu0 0.0
        %3720 = vmatpush.msra.mxu0 0.0
        %3721 = vmatpush.msra.mxu0 0.0
        %3722 = vmatpush.msra.mxu0 0.0
        %3723 = vmatpush.msra.mxu0 0.0
        %3724 = vmatpush.msra.mxu0 0.0
        %3725 = vmatpush.msra.mxu0 %v3685
        %3726 = vmatpush.msra.mxu0 %v3681
        %3727 = vmatpush.msra.mxu0 %v3677
        %3728 = vmatpush.msra.mxu0 %v3673
        %3729 = vmatpush.msra.mxu0 %v3669
        %3730 = vmatpush.msra.mxu0 %v3665
        %3731 = vmatpush.msra.mxu0 %v3661
        %3732 = vmatpush.msra.mxu0 %v3657
        %3733 = vmatmul.f32.gmra.mxu0 %v3689
        %v3734 = vpop.f32.mrf.mxu0
        %v3735 = vadd.f32 0.0, %v3734
        %3736 = vmatmul.f32.gmra.mxu0 %v3692
        %v3737 = vpop.f32.mrf.mxu0
        %v3738 = vadd.f32 0.0, %v3737
        %3739 = vdwg.mxu0
        %3740 = vmatpush.msra.mxu0 0.0
        %3741 = vmatpush.msra.mxu0 0.0
        %3742 = vmatpush.msra.mxu0 0.0
        %3743 = vmatpush.msra.mxu0 0.0
        %3744 = vmatpush.msra.mxu0 0.0
        %3745 = vmatpush.msra.mxu0 0.0
        %3746 = vmatpush.msra.mxu0 0.0
        %3747 = vmatpush.msra.mxu0 0.0
        %3748 = vmatpush.msra.mxu0 %v3686
        %3749 = vmatpush.msra.mxu0 %v3682
        %3750 = vmatpush.msra.mxu0 %v3678
        %3751 = vmatpush.msra.mxu0 %v3674
        %3752 = vmatpush.msra.mxu0 %v3670
        %3753 = vmatpush.msra.mxu0 %v3666
        %3754 = vmatpush.msra.mxu0 %v3662
        %3755 = vmatpush.msra.mxu0 %v3658
        %3756 = vmatmul.f32.gmra.mxu0 %v3689
        %v3757 = vpop.f32.mrf.mxu0
        %v3758 = vadd.f32 0.0, %v3757
        %3759 = vmatmul.f32.gmra.mxu0 %v3692
        %v3760 = vpop.f32.mrf.mxu0
        %v3761 = vadd.f32 0.0, %v3760
        %3762 = vdwg.mxu0
        %3763 = vmatpush.msra.mxu0 0.0
        %3764 = vmatpush.msra.mxu0 0.0
        %3765 = vmatpush.msra.mxu0 0.0
        %3766 = vmatpush.msra.mxu0 0.0
        %3767 = vmatpush.msra.mxu0 0.0
        %3768 = vmatpush.msra.mxu0 0.0
        %3769 = vmatpush.msra.mxu0 0.0
        %3770 = vmatpush.msra.mxu0 0.0
        %3771 = vmatpush.msra.mxu0 %v3687
        %3772 = vmatpush.msra.mxu0 %v3683
        %3773 = vmatpush.msra.mxu0 %v3679
        %3774 = vmatpush.msra.mxu0 %v3675
        %3775 = vmatpush.msra.mxu0 %v3671
        %3776 = vmatpush.msra.mxu0 %v3667
        %3777 = vmatpush.msra.mxu0 %v3663
        %3778 = vmatpush.msra.mxu0 %v3659
        %3779 = vmatmul.f32.gmra.mxu0 %v3689
        %v3780 = vpop.f32.mrf.mxu0
        %v3781 = vadd.f32 0.0, %v3780
        %3782 = vmatmul.f32.gmra.mxu0 %v3692
        %v3783 = vpop.f32.mrf.mxu0
        %v3784 = vadd.f32 0.0, %v3783
        %3785 = vdwg.mxu0
        %v3786 = vadd.f32 %v3583, %v3712
        %v3787 = vadd.f32 %v3584, %v3735
        %v3788 = vadd.f32 %v3585, %v3758
        %v3789 = vadd.f32 %v3586, %v3781
        %v3790 = vadd.f32 %v3587, %v3715
        %v3791 = vadd.f32 %v3588, %v3738
        %v3792 = vadd.f32 %v3589, %v3761
        %v3793 = vadd.f32 %v3590, %v3784
        %3795 = vrot.lane.b32.xlu0 %v3591, 64
        %v3796 = vpop.permute.xlu0 %3795
        %3798 = vrot.lane.b32.xlu0 %v3592, 64
        %v3799 = vpop.permute.xlu0 %3798
        %v3801 = vsel %vm2782, %v3796, 0
        %v3804 = vsel %vm2782, %v3799, 0
        %3806 = vmatpush.bf16.xpose.msra.mxu0 0
        %3807 = vmatpush.bf16.xpose.msra.mxu0 0
        %3808 = vmatpush.bf16.xpose.msra.mxu0 0
        %3809 = vmatpush.bf16.xpose.msra.mxu0 0
        %3810 = vmatpush.bf16.xpose.msra.mxu0 0
        %3811 = vmatpush.bf16.xpose.msra.mxu0 0
        %3812 = vmatpush.bf16.xpose.msra.mxu0 0
        %3813 = vmatpush.bf16.xpose.msra.mxu0 %v3804
        %3814 = vmatmul.bf16.gmra.mxu0 %v3801
        %v3815 = vpop.f32.mrf.mxu0
        %v3816 = vadd.f32 0.0, %v3815
        %v3817 = vpop.f32.mrf.mxu0
        %v3818 = vadd.f32 0.0, %v3817
        %3819 = vdwg.mxu0
        %v3820 = vmul.f32 %v3816, 0.125
        %v3821 = vmul.f32 %v3818, 0.125
        %v3822 = vsel %vm2805, %v3820, -inf
        %3823 = vmax.xlane.f32.xlu0 %v3822
        %v3824 = vpop.xlane.xlu0 %3823
        %v3825 = vsel %vm2805, %v3821, -inf
        %3826 = vmax.xlane.f32.xlu0 %v3825
        %v3827 = vpop.xlane.xlu0 %3826
        %v3828 = vsub.f32 %v3820, %v3824
        %v3829 = vsub.f32 %v3821, %v3827
        %v3830 = vmul.f32 %v3828, 1.442695
        %v3831 = vpow.pop %v3830
        %v3832 = vmul.f32 %v3829, 1.442695
        %v3833 = vpow.pop %v3832
        %v3834 = vsel %vm2805, %v3831, 0.0
        %3835 = vadd.xlane.f32.xlu0 %v3834
        %v3836 = vpop.xlane.xlu0 %3835
        %v3837 = vsel %vm2805, %v3833, 0.0
        %3838 = vadd.xlane.f32.xlu0 %v3837
        %v3839 = vpop.xlane.xlu0 %3838
        %v3840 = vrcp.pop %v3836
        %v3841 = vrcp.pop %v3839
        %v3842 = vmul.f32 %v3831, %v3840
        %v3843 = vmul.f32 %v3833, %v3841
        %v3844 = vpack.c.bf16 %v3843, %v3842
        %3846 = vrot.lane.b32.xlu0 %v3593, 64
        %v3847 = vpop.permute.xlu0 %3846
        %v3850 = vsel %vm2805, %v3844, 0
        %3852 = vmatpush.bf16.msra.mxu0 0
        %3853 = vmatpush.bf16.msra.mxu0 0
        %3854 = vmatpush.bf16.msra.mxu0 0
        %3855 = vmatpush.bf16.msra.mxu0 0
        %3856 = vmatpush.bf16.msra.mxu0 0
        %3857 = vmatpush.bf16.msra.mxu0 0
        %3858 = vmatpush.bf16.msra.mxu0 0
        %3859 = vmatpush.bf16.msra.mxu0 %v3847
        %3860 = vmatmul.bf16.gmra.mxu0 %v3850
        %v3861 = vpop.f32.mrf.mxu0
        %v3862 = vadd.f32 0.0, %v3861
        %v3863 = vpop.f32.mrf.mxu0
        %v3864 = vadd.f32 0.0, %v3863
        %3865 = vdwg.mxu0
        %v3866 = vld [vmem:[#allocation8 + $0x500] sm:$0xff]
        %v3867 = vld [vmem:[#allocation8 + $0x508] sm:$0xff]
        %v3868 = vld [vmem:[#allocation8 + $0x510] sm:$0xff]
        %v3869 = vld [vmem:[#allocation8 + $0x518] sm:$0xff]
        %v3870 = vld [vmem:[#allocation8 + $0x520] sm:$0xff]
        %v3871 = vld [vmem:[#allocation8 + $0x528] sm:$0xff]
        %v3872 = vld [vmem:[#allocation8 + $0x530] sm:$0xff]
        %v3873 = vld [vmem:[#allocation8 + $0x538] sm:$0xff]
        %v3874 = vld [vmem:[#allocation8 + $0x540] sm:$0xff]
        %v3875 = vld [vmem:[#allocation8 + $0x548] sm:$0xff]
        %v3876 = vld [vmem:[#allocation8 + $0x550] sm:$0xff]
        %v3877 = vld [vmem:[#allocation8 + $0x558] sm:$0xff]
        %v3878 = vld [vmem:[#allocation8 + $0x560] sm:$0xff]
        %v3879 = vld [vmem:[#allocation8 + $0x568] sm:$0xff]
        %v3880 = vld [vmem:[#allocation8 + $0x570] sm:$0xff]
        %v3881 = vld [vmem:[#allocation8 + $0x578] sm:$0xff]
        %v3882 = vld [vmem:[#allocation8 + $0x580] sm:$0xff]
        %v3883 = vld [vmem:[#allocation8 + $0x588] sm:$0xff]
        %v3884 = vld [vmem:[#allocation8 + $0x590] sm:$0xff]
        %v3885 = vld [vmem:[#allocation8 + $0x598] sm:$0xff]
        %v3886 = vld [vmem:[#allocation8 + $0x5a0] sm:$0xff]
        %v3887 = vld [vmem:[#allocation8 + $0x5a8] sm:$0xff]
        %v3888 = vld [vmem:[#allocation8 + $0x5b0] sm:$0xff]
        %v3889 = vld [vmem:[#allocation8 + $0x5b8] sm:$0xff]
        %v3890 = vld [vmem:[#allocation8 + $0x5c0] sm:$0xff]
        %v3891 = vld [vmem:[#allocation8 + $0x5c8] sm:$0xff]
        %v3892 = vld [vmem:[#allocation8 + $0x5d0] sm:$0xff]
        %v3893 = vld [vmem:[#allocation8 + $0x5d8] sm:$0xff]
        %v3894 = vld [vmem:[#allocation8 + $0x5e0] sm:$0xff]
        %v3895 = vld [vmem:[#allocation8 + $0x5e8] sm:$0xff]
        %v3896 = vld [vmem:[#allocation8 + $0x5f0] sm:$0xff]
        %v3897 = vld [vmem:[#allocation8 + $0x5f8] sm:$0xff]
        %v3899 = vsel %vm2782, %v3862, 0
        %v3902 = vsel %vm2782, %v3864, 0
        %3904 = vmatpush.msra.mxu0 0.0
        %3905 = vmatpush.msra.mxu0 0.0
        %3906 = vmatpush.msra.mxu0 0.0
        %3907 = vmatpush.msra.mxu0 0.0
        %3908 = vmatpush.msra.mxu0 0.0
        %3909 = vmatpush.msra.mxu0 0.0
        %3910 = vmatpush.msra.mxu0 0.0
        %3911 = vmatpush.msra.mxu0 0.0
        %3912 = vmatpush.msra.mxu0 %v3894
        %3913 = vmatpush.msra.mxu0 %v3890
        %3914 = vmatpush.msra.mxu0 %v3886
        %3915 = vmatpush.msra.mxu0 %v3882
        %3916 = vmatpush.msra.mxu0 %v3878
        %3917 = vmatpush.msra.mxu0 %v3874
        %3918 = vmatpush.msra.mxu0 %v3870
        %3919 = vmatpush.msra.mxu0 %v3866
        %3920 = vmatmul.f32.gmra.mxu0 %v3899
        %v3921 = vpop.f32.mrf.mxu0
        %v3922 = vadd.f32 0.0, %v3921
        %3923 = vmatmul.f32.gmra.mxu0 %v3902
        %v3924 = vpop.f32.mrf.mxu0
        %v3925 = vadd.f32 0.0, %v3924
        %3926 = vdwg.mxu0
        %3927 = vmatpush.msra.mxu0 0.0
        %3928 = vmatpush.msra.mxu0 0.0
        %3929 = vmatpush.msra.mxu0 0.0
        %3930 = vmatpush.msra.mxu0 0.0
        %3931 = vmatpush.msra.mxu0 0.0
        %3932 = vmatpush.msra.mxu0 0.0
        %3933 = vmatpush.msra.mxu0 0.0
        %3934 = vmatpush.msra.mxu0 0.0
        %3935 = vmatpush.msra.mxu0 %v3895
        %3936 = vmatpush.msra.mxu0 %v3891
        %3937 = vmatpush.msra.mxu0 %v3887
        %3938 = vmatpush.msra.mxu0 %v3883
        %3939 = vmatpush.msra.mxu0 %v3879
        %3940 = vmatpush.msra.mxu0 %v3875
        %3941 = vmatpush.msra.mxu0 %v3871
        %3942 = vmatpush.msra.mxu0 %v3867
        %3943 = vmatmul.f32.gmra.mxu0 %v3899
        %v3944 = vpop.f32.mrf.mxu0
        %v3945 = vadd.f32 0.0, %v3944
        %3946 = vmatmul.f32.gmra.mxu0 %v3902
        %v3947 = vpop.f32.mrf.mxu0
        %v3948 = vadd.f32 0.0, %v3947
        %3949 = vdwg.mxu0
        %3950 = vmatpush.msra.mxu0 0.0
        %3951 = vmatpush.msra.mxu0 0.0
        %3952 = vmatpush.msra.mxu0 0.0
        %3953 = vmatpush.msra.mxu0 0.0
        %3954 = vmatpush.msra.mxu0 0.0
        %3955 = vmatpush.msra.mxu0 0.0
        %3956 = vmatpush.msra.mxu0 0.0
        %3957 = vmatpush.msra.mxu0 0.0
        %3958 = vmatpush.msra.mxu0 %v3896
        %3959 = vmatpush.msra.mxu0 %v3892
        %3960 = vmatpush.msra.mxu0 %v3888
        %3961 = vmatpush.msra.mxu0 %v3884
        %3962 = vmatpush.msra.mxu0 %v3880
        %3963 = vmatpush.msra.mxu0 %v3876
        %3964 = vmatpush.msra.mxu0 %v3872
        %3965 = vmatpush.msra.mxu0 %v3868
        %3966 = vmatmul.f32.gmra.mxu0 %v3899
        %v3967 = vpop.f32.mrf.mxu0
        %v3968 = vadd.f32 0.0, %v3967
        %3969 = vmatmul.f32.gmra.mxu0 %v3902
        %v3970 = vpop.f32.mrf.mxu0
        %v3971 = vadd.f32 0.0, %v3970
        %3972 = vdwg.mxu0
        %3973 = vmatpush.msra.mxu0 0.0
        %3974 = vmatpush.msra.mxu0 0.0
        %3975 = vmatpush.msra.mxu0 0.0
        %3976 = vmatpush.msra.mxu0 0.0
        %3977 = vmatpush.msra.mxu0 0.0
        %3978 = vmatpush.msra.mxu0 0.0
        %3979 = vmatpush.msra.mxu0 0.0
        %3980 = vmatpush.msra.mxu0 0.0
        %3981 = vmatpush.msra.mxu0 %v3897
        %3982 = vmatpush.msra.mxu0 %v3893
        %3983 = vmatpush.msra.mxu0 %v3889
        %3984 = vmatpush.msra.mxu0 %v3885
        %3985 = vmatpush.msra.mxu0 %v3881
        %3986 = vmatpush.msra.mxu0 %v3877
        %3987 = vmatpush.msra.mxu0 %v3873
        %3988 = vmatpush.msra.mxu0 %v3869
        %3989 = vmatmul.f32.gmra.mxu0 %v3899
        %v3990 = vpop.f32.mrf.mxu0
        %v3991 = vadd.f32 0.0, %v3990
        %3992 = vmatmul.f32.gmra.mxu0 %v3902
        %v3993 = vpop.f32.mrf.mxu0
        %v3994 = vadd.f32 0.0, %v3993
        %3995 = vdwg.mxu0
        %v3996 = vadd.f32 %v3786, %v3922
        %v3997 = vadd.f32 %v3787, %v3945
        %v3998 = vadd.f32 %v3788, %v3968
        %v3999 = vadd.f32 %v3789, %v3991
        %v4000 = vadd.f32 %v3790, %v3925
        %v4001 = vadd.f32 %v3791, %v3948
        %v4002 = vadd.f32 %v3792, %v3971
        %v4003 = vadd.f32 %v3793, %v3994
        %v4004 = vpack.c.bf16 %v2041, %v2038
        %v4005 = vpack.c.bf16 %v2409, %v2406
        %v4006 = vpack.c.bf16 %v2777, %v2774
        %v4008 = vsel %vm2782, %v4004, 0
        %v4011 = vsel %vm2782, %v4005, 0
        %4013 = vmatpush.bf16.xpose.msra.mxu0 0
        %4014 = vmatpush.bf16.xpose.msra.mxu0 0
        %4015 = vmatpush.bf16.xpose.msra.mxu0 0
        %4016 = vmatpush.bf16.xpose.msra.mxu0 0
        %4017 = vmatpush.bf16.xpose.msra.mxu0 0
        %4018 = vmatpush.bf16.xpose.msra.mxu0 0
        %4019 = vmatpush.bf16.xpose.msra.mxu0 0
        %4020 = vmatpush.bf16.xpose.msra.mxu0 %v4011
        %4021 = vmatmul.bf16.gmra.mxu0 %v4008
        %v4022 = vpop.f32.mrf.mxu0
        %v4023 = vadd.f32 0.0, %v4022
        %v4024 = vpop.f32.mrf.mxu0
        %v4025 = vadd.f32 0.0, %v4024
        %4026 = vdwg.mxu0
        %v4027 = vmul.f32 %v4023, 0.125
        %v4028 = vmul.f32 %v4025, 0.125
        %v4029 = vsel %vm2805, %v4027, -inf
        %4030 = vmax.xlane.f32.xlu0 %v4029
        %v4031 = vpop.xlane.xlu0 %4030
        %v4032 = vsel %vm2805, %v4028, -inf
        %4033 = vmax.xlane.f32.xlu0 %v4032
        %v4034 = vpop.xlane.xlu0 %4033
        %v4035 = vsub.f32 %v4027, %v4031
        %v4036 = vsub.f32 %v4028, %v4034
        %v4037 = vmul.f32 %v4035, 1.442695
        %v4038 = vpow.pop %v4037
        %v4039 = vmul.f32 %v4036, 1.442695
        %v4040 = vpow.pop %v4039
        %v4041 = vsel %vm2805, %v4038, 0.0
        %4042 = vadd.xlane.f32.xlu0 %v4041
        %v4043 = vpop.xlane.xlu0 %4042
        %v4044 = vsel %vm2805, %v4040, 0.0
        %4045 = vadd.xlane.f32.xlu0 %v4044
        %v4046 = vpop.xlane.xlu0 %4045
        %v4047 = vrcp.pop %v4043
        %v4048 = vrcp.pop %v4046
        %v4049 = vmul.f32 %v4038, %v4047
        %v4050 = vmul.f32 %v4040, %v4048
        %v4051 = vpack.c.bf16 %v4050, %v4049
        %v4053 = vsel %vm2805, %v4051, 0
        %4055 = vmatpush.bf16.msra.mxu0 0
        %4056 = vmatpush.bf16.msra.mxu0 0
        %4057 = vmatpush.bf16.msra.mxu0 0
        %4058 = vmatpush.bf16.msra.mxu0 0
        %4059 = vmatpush.bf16.msra.mxu0 0
        %4060 = vmatpush.bf16.msra.mxu0 0
        %4061 = vmatpush.bf16.msra.mxu0 0
        %4062 = vmatpush.bf16.msra.mxu0 %v4006
        %4063 = vmatmul.bf16.gmra.mxu0 %v4053
        %v4064 = vpop.f32.mrf.mxu0
        %v4065 = vadd.f32 0.0, %v4064
        %v4066 = vpop.f32.mrf.mxu0
        %v4067 = vadd.f32 0.0, %v4066
        %4068 = vdwg.mxu0
        %v4069 = vld [vmem:[#allocation8 + $0x600] sm:$0xff]
        %v4070 = vld [vmem:[#allocation8 + $0x608] sm:$0xff]
        %v4071 = vld [vmem:[#allocation8 + $0x610] sm:$0xff]
        %v4072 = vld [vmem:[#allocation8 + $0x618] sm:$0xff]
        %v4073 = vld [vmem:[#allocation8 + $0x620] sm:$0xff]
        %v4074 = vld [vmem:[#allocation8 + $0x628] sm:$0xff]
        %v4075 = vld [vmem:[#allocation8 + $0x630] sm:$0xff]
        %v4076 = vld [vmem:[#allocation8 + $0x638] sm:$0xff]
        %v4077 = vld [vmem:[#allocation8 + $0x640] sm:$0xff]
        %v4078 = vld [vmem:[#allocation8 + $0x648] sm:$0xff]
        %v4079 = vld [vmem:[#allocation8 + $0x650] sm:$0xff]
        %v4080 = vld [vmem:[#allocation8 + $0x658] sm:$0xff]
        %v4081 = vld [vmem:[#allocation8 + $0x660] sm:$0xff]
        %v4082 = vld [vmem:[#allocation8 + $0x668] sm:$0xff]
        %v4083 = vld [vmem:[#allocation8 + $0x670] sm:$0xff]
        %v4084 = vld [vmem:[#allocation8 + $0x678] sm:$0xff]
        %v4085 = vld [vmem:[#allocation8 + $0x680] sm:$0xff]
        %v4086 = vld [vmem:[#allocation8 + $0x688] sm:$0xff]
        %v4087 = vld [vmem:[#allocation8 + $0x690] sm:$0xff]
        %v4088 = vld [vmem:[#allocation8 + $0x698] sm:$0xff]
        %v4089 = vld [vmem:[#allocation8 + $0x6a0] sm:$0xff]
        %v4090 = vld [vmem:[#allocation8 + $0x6a8] sm:$0xff]
        %v4091 = vld [vmem:[#allocation8 + $0x6b0] sm:$0xff]
        %v4092 = vld [vmem:[#allocation8 + $0x6b8] sm:$0xff]
        %v4093 = vld [vmem:[#allocation8 + $0x6c0] sm:$0xff]
        %v4094 = vld [vmem:[#allocation8 + $0x6c8] sm:$0xff]
        %v4095 = vld [vmem:[#allocation8 + $0x6d0] sm:$0xff]
        %v4096 = vld [vmem:[#allocation8 + $0x6d8] sm:$0xff]
        %v4097 = vld [vmem:[#allocation8 + $0x6e0] sm:$0xff]
        %v4098 = vld [vmem:[#allocation8 + $0x6e8] sm:$0xff]
        %v4099 = vld [vmem:[#allocation8 + $0x6f0] sm:$0xff]
        %v4100 = vld [vmem:[#allocation8 + $0x6f8] sm:$0xff]
        %v4102 = vsel %vm2782, %v4065, 0
        %v4105 = vsel %vm2782, %v4067, 0
        %4107 = vmatpush.msra.mxu0 0.0
        %4108 = vmatpush.msra.mxu0 0.0
        %4109 = vmatpush.msra.mxu0 0.0
        %4110 = vmatpush.msra.mxu0 0.0
        %4111 = vmatpush.msra.mxu0 0.0
        %4112 = vmatpush.msra.mxu0 0.0
        %4113 = vmatpush.msra.mxu0 0.0
        %4114 = vmatpush.msra.mxu0 0.0
        %4115 = vmatpush.msra.mxu0 %v4097
        %4116 = vmatpush.msra.mxu0 %v4093
        %4117 = vmatpush.msra.mxu0 %v4089
        %4118 = vmatpush.msra.mxu0 %v4085
        %4119 = vmatpush.msra.mxu0 %v4081
        %4120 = vmatpush.msra.mxu0 %v4077
        %4121 = vmatpush.msra.mxu0 %v4073
        %4122 = vmatpush.msra.mxu0 %v4069
        %4123 = vmatmul.f32.gmra.mxu0 %v4102
        %v4124 = vpop.f32.mrf.mxu0
        %v4125 = vadd.f32 0.0, %v4124
        %4126 = vmatmul.f32.gmra.mxu0 %v4105
        %v4127 = vpop.f32.mrf.mxu0
        %v4128 = vadd.f32 0.0, %v4127
        %4129 = vdwg.mxu0
        %4130 = vmatpush.msra.mxu0 0.0
        %4131 = vmatpush.msra.mxu0 0.0
        %4132 = vmatpush.msra.mxu0 0.0
        %4133 = vmatpush.msra.mxu0 0.0
        %4134 = vmatpush.msra.mxu0 0.0
        %4135 = vmatpush.msra.mxu0 0.0
        %4136 = vmatpush.msra.mxu0 0.0
        %4137 = vmatpush.msra.mxu0 0.0
        %4138 = vmatpush.msra.mxu0 %v4098
        %4139 = vmatpush.msra.mxu0 %v4094
        %4140 = vmatpush.msra.mxu0 %v4090
        %4141 = vmatpush.msra.mxu0 %v4086
        %4142 = vmatpush.msra.mxu0 %v4082
        %4143 = vmatpush.msra.mxu0 %v4078
        %4144 = vmatpush.msra.mxu0 %v4074
        %4145 = vmatpush.msra.mxu0 %v4070
        %4146 = vmatmul.f32.gmra.mxu0 %v4102
        %v4147 = vpop.f32.mrf.mxu0
        %v4148 = vadd.f32 0.0, %v4147
        %4149 = vmatmul.f32.gmra.mxu0 %v4105
        %v4150 = vpop.f32.mrf.mxu0
        %v4151 = vadd.f32 0.0, %v4150
        %4152 = vdwg.mxu0
        %4153 = vmatpush.msra.mxu0 0.0
        %4154 = vmatpush.msra.mxu0 0.0
        %4155 = vmatpush.msra.mxu0 0.0
        %4156 = vmatpush.msra.mxu0 0.0
        %4157 = vmatpush.msra.mxu0 0.0
        %4158 = vmatpush.msra.mxu0 0.0
        %4159 = vmatpush.msra.mxu0 0.0
        %4160 = vmatpush.msra.mxu0 0.0
        %4161 = vmatpush.msra.mxu0 %v4099
        %4162 = vmatpush.msra.mxu0 %v4095
        %4163 = vmatpush.msra.mxu0 %v4091
        %4164 = vmatpush.msra.mxu0 %v4087
        %4165 = vmatpush.msra.mxu0 %v4083
        %4166 = vmatpush.msra.mxu0 %v4079
        %4167 = vmatpush.msra.mxu0 %v4075
        %4168 = vmatpush.msra.mxu0 %v4071
        %4169 = vmatmul.f32.gmra.mxu0 %v4102
        %v4170 = vpop.f32.mrf.mxu0
        %v4171 = vadd.f32 0.0, %v4170
        %4172 = vmatmul.f32.gmra.mxu0 %v4105
        %v4173 = vpop.f32.mrf.mxu0
        %v4174 = vadd.f32 0.0, %v4173
        %4175 = vdwg.mxu0
        %4176 = vmatpush.msra.mxu0 0.0
        %4177 = vmatpush.msra.mxu0 0.0
        %4178 = vmatpush.msra.mxu0 0.0
        %4179 = vmatpush.msra.mxu0 0.0
        %4180 = vmatpush.msra.mxu0 0.0
        %4181 = vmatpush.msra.mxu0 0.0
        %4182 = vmatpush.msra.mxu0 0.0
        %4183 = vmatpush.msra.mxu0 0.0
        %4184 = vmatpush.msra.mxu0 %v4100
        %4185 = vmatpush.msra.mxu0 %v4096
        %4186 = vmatpush.msra.mxu0 %v4092
        %4187 = vmatpush.msra.mxu0 %v4088
        %4188 = vmatpush.msra.mxu0 %v4084
        %4189 = vmatpush.msra.mxu0 %v4080
        %4190 = vmatpush.msra.mxu0 %v4076
        %4191 = vmatpush.msra.mxu0 %v4072
        %4192 = vmatmul.f32.gmra.mxu0 %v4102
        %v4193 = vpop.f32.mrf.mxu0
        %v4194 = vadd.f32 0.0, %v4193
        %4195 = vmatmul.f32.gmra.mxu0 %v4105
        %v4196 = vpop.f32.mrf.mxu0
        %v4197 = vadd.f32 0.0, %v4196
        %4198 = vdwg.mxu0
        %v4199 = vadd.f32 %v3996, %v4125
        %v4200 = vadd.f32 %v3997, %v4148
        %v4201 = vadd.f32 %v3998, %v4171
        %v4202 = vadd.f32 %v3999, %v4194
        %v4203 = vadd.f32 %v4000, %v4128
        %v4204 = vadd.f32 %v4001, %v4151
        %v4205 = vadd.f32 %v4002, %v4174
        %v4206 = vadd.f32 %v4003, %v4197
        %4208 = vrot.lane.b32.xlu0 %v4004, 64
        %v4209 = vpop.permute.xlu0 %4208
        %4211 = vrot.lane.b32.xlu0 %v4005, 64
        %v4212 = vpop.permute.xlu0 %4211
        %v4214 = vsel %vm2782, %v4209, 0
        %v4217 = vsel %vm2782, %v4212, 0
        %4219 = vmatpush.bf16.xpose.msra.mxu0 0
        %4220 = vmatpush.bf16.xpose.msra.mxu0 0
        %4221 = vmatpush.bf16.xpose.msra.mxu0 0
        %4222 = vmatpush.bf16.xpose.msra.mxu0 0
        %4223 = vmatpush.bf16.xpose.msra.mxu0 0
        %4224 = vmatpush.bf16.xpose.msra.mxu0 0
        %4225 = vmatpush.bf16.xpose.msra.mxu0 0
        %4226 = vmatpush.bf16.xpose.msra.mxu0 %v4217
        %4227 = vmatmul.bf16.gmra.mxu0 %v4214
        %v4228 = vpop.f32.mrf.mxu0
        %v4229 = vadd.f32 0.0, %v4228
        %v4230 = vpop.f32.mrf.mxu0
        %v4231 = vadd.f32 0.0, %v4230
        %4232 = vdwg.mxu0
        %v4233 = vmul.f32 %v4229, 0.125
        %v4234 = vmul.f32 %v4231, 0.125
        %v4235 = vsel %vm2805, %v4233, -inf
        %4236 = vmax.xlane.f32.xlu0 %v4235
        %v4237 = vpop.xlane.xlu0 %4236
        %v4238 = vsel %vm2805, %v4234, -inf
        %4239 = vmax.xlane.f32.xlu0 %v4238
        %v4240 = vpop.xlane.xlu0 %4239
        %v4241 = vsub.f32 %v4233, %v4237
        %v4242 = vsub.f32 %v4234, %v4240
        %v4243 = vmul.f32 %v4241, 1.442695
        %v4244 = vpow.pop %v4243
        %v4245 = vmul.f32 %v4242, 1.442695
        %v4246 = vpow.pop %v4245
        %v4247 = vsel %vm2805, %v4244, 0.0
        %4248 = vadd.xlane.f32.xlu0 %v4247
        %v4249 = vpop.xlane.xlu0 %4248
        %v4250 = vsel %vm2805, %v4246, 0.0
        %4251 = vadd.xlane.f32.xlu0 %v4250
        %v4252 = vpop.xlane.xlu0 %4251
        %v4253 = vrcp.pop %v4249
        %v4254 = vrcp.pop %v4252
        %v4255 = vmul.f32 %v4244, %v4253
        %v4256 = vmul.f32 %v4246, %v4254
        %v4257 = vpack.c.bf16 %v4256, %v4255
        %4259 = vrot.lane.b32.xlu0 %v4006, 64
        %v4260 = vpop.permute.xlu0 %4259
        %v4263 = vsel %vm2805, %v4257, 0
        %4265 = vmatpush.bf16.msra.mxu0 0
        %4266 = vmatpush.bf16.msra.mxu0 0
        %4267 = vmatpush.bf16.msra.mxu0 0
        %4268 = vmatpush.bf16.msra.mxu0 0
        %4269 = vmatpush.bf16.msra.mxu0 0
        %4270 = vmatpush.bf16.msra.mxu0 0
        %4271 = vmatpush.bf16.msra.mxu0 0
        %4272 = vmatpush.bf16.msra.mxu0 %v4260
        %4273 = vmatmul.bf16.gmra.mxu0 %v4263
        %v4274 = vpop.f32.mrf.mxu0
        %v4275 = vadd.f32 0.0, %v4274
        %v4276 = vpop.f32.mrf.mxu0
        %v4277 = vadd.f32 0.0, %v4276
        %4278 = vdwg.mxu0
        %v4279 = vld [vmem:[#allocation8 + $0x700] sm:$0xff]
        %v4280 = vld [vmem:[#allocation8 + $0x708] sm:$0xff]
        %v4281 = vld [vmem:[#allocation8 + $0x710] sm:$0xff]
        %v4282 = vld [vmem:[#allocation8 + $0x718] sm:$0xff]
        %v4283 = vld [vmem:[#allocation8 + $0x720] sm:$0xff]
        %v4284 = vld [vmem:[#allocation8 + $0x728] sm:$0xff]
        %v4285 = vld [vmem:[#allocation8 + $0x730] sm:$0xff]
        %v4286 = vld [vmem:[#allocation8 + $0x738] sm:$0xff]
        %v4287 = vld [vmem:[#allocation8 + $0x740] sm:$0xff]
        %v4288 = vld [vmem:[#allocation8 + $0x748] sm:$0xff]
        %v4289 = vld [vmem:[#allocation8 + $0x750] sm:$0xff]
        %v4290 = vld [vmem:[#allocation8 + $0x758] sm:$0xff]
        %v4291 = vld [vmem:[#allocation8 + $0x760] sm:$0xff]
        %v4292 = vld [vmem:[#allocation8 + $0x768] sm:$0xff]
        %v4293 = vld [vmem:[#allocation8 + $0x770] sm:$0xff]
        %v4294 = vld [vmem:[#allocation8 + $0x778] sm:$0xff]
        %v4295 = vld [vmem:[#allocation8 + $0x780] sm:$0xff]
        %v4296 = vld [vmem:[#allocation8 + $0x788] sm:$0xff]
        %v4297 = vld [vmem:[#allocation8 + $0x790] sm:$0xff]
        %v4298 = vld [vmem:[#allocation8 + $0x798] sm:$0xff]
        %v4299 = vld [vmem:[#allocation8 + $0x7a0] sm:$0xff]
        %v4300 = vld [vmem:[#allocation8 + $0x7a8] sm:$0xff]
        %v4301 = vld [vmem:[#allocation8 + $0x7b0] sm:$0xff]
        %v4302 = vld [vmem:[#allocation8 + $0x7b8] sm:$0xff]
        %v4303 = vld [vmem:[#allocation8 + $0x7c0] sm:$0xff]
        %v4304 = vld [vmem:[#allocation8 + $0x7c8] sm:$0xff]
        %v4305 = vld [vmem:[#allocation8 + $0x7d0] sm:$0xff]
        %v4306 = vld [vmem:[#allocation8 + $0x7d8] sm:$0xff]
        %v4307 = vld [vmem:[#allocation8 + $0x7e0] sm:$0xff]
        %v4308 = vld [vmem:[#allocation8 + $0x7e8] sm:$0xff]
        %v4309 = vld [vmem:[#allocation8 + $0x7f0] sm:$0xff]
        %v4310 = vld [vmem:[#allocation8 + $0x7f8] sm:$0xff]
        %v4312 = vsel %vm2782, %v4275, 0
        %v4315 = vsel %vm2782, %v4277, 0
        %4317 = vmatpush.msra.mxu0 0.0
        %4318 = vmatpush.msra.mxu0 0.0
        %4319 = vmatpush.msra.mxu0 0.0
        %4320 = vmatpush.msra.mxu0 0.0
        %4321 = vmatpush.msra.mxu0 0.0
        %4322 = vmatpush.msra.mxu0 0.0
        %4323 = vmatpush.msra.mxu0 0.0
        %4324 = vmatpush.msra.mxu0 0.0
        %4325 = vmatpush.msra.mxu0 %v4307
        %4326 = vmatpush.msra.mxu0 %v4303
        %4327 = vmatpush.msra.mxu0 %v4299
        %4328 = vmatpush.msra.mxu0 %v4295
        %4329 = vmatpush.msra.mxu0 %v4291
        %4330 = vmatpush.msra.mxu0 %v4287
        %4331 = vmatpush.msra.mxu0 %v4283
        %4332 = vmatpush.msra.mxu0 %v4279
        %4333 = vmatmul.f32.gmra.mxu0 %v4312
        %v4334 = vpop.f32.mrf.mxu0
        %v4335 = vadd.f32 0.0, %v4334
        %4336 = vmatmul.f32.gmra.mxu0 %v4315
        %v4337 = vpop.f32.mrf.mxu0
        %v4338 = vadd.f32 0.0, %v4337
        %4339 = vdwg.mxu0
        %4340 = vmatpush.msra.mxu0 0.0
        %4341 = vmatpush.msra.mxu0 0.0
        %4342 = vmatpush.msra.mxu0 0.0
        %4343 = vmatpush.msra.mxu0 0.0
        %4344 = vmatpush.msra.mxu0 0.0
        %4345 = vmatpush.msra.mxu0 0.0
        %4346 = vmatpush.msra.mxu0 0.0
        %4347 = vmatpush.msra.mxu0 0.0
        %4348 = vmatpush.msra.mxu0 %v4308
        %4349 = vmatpush.msra.mxu0 %v4304
        %4350 = vmatpush.msra.mxu0 %v4300
        %4351 = vmatpush.msra.mxu0 %v4296
        %4352 = vmatpush.msra.mxu0 %v4292
        %4353 = vmatpush.msra.mxu0 %v4288
        %4354 = vmatpush.msra.mxu0 %v4284
        %4355 = vmatpush.msra.mxu0 %v4280
        %4356 = vmatmul.f32.gmra.mxu0 %v4312
        %v4357 = vpop.f32.mrf.mxu0
        %v4358 = vadd.f32 0.0, %v4357
        %4359 = vmatmul.f32.gmra.mxu0 %v4315
        %v4360 = vpop.f32.mrf.mxu0
        %v4361 = vadd.f32 0.0, %v4360
        %4362 = vdwg.mxu0
        %4363 = vmatpush.msra.mxu0 0.0
        %4364 = vmatpush.msra.mxu0 0.0
        %4365 = vmatpush.msra.mxu0 0.0
        %4366 = vmatpush.msra.mxu0 0.0
        %4367 = vmatpush.msra.mxu0 0.0
        %4368 = vmatpush.msra.mxu0 0.0
        %4369 = vmatpush.msra.mxu0 0.0
        %4370 = vmatpush.msra.mxu0 0.0
        %4371 = vmatpush.msra.mxu0 %v4309
        %4372 = vmatpush.msra.mxu0 %v4305
        %4373 = vmatpush.msra.mxu0 %v4301
        %4374 = vmatpush.msra.mxu0 %v4297
        %4375 = vmatpush.msra.mxu0 %v4293
        %4376 = vmatpush.msra.mxu0 %v4289
        %4377 = vmatpush.msra.mxu0 %v4285
        %4378 = vmatpush.msra.mxu0 %v4281
        %4379 = vmatmul.f32.gmra.mxu0 %v4312
        %v4380 = vpop.f32.mrf.mxu0
        %v4381 = vadd.f32 0.0, %v4380
        %4382 = vmatmul.f32.gmra.mxu0 %v4315
        %v4383 = vpop.f32.mrf.mxu0
        %v4384 = vadd.f32 0.0, %v4383
        %4385 = vdwg.mxu0
        %4386 = vmatpush.msra.mxu0 0.0
        %4387 = vmatpush.msra.mxu0 0.0
        %4388 = vmatpush.msra.mxu0 0.0
        %4389 = vmatpush.msra.mxu0 0.0
        %4390 = vmatpush.msra.mxu0 0.0
        %4391 = vmatpush.msra.mxu0 0.0
        %4392 = vmatpush.msra.mxu0 0.0
        %4393 = vmatpush.msra.mxu0 0.0
        %4394 = vmatpush.msra.mxu0 %v4310
        %4395 = vmatpush.msra.mxu0 %v4306
        %4396 = vmatpush.msra.mxu0 %v4302
        %4397 = vmatpush.msra.mxu0 %v4298
        %4398 = vmatpush.msra.mxu0 %v4294
        %4399 = vmatpush.msra.mxu0 %v4290
        %4400 = vmatpush.msra.mxu0 %v4286
        %4401 = vmatpush.msra.mxu0 %v4282
        %4402 = vmatmul.f32.gmra.mxu0 %v4312
        %v4403 = vpop.f32.mrf.mxu0
        %v4404 = vadd.f32 0.0, %v4403
        %4405 = vmatmul.f32.gmra.mxu0 %v4315
        %v4406 = vpop.f32.mrf.mxu0
        %v4407 = vadd.f32 0.0, %v4406
        %4408 = vdwg.mxu0
        %v4409 = vadd.f32 %v4199, %v4335
        %v4410 = vadd.f32 %v4200, %v4358
        %v4411 = vadd.f32 %v4201, %v4381
        %v4412 = vadd.f32 %v4202, %v4404
        %v4413 = vadd.f32 %v4203, %v4338
        %v4414 = vadd.f32 %v4204, %v4361
        %v4415 = vadd.f32 %v4205, %v4384
        %v4416 = vadd.f32 %v4206, %v4407
        %v4417 = vld [vmem:[#allocation10] sm:$0xf]
        %v4419 = vperm.slane %v4417, 0
        %v4420 = vperm.slane %v4417, 1
        %v4421 = vperm.slane %v4417, 2
        %v4422 = vperm.slane %v4417, 3
        %v4427 = vadd.f32 %v4409, %v4419
        %v4428 = vadd.f32 %v4410, %v4420
        %v4429 = vadd.f32 %v4411, %v4421
        %v4430 = vadd.f32 %v4412, %v4422
        %v4431 = vadd.f32 %v4413, %v4419
        %v4432 = vadd.f32 %v4414, %v4420
        %v4433 = vadd.f32 %v4415, %v4421
        %v4434 = vadd.f32 %v4416, %v4422
        %s4435 = sld [smem:[#allocation2]]
        %v4436 = vstv %s4435
        %v4437 = vmul.f32 %v4436, %v4427
        %v4438 = vmul.f32 %v4436, %v4428
        %v4439 = vmul.f32 %v4436, %v4429
        %v4440 = vmul.f32 %v4436, %v4430
        %v4441 = vmul.f32 %v4436, %v4431
        %v4442 = vmul.f32 %v4436, %v4432
        %v4443 = vmul.f32 %v4436, %v4433
        %v4444 = vmul.f32 %v4436, %v4434
        %v4445 = vadd.f32 %v736, %v4437
        %v4446 = vadd.f32 %v782, %v4438
        %v4447 = vadd.f32 %v828, %v4439
        %v4448 = vadd.f32 %v874, %v4440
        %v4449 = vadd.f32 %v739, %v4441
        %v4450 = vadd.f32 %v785, %v4442
        %v4451 = vadd.f32 %v831, %v4443
        %v4452 = vadd.f32 %v877, %v4444
        %v4453 = vld [vmem:[%s7] sm:$0xff]
        %v4454 = vld [vmem:[%s7 + $0x8] sm:$0xff]
        %v4455 = vld [vmem:[%s7 + $0x10] sm:$0xff]
        %v4456 = vld [vmem:[%s7 + $0x18] sm:$0xff]
        %v4457 = vld [vmem:[%s7 + $0x20] sm:$0xff]
        %v4458 = vld [vmem:[%s7 + $0x28] sm:$0xff]
        %v4459 = vld [vmem:[%s7 + $0x30] sm:$0xff]
        %v4460 = vld [vmem:[%s7 + $0x38] sm:$0xff]
        %v4461 = vld [vmem:[%s7 + $0x40] sm:$0xff]
        %v4462 = vld [vmem:[%s7 + $0x48] sm:$0xff]
        %v4463 = vld [vmem:[%s7 + $0x50] sm:$0xff]
        %v4464 = vld [vmem:[%s7 + $0x58] sm:$0xff]
        %v4465 = vld [vmem:[%s7 + $0x60] sm:$0xff]
        %v4466 = vld [vmem:[%s7 + $0x68] sm:$0xff]
        %v4467 = vld [vmem:[%s7 + $0x70] sm:$0xff]
        %v4468 = vld [vmem:[%s7 + $0x78] sm:$0xff]
        %v4469 = vld [vmem:[%s7 + $0x80] sm:$0xff]
        %v4470 = vld [vmem:[%s7 + $0x88] sm:$0xff]
        %v4471 = vld [vmem:[%s7 + $0x90] sm:$0xff]
        %v4472 = vld [vmem:[%s7 + $0x98] sm:$0xff]
        %v4473 = vld [vmem:[%s7 + $0xa0] sm:$0xff]
        %v4474 = vld [vmem:[%s7 + $0xa8] sm:$0xff]
        %v4475 = vld [vmem:[%s7 + $0xb0] sm:$0xff]
        %v4476 = vld [vmem:[%s7 + $0xb8] sm:$0xff]
        %v4477 = vld [vmem:[%s7 + $0xc0] sm:$0xff]
        %v4478 = vld [vmem:[%s7 + $0xc8] sm:$0xff]
        %v4479 = vld [vmem:[%s7 + $0xd0] sm:$0xff]
        %v4480 = vld [vmem:[%s7 + $0xd8] sm:$0xff]
        %v4481 = vld [vmem:[%s7 + $0xe0] sm:$0xff]
        %v4482 = vld [vmem:[%s7 + $0xe8] sm:$0xff]
        %v4483 = vld [vmem:[%s7 + $0xf0] sm:$0xff]
        %v4484 = vld [vmem:[%s7 + $0xf8] sm:$0xff]
        %v4485 = vld [vmem:[%s7 + $0x100] sm:$0xff]
        %v4486 = vld [vmem:[%s7 + $0x108] sm:$0xff]
        %v4487 = vld [vmem:[%s7 + $0x110] sm:$0xff]
        %v4488 = vld [vmem:[%s7 + $0x118] sm:$0xff]
        %v4489 = vld [vmem:[%s7 + $0x120] sm:$0xff]
        %v4490 = vld [vmem:[%s7 + $0x128] sm:$0xff]
        %v4491 = vld [vmem:[%s7 + $0x130] sm:$0xff]
        %v4492 = vld [vmem:[%s7 + $0x138] sm:$0xff]
        %v4493 = vld [vmem:[%s7 + $0x140] sm:$0xff]
        %v4494 = vld [vmem:[%s7 + $0x148] sm:$0xff]
        %v4495 = vld [vmem:[%s7 + $0x150] sm:$0xff]
        %v4496 = vld [vmem:[%s7 + $0x158] sm:$0xff]
        %v4497 = vld [vmem:[%s7 + $0x160] sm:$0xff]
        %v4498 = vld [vmem:[%s7 + $0x168] sm:$0xff]
        %v4499 = vld [vmem:[%s7 + $0x170] sm:$0xff]
        %v4500 = vld [vmem:[%s7 + $0x178] sm:$0xff]
        %v4501 = vld [vmem:[%s7 + $0x180] sm:$0xff]
        %v4502 = vld [vmem:[%s7 + $0x188] sm:$0xff]
        %v4503 = vld [vmem:[%s7 + $0x190] sm:$0xff]
        %v4504 = vld [vmem:[%s7 + $0x198] sm:$0xff]
        %v4505 = vld [vmem:[%s7 + $0x1a0] sm:$0xff]
        %v4506 = vld [vmem:[%s7 + $0x1a8] sm:$0xff]
        %v4507 = vld [vmem:[%s7 + $0x1b0] sm:$0xff]
        %v4508 = vld [vmem:[%s7 + $0x1b8] sm:$0xff]
        %v4509 = vld [vmem:[%s7 + $0x1c0] sm:$0xff]
        %v4510 = vld [vmem:[%s7 + $0x1c8] sm:$0xff]
        %v4511 = vld [vmem:[%s7 + $0x1d0] sm:$0xff]
        %v4512 = vld [vmem:[%s7 + $0x1d8] sm:$0xff]
        %v4513 = vld [vmem:[%s7 + $0x1e0] sm:$0xff]
        %v4514 = vld [vmem:[%s7 + $0x1e8] sm:$0xff]
        %v4515 = vld [vmem:[%s7 + $0x1f0] sm:$0xff]
        %v4516 = vld [vmem:[%s7 + $0x1f8] sm:$0xff]
        %v4517 = vld [vmem:[#allocation11] sm:$0x1]
        %v4519 = vperm.slane %v4517, 0
        %4521 = vmatpush.msra.mxu0 %v4468
        %4522 = vmatpush.msra.mxu0 %v4467
        %4523 = vmatpush.msra.mxu0 %v4466
        %4524 = vmatpush.msra.mxu0 %v4465
        %4525 = vmatpush.msra.mxu0 %v4464
        %4526 = vmatpush.msra.mxu0 %v4463
        %4527 = vmatpush.msra.mxu0 %v4462
        %4528 = vmatpush.msra.mxu0 %v4461
        %4529 = vmatpush.msra.mxu0 %v4460
        %4530 = vmatpush.msra.mxu0 %v4459
        %4531 = vmatpush.msra.mxu0 %v4458
        %4532 = vmatpush.msra.mxu0 %v4457
        %4533 = vmatpush.msra.mxu0 %v4456
        %4534 = vmatpush.msra.mxu0 %v4455
        %4535 = vmatpush.msra.mxu0 %v4454
        %4536 = vmatpush.msra.mxu0 %v4453
        %4537 = vmatmul.f32.gmra.mxu0 %v4445
        %v4538 = vpop.f32.mrf.mxu0
        %v4539 = vadd.f32 %v4519, %v4538
        %4540 = vmatmul.f32.gmra.mxu0 %v4449
        %v4541 = vpop.f32.mrf.mxu0
        %v4542 = vadd.f32 %v4519, %v4541
        %4543 = vdwg.mxu0
        %4544 = vmatpush.msra.mxu0 %v4484
        %4545 = vmatpush.msra.mxu0 %v4483
        %4546 = vmatpush.msra.mxu0 %v4482
        %4547 = vmatpush.msra.mxu0 %v4481
        %4548 = vmatpush.msra.mxu0 %v4480
        %4549 = vmatpush.msra.mxu0 %v4479
        %4550 = vmatpush.msra.mxu0 %v4478
        %4551 = vmatpush.msra.mxu0 %v4477
        %4552 = vmatpush.msra.mxu0 %v4476
        %4553 = vmatpush.msra.mxu0 %v4475
        %4554 = vmatpush.msra.mxu0 %v4474
        %4555 = vmatpush.msra.mxu0 %v4473
        %4556 = vmatpush.msra.mxu0 %v4472
        %4557 = vmatpush.msra.mxu0 %v4471
        %4558 = vmatpush.msra.mxu0 %v4470
        %4559 = vmatpush.msra.mxu0 %v4469
        %4560 = vmatmul.f32.gmra.mxu0 %v4446
        %v4561 = vpop.f32.mrf.mxu0
        %v4562 = vadd.f32 %v4539, %v4561
        %4563 = vmatmul.f32.gmra.mxu0 %v4450
        %v4564 = vpop.f32.mrf.mxu0
        %v4565 = vadd.f32 %v4542, %v4564
        %4566 = vdwg.mxu0
        %4567 = vmatpush.msra.mxu0 %v4500
        %4568 = vmatpush.msra.mxu0 %v4499
        %4569 = vmatpush.msra.mxu0 %v4498
        %4570 = vmatpush.msra.mxu0 %v4497
        %4571 = vmatpush.msra.mxu0 %v4496
        %4572 = vmatpush.msra.mxu0 %v4495
        %4573 = vmatpush.msra.mxu0 %v4494
        %4574 = vmatpush.msra.mxu0 %v4493
        %4575 = vmatpush.msra.mxu0 %v4492
        %4576 = vmatpush.msra.mxu0 %v4491
        %4577 = vmatpush.msra.mxu0 %v4490
        %4578 = vmatpush.msra.mxu0 %v4489
        %4579 = vmatpush.msra.mxu0 %v4488
        %4580 = vmatpush.msra.mxu0 %v4487
        %4581 = vmatpush.msra.mxu0 %v4486
        %4582 = vmatpush.msra.mxu0 %v4485
        %4583 = vmatmul.f32.gmra.mxu0 %v4447
        %v4584 = vpop.f32.mrf.mxu0
        %v4585 = vadd.f32 %v4562, %v4584
        %4586 = vmatmul.f32.gmra.mxu0 %v4451
        %v4587 = vpop.f32.mrf.mxu0
        %v4588 = vadd.f32 %v4565, %v4587
        %4589 = vdwg.mxu0
        %4590 = vmatpush.msra.mxu0 %v4516
        %4591 = vmatpush.msra.mxu0 %v4515
        %4592 = vmatpush.msra.mxu0 %v4514
        %4593 = vmatpush.msra.mxu0 %v4513
        %4594 = vmatpush.msra.mxu0 %v4512
        %4595 = vmatpush.msra.mxu0 %v4511
        %4596 = vmatpush.msra.mxu0 %v4510
        %4597 = vmatpush.msra.mxu0 %v4509
        %4598 = vmatpush.msra.mxu0 %v4508
        %4599 = vmatpush.msra.mxu0 %v4507
        %4600 = vmatpush.msra.mxu0 %v4506
        %4601 = vmatpush.msra.mxu0 %v4505
        %4602 = vmatpush.msra.mxu0 %v4504
        %4603 = vmatpush.msra.mxu0 %v4503
        %4604 = vmatpush.msra.mxu0 %v4502
        %4605 = vmatpush.msra.mxu0 %v4501
        %4606 = vmatmul.f32.gmra.mxu0 %v4448
        %v4607 = vpop.f32.mrf.mxu0
        %v4608 = vadd.f32 %v4585, %v4607
        %4609 = vmatmul.f32.gmra.mxu0 %v4452
        %v4610 = vpop.f32.mrf.mxu0
        %v4611 = vadd.f32 %v4588, %v4610
        %4612 = vdwg.mxu0
        %v4613 = vld [vmem:[%s9] sm:$0xff]
        %v4614 = vld [vmem:[%s9 + $0x8] sm:$0xff]
        %v4615 = vld [vmem:[%s9 + $0x10] sm:$0xff]
        %v4616 = vld [vmem:[%s9 + $0x18] sm:$0xff]
        %vm4617 = vcmask 261120
        %v4619 = vsel %vm4617, %v4608, 0
        %v4622 = vsel %vm4617, %v4611, 0
        %4624 = vmatpush.msra.mxu0 0.0
        %4625 = vmatpush.msra.mxu0 0.0
        %4626 = vmatpush.msra.mxu0 0.0
        %4627 = vmatpush.msra.mxu0 0.0
        %4628 = vmatpush.msra.mxu0 0.0
        %4629 = vmatpush.msra.mxu0 0.0
        %4630 = vmatpush.msra.mxu0 0.0
        %4631 = vmatpush.msra.mxu0 0.0
        %4632 = vmatpush.msra.mxu0 0.0
        %4633 = vmatpush.msra.mxu0 0.0
        %4634 = vmatpush.msra.mxu0 0.0
        %4635 = vmatpush.msra.mxu0 0.0
        %4636 = vmatpush.msra.mxu0 %v4616
        %4637 = vmatpush.msra.mxu0 %v4615
        %4638 = vmatpush.msra.mxu0 %v4614
        %4639 = vmatpush.msra.mxu0 %v4613
        %4640 = vmatmul.f32.gmra.mxu0 %v4619
        %v4641 = vpop.f32.mrf.mxu0
        %v4642 = vadd.f32 0.0, %v4641
        %4643 = vmatmul.f32.gmra.mxu0 %v4622
        %v4644 = vpop.f32.mrf.mxu0
        %v4645 = vadd.f32 0.0, %v4644
        %4646 = vdwg.mxu0
        %v4647 = vld [vmem:[#allocation13] sm:$0xff]
        %v4648 = vld [vmem:[#allocation13 + $0x8] sm:$0xff]
        %s4649 = scalar_lea.vmem %s9, 32
        %v4650 = vld [vmem:[%s4649] sm:$0xff]
        %v4651 = vld [vmem:[%s4649 + $0x8] sm:$0xff]
        %v4652 = vld [vmem:[%s4649 + $0x10] sm:$0xff]
        %v4653 = vld [vmem:[%s4649 + $0x18] sm:$0xff]
        %4654 = vmatpush.msra.mxu0 0.0
        %4655 = vmatpush.msra.mxu0 0.0
        %4656 = vmatpush.msra.mxu0 0.0
        %4657 = vmatpush.msra.mxu0 0.0
        %4658 = vmatpush.msra.mxu0 0.0
        %4659 = vmatpush.msra.mxu0 0.0
        %4660 = vmatpush.msra.mxu0 0.0
        %4661 = vmatpush.msra.mxu0 0.0
        %4662 = vmatpush.msra.mxu0 0.0
        %4663 = vmatpush.msra.mxu0 0.0
        %4664 = vmatpush.msra.mxu0 0.0
        %4665 = vmatpush.msra.mxu0 0.0
        %4666 = vmatpush.msra.mxu0 %v4653
        %4667 = vmatpush.msra.mxu0 %v4652
        %4668 = vmatpush.msra.mxu0 %v4651
        %4669 = vmatpush.msra.mxu0 %v4650
        %4670 = vmatmul.f32.gmra.mxu0 %v4619
        %v4671 = vpop.f32.mrf.mxu0
        %v4672 = vadd.f32 0.0, %v4671
        %4673 = vmatmul.f32.gmra.mxu0 %v4622
        %v4674 = vpop.f32.mrf.mxu0
        %v4675 = vadd.f32 0.0, %v4674
        %4676 = vdwg.mxu0
        %s4677 = scalar_lea.vmem [#allocation13], 16
        %v4678 = vld [vmem:[%s4677] sm:$0xff]
        %v4679 = vld [vmem:[%s4677 + $0x8] sm:$0xff]
        %v4681 = vsel %vm2805, %v4678, 0
        %v4684 = vsel %vm2805, %v4679, 0
        %4686 = vmatpush.msra.mxu0 0.0
        %4687 = vmatpush.msra.mxu0 0.0
        %4688 = vmatpush.msra.mxu0 0.0
        %4689 = vmatpush.msra.mxu0 0.0
        %4690 = vmatpush.msra.mxu0 0.0
        %4691 = vmatpush.msra.mxu0 0.0
        %4692 = vmatpush.msra.mxu0 0.0
        %4693 = vmatpush.msra.mxu0 0.0
        %4694 = vmatpush.msra.mxu0 0.0
        %4695 = vmatpush.msra.mxu0 0.0
        %4696 = vmatpush.msra.mxu0 0.0
        %4697 = vmatpush.msra.mxu0 0.0
        %4698 = vmatpush.msra.mxu0 0.0
        %4699 = vmatpush.msra.mxu0 0.0
        %4700 = vmatpush.msra.mxu0 %v4675
        %4701 = vmatpush.msra.mxu0 %v4672
        %4702 = vmatmul.f32.gmra.mxu0 %v4681
        %v4703 = vpop.f32.mrf.mxu0
        %v4704 = vadd.f32 0.0, %v4703
        %4705 = vmatmul.f32.gmra.mxu0 %v4684
        %v4706 = vpop.f32.mrf.mxu0
        %v4707 = vadd.f32 0.0, %v4706
        %4708 = vdwg.mxu0
        %v4710 = vsel %vm2805, %v4647, 0
        %v4713 = vsel %vm2805, %v4648, 0
        %4715 = vmatpush.msra.mxu0 0.0
        %4716 = vmatpush.msra.mxu0 0.0
        %4717 = vmatpush.msra.mxu0 0.0
        %4718 = vmatpush.msra.mxu0 0.0
        %4719 = vmatpush.msra.mxu0 0.0
        %4720 = vmatpush.msra.mxu0 0.0
        %4721 = vmatpush.msra.mxu0 0.0
        %4722 = vmatpush.msra.mxu0 0.0
        %4723 = vmatpush.msra.mxu0 0.0
        %4724 = vmatpush.msra.mxu0 0.0
        %4725 = vmatpush.msra.mxu0 0.0
        %4726 = vmatpush.msra.mxu0 0.0
        %4727 = vmatpush.msra.mxu0 0.0
        %4728 = vmatpush.msra.mxu0 0.0
        %4729 = vmatpush.msra.mxu0 %v4645
        %4730 = vmatpush.msra.mxu0 %v4642
        %4731 = vmatmul.f32.gmra.mxu0 %v4710
        %v4732 = vpop.f32.mrf.mxu0
        %v4733 = vadd.f32 %v4704, %v4732
        %4734 = vmatmul.f32.gmra.mxu0 %v4713
        %v4735 = vpop.f32.mrf.mxu0
        %v4736 = vadd.f32 %v4707, %v4735
        %4737 = vdwg.mxu0
        %s4738 = scalar_lea.vmem %s9, 64
        %v4739 = vld [vmem:[%s4738] sm:$0xff]
        %v4740 = vld [vmem:[%s4738 + $0x8] sm:$0xff]
        %v4741 = vld [vmem:[%s4738 + $0x10] sm:$0xff]
        %v4742 = vld [vmem:[%s4738 + $0x18] sm:$0xff]
        %4743 = vmatpush.msra.mxu0 0.0
        %4744 = vmatpush.msra.mxu0 0.0
        %4745 = vmatpush.msra.mxu0 0.0
        %4746 = vmatpush.msra.mxu0 0.0
        %4747 = vmatpush.msra.mxu0 0.0
        %4748 = vmatpush.msra.mxu0 0.0
        %4749 = vmatpush.msra.mxu0 0.0
        %4750 = vmatpush.msra.mxu0 0.0
        %4751 = vmatpush.msra.mxu0 0.0
        %4752 = vmatpush.msra.mxu0 0.0
        %4753 = vmatpush.msra.mxu0 0.0
        %4754 = vmatpush.msra.mxu0 0.0
        %4755 = vmatpush.msra.mxu0 %v4742
        %4756 = vmatpush.msra.mxu0 %v4741
        %4757 = vmatpush.msra.mxu0 %v4740
        %4758 = vmatpush.msra.mxu0 %v4739
        %4759 = vmatmul.f32.gmra.mxu0 %v4619
        %v4760 = vpop.f32.mrf.mxu0
        %v4761 = vadd.f32 0.0, %v4760
        %4762 = vmatmul.f32.gmra.mxu0 %v4622
        %v4763 = vpop.f32.mrf.mxu0
        %v4764 = vadd.f32 0.0, %v4763
        %4765 = vdwg.mxu0
        %s4766 = scalar_lea.vmem [#allocation13], 32
        %v4767 = vld [vmem:[%s4766] sm:$0xff]
        %v4768 = vld [vmem:[%s4766 + $0x8] sm:$0xff]
        %v4770 = vsel %vm2805, %v4767, 0
        %v4773 = vsel %vm2805, %v4768, 0
        %4775 = vmatpush.msra.mxu0 0.0
        %4776 = vmatpush.msra.mxu0 0.0
        %4777 = vmatpush.msra.mxu0 0.0
        %4778 = vmatpush.msra.mxu0 0.0
        %4779 = vmatpush.msra.mxu0 0.0
        %4780 = vmatpush.msra.mxu0 0.0
        %4781 = vmatpush.msra.mxu0 0.0
        %4782 = vmatpush.msra.mxu0 0.0
        %4783 = vmatpush.msra.mxu0 0.0
        %4784 = vmatpush.msra.mxu0 0.0
        %4785 = vmatpush.msra.mxu0 0.0
        %4786 = vmatpush.msra.mxu0 0.0
        %4787 = vmatpush.msra.mxu0 0.0
        %4788 = vmatpush.msra.mxu0 0.0
        %4789 = vmatpush.msra.mxu0 %v4764
        %4790 = vmatpush.msra.mxu0 %v4761
        %4791 = vmatmul.f32.gmra.mxu0 %v4770
        %v4792 = vpop.f32.mrf.mxu0
        %v4793 = vadd.f32 0.0, %v4792
        %4794 = vmatmul.f32.gmra.mxu0 %v4773
        %v4795 = vpop.f32.mrf.mxu0
        %v4796 = vadd.f32 0.0, %v4795
        %4797 = vdwg.mxu0
        %v4798 = vadd.f32 %v4733, %v4793
        %v4799 = vadd.f32 %v4736, %v4796
        %s4800 = scalar_lea.vmem %s9, 96
        %v4801 = vld [vmem:[%s4800] sm:$0xff]
        %v4802 = vld [vmem:[%s4800 + $0x8] sm:$0xff]
        %v4803 = vld [vmem:[%s4800 + $0x10] sm:$0xff]
        %v4804 = vld [vmem:[%s4800 + $0x18] sm:$0xff]
        %4805 = vmatpush.msra.mxu0 0.0
        %4806 = vmatpush.msra.mxu0 0.0
        %4807 = vmatpush.msra.mxu0 0.0
        %4808 = vmatpush.msra.mxu0 0.0
        %4809 = vmatpush.msra.mxu0 0.0
        %4810 = vmatpush.msra.mxu0 0.0
        %4811 = vmatpush.msra.mxu0 0.0
        %4812 = vmatpush.msra.mxu0 0.0
        %4813 = vmatpush.msra.mxu0 0.0
        %4814 = vmatpush.msra.mxu0 0.0
        %4815 = vmatpush.msra.mxu0 0.0
        %4816 = vmatpush.msra.mxu0 0.0
        %4817 = vmatpush.msra.mxu0 %v4804
        %4818 = vmatpush.msra.mxu0 %v4803
        %4819 = vmatpush.msra.mxu0 %v4802
        %4820 = vmatpush.msra.mxu0 %v4801
        %4821 = vmatmul.f32.gmra.mxu0 %v4619
        %v4822 = vpop.f32.mrf.mxu0
        %v4823 = vadd.f32 0.0, %v4822
        %4824 = vmatmul.f32.gmra.mxu0 %v4622
        %v4825 = vpop.f32.mrf.mxu0
        %v4826 = vadd.f32 0.0, %v4825
        %4827 = vdwg.mxu0
        %s4828 = scalar_lea.vmem [#allocation13], 48
        %v4829 = vld [vmem:[%s4828] sm:$0xff]
        %v4830 = vld [vmem:[%s4828 + $0x8] sm:$0xff]
        %v4832 = vsel %vm2805, %v4829, 0
        %v4835 = vsel %vm2805, %v4830, 0
        %4837 = vmatpush.msra.mxu0 0.0
        %4838 = vmatpush.msra.mxu0 0.0
        %4839 = vmatpush.msra.mxu0 0.0
        %4840 = vmatpush.msra.mxu0 0.0
        %4841 = vmatpush.msra.mxu0 0.0
        %4842 = vmatpush.msra.mxu0 0.0
        %4843 = vmatpush.msra.mxu0 0.0
        %4844 = vmatpush.msra.mxu0 0.0
        %4845 = vmatpush.msra.mxu0 0.0
        %4846 = vmatpush.msra.mxu0 0.0
        %4847 = vmatpush.msra.mxu0 0.0
        %4848 = vmatpush.msra.mxu0 0.0
        %4849 = vmatpush.msra.mxu0 0.0
        %4850 = vmatpush.msra.mxu0 0.0
        %4851 = vmatpush.msra.mxu0 %v4826
        %4852 = vmatpush.msra.mxu0 %v4823
        %4853 = vmatmul.f32.gmra.mxu0 %v4832
        %v4854 = vpop.f32.mrf.mxu0
        %v4855 = vadd.f32 0.0, %v4854
        %4856 = vmatmul.f32.gmra.mxu0 %v4835
        %v4857 = vpop.f32.mrf.mxu0
        %v4858 = vadd.f32 0.0, %v4857
        %4859 = vdwg.mxu0
        %v4860 = vadd.f32 %v4798, %v4855
        %v4861 = vadd.f32 %v4799, %v4858
        %s4862 = scalar_lea.vmem %s9, 128
        %v4863 = vld [vmem:[%s4862] sm:$0xff]
        %v4864 = vld [vmem:[%s4862 + $0x8] sm:$0xff]
        %v4865 = vld [vmem:[%s4862 + $0x10] sm:$0xff]
        %v4866 = vld [vmem:[%s4862 + $0x18] sm:$0xff]
        %4867 = vmatpush.msra.mxu0 0.0
        %4868 = vmatpush.msra.mxu0 0.0
        %4869 = vmatpush.msra.mxu0 0.0
        %4870 = vmatpush.msra.mxu0 0.0
        %4871 = vmatpush.msra.mxu0 0.0
        %4872 = vmatpush.msra.mxu0 0.0
        %4873 = vmatpush.msra.mxu0 0.0
        %4874 = vmatpush.msra.mxu0 0.0
        %4875 = vmatpush.msra.mxu0 0.0
        %4876 = vmatpush.msra.mxu0 0.0
        %4877 = vmatpush.msra.mxu0 0.0
        %4878 = vmatpush.msra.mxu0 0.0
        %4879 = vmatpush.msra.mxu0 %v4866
        %4880 = vmatpush.msra.mxu0 %v4865
        %4881 = vmatpush.msra.mxu0 %v4864
        %4882 = vmatpush.msra.mxu0 %v4863
        %4883 = vmatmul.f32.gmra.mxu0 %v4619
        %v4884 = vpop.f32.mrf.mxu0
        %v4885 = vadd.f32 0.0, %v4884
        %4886 = vmatmul.f32.gmra.mxu0 %v4622
        %v4887 = vpop.f32.mrf.mxu0
        %v4888 = vadd.f32 0.0, %v4887
        %4889 = vdwg.mxu0
        %s4890 = scalar_lea.vmem [#allocation13], 64
        %v4891 = vld [vmem:[%s4890] sm:$0xff]
        %v4892 = vld [vmem:[%s4890 + $0x8] sm:$0xff]
        %v4894 = vsel %vm2805, %v4891, 0
        %v4897 = vsel %vm2805, %v4892, 0
        %4899 = vmatpush.msra.mxu0 0.0
        %4900 = vmatpush.msra.mxu0 0.0
        %4901 = vmatpush.msra.mxu0 0.0
        %4902 = vmatpush.msra.mxu0 0.0
        %4903 = vmatpush.msra.mxu0 0.0
        %4904 = vmatpush.msra.mxu0 0.0
        %4905 = vmatpush.msra.mxu0 0.0
        %4906 = vmatpush.msra.mxu0 0.0
        %4907 = vmatpush.msra.mxu0 0.0
        %4908 = vmatpush.msra.mxu0 0.0
        %4909 = vmatpush.msra.mxu0 0.0
        %4910 = vmatpush.msra.mxu0 0.0
        %4911 = vmatpush.msra.mxu0 0.0
        %4912 = vmatpush.msra.mxu0 0.0
        %4913 = vmatpush.msra.mxu0 %v4888
        %4914 = vmatpush.msra.mxu0 %v4885
        %4915 = vmatmul.f32.gmra.mxu0 %v4894
        %v4916 = vpop.f32.mrf.mxu0
        %v4917 = vadd.f32 0.0, %v4916
        %4918 = vmatmul.f32.gmra.mxu0 %v4897
        %v4919 = vpop.f32.mrf.mxu0
        %v4920 = vadd.f32 0.0, %v4919
        %4921 = vdwg.mxu0
        %v4922 = vadd.f32 %v4860, %v4917
        %v4923 = vadd.f32 %v4861, %v4920
        %s4924 = scalar_lea.vmem %s9, 160
        %v4925 = vld [vmem:[%s4924] sm:$0xff]
        %v4926 = vld [vmem:[%s4924 + $0x8] sm:$0xff]
        %v4927 = vld [vmem:[%s4924 + $0x10] sm:$0xff]
        %v4928 = vld [vmem:[%s4924 + $0x18] sm:$0xff]
        %4929 = vmatpush.msra.mxu0 0.0
        %4930 = vmatpush.msra.mxu0 0.0
        %4931 = vmatpush.msra.mxu0 0.0
        %4932 = vmatpush.msra.mxu0 0.0
        %4933 = vmatpush.msra.mxu0 0.0
        %4934 = vmatpush.msra.mxu0 0.0
        %4935 = vmatpush.msra.mxu0 0.0
        %4936 = vmatpush.msra.mxu0 0.0
        %4937 = vmatpush.msra.mxu0 0.0
        %4938 = vmatpush.msra.mxu0 0.0
        %4939 = vmatpush.msra.mxu0 0.0
        %4940 = vmatpush.msra.mxu0 0.0
        %4941 = vmatpush.msra.mxu0 %v4928
        %4942 = vmatpush.msra.mxu0 %v4927
        %4943 = vmatpush.msra.mxu0 %v4926
        %4944 = vmatpush.msra.mxu0 %v4925
        %4945 = vmatmul.f32.gmra.mxu0 %v4619
        %v4946 = vpop.f32.mrf.mxu0
        %v4947 = vadd.f32 0.0, %v4946
        %4948 = vmatmul.f32.gmra.mxu0 %v4622
        %v4949 = vpop.f32.mrf.mxu0
        %v4950 = vadd.f32 0.0, %v4949
        %4951 = vdwg.mxu0
        %s4952 = scalar_lea.vmem [#allocation13], 80
        %v4953 = vld [vmem:[%s4952] sm:$0xff]
        %v4954 = vld [vmem:[%s4952 + $0x8] sm:$0xff]
        %v4956 = vsel %vm2805, %v4953, 0
        %v4959 = vsel %vm2805, %v4954, 0
        %4961 = vmatpush.msra.mxu0 0.0
        %4962 = vmatpush.msra.mxu0 0.0
        %4963 = vmatpush.msra.mxu0 0.0
        %4964 = vmatpush.msra.mxu0 0.0
        %4965 = vmatpush.msra.mxu0 0.0
        %4966 = vmatpush.msra.mxu0 0.0
        %4967 = vmatpush.msra.mxu0 0.0
        %4968 = vmatpush.msra.mxu0 0.0
        %4969 = vmatpush.msra.mxu0 0.0
        %4970 = vmatpush.msra.mxu0 0.0
        %4971 = vmatpush.msra.mxu0 0.0
        %4972 = vmatpush.msra.mxu0 0.0
        %4973 = vmatpush.msra.mxu0 0.0
        %4974 = vmatpush.msra.mxu0 0.0
        %4975 = vmatpush.msra.mxu0 %v4950
        %4976 = vmatpush.msra.mxu0 %v4947
        %4977 = vmatmul.f32.gmra.mxu0 %v4956
        %v4978 = vpop.f32.mrf.mxu0
        %v4979 = vadd.f32 0.0, %v4978
        %4980 = vmatmul.f32.gmra.mxu0 %v4959
        %v4981 = vpop.f32.mrf.mxu0
        %v4982 = vadd.f32 0.0, %v4981
        %4983 = vdwg.mxu0
        %v4984 = vadd.f32 %v4922, %v4979
        %v4985 = vadd.f32 %v4923, %v4982
        %s4986 = scalar_lea.vmem %s9, 192
        %v4987 = vld [vmem:[%s4986] sm:$0xff]
        %v4988 = vld [vmem:[%s4986 + $0x8] sm:$0xff]
        %v4989 = vld [vmem:[%s4986 + $0x10] sm:$0xff]
        %v4990 = vld [vmem:[%s4986 + $0x18] sm:$0xff]
        %4991 = vmatpush.msra.mxu0 0.0
        %4992 = vmatpush.msra.mxu0 0.0
        %4993 = vmatpush.msra.mxu0 0.0
        %4994 = vmatpush.msra.mxu0 0.0
        %4995 = vmatpush.msra.mxu0 0.0
        %4996 = vmatpush.msra.mxu0 0.0
        %4997 = vmatpush.msra.mxu0 0.0
        %4998 = vmatpush.msra.mxu0 0.0
        %4999 = vmatpush.msra.mxu0 0.0
        %5000 = vmatpush.msra.mxu0 0.0
        %5001 = vmatpush.msra.mxu0 0.0
        %5002 = vmatpush.msra.mxu0 0.0
        %5003 = vmatpush.msra.mxu0 %v4990
        %5004 = vmatpush.msra.mxu0 %v4989
        %5005 = vmatpush.msra.mxu0 %v4988
        %5006 = vmatpush.msra.mxu0 %v4987
        %5007 = vmatmul.f32.gmra.mxu0 %v4619
        %v5008 = vpop.f32.mrf.mxu0
        %v5009 = vadd.f32 0.0, %v5008
        %5010 = vmatmul.f32.gmra.mxu0 %v4622
        %v5011 = vpop.f32.mrf.mxu0
        %v5012 = vadd.f32 0.0, %v5011
        %5013 = vdwg.mxu0
        %s5014 = scalar_lea.vmem [#allocation13], 96
        %v5015 = vld [vmem:[%s5014] sm:$0xff]
        %v5016 = vld [vmem:[%s5014 + $0x8] sm:$0xff]
        %v5018 = vsel %vm2805, %v5015, 0
        %v5021 = vsel %vm2805, %v5016, 0
        %5023 = vmatpush.msra.mxu0 0.0
        %5024 = vmatpush.msra.mxu0 0.0
        %5025 = vmatpush.msra.mxu0 0.0
        %5026 = vmatpush.msra.mxu0 0.0
        %5027 = vmatpush.msra.mxu0 0.0
        %5028 = vmatpush.msra.mxu0 0.0
        %5029 = vmatpush.msra.mxu0 0.0
        %5030 = vmatpush.msra.mxu0 0.0
        %5031 = vmatpush.msra.mxu0 0.0
        %5032 = vmatpush.msra.mxu0 0.0
        %5033 = vmatpush.msra.mxu0 0.0
        %5034 = vmatpush.msra.mxu0 0.0
        %5035 = vmatpush.msra.mxu0 0.0
        %5036 = vmatpush.msra.mxu0 0.0
        %5037 = vmatpush.msra.mxu0 %v5012
        %5038 = vmatpush.msra.mxu0 %v5009
        %5039 = vmatmul.f32.gmra.mxu0 %v5018
        %v5040 = vpop.f32.mrf.mxu0
        %v5041 = vadd.f32 0.0, %v5040
        %5042 = vmatmul.f32.gmra.mxu0 %v5021
        %v5043 = vpop.f32.mrf.mxu0
        %v5044 = vadd.f32 0.0, %v5043
        %5045 = vdwg.mxu0
        %v5046 = vadd.f32 %v4984, %v5041
        %v5047 = vadd.f32 %v4985, %v5044
        %s5048 = scalar_lea.vmem %s9, 224
        %v5049 = vld [vmem:[%s5048] sm:$0xff]
        %v5050 = vld [vmem:[%s5048 + $0x8] sm:$0xff]
        %v5051 = vld [vmem:[%s5048 + $0x10] sm:$0xff]
        %v5052 = vld [vmem:[%s5048 + $0x18] sm:$0xff]
        %5053 = vmatpush.msra.mxu0 0.0
        %5054 = vmatpush.msra.mxu0 0.0
        %5055 = vmatpush.msra.mxu0 0.0
        %5056 = vmatpush.msra.mxu0 0.0
        %5057 = vmatpush.msra.mxu0 0.0
        %5058 = vmatpush.msra.mxu0 0.0
        %5059 = vmatpush.msra.mxu0 0.0
        %5060 = vmatpush.msra.mxu0 0.0
        %5061 = vmatpush.msra.mxu0 0.0
        %5062 = vmatpush.msra.mxu0 0.0
        %5063 = vmatpush.msra.mxu0 0.0
        %5064 = vmatpush.msra.mxu0 0.0
        %5065 = vmatpush.msra.mxu0 %v5052
        %5066 = vmatpush.msra.mxu0 %v5051
        %5067 = vmatpush.msra.mxu0 %v5050
        %5068 = vmatpush.msra.mxu0 %v5049
        %5069 = vmatmul.f32.gmra.mxu0 %v4619
        %v5070 = vpop.f32.mrf.mxu0
        %v5071 = vadd.f32 0.0, %v5070
        %5072 = vmatmul.f32.gmra.mxu0 %v4622
        %v5073 = vpop.f32.mrf.mxu0
        %v5074 = vadd.f32 0.0, %v5073
        %5075 = vdwg.mxu0
        %s5076 = scalar_lea.vmem [#allocation13], 112
        %v5077 = vld [vmem:[%s5076] sm:$0xff]
        %v5078 = vld [vmem:[%s5076 + $0x8] sm:$0xff]
        %v5080 = vsel %vm2805, %v5077, 0
        %v5083 = vsel %vm2805, %v5078, 0
        %5085 = vmatpush.msra.mxu0 0.0
        %5086 = vmatpush.msra.mxu0 0.0
        %5087 = vmatpush.msra.mxu0 0.0
        %5088 = vmatpush.msra.mxu0 0.0
        %5089 = vmatpush.msra.mxu0 0.0
        %5090 = vmatpush.msra.mxu0 0.0
        %5091 = vmatpush.msra.mxu0 0.0
        %5092 = vmatpush.msra.mxu0 0.0
        %5093 = vmatpush.msra.mxu0 0.0
        %5094 = vmatpush.msra.mxu0 0.0
        %5095 = vmatpush.msra.mxu0 0.0
        %5096 = vmatpush.msra.mxu0 0.0
        %5097 = vmatpush.msra.mxu0 0.0
        %5098 = vmatpush.msra.mxu0 0.0
        %5099 = vmatpush.msra.mxu0 %v5074
        %5100 = vmatpush.msra.mxu0 %v5071
        %5101 = vmatmul.f32.gmra.mxu0 %v5080
        %v5102 = vpop.f32.mrf.mxu0
        %v5103 = vadd.f32 0.0, %v5102
        %5104 = vmatmul.f32.gmra.mxu0 %v5083
        %v5105 = vpop.f32.mrf.mxu0
        %v5106 = vadd.f32 0.0, %v5105
        %5107 = vdwg.mxu0
        %v5108 = vadd.f32 %v5046, %v5103
        %v5109 = vadd.f32 %v5047, %v5106
        %s5110 = scalar_lea.vmem %s9, 256
        %v5111 = vld [vmem:[%s5110] sm:$0xff]
        %v5112 = vld [vmem:[%s5110 + $0x8] sm:$0xff]
        %v5113 = vld [vmem:[%s5110 + $0x10] sm:$0xff]
        %v5114 = vld [vmem:[%s5110 + $0x18] sm:$0xff]
        %5115 = vmatpush.msra.mxu0 0.0
        %5116 = vmatpush.msra.mxu0 0.0
        %5117 = vmatpush.msra.mxu0 0.0
        %5118 = vmatpush.msra.mxu0 0.0
        %5119 = vmatpush.msra.mxu0 0.0
        %5120 = vmatpush.msra.mxu0 0.0
        %5121 = vmatpush.msra.mxu0 0.0
        %5122 = vmatpush.msra.mxu0 0.0
        %5123 = vmatpush.msra.mxu0 0.0
        %5124 = vmatpush.msra.mxu0 0.0
        %5125 = vmatpush.msra.mxu0 0.0
        %5126 = vmatpush.msra.mxu0 0.0
        %5127 = vmatpush.msra.mxu0 %v5114
        %5128 = vmatpush.msra.mxu0 %v5113
        %5129 = vmatpush.msra.mxu0 %v5112
        %5130 = vmatpush.msra.mxu0 %v5111
        %5131 = vmatmul.f32.gmra.mxu0 %v4619
        %v5132 = vpop.f32.mrf.mxu0
        %v5133 = vadd.f32 0.0, %v5132
        %5134 = vmatmul.f32.gmra.mxu0 %v4622
        %v5135 = vpop.f32.mrf.mxu0
        %v5136 = vadd.f32 0.0, %v5135
        %5137 = vdwg.mxu0
        %s5138 = scalar_lea.vmem [#allocation13], 128
        %v5139 = vld [vmem:[%s5138] sm:$0xff]
        %v5140 = vld [vmem:[%s5138 + $0x8] sm:$0xff]
        %v5142 = vsel %vm2805, %v5139, 0
        %v5145 = vsel %vm2805, %v5140, 0
        %5147 = vmatpush.msra.mxu0 0.0
        %5148 = vmatpush.msra.mxu0 0.0
        %5149 = vmatpush.msra.mxu0 0.0
        %5150 = vmatpush.msra.mxu0 0.0
        %5151 = vmatpush.msra.mxu0 0.0
        %5152 = vmatpush.msra.mxu0 0.0
        %5153 = vmatpush.msra.mxu0 0.0
        %5154 = vmatpush.msra.mxu0 0.0
        %5155 = vmatpush.msra.mxu0 0.0
        %5156 = vmatpush.msra.mxu0 0.0
        %5157 = vmatpush.msra.mxu0 0.0
        %5158 = vmatpush.msra.mxu0 0.0
        %5159 = vmatpush.msra.mxu0 0.0
        %5160 = vmatpush.msra.mxu0 0.0
        %5161 = vmatpush.msra.mxu0 %v5136
        %5162 = vmatpush.msra.mxu0 %v5133
        %5163 = vmatmul.f32.gmra.mxu0 %v5142
        %v5164 = vpop.f32.mrf.mxu0
        %v5165 = vadd.f32 0.0, %v5164
        %5166 = vmatmul.f32.gmra.mxu0 %v5145
        %v5167 = vpop.f32.mrf.mxu0
        %v5168 = vadd.f32 0.0, %v5167
        %5169 = vdwg.mxu0
        %v5170 = vadd.f32 %v5108, %v5165
        %v5171 = vadd.f32 %v5109, %v5168
        %s5172 = scalar_lea.vmem %s9, 288
        %v5173 = vld [vmem:[%s5172] sm:$0xff]
        %v5174 = vld [vmem:[%s5172 + $0x8] sm:$0xff]
        %v5175 = vld [vmem:[%s5172 + $0x10] sm:$0xff]
        %v5176 = vld [vmem:[%s5172 + $0x18] sm:$0xff]
        %5177 = vmatpush.msra.mxu0 0.0
        %5178 = vmatpush.msra.mxu0 0.0
        %5179 = vmatpush.msra.mxu0 0.0
        %5180 = vmatpush.msra.mxu0 0.0
        %5181 = vmatpush.msra.mxu0 0.0
        %5182 = vmatpush.msra.mxu0 0.0
        %5183 = vmatpush.msra.mxu0 0.0
        %5184 = vmatpush.msra.mxu0 0.0
        %5185 = vmatpush.msra.mxu0 0.0
        %5186 = vmatpush.msra.mxu0 0.0
        %5187 = vmatpush.msra.mxu0 0.0
        %5188 = vmatpush.msra.mxu0 0.0
        %5189 = vmatpush.msra.mxu0 %v5176
        %5190 = vmatpush.msra.mxu0 %v5175
        %5191 = vmatpush.msra.mxu0 %v5174
        %5192 = vmatpush.msra.mxu0 %v5173
        %5193 = vmatmul.f32.gmra.mxu0 %v4619
        %v5194 = vpop.f32.mrf.mxu0
        %v5195 = vadd.f32 0.0, %v5194
        %5196 = vmatmul.f32.gmra.mxu0 %v4622
        %v5197 = vpop.f32.mrf.mxu0
        %v5198 = vadd.f32 0.0, %v5197
        %5199 = vdwg.mxu0
        %s5200 = scalar_lea.vmem [#allocation13], 144
        %v5201 = vld [vmem:[%s5200] sm:$0xff]
        %v5202 = vld [vmem:[%s5200 + $0x8] sm:$0xff]
        %v5204 = vsel %vm2805, %v5201, 0
        %v5207 = vsel %vm2805, %v5202, 0
        %5209 = vmatpush.msra.mxu0 0.0
        %5210 = vmatpush.msra.mxu0 0.0
        %5211 = vmatpush.msra.mxu0 0.0
        %5212 = vmatpush.msra.mxu0 0.0
        %5213 = vmatpush.msra.mxu0 0.0
        %5214 = vmatpush.msra.mxu0 0.0
        %5215 = vmatpush.msra.mxu0 0.0
        %5216 = vmatpush.msra.mxu0 0.0
        %5217 = vmatpush.msra.mxu0 0.0
        %5218 = vmatpush.msra.mxu0 0.0
        %5219 = vmatpush.msra.mxu0 0.0
        %5220 = vmatpush.msra.mxu0 0.0
        %5221 = vmatpush.msra.mxu0 0.0
        %5222 = vmatpush.msra.mxu0 0.0
        %5223 = vmatpush.msra.mxu0 %v5198
        %5224 = vmatpush.msra.mxu0 %v5195
        %5225 = vmatmul.f32.gmra.mxu0 %v5204
        %v5226 = vpop.f32.mrf.mxu0
        %v5227 = vadd.f32 0.0, %v5226
        %5228 = vmatmul.f32.gmra.mxu0 %v5207
        %v5229 = vpop.f32.mrf.mxu0
        %v5230 = vadd.f32 0.0, %v5229
        %5231 = vdwg.mxu0
        %v5232 = vadd.f32 %v5170, %v5227
        %v5233 = vadd.f32 %v5171, %v5230
        %s5234 = scalar_lea.vmem %s9, 320
        %v5235 = vld [vmem:[%s5234] sm:$0xff]
        %v5236 = vld [vmem:[%s5234 + $0x8] sm:$0xff]
        %v5237 = vld [vmem:[%s5234 + $0x10] sm:$0xff]
        %v5238 = vld [vmem:[%s5234 + $0x18] sm:$0xff]
        %5239 = vmatpush.msra.mxu0 0.0
        %5240 = vmatpush.msra.mxu0 0.0
        %5241 = vmatpush.msra.mxu0 0.0
        %5242 = vmatpush.msra.mxu0 0.0
        %5243 = vmatpush.msra.mxu0 0.0
        %5244 = vmatpush.msra.mxu0 0.0
        %5245 = vmatpush.msra.mxu0 0.0
        %5246 = vmatpush.msra.mxu0 0.0
        %5247 = vmatpush.msra.mxu0 0.0
        %5248 = vmatpush.msra.mxu0 0.0
        %5249 = vmatpush.msra.mxu0 0.0
        %5250 = vmatpush.msra.mxu0 0.0
        %5251 = vmatpush.msra.mxu0 %v5238
        %5252 = vmatpush.msra.mxu0 %v5237
        %5253 = vmatpush.msra.mxu0 %v5236
        %5254 = vmatpush.msra.mxu0 %v5235
        %5255 = vmatmul.f32.gmra.mxu0 %v4619
        %v5256 = vpop.f32.mrf.mxu0
        %v5257 = vadd.f32 0.0, %v5256
        %5258 = vmatmul.f32.gmra.mxu0 %v4622
        %v5259 = vpop.f32.mrf.mxu0
        %v5260 = vadd.f32 0.0, %v5259
        %5261 = vdwg.mxu0
        %s5262 = scalar_lea.vmem [#allocation13], 160
        %v5263 = vld [vmem:[%s5262] sm:$0xff]
        %v5264 = vld [vmem:[%s5262 + $0x8] sm:$0xff]
        %v5266 = vsel %vm2805, %v5263, 0
        %v5269 = vsel %vm2805, %v5264, 0
        %5271 = vmatpush.msra.mxu0 0.0
        %5272 = vmatpush.msra.mxu0 0.0
        %5273 = vmatpush.msra.mxu0 0.0
        %5274 = vmatpush.msra.mxu0 0.0
        %5275 = vmatpush.msra.mxu0 0.0
        %5276 = vmatpush.msra.mxu0 0.0
        %5277 = vmatpush.msra.mxu0 0.0
        %5278 = vmatpush.msra.mxu0 0.0
        %5279 = vmatpush.msra.mxu0 0.0
        %5280 = vmatpush.msra.mxu0 0.0
        %5281 = vmatpush.msra.mxu0 0.0
        %5282 = vmatpush.msra.mxu0 0.0
        %5283 = vmatpush.msra.mxu0 0.0
        %5284 = vmatpush.msra.mxu0 0.0
        %5285 = vmatpush.msra.mxu0 %v5260
        %5286 = vmatpush.msra.mxu0 %v5257
        %5287 = vmatmul.f32.gmra.mxu0 %v5266
        %v5288 = vpop.f32.mrf.mxu0
        %v5289 = vadd.f32 0.0, %v5288
        %5290 = vmatmul.f32.gmra.mxu0 %v5269
        %v5291 = vpop.f32.mrf.mxu0
        %v5292 = vadd.f32 0.0, %v5291
        %5293 = vdwg.mxu0
        %v5294 = vadd.f32 %v5232, %v5289
        %v5295 = vadd.f32 %v5233, %v5292
        %s5296 = scalar_lea.vmem %s9, 352
        %v5297 = vld [vmem:[%s5296] sm:$0xff]
        %v5298 = vld [vmem:[%s5296 + $0x8] sm:$0xff]
        %v5299 = vld [vmem:[%s5296 + $0x10] sm:$0xff]
        %v5300 = vld [vmem:[%s5296 + $0x18] sm:$0xff]
        %5301 = vmatpush.msra.mxu0 0.0
        %5302 = vmatpush.msra.mxu0 0.0
        %5303 = vmatpush.msra.mxu0 0.0
        %5304 = vmatpush.msra.mxu0 0.0
        %5305 = vmatpush.msra.mxu0 0.0
        %5306 = vmatpush.msra.mxu0 0.0
        %5307 = vmatpush.msra.mxu0 0.0
        %5308 = vmatpush.msra.mxu0 0.0
        %5309 = vmatpush.msra.mxu0 0.0
        %5310 = vmatpush.msra.mxu0 0.0
        %5311 = vmatpush.msra.mxu0 0.0
        %5312 = vmatpush.msra.mxu0 0.0
        %5313 = vmatpush.msra.mxu0 %v5300
        %5314 = vmatpush.msra.mxu0 %v5299
        %5315 = vmatpush.msra.mxu0 %v5298
        %5316 = vmatpush.msra.mxu0 %v5297
        %5317 = vmatmul.f32.gmra.mxu0 %v4619
        %v5318 = vpop.f32.mrf.mxu0
        %v5319 = vadd.f32 0.0, %v5318
        %5320 = vmatmul.f32.gmra.mxu0 %v4622
        %v5321 = vpop.f32.mrf.mxu0
        %v5322 = vadd.f32 0.0, %v5321
        %5323 = vdwg.mxu0
        %s5324 = scalar_lea.vmem [#allocation13], 176
        %v5325 = vld [vmem:[%s5324] sm:$0xff]
        %v5326 = vld [vmem:[%s5324 + $0x8] sm:$0xff]
        %v5328 = vsel %vm2805, %v5325, 0
        %v5331 = vsel %vm2805, %v5326, 0
        %5333 = vmatpush.msra.mxu0 0.0
        %5334 = vmatpush.msra.mxu0 0.0
        %5335 = vmatpush.msra.mxu0 0.0
        %5336 = vmatpush.msra.mxu0 0.0
        %5337 = vmatpush.msra.mxu0 0.0
        %5338 = vmatpush.msra.mxu0 0.0
        %5339 = vmatpush.msra.mxu0 0.0
        %5340 = vmatpush.msra.mxu0 0.0
        %5341 = vmatpush.msra.mxu0 0.0
        %5342 = vmatpush.msra.mxu0 0.0
        %5343 = vmatpush.msra.mxu0 0.0
        %5344 = vmatpush.msra.mxu0 0.0
        %5345 = vmatpush.msra.mxu0 0.0
        %5346 = vmatpush.msra.mxu0 0.0
        %5347 = vmatpush.msra.mxu0 %v5322
        %5348 = vmatpush.msra.mxu0 %v5319
        %5349 = vmatmul.f32.gmra.mxu0 %v5328
        %v5350 = vpop.f32.mrf.mxu0
        %v5351 = vadd.f32 0.0, %v5350
        %5352 = vmatmul.f32.gmra.mxu0 %v5331
        %v5353 = vpop.f32.mrf.mxu0
        %v5354 = vadd.f32 0.0, %v5353
        %5355 = vdwg.mxu0
        %v5356 = vadd.f32 %v5294, %v5351
        %v5357 = vadd.f32 %v5295, %v5354
        %s5358 = scalar_lea.vmem %s9, 384
        %v5359 = vld [vmem:[%s5358] sm:$0xff]
        %v5360 = vld [vmem:[%s5358 + $0x8] sm:$0xff]
        %v5361 = vld [vmem:[%s5358 + $0x10] sm:$0xff]
        %v5362 = vld [vmem:[%s5358 + $0x18] sm:$0xff]
        %5363 = vmatpush.msra.mxu0 0.0
        %5364 = vmatpush.msra.mxu0 0.0
        %5365 = vmatpush.msra.mxu0 0.0
        %5366 = vmatpush.msra.mxu0 0.0
        %5367 = vmatpush.msra.mxu0 0.0
        %5368 = vmatpush.msra.mxu0 0.0
        %5369 = vmatpush.msra.mxu0 0.0
        %5370 = vmatpush.msra.mxu0 0.0
        %5371 = vmatpush.msra.mxu0 0.0
        %5372 = vmatpush.msra.mxu0 0.0
        %5373 = vmatpush.msra.mxu0 0.0
        %5374 = vmatpush.msra.mxu0 0.0
        %5375 = vmatpush.msra.mxu0 %v5362
        %5376 = vmatpush.msra.mxu0 %v5361
        %5377 = vmatpush.msra.mxu0 %v5360
        %5378 = vmatpush.msra.mxu0 %v5359
        %5379 = vmatmul.f32.gmra.mxu0 %v4619
        %v5380 = vpop.f32.mrf.mxu0
        %v5381 = vadd.f32 0.0, %v5380
        %5382 = vmatmul.f32.gmra.mxu0 %v4622
        %v5383 = vpop.f32.mrf.mxu0
        %v5384 = vadd.f32 0.0, %v5383
        %5385 = vdwg.mxu0
        %s5386 = scalar_lea.vmem [#allocation13], 192
        %v5387 = vld [vmem:[%s5386] sm:$0xff]
        %v5388 = vld [vmem:[%s5386 + $0x8] sm:$0xff]
        %v5390 = vsel %vm2805, %v5387, 0
        %v5393 = vsel %vm2805, %v5388, 0
        %5395 = vmatpush.msra.mxu0 0.0
        %5396 = vmatpush.msra.mxu0 0.0
        %5397 = vmatpush.msra.mxu0 0.0
        %5398 = vmatpush.msra.mxu0 0.0
        %5399 = vmatpush.msra.mxu0 0.0
        %5400 = vmatpush.msra.mxu0 0.0
        %5401 = vmatpush.msra.mxu0 0.0
        %5402 = vmatpush.msra.mxu0 0.0
        %5403 = vmatpush.msra.mxu0 0.0
        %5404 = vmatpush.msra.mxu0 0.0
        %5405 = vmatpush.msra.mxu0 0.0
        %5406 = vmatpush.msra.mxu0 0.0
        %5407 = vmatpush.msra.mxu0 0.0
        %5408 = vmatpush.msra.mxu0 0.0
        %5409 = vmatpush.msra.mxu0 %v5384
        %5410 = vmatpush.msra.mxu0 %v5381
        %5411 = vmatmul.f32.gmra.mxu0 %v5390
        %v5412 = vpop.f32.mrf.mxu0
        %v5413 = vadd.f32 0.0, %v5412
        %5414 = vmatmul.f32.gmra.mxu0 %v5393
        %v5415 = vpop.f32.mrf.mxu0
        %v5416 = vadd.f32 0.0, %v5415
        %5417 = vdwg.mxu0
        %v5418 = vadd.f32 %v5356, %v5413
        %v5419 = vadd.f32 %v5357, %v5416
        %s5420 = scalar_lea.vmem %s9, 416
        %v5421 = vld [vmem:[%s5420] sm:$0xff]
        %v5422 = vld [vmem:[%s5420 + $0x8] sm:$0xff]
        %v5423 = vld [vmem:[%s5420 + $0x10] sm:$0xff]
        %v5424 = vld [vmem:[%s5420 + $0x18] sm:$0xff]
        %5425 = vmatpush.msra.mxu0 0.0
        %5426 = vmatpush.msra.mxu0 0.0
        %5427 = vmatpush.msra.mxu0 0.0
        %5428 = vmatpush.msra.mxu0 0.0
        %5429 = vmatpush.msra.mxu0 0.0
        %5430 = vmatpush.msra.mxu0 0.0
        %5431 = vmatpush.msra.mxu0 0.0
        %5432 = vmatpush.msra.mxu0 0.0
        %5433 = vmatpush.msra.mxu0 0.0
        %5434 = vmatpush.msra.mxu0 0.0
        %5435 = vmatpush.msra.mxu0 0.0
        %5436 = vmatpush.msra.mxu0 0.0
        %5437 = vmatpush.msra.mxu0 %v5424
        %5438 = vmatpush.msra.mxu0 %v5423
        %5439 = vmatpush.msra.mxu0 %v5422
        %5440 = vmatpush.msra.mxu0 %v5421
        %5441 = vmatmul.f32.gmra.mxu0 %v4619
        %v5442 = vpop.f32.mrf.mxu0
        %v5443 = vadd.f32 0.0, %v5442
        %5444 = vmatmul.f32.gmra.mxu0 %v4622
        %v5445 = vpop.f32.mrf.mxu0
        %v5446 = vadd.f32 0.0, %v5445
        %5447 = vdwg.mxu0
        %s5448 = scalar_lea.vmem [#allocation13], 208
        %v5449 = vld [vmem:[%s5448] sm:$0xff]
        %v5450 = vld [vmem:[%s5448 + $0x8] sm:$0xff]
        %v5452 = vsel %vm2805, %v5449, 0
        %v5455 = vsel %vm2805, %v5450, 0
        %5457 = vmatpush.msra.mxu0 0.0
        %5458 = vmatpush.msra.mxu0 0.0
        %5459 = vmatpush.msra.mxu0 0.0
        %5460 = vmatpush.msra.mxu0 0.0
        %5461 = vmatpush.msra.mxu0 0.0
        %5462 = vmatpush.msra.mxu0 0.0
        %5463 = vmatpush.msra.mxu0 0.0
        %5464 = vmatpush.msra.mxu0 0.0
        %5465 = vmatpush.msra.mxu0 0.0
        %5466 = vmatpush.msra.mxu0 0.0
        %5467 = vmatpush.msra.mxu0 0.0
        %5468 = vmatpush.msra.mxu0 0.0
        %5469 = vmatpush.msra.mxu0 0.0
        %5470 = vmatpush.msra.mxu0 0.0
        %5471 = vmatpush.msra.mxu0 %v5446
        %5472 = vmatpush.msra.mxu0 %v5443
        %5473 = vmatmul.f32.gmra.mxu0 %v5452
        %v5474 = vpop.f32.mrf.mxu0
        %v5475 = vadd.f32 0.0, %v5474
        %5476 = vmatmul.f32.gmra.mxu0 %v5455
        %v5477 = vpop.f32.mrf.mxu0
        %v5478 = vadd.f32 0.0, %v5477
        %5479 = vdwg.mxu0
        %v5480 = vadd.f32 %v5418, %v5475
        %v5481 = vadd.f32 %v5419, %v5478
        %s5482 = scalar_lea.vmem %s9, 448
        %v5483 = vld [vmem:[%s5482] sm:$0xff]
        %v5484 = vld [vmem:[%s5482 + $0x8] sm:$0xff]
        %v5485 = vld [vmem:[%s5482 + $0x10] sm:$0xff]
        %v5486 = vld [vmem:[%s5482 + $0x18] sm:$0xff]
        %5487 = vmatpush.msra.mxu0 0.0
        %5488 = vmatpush.msra.mxu0 0.0
        %5489 = vmatpush.msra.mxu0 0.0
        %5490 = vmatpush.msra.mxu0 0.0
        %5491 = vmatpush.msra.mxu0 0.0
        %5492 = vmatpush.msra.mxu0 0.0
        %5493 = vmatpush.msra.mxu0 0.0
        %5494 = vmatpush.msra.mxu0 0.0
        %5495 = vmatpush.msra.mxu0 0.0
        %5496 = vmatpush.msra.mxu0 0.0
        %5497 = vmatpush.msra.mxu0 0.0
        %5498 = vmatpush.msra.mxu0 0.0
        %5499 = vmatpush.msra.mxu0 %v5486
        %5500 = vmatpush.msra.mxu0 %v5485
        %5501 = vmatpush.msra.mxu0 %v5484
        %5502 = vmatpush.msra.mxu0 %v5483
        %5503 = vmatmul.f32.gmra.mxu0 %v4619
        %v5504 = vpop.f32.mrf.mxu0
        %v5505 = vadd.f32 0.0, %v5504
        %5506 = vmatmul.f32.gmra.mxu0 %v4622
        %v5507 = vpop.f32.mrf.mxu0
        %v5508 = vadd.f32 0.0, %v5507
        %5509 = vdwg.mxu0
        %s5510 = scalar_lea.vmem [#allocation13], 224
        %v5511 = vld [vmem:[%s5510] sm:$0xff]
        %v5512 = vld [vmem:[%s5510 + $0x8] sm:$0xff]
        %v5514 = vsel %vm2805, %v5511, 0
        %v5517 = vsel %vm2805, %v5512, 0
        %5519 = vmatpush.msra.mxu0 0.0
        %5520 = vmatpush.msra.mxu0 0.0
        %5521 = vmatpush.msra.mxu0 0.0
        %5522 = vmatpush.msra.mxu0 0.0
        %5523 = vmatpush.msra.mxu0 0.0
        %5524 = vmatpush.msra.mxu0 0.0
        %5525 = vmatpush.msra.mxu0 0.0
        %5526 = vmatpush.msra.mxu0 0.0
        %5527 = vmatpush.msra.mxu0 0.0
        %5528 = vmatpush.msra.mxu0 0.0
        %5529 = vmatpush.msra.mxu0 0.0
        %5530 = vmatpush.msra.mxu0 0.0
        %5531 = vmatpush.msra.mxu0 0.0
        %5532 = vmatpush.msra.mxu0 0.0
        %5533 = vmatpush.msra.mxu0 %v5508
        %5534 = vmatpush.msra.mxu0 %v5505
        %5535 = vmatmul.f32.gmra.mxu0 %v5514
        %v5536 = vpop.f32.mrf.mxu0
        %v5537 = vadd.f32 0.0, %v5536
        %5538 = vmatmul.f32.gmra.mxu0 %v5517
        %v5539 = vpop.f32.mrf.mxu0
        %v5540 = vadd.f32 0.0, %v5539
        %5541 = vdwg.mxu0
        %v5542 = vadd.f32 %v5480, %v5537
        %v5543 = vadd.f32 %v5481, %v5540
        %s5544 = scalar_lea.vmem %s9, 480
        %v5545 = vld [vmem:[%s5544] sm:$0xff]
        %v5546 = vld [vmem:[%s5544 + $0x8] sm:$0xff]
        %v5547 = vld [vmem:[%s5544 + $0x10] sm:$0xff]
        %v5548 = vld [vmem:[%s5544 + $0x18] sm:$0xff]
        %5549 = vmatpush.msra.mxu0 0.0
        %5550 = vmatpush.msra.mxu0 0.0
        %5551 = vmatpush.msra.mxu0 0.0
        %5552 = vmatpush.msra.mxu0 0.0
        %5553 = vmatpush.msra.mxu0 0.0
        %5554 = vmatpush.msra.mxu0 0.0
        %5555 = vmatpush.msra.mxu0 0.0
        %5556 = vmatpush.msra.mxu0 0.0
        %5557 = vmatpush.msra.mxu0 0.0
        %5558 = vmatpush.msra.mxu0 0.0
        %5559 = vmatpush.msra.mxu0 0.0
        %5560 = vmatpush.msra.mxu0 0.0
        %5561 = vmatpush.msra.mxu0 %v5548
        %5562 = vmatpush.msra.mxu0 %v5547
        %5563 = vmatpush.msra.mxu0 %v5546
        %5564 = vmatpush.msra.mxu0 %v5545
        %5565 = vmatmul.f32.gmra.mxu0 %v4619
        %v5566 = vpop.f32.mrf.mxu0
        %v5567 = vadd.f32 0.0, %v5566
        %5568 = vmatmul.f32.gmra.mxu0 %v4622
        %v5569 = vpop.f32.mrf.mxu0
        %v5570 = vadd.f32 0.0, %v5569
        %5571 = vdwg.mxu0
        %s5572 = scalar_lea.vmem [#allocation13], 240
        %v5573 = vld [vmem:[%s5572] sm:$0xff]
        %v5574 = vld [vmem:[%s5572 + $0x8] sm:$0xff]
        %v5576 = vsel %vm2805, %v5573, 0
        %v5579 = vsel %vm2805, %v5574, 0
        %5581 = vmatpush.msra.mxu0 0.0
        %5582 = vmatpush.msra.mxu0 0.0
        %5583 = vmatpush.msra.mxu0 0.0
        %5584 = vmatpush.msra.mxu0 0.0
        %5585 = vmatpush.msra.mxu0 0.0
        %5586 = vmatpush.msra.mxu0 0.0
        %5587 = vmatpush.msra.mxu0 0.0
        %5588 = vmatpush.msra.mxu0 0.0
        %5589 = vmatpush.msra.mxu0 0.0
        %5590 = vmatpush.msra.mxu0 0.0
        %5591 = vmatpush.msra.mxu0 0.0
        %5592 = vmatpush.msra.mxu0 0.0
        %5593 = vmatpush.msra.mxu0 0.0
        %5594 = vmatpush.msra.mxu0 0.0
        %5595 = vmatpush.msra.mxu0 %v5570
        %5596 = vmatpush.msra.mxu0 %v5567
        %5597 = vmatmul.f32.gmra.mxu0 %v5576
        %v5598 = vpop.f32.mrf.mxu0
        %v5599 = vadd.f32 0.0, %v5598
        %5600 = vmatmul.f32.gmra.mxu0 %v5579
        %v5601 = vpop.f32.mrf.mxu0
        %v5602 = vadd.f32 0.0, %v5601
        %5603 = vdwg.mxu0
        %v5604 = vadd.f32 %v5542, %v5599
        %v5605 = vadd.f32 %v5543, %v5602
        %s5606 = scalar_lea.vmem %s9, 512
        %v5607 = vld [vmem:[%s5606] sm:$0xff]
        %v5608 = vld [vmem:[%s5606 + $0x8] sm:$0xff]
        %v5609 = vld [vmem:[%s5606 + $0x10] sm:$0xff]
        %v5610 = vld [vmem:[%s5606 + $0x18] sm:$0xff]
        %5611 = vmatpush.msra.mxu0 0.0
        %5612 = vmatpush.msra.mxu0 0.0
        %5613 = vmatpush.msra.mxu0 0.0
        %5614 = vmatpush.msra.mxu0 0.0
        %5615 = vmatpush.msra.mxu0 0.0
        %5616 = vmatpush.msra.mxu0 0.0
        %5617 = vmatpush.msra.mxu0 0.0
        %5618 = vmatpush.msra.mxu0 0.0
        %5619 = vmatpush.msra.mxu0 0.0
        %5620 = vmatpush.msra.mxu0 0.0
        %5621 = vmatpush.msra.mxu0 0.0
        %5622 = vmatpush.msra.mxu0 0.0
        %5623 = vmatpush.msra.mxu0 %v5610
        %5624 = vmatpush.msra.mxu0 %v5609
        %5625 = vmatpush.msra.mxu0 %v5608
        %5626 = vmatpush.msra.mxu0 %v5607
        %5627 = vmatmul.f32.gmra.mxu0 %v4619
        %v5628 = vpop.f32.mrf.mxu0
        %v5629 = vadd.f32 0.0, %v5628
        %5630 = vmatmul.f32.gmra.mxu0 %v4622
        %v5631 = vpop.f32.mrf.mxu0
        %v5632 = vadd.f32 0.0, %v5631
        %5633 = vdwg.mxu0
        %s5634 = scalar_lea.vmem [#allocation13], 256
        %v5635 = vld [vmem:[%s5634] sm:$0xff]
        %v5636 = vld [vmem:[%s5634 + $0x8] sm:$0xff]
        %v5638 = vsel %vm2805, %v5635, 0
        %v5641 = vsel %vm2805, %v5636, 0
        %5643 = vmatpush.msra.mxu0 0.0
        %5644 = vmatpush.msra.mxu0 0.0
        %5645 = vmatpush.msra.mxu0 0.0
        %5646 = vmatpush.msra.mxu0 0.0
        %5647 = vmatpush.msra.mxu0 0.0
        %5648 = vmatpush.msra.mxu0 0.0
        %5649 = vmatpush.msra.mxu0 0.0
        %5650 = vmatpush.msra.mxu0 0.0
        %5651 = vmatpush.msra.mxu0 0.0
        %5652 = vmatpush.msra.mxu0 0.0
        %5653 = vmatpush.msra.mxu0 0.0
        %5654 = vmatpush.msra.mxu0 0.0
        %5655 = vmatpush.msra.mxu0 0.0
        %5656 = vmatpush.msra.mxu0 0.0
        %5657 = vmatpush.msra.mxu0 %v5632
        %5658 = vmatpush.msra.mxu0 %v5629
        %5659 = vmatmul.f32.gmra.mxu0 %v5638
        %v5660 = vpop.f32.mrf.mxu0
        %v5661 = vadd.f32 0.0, %v5660
        %5662 = vmatmul.f32.gmra.mxu0 %v5641
        %v5663 = vpop.f32.mrf.mxu0
        %v5664 = vadd.f32 0.0, %v5663
        %5665 = vdwg.mxu0
        %v5666 = vadd.f32 %v5604, %v5661
        %v5667 = vadd.f32 %v5605, %v5664
        %s5668 = scalar_lea.vmem %s9, 544
        %v5669 = vld [vmem:[%s5668] sm:$0xff]
        %v5670 = vld [vmem:[%s5668 + $0x8] sm:$0xff]
        %v5671 = vld [vmem:[%s5668 + $0x10] sm:$0xff]
        %v5672 = vld [vmem:[%s5668 + $0x18] sm:$0xff]
        %5673 = vmatpush.msra.mxu0 0.0
        %5674 = vmatpush.msra.mxu0 0.0
        %5675 = vmatpush.msra.mxu0 0.0
        %5676 = vmatpush.msra.mxu0 0.0
        %5677 = vmatpush.msra.mxu0 0.0
        %5678 = vmatpush.msra.mxu0 0.0
        %5679 = vmatpush.msra.mxu0 0.0
        %5680 = vmatpush.msra.mxu0 0.0
        %5681 = vmatpush.msra.mxu0 0.0
        %5682 = vmatpush.msra.mxu0 0.0
        %5683 = vmatpush.msra.mxu0 0.0
        %5684 = vmatpush.msra.mxu0 0.0
        %5685 = vmatpush.msra.mxu0 %v5672
        %5686 = vmatpush.msra.mxu0 %v5671
        %5687 = vmatpush.msra.mxu0 %v5670
        %5688 = vmatpush.msra.mxu0 %v5669
        %5689 = vmatmul.f32.gmra.mxu0 %v4619
        %v5690 = vpop.f32.mrf.mxu0
        %v5691 = vadd.f32 0.0, %v5690
        %5692 = vmatmul.f32.gmra.mxu0 %v4622
        %v5693 = vpop.f32.mrf.mxu0
        %v5694 = vadd.f32 0.0, %v5693
        %5695 = vdwg.mxu0
        %s5696 = scalar_lea.vmem [#allocation13], 272
        %v5697 = vld [vmem:[%s5696] sm:$0xff]
        %v5698 = vld [vmem:[%s5696 + $0x8] sm:$0xff]
        %v5700 = vsel %vm2805, %v5697, 0
        %v5703 = vsel %vm2805, %v5698, 0
        %5705 = vmatpush.msra.mxu0 0.0
        %5706 = vmatpush.msra.mxu0 0.0
        %5707 = vmatpush.msra.mxu0 0.0
        %5708 = vmatpush.msra.mxu0 0.0
        %5709 = vmatpush.msra.mxu0 0.0
        %5710 = vmatpush.msra.mxu0 0.0
        %5711 = vmatpush.msra.mxu0 0.0
        %5712 = vmatpush.msra.mxu0 0.0
        %5713 = vmatpush.msra.mxu0 0.0
        %5714 = vmatpush.msra.mxu0 0.0
        %5715 = vmatpush.msra.mxu0 0.0
        %5716 = vmatpush.msra.mxu0 0.0
        %5717 = vmatpush.msra.mxu0 0.0
        %5718 = vmatpush.msra.mxu0 0.0
        %5719 = vmatpush.msra.mxu0 %v5694
        %5720 = vmatpush.msra.mxu0 %v5691
        %5721 = vmatmul.f32.gmra.mxu0 %v5700
        %v5722 = vpop.f32.mrf.mxu0
        %v5723 = vadd.f32 0.0, %v5722
        %5724 = vmatmul.f32.gmra.mxu0 %v5703
        %v5725 = vpop.f32.mrf.mxu0
        %v5726 = vadd.f32 0.0, %v5725
        %5727 = vdwg.mxu0
        %v5728 = vadd.f32 %v5666, %v5723
        %v5729 = vadd.f32 %v5667, %v5726
        %s5730 = scalar_lea.vmem %s9, 576
        %v5731 = vld [vmem:[%s5730] sm:$0xff]
        %v5732 = vld [vmem:[%s5730 + $0x8] sm:$0xff]
        %v5733 = vld [vmem:[%s5730 + $0x10] sm:$0xff]
        %v5734 = vld [vmem:[%s5730 + $0x18] sm:$0xff]
        %5735 = vmatpush.msra.mxu0 0.0
        %5736 = vmatpush.msra.mxu0 0.0
        %5737 = vmatpush.msra.mxu0 0.0
        %5738 = vmatpush.msra.mxu0 0.0
        %5739 = vmatpush.msra.mxu0 0.0
        %5740 = vmatpush.msra.mxu0 0.0
        %5741 = vmatpush.msra.mxu0 0.0
        %5742 = vmatpush.msra.mxu0 0.0
        %5743 = vmatpush.msra.mxu0 0.0
        %5744 = vmatpush.msra.mxu0 0.0
        %5745 = vmatpush.msra.mxu0 0.0
        %5746 = vmatpush.msra.mxu0 0.0
        %5747 = vmatpush.msra.mxu0 %v5734
        %5748 = vmatpush.msra.mxu0 %v5733
        %5749 = vmatpush.msra.mxu0 %v5732
        %5750 = vmatpush.msra.mxu0 %v5731
        %5751 = vmatmul.f32.gmra.mxu0 %v4619
        %v5752 = vpop.f32.mrf.mxu0
        %v5753 = vadd.f32 0.0, %v5752
        %5754 = vmatmul.f32.gmra.mxu0 %v4622
        %v5755 = vpop.f32.mrf.mxu0
        %v5756 = vadd.f32 0.0, %v5755
        %5757 = vdwg.mxu0
        %s5758 = scalar_lea.vmem [#allocation13], 288
        %v5759 = vld [vmem:[%s5758] sm:$0xff]
        %v5760 = vld [vmem:[%s5758 + $0x8] sm:$0xff]
        %v5762 = vsel %vm2805, %v5759, 0
        %v5765 = vsel %vm2805, %v5760, 0
        %5767 = vmatpush.msra.mxu0 0.0
        %5768 = vmatpush.msra.mxu0 0.0
        %5769 = vmatpush.msra.mxu0 0.0
        %5770 = vmatpush.msra.mxu0 0.0
        %5771 = vmatpush.msra.mxu0 0.0
        %5772 = vmatpush.msra.mxu0 0.0
        %5773 = vmatpush.msra.mxu0 0.0
        %5774 = vmatpush.msra.mxu0 0.0
        %5775 = vmatpush.msra.mxu0 0.0
        %5776 = vmatpush.msra.mxu0 0.0
        %5777 = vmatpush.msra.mxu0 0.0
        %5778 = vmatpush.msra.mxu0 0.0
        %5779 = vmatpush.msra.mxu0 0.0
        %5780 = vmatpush.msra.mxu0 0.0
        %5781 = vmatpush.msra.mxu0 %v5756
        %5782 = vmatpush.msra.mxu0 %v5753
        %5783 = vmatmul.f32.gmra.mxu0 %v5762
        %v5784 = vpop.f32.mrf.mxu0
        %v5785 = vadd.f32 0.0, %v5784
        %5786 = vmatmul.f32.gmra.mxu0 %v5765
        %v5787 = vpop.f32.mrf.mxu0
        %v5788 = vadd.f32 0.0, %v5787
        %5789 = vdwg.mxu0
        %v5790 = vadd.f32 %v5728, %v5785
        %v5791 = vadd.f32 %v5729, %v5788
        %s5792 = scalar_lea.vmem %s9, 608
        %v5793 = vld [vmem:[%s5792] sm:$0xff]
        %v5794 = vld [vmem:[%s5792 + $0x8] sm:$0xff]
        %v5795 = vld [vmem:[%s5792 + $0x10] sm:$0xff]
        %v5796 = vld [vmem:[%s5792 + $0x18] sm:$0xff]
        %5797 = vmatpush.msra.mxu0 0.0
        %5798 = vmatpush.msra.mxu0 0.0
        %5799 = vmatpush.msra.mxu0 0.0
        %5800 = vmatpush.msra.mxu0 0.0
        %5801 = vmatpush.msra.mxu0 0.0
        %5802 = vmatpush.msra.mxu0 0.0
        %5803 = vmatpush.msra.mxu0 0.0
        %5804 = vmatpush.msra.mxu0 0.0
        %5805 = vmatpush.msra.mxu0 0.0
        %5806 = vmatpush.msra.mxu0 0.0
        %5807 = vmatpush.msra.mxu0 0.0
        %5808 = vmatpush.msra.mxu0 0.0
        %5809 = vmatpush.msra.mxu0 %v5796
        %5810 = vmatpush.msra.mxu0 %v5795
        %5811 = vmatpush.msra.mxu0 %v5794
        %5812 = vmatpush.msra.mxu0 %v5793
        %5813 = vmatmul.f32.gmra.mxu0 %v4619
        %v5814 = vpop.f32.mrf.mxu0
        %v5815 = vadd.f32 0.0, %v5814
        %5816 = vmatmul.f32.gmra.mxu0 %v4622
        %v5817 = vpop.f32.mrf.mxu0
        %v5818 = vadd.f32 0.0, %v5817
        %5819 = vdwg.mxu0
        %s5820 = scalar_lea.vmem [#allocation13], 304
        %v5821 = vld [vmem:[%s5820] sm:$0xff]
        %v5822 = vld [vmem:[%s5820 + $0x8] sm:$0xff]
        %v5824 = vsel %vm2805, %v5821, 0
        %v5827 = vsel %vm2805, %v5822, 0
        %5829 = vmatpush.msra.mxu0 0.0
        %5830 = vmatpush.msra.mxu0 0.0
        %5831 = vmatpush.msra.mxu0 0.0
        %5832 = vmatpush.msra.mxu0 0.0
        %5833 = vmatpush.msra.mxu0 0.0
        %5834 = vmatpush.msra.mxu0 0.0
        %5835 = vmatpush.msra.mxu0 0.0
        %5836 = vmatpush.msra.mxu0 0.0
        %5837 = vmatpush.msra.mxu0 0.0
        %5838 = vmatpush.msra.mxu0 0.0
        %5839 = vmatpush.msra.mxu0 0.0
        %5840 = vmatpush.msra.mxu0 0.0
        %5841 = vmatpush.msra.mxu0 0.0
        %5842 = vmatpush.msra.mxu0 0.0
        %5843 = vmatpush.msra.mxu0 %v5818
        %5844 = vmatpush.msra.mxu0 %v5815
        %5845 = vmatmul.f32.gmra.mxu0 %v5824
        %v5846 = vpop.f32.mrf.mxu0
        %v5847 = vadd.f32 0.0, %v5846
        %5848 = vmatmul.f32.gmra.mxu0 %v5827
        %v5849 = vpop.f32.mrf.mxu0
        %v5850 = vadd.f32 0.0, %v5849
        %5851 = vdwg.mxu0
        %v5852 = vadd.f32 %v5790, %v5847
        %v5853 = vadd.f32 %v5791, %v5850
        %s5854 = scalar_lea.vmem %s9, 640
        %v5855 = vld [vmem:[%s5854] sm:$0xff]
        %v5856 = vld [vmem:[%s5854 + $0x8] sm:$0xff]
        %v5857 = vld [vmem:[%s5854 + $0x10] sm:$0xff]
        %v5858 = vld [vmem:[%s5854 + $0x18] sm:$0xff]
        %5859 = vmatpush.msra.mxu0 0.0
        %5860 = vmatpush.msra.mxu0 0.0
        %5861 = vmatpush.msra.mxu0 0.0
        %5862 = vmatpush.msra.mxu0 0.0
        %5863 = vmatpush.msra.mxu0 0.0
        %5864 = vmatpush.msra.mxu0 0.0
        %5865 = vmatpush.msra.mxu0 0.0
        %5866 = vmatpush.msra.mxu0 0.0
        %5867 = vmatpush.msra.mxu0 0.0
        %5868 = vmatpush.msra.mxu0 0.0
        %5869 = vmatpush.msra.mxu0 0.0
        %5870 = vmatpush.msra.mxu0 0.0
        %5871 = vmatpush.msra.mxu0 %v5858
        %5872 = vmatpush.msra.mxu0 %v5857
        %5873 = vmatpush.msra.mxu0 %v5856
        %5874 = vmatpush.msra.mxu0 %v5855
        %5875 = vmatmul.f32.gmra.mxu0 %v4619
        %v5876 = vpop.f32.mrf.mxu0
        %v5877 = vadd.f32 0.0, %v5876
        %5878 = vmatmul.f32.gmra.mxu0 %v4622
        %v5879 = vpop.f32.mrf.mxu0
        %v5880 = vadd.f32 0.0, %v5879
        %5881 = vdwg.mxu0
        %s5882 = scalar_lea.vmem [#allocation13], 320
        %v5883 = vld [vmem:[%s5882] sm:$0xff]
        %v5884 = vld [vmem:[%s5882 + $0x8] sm:$0xff]
        %v5886 = vsel %vm2805, %v5883, 0
        %v5889 = vsel %vm2805, %v5884, 0
        %5891 = vmatpush.msra.mxu0 0.0
        %5892 = vmatpush.msra.mxu0 0.0
        %5893 = vmatpush.msra.mxu0 0.0
        %5894 = vmatpush.msra.mxu0 0.0
        %5895 = vmatpush.msra.mxu0 0.0
        %5896 = vmatpush.msra.mxu0 0.0
        %5897 = vmatpush.msra.mxu0 0.0
        %5898 = vmatpush.msra.mxu0 0.0
        %5899 = vmatpush.msra.mxu0 0.0
        %5900 = vmatpush.msra.mxu0 0.0
        %5901 = vmatpush.msra.mxu0 0.0
        %5902 = vmatpush.msra.mxu0 0.0
        %5903 = vmatpush.msra.mxu0 0.0
        %5904 = vmatpush.msra.mxu0 0.0
        %5905 = vmatpush.msra.mxu0 %v5880
        %5906 = vmatpush.msra.mxu0 %v5877
        %5907 = vmatmul.f32.gmra.mxu0 %v5886
        %v5908 = vpop.f32.mrf.mxu0
        %v5909 = vadd.f32 0.0, %v5908
        %5910 = vmatmul.f32.gmra.mxu0 %v5889
        %v5911 = vpop.f32.mrf.mxu0
        %v5912 = vadd.f32 0.0, %v5911
        %5913 = vdwg.mxu0
        %v5914 = vadd.f32 %v5852, %v5909
        %v5915 = vadd.f32 %v5853, %v5912
        %s5916 = scalar_lea.vmem %s9, 672
        %v5917 = vld [vmem:[%s5916] sm:$0xff]
        %v5918 = vld [vmem:[%s5916 + $0x8] sm:$0xff]
        %v5919 = vld [vmem:[%s5916 + $0x10] sm:$0xff]
        %v5920 = vld [vmem:[%s5916 + $0x18] sm:$0xff]
        %5921 = vmatpush.msra.mxu0 0.0
        %5922 = vmatpush.msra.mxu0 0.0
        %5923 = vmatpush.msra.mxu0 0.0
        %5924 = vmatpush.msra.mxu0 0.0
        %5925 = vmatpush.msra.mxu0 0.0
        %5926 = vmatpush.msra.mxu0 0.0
        %5927 = vmatpush.msra.mxu0 0.0
        %5928 = vmatpush.msra.mxu0 0.0
        %5929 = vmatpush.msra.mxu0 0.0
        %5930 = vmatpush.msra.mxu0 0.0
        %5931 = vmatpush.msra.mxu0 0.0
        %5932 = vmatpush.msra.mxu0 0.0
        %5933 = vmatpush.msra.mxu0 %v5920
        %5934 = vmatpush.msra.mxu0 %v5919
        %5935 = vmatpush.msra.mxu0 %v5918
        %5936 = vmatpush.msra.mxu0 %v5917
        %5937 = vmatmul.f32.gmra.mxu0 %v4619
        %v5938 = vpop.f32.mrf.mxu0
        %v5939 = vadd.f32 0.0, %v5938
        %5940 = vmatmul.f32.gmra.mxu0 %v4622
        %v5941 = vpop.f32.mrf.mxu0
        %v5942 = vadd.f32 0.0, %v5941
        %5943 = vdwg.mxu0
        %s5944 = scalar_lea.vmem [#allocation13], 336
        %v5945 = vld [vmem:[%s5944] sm:$0xff]
        %v5946 = vld [vmem:[%s5944 + $0x8] sm:$0xff]
        %v5948 = vsel %vm2805, %v5945, 0
        %v5951 = vsel %vm2805, %v5946, 0
        %5953 = vmatpush.msra.mxu0 0.0
        %5954 = vmatpush.msra.mxu0 0.0
        %5955 = vmatpush.msra.mxu0 0.0
        %5956 = vmatpush.msra.mxu0 0.0
        %5957 = vmatpush.msra.mxu0 0.0
        %5958 = vmatpush.msra.mxu0 0.0
        %5959 = vmatpush.msra.mxu0 0.0
        %5960 = vmatpush.msra.mxu0 0.0
        %5961 = vmatpush.msra.mxu0 0.0
        %5962 = vmatpush.msra.mxu0 0.0
        %5963 = vmatpush.msra.mxu0 0.0
        %5964 = vmatpush.msra.mxu0 0.0
        %5965 = vmatpush.msra.mxu0 0.0
        %5966 = vmatpush.msra.mxu0 0.0
        %5967 = vmatpush.msra.mxu0 %v5942
        %5968 = vmatpush.msra.mxu0 %v5939
        %5969 = vmatmul.f32.gmra.mxu0 %v5948
        %v5970 = vpop.f32.mrf.mxu0
        %v5971 = vadd.f32 0.0, %v5970
        %5972 = vmatmul.f32.gmra.mxu0 %v5951
        %v5973 = vpop.f32.mrf.mxu0
        %v5974 = vadd.f32 0.0, %v5973
        %5975 = vdwg.mxu0
        %v5976 = vadd.f32 %v5914, %v5971
        %v5977 = vadd.f32 %v5915, %v5974
        %s5978 = scalar_lea.vmem %s9, 704
        %v5979 = vld [vmem:[%s5978] sm:$0xff]
        %v5980 = vld [vmem:[%s5978 + $0x8] sm:$0xff]
        %v5981 = vld [vmem:[%s5978 + $0x10] sm:$0xff]
        %v5982 = vld [vmem:[%s5978 + $0x18] sm:$0xff]
        %5983 = vmatpush.msra.mxu0 0.0
        %5984 = vmatpush.msra.mxu0 0.0
        %5985 = vmatpush.msra.mxu0 0.0
        %5986 = vmatpush.msra.mxu0 0.0
        %5987 = vmatpush.msra.mxu0 0.0
        %5988 = vmatpush.msra.mxu0 0.0
        %5989 = vmatpush.msra.mxu0 0.0
        %5990 = vmatpush.msra.mxu0 0.0
        %5991 = vmatpush.msra.mxu0 0.0
        %5992 = vmatpush.msra.mxu0 0.0
        %5993 = vmatpush.msra.mxu0 0.0
        %5994 = vmatpush.msra.mxu0 0.0
        %5995 = vmatpush.msra.mxu0 %v5982
        %5996 = vmatpush.msra.mxu0 %v5981
        %5997 = vmatpush.msra.mxu0 %v5980
        %5998 = vmatpush.msra.mxu0 %v5979
        %5999 = vmatmul.f32.gmra.mxu0 %v4619
        %v6000 = vpop.f32.mrf.mxu0
        %v6001 = vadd.f32 0.0, %v6000
        %6002 = vmatmul.f32.gmra.mxu0 %v4622
        %v6003 = vpop.f32.mrf.mxu0
        %v6004 = vadd.f32 0.0, %v6003
        %6005 = vdwg.mxu0
        %s6006 = scalar_lea.vmem [#allocation13], 352
        %v6007 = vld [vmem:[%s6006] sm:$0xff]
        %v6008 = vld [vmem:[%s6006 + $0x8] sm:$0xff]
        %v6010 = vsel %vm2805, %v6007, 0
        %v6013 = vsel %vm2805, %v6008, 0
        %6015 = vmatpush.msra.mxu0 0.0
        %6016 = vmatpush.msra.mxu0 0.0
        %6017 = vmatpush.msra.mxu0 0.0
        %6018 = vmatpush.msra.mxu0 0.0
        %6019 = vmatpush.msra.mxu0 0.0
        %6020 = vmatpush.msra.mxu0 0.0
        %6021 = vmatpush.msra.mxu0 0.0
        %6022 = vmatpush.msra.mxu0 0.0
        %6023 = vmatpush.msra.mxu0 0.0
        %6024 = vmatpush.msra.mxu0 0.0
        %6025 = vmatpush.msra.mxu0 0.0
        %6026 = vmatpush.msra.mxu0 0.0
        %6027 = vmatpush.msra.mxu0 0.0
        %6028 = vmatpush.msra.mxu0 0.0
        %6029 = vmatpush.msra.mxu0 %v6004
        %6030 = vmatpush.msra.mxu0 %v6001
        %6031 = vmatmul.f32.gmra.mxu0 %v6010
        %v6032 = vpop.f32.mrf.mxu0
        %v6033 = vadd.f32 0.0, %v6032
        %6034 = vmatmul.f32.gmra.mxu0 %v6013
        %v6035 = vpop.f32.mrf.mxu0
        %v6036 = vadd.f32 0.0, %v6035
        %6037 = vdwg.mxu0
        %v6038 = vadd.f32 %v5976, %v6033
        %v6039 = vadd.f32 %v5977, %v6036
        %s6040 = scalar_lea.vmem %s9, 736
        %v6041 = vld [vmem:[%s6040] sm:$0xff]
        %v6042 = vld [vmem:[%s6040 + $0x8] sm:$0xff]
        %v6043 = vld [vmem:[%s6040 + $0x10] sm:$0xff]
        %v6044 = vld [vmem:[%s6040 + $0x18] sm:$0xff]
        %6045 = vmatpush.msra.mxu0 0.0
        %6046 = vmatpush.msra.mxu0 0.0
        %6047 = vmatpush.msra.mxu0 0.0
        %6048 = vmatpush.msra.mxu0 0.0
        %6049 = vmatpush.msra.mxu0 0.0
        %6050 = vmatpush.msra.mxu0 0.0
        %6051 = vmatpush.msra.mxu0 0.0
        %6052 = vmatpush.msra.mxu0 0.0
        %6053 = vmatpush.msra.mxu0 0.0
        %6054 = vmatpush.msra.mxu0 0.0
        %6055 = vmatpush.msra.mxu0 0.0
        %6056 = vmatpush.msra.mxu0 0.0
        %6057 = vmatpush.msra.mxu0 %v6044
        %6058 = vmatpush.msra.mxu0 %v6043
        %6059 = vmatpush.msra.mxu0 %v6042
        %6060 = vmatpush.msra.mxu0 %v6041
        %6061 = vmatmul.f32.gmra.mxu0 %v4619
        %v6062 = vpop.f32.mrf.mxu0
        %v6063 = vadd.f32 0.0, %v6062
        %6064 = vmatmul.f32.gmra.mxu0 %v4622
        %v6065 = vpop.f32.mrf.mxu0
        %v6066 = vadd.f32 0.0, %v6065
        %6067 = vdwg.mxu0
        %s6068 = scalar_lea.vmem [#allocation13], 368
        %v6069 = vld [vmem:[%s6068] sm:$0xff]
        %v6070 = vld [vmem:[%s6068 + $0x8] sm:$0xff]
        %v6072 = vsel %vm2805, %v6069, 0
        %v6075 = vsel %vm2805, %v6070, 0
        %6077 = vmatpush.msra.mxu0 0.0
        %6078 = vmatpush.msra.mxu0 0.0
        %6079 = vmatpush.msra.mxu0 0.0
        %6080 = vmatpush.msra.mxu0 0.0
        %6081 = vmatpush.msra.mxu0 0.0
        %6082 = vmatpush.msra.mxu0 0.0
        %6083 = vmatpush.msra.mxu0 0.0
        %6084 = vmatpush.msra.mxu0 0.0
        %6085 = vmatpush.msra.mxu0 0.0
        %6086 = vmatpush.msra.mxu0 0.0
        %6087 = vmatpush.msra.mxu0 0.0
        %6088 = vmatpush.msra.mxu0 0.0
        %6089 = vmatpush.msra.mxu0 0.0
        %6090 = vmatpush.msra.mxu0 0.0
        %6091 = vmatpush.msra.mxu0 %v6066
        %6092 = vmatpush.msra.mxu0 %v6063
        %6093 = vmatmul.f32.gmra.mxu0 %v6072
        %v6094 = vpop.f32.mrf.mxu0
        %v6095 = vadd.f32 0.0, %v6094
        %6096 = vmatmul.f32.gmra.mxu0 %v6075
        %v6097 = vpop.f32.mrf.mxu0
        %v6098 = vadd.f32 0.0, %v6097
        %6099 = vdwg.mxu0
        %v6100 = vadd.f32 %v6038, %v6095
        %v6101 = vadd.f32 %v6039, %v6098
        %s6102 = scalar_lea.vmem %s9, 768
        %v6103 = vld [vmem:[%s6102] sm:$0xff]
        %v6104 = vld [vmem:[%s6102 + $0x8] sm:$0xff]
        %v6105 = vld [vmem:[%s6102 + $0x10] sm:$0xff]
        %v6106 = vld [vmem:[%s6102 + $0x18] sm:$0xff]
        %6107 = vmatpush.msra.mxu0 0.0
        %6108 = vmatpush.msra.mxu0 0.0
        %6109 = vmatpush.msra.mxu0 0.0
        %6110 = vmatpush.msra.mxu0 0.0
        %6111 = vmatpush.msra.mxu0 0.0
        %6112 = vmatpush.msra.mxu0 0.0
        %6113 = vmatpush.msra.mxu0 0.0
        %6114 = vmatpush.msra.mxu0 0.0
        %6115 = vmatpush.msra.mxu0 0.0
        %6116 = vmatpush.msra.mxu0 0.0
        %6117 = vmatpush.msra.mxu0 0.0
        %6118 = vmatpush.msra.mxu0 0.0
        %6119 = vmatpush.msra.mxu0 %v6106
        %6120 = vmatpush.msra.mxu0 %v6105
        %6121 = vmatpush.msra.mxu0 %v6104
        %6122 = vmatpush.msra.mxu0 %v6103
        %6123 = vmatmul.f32.gmra.mxu0 %v4619
        %v6124 = vpop.f32.mrf.mxu0
        %v6125 = vadd.f32 0.0, %v6124
        %6126 = vmatmul.f32.gmra.mxu0 %v4622
        %v6127 = vpop.f32.mrf.mxu0
        %v6128 = vadd.f32 0.0, %v6127
        %6129 = vdwg.mxu0
        %s6130 = scalar_lea.vmem [#allocation13], 384
        %v6131 = vld [vmem:[%s6130] sm:$0xff]
        %v6132 = vld [vmem:[%s6130 + $0x8] sm:$0xff]
        %v6134 = vsel %vm2805, %v6131, 0
        %v6137 = vsel %vm2805, %v6132, 0
        %6139 = vmatpush.msra.mxu0 0.0
        %6140 = vmatpush.msra.mxu0 0.0
        %6141 = vmatpush.msra.mxu0 0.0
        %6142 = vmatpush.msra.mxu0 0.0
        %6143 = vmatpush.msra.mxu0 0.0
        %6144 = vmatpush.msra.mxu0 0.0
        %6145 = vmatpush.msra.mxu0 0.0
        %6146 = vmatpush.msra.mxu0 0.0
        %6147 = vmatpush.msra.mxu0 0.0
        %6148 = vmatpush.msra.mxu0 0.0
        %6149 = vmatpush.msra.mxu0 0.0
        %6150 = vmatpush.msra.mxu0 0.0
        %6151 = vmatpush.msra.mxu0 0.0
        %6152 = vmatpush.msra.mxu0 0.0
        %6153 = vmatpush.msra.mxu0 %v6128
        %6154 = vmatpush.msra.mxu0 %v6125
        %6155 = vmatmul.f32.gmra.mxu0 %v6134
        %v6156 = vpop.f32.mrf.mxu0
        %v6157 = vadd.f32 0.0, %v6156
        %6158 = vmatmul.f32.gmra.mxu0 %v6137
        %v6159 = vpop.f32.mrf.mxu0
        %v6160 = vadd.f32 0.0, %v6159
        %6161 = vdwg.mxu0
        %v6162 = vadd.f32 %v6100, %v6157
        %v6163 = vadd.f32 %v6101, %v6160
        %v6164 = vld [vmem:[%s10] sm:$0x1]
        %v6166 = vperm.slane %v6164, 0
        %v6168 = vadd.f32 %v6162, %v6166
        %v6169 = vadd.f32 %v6163, %v6166
        %v6170 = vmax.f32 %v6168, 0.0
        %v6171 = vmax.f32 %v6169, 0.0
        %v6172 = vand.u32 2147483647, %v6168
        %v6173 = vand.u32 2147483647, %v6169
        %v6174 = vsub.f32 0.0, %v6172
        %v6175 = vsub.f32 0.0, %v6173
        %v6176 = vmul.f32 %v6174, 1.442695
        %v6177 = vpow.pop %v6176
        %v6178 = vmul.f32 %v6175, 1.442695
        %v6179 = vpow.pop %v6178
        %v6180 = vadd.f32 %v6177, 1.0
        %v6181 = vlog2.pop %v6180
        %v6182 = vmul.f32 %v6181, 0.6931472
        %v6183 = vmul.f32 -0.5, %v6177
        %v6184 = vadd.f32 %v6183, 1.0
        %v6185 = vmul.f32 %v6184, %v6177
        %v6186 = vand.u32 2147483647, %v6177
        %vm6187 = vcmp.lt.f32.partialorder %v6186, 0.0004427343
        %v6188 = vsel %vm6187, %v6185, %v6182
        %v6189 = vadd.f32 %v6179, 1.0
        %v6190 = vlog2.pop %v6189
        %v6191 = vmul.f32 %v6190, 0.6931472
        %v6192 = vmul.f32 -0.5, %v6179
        %v6193 = vadd.f32 %v6192, 1.0
        %v6194 = vmul.f32 %v6193, %v6179
        %v6195 = vand.u32 2147483647, %v6179
        %vm6196 = vcmp.lt.f32.partialorder %v6195, 0.0004427343
        %v6197 = vsel %vm6196, %v6194, %v6191
        %v6198 = vadd.f32 %v6170, %v6188
        %v6199 = vadd.f32 %v6171, %v6197
        %vm6200 = vcmask 15360
        %6201 = vst.msk [vmem:[%s551] sm:$0xff] %vm6200, %v6198
        %6202 = vst.msk [vmem:[%s551 + $0x8] sm:$0xff] %vm6200, %v6199
        %p6203 = scmp.lt.s32.totalorder %s29, 1
        %s6204 = scalar_select %p6203, %s29, 1
        %s6205 = smul.addr %s6204, 2
        %s6206 = smul.addr %s6205, 8
        %s6207 = scalar_lea.vmem %s13, %s6206
        // Predicated region
        $region101: #{simplenet_forward.1} parent=71 // pred_check
          %p6208 = pneg %p325
        $region102: #{simplenet_forward.1} parent=71 // pred_check_branch
          %6210 = sbr.rel (%p6208) target = $region104
        $region103: #{simplenet_forward.1} parent=71 // pred_region
          _
        $region104: #{simplenet_forward.1} parent=71 // pred_fallthru
          _
      $region72: #{simplenet_forward.1} parent=5 // pred_fallthru
        _
      %p6211 = scmp.le.s32.totalorder 2, %s24
      // Predicated region
      $region105: #{simplenet_forward.1} parent=5 // pred_check
        %p6212 = pneg %p6211
      $region106: #{simplenet_forward.1} parent=5 // pred_check_branch
        %6214 = sbr.rel (%p6212) target = $region108
      $region107: #{simplenet_forward.1} parent=5 // pred_region
        %s6215 = ssub.s32 %s24, 2
        // Predicated region
        $region109: #{simplenet_forward.1} parent=107 // pred_check
          %p6216 = pneg %p331
        $region110: #{simplenet_forward.1} parent=107 // pred_check_branch
          %6218 = sbr.rel (%p6216) target = $region112
        $region111: #{simplenet_forward.1} parent=107 // pred_region
          %p6219 = scmp.lt.s32.totalorder %s30, 1
          %s6220 = scalar_select %p6219, %s30, 1
          %s6221 = smul.addr %s6220, 2
          %s6222 = smul.addr %s6221, 8
          %s6223 = scalar_lea.vmem %s13, %s6222
        $region112: #{simplenet_forward.1} parent=107 // pred_fallthru
          _
      $region108: #{simplenet_forward.1} parent=5 // pred_fallthru
        _
    $region6: #{simplenet_forward.1} parent=1 // loop_footer
      %s28 = sadd.s32 1, %s24
    $region7: #{simplenet_forward.1} parent=1 // loop_footer_branch
      %23 = sbr.rel target = $region3
    $region8: #{simplenet_forward.1} parent=1 // loop_exit
      _
    %6224 = vsyncpa [#allocation4], 1
    %s6225 = scalar_lea.sflag [#allocation4], 1
    %6226 = vsyncpa %s6225, 1
    %6227 = vsyncpa [#allocation6], 1
    %6228 = vsyncpa [#allocation9], 1
    %6229 = vsyncpa [#allocation12], 1

</llo_original>
